<compile_context>
chip_gen: v7x
topology: tpu7x:2x2x1
jax: 0.10.0
libtpu: 0.0.40
codegen_flags: <defaults>
</compile_context>

<pallas_src>
import functools

import jax
import jax.numpy as jnp
from jax.experimental import pallas as pl
from jax.experimental.pallas import tpu as pltpu


# ----------------------------------------------------------------------------
# Fused kernel: one batch element per grid step.
# ----------------------------------------------------------------------------
def _multi_context_kernel(x_ref, mask_ref, wb_ref, sb_ref, bb_ref,
                          wf_ref, sf_ref, bf_ref, o_ref,
                          acc_b, brp, acc_f, *, H, W):
    # x_ref:    (1, Cp, (H+6)*W)   H-padded, flattened NCHW image (compute dtype)
    # mask_ref: (5, H*W)           per-dx column masks (delta = dx-2 in -2..2)
    # wb_ref:   (25, 3*Cp, Cp)     all three branch convs, one matrix per tap
    # sb/bb:    (3*Cp, 1) f32      folded BN affine for the branches
    # wf_ref:   (9, Cp, 3*Cp)      fuse 3x3 conv, one matrix per tap
    # sf/bf:    (Cp, 1) f32        folded BN affine for the fuse conv
    # o_ref:    (1, Cp, H*W) f32   lane-dense output (H*W lanes, unmasked store)
    # acc_b:    (3*Cp, H*W) f32    branch accumulator (VMEM scratch)
    # brp:      (3*Cp, (H+4)*W)    row-padded branch activations (compute dtype)
    # acc_f:    (Cp, H*W) f32      fuse accumulator
    HW = H * W
    f32 = jnp.float32

    xv = x_ref[0]            # (Cp, (H+6)*W)
    m = mask_ref[...]        # (5, H*W)

    # ---- Stage 1: the three branch convs as 25 tap matmuls (5x5 support). --
    # Tap (dy, dx) is a static lane shift of the flat H-padded image; taps
    # with dx != 2 wrap across image rows, so their out-of-row lanes are
    # zeroed with the per-dx column mask BEFORE the matmul.
    acc_b[...] = jnp.zeros_like(acc_b)
    for dy in range(5):
        for dx in range(5):
            s = (dy + 1) * W + (dx - 2)
            xs = xv[:, s:s + HW]                       # (Cp, H*W)
            if dx != 2:
                xs = xs * m[dx:dx + 1]                 # zero wrapped lanes
            acc_b[...] += jnp.dot(wb_ref[5 * dy + dx], xs,
                                  preferred_element_type=f32)

    # Folded BN + ReLU epilogue in f32, then park the branch activations in a
    # row-padded scratch (2 zero halo rows top & bottom) so the fuse conv can
    # reuse the same flat-shift trick. Halos are re-zeroed every step so the
    # kernel is correct under any grid scheduling (megacore 'parallel').
    br = jnp.maximum(acc_b[...] * sb_ref[...] + bb_ref[...], 0.0)
    zero_halo = jnp.zeros((brp.shape[0], 2 * W), brp.dtype)
    brp[:, 0:2 * W] = zero_halo
    brp[:, 2 * W + HW:4 * W + HW] = zero_halo
    brp[:, 2 * W:2 * W + HW] = br.astype(brp.dtype)

    # ---- Stage 2: fuse 3x3 conv as 9 tap matmuls. ---------------------------
    acc_f[...] = jnp.zeros_like(acc_f)
    bp = brp[...]
    for dy in range(3):
        for dx in range(3):
            s = (dy + 1) * W + (dx - 1)
            bs = bp[:, s:s + HW]                       # (3*Cp, H*W)
            if dx != 1:
                bs = bs * m[dx + 1:dx + 2]             # delta = dx-1 -> mask[dx+1]
            acc_f[...] += jnp.dot(wf_ref[3 * dy + dx], bs,
                                  preferred_element_type=f32)

    # Folded BN (no ReLU), f32 epilogue; unmasked H*W-lane store.
    o_ref[0] = (acc_f[...] * sf_ref[...] + bf_ref[...]).astype(o_ref.dtype)


# ----------------------------------------------------------------------------
# Wrapper: consumes / produces NCHW directly.
# ----------------------------------------------------------------------------
def multi_context_forward(x_nchw, params, *, use_bf16_matmul=True):
    N, C, H, W = x_nchw.shape
    assert W >= 2, "flat-shift geometry needs W >= 2"
    Cp = params["Cp"]
    assert C <= Cp
    HW = H * W
    Lx = (H + 6) * W
    cdt = jnp.bfloat16 if use_bf16_matmul else jnp.float32
    f32 = jnp.float32
    itemsize = jnp.dtype(cdt).itemsize

    # Pad channels to the packed size, pad H by 3 zero rows top & bottom
    # (keeps every tap slice in-bounds and supplies vertical zero padding),
    # flatten spatially. NO W padding: lane dim is exactly H*W.
    xp = jnp.pad(x_nchw, ((0, 0), (0, Cp - C), (3, 3), (0, 0)))
    x_flat = xp.reshape(N, Cp, Lx).astype(cdt)

    # Per-dx column masks in output-column geometry: mask[d, h*W+w] = 1 iff
    # 0 <= w + (d-2) < W.  Shared by the 5x5 branch taps and the 3x3 fuse taps.
    wcol = jnp.arange(HW, dtype=jnp.int32) % W
    delta = jnp.arange(-2, 3, dtype=jnp.int32)[:, None]
    mask = ((wcol[None, :] + delta >= 0) &
            (wcol[None, :] + delta < W)).astype(cdt)           # (5, H*W)

    # Weights shipped in the MXU compute dtype (cast once here, not in-kernel).
    wb = params["branch_w"].astype(cdt)      # (25, 3*Cp, Cp)
    wf = params["fuse_w"].astype(cdt)        # (9, Cp, 3*Cp)
    sb = params["branch_scale"]              # (3*Cp, 1) f32
    bb = params["branch_bias"]
    sf = params["fuse_scale"]                # (Cp, 1) f32
    bf = params["fuse_bias"]

    kernel = functools.partial(_multi_context_kernel, H=H, W=W)

    def _full(a):
        return pl.BlockSpec(a.shape, lambda n, _nd=a.ndim: (0,) * _nd)

    # Explicit scoped-VMEM budget from the per-step footprint (with headroom
    # for double-buffered invariant inputs).
    per_step_vmem = (
        2 * Cp * Lx * itemsize                 # input block (double-buffered)
        + 2 * Cp * HW * 4                      # output block (double-buffered)
        + 2 * (wb.size + wf.size + mask.size) * itemsize
        + 2 * (sb.size + bb.size + sf.size + bf.size) * 4
        + 3 * Cp * HW * 4                      # acc_b
        + 3 * Cp * (H + 4) * W * itemsize      # brp
        + Cp * HW * 4                          # acc_f
    )
    vmem_limit = int(min(64 << 20, max(16 << 20, 2 * per_step_vmem)))

    flops = 2 * (25 * (3 * Cp) * Cp + 9 * Cp * (3 * Cp)) * HW * N
    bytes_accessed = int(
        x_flat.size * itemsize + N * Cp * HW * 4
        + (wb.size + wf.size + mask.size) * itemsize
        + (sb.size + bb.size + sf.size + bf.size) * 4)

    out_flat = pl.pallas_call(
        kernel,
        out_shape=jax.ShapeDtypeStruct((N, Cp, HW), f32),
        grid_spec=pltpu.PrefetchScalarGridSpec(
            num_scalar_prefetch=0,
            # TODO(synk): at production C / H*W, add a second 'parallel' grid
            # axis over spatial row-blocks to fill v7x's 2 TensorCores and cap
            # per-step VMEM under 64 MiB.
            grid=(N,),
            in_specs=[
                pl.BlockSpec((1, Cp, Lx), lambda n: (n, 0, 0)),
                _full(mask), _full(wb), _full(sb), _full(bb),
                _full(wf), _full(sf), _full(bf),
            ],
            out_specs=pl.BlockSpec((1, Cp, HW), lambda n: (n, 0, 0)),
            scratch_shapes=[
                pltpu.VMEM((3 * Cp, HW), f32),            # branch accumulator
                pltpu.VMEM((3 * Cp, (H + 4) * W), cdt),   # row-padded branch acts
                pltpu.VMEM((Cp, HW), f32),                # fuse accumulator
            ]),
        compiler_params=pltpu.CompilerParams(
            dimension_semantics=("parallel",),
            vmem_limit_bytes=vmem_limit),
        cost_estimate=pl.CostEstimate(
            flops=flops, transcendentals=0, bytes_accessed=bytes_accessed),
    )(x_flat, mask, wb, sb, bb, wf, sf, bf)

    # Drop channel padding; (N, C, H*W) -> (N, C, H, W) is a free reshape.
    return out_flat[:, :C, :].reshape(N, C, H, W)


# ----------------------------------------------------------------------------
# Parameter construction / BN folding / per-tap weight packing (one-time glue).
# ----------------------------------------------------------------------------
def _rand_conv_bn(key, cout, cin, k):
    kw, kb, kg, kbt, km, kv = jax.random.split(key, 6)
    return dict(
        w=jax.random.normal(kw, (cout, cin, k, k), jnp.float32) * 0.1,   # OIHW
        b=jax.random.normal(kb, (cout,), jnp.float32) * 0.1,
        gamma=1.0 + 0.1 * jax.random.normal(kg, (cout,), jnp.float32),
        beta=0.1 * jax.random.normal(kbt, (cout,), jnp.float32),
        mean=0.1 * jax.random.normal(km, (cout,), jnp.float32),
        var=1.0 + jnp.abs(0.1 * jax.random.normal(kv, (cout,), jnp.float32)),
    )


def _fold_bn(p, eps):
    scale = p["gamma"] / jnp.sqrt(p["var"] + eps)
    bias = p["beta"] + (p["b"] - p["mean"]) * scale
    return scale, bias


def make_params(key, cin, eps=1e-5):
    k1, k2, k3, k4 = jax.random.split(key, 4)
    b1 = _rand_conv_bn(k1, cin, cin, 1)
    b2 = _rand_conv_bn(k2, cin, cin, 3)
    b3 = _rand_conv_bn(k3, cin, cin, 5)
    fu = _rand_conv_bn(k4, cin, 3 * cin, 3)

    # Pad channels to a multiple of 16 (bf16 sublane packing) in the packed
    # layout; a no-op at production channel counts.
    Cp = -(-cin // 16) * 16

    # Zero-embed the 1x1 / 3x3 branch kernels into the shared 5x5 support so
    # all three branches share the same 25-tap accumulation loop.
    w1 = jnp.pad(b1["w"], ((0, 0), (0, 0), (2, 2), (2, 2)))
    w2 = jnp.pad(b2["w"], ((0, 0), (0, 0), (1, 1), (1, 1)))
    wcomb = jnp.zeros((3 * Cp, Cp, 5, 5), jnp.float32)
    for i, w in enumerate((w1, w2, b3["w"])):
        wcomb = wcomb.at[i * Cp:i * Cp + cin, :cin].set(w)
    branch_w = jnp.transpose(wcomb, (2, 3, 0, 1)).reshape(25, 3 * Cp, Cp)

    bscale = jnp.zeros((3 * Cp,), jnp.float32)
    bbias = jnp.zeros((3 * Cp,), jnp.float32)
    for i, p in enumerate((b1, b2, b3)):
        s, o = _fold_bn(p, eps)
        bscale = bscale.at[i * Cp:i * Cp + cin].set(s)
        bbias = bbias.at[i * Cp:i * Cp + cin].set(o)

    # Fuse conv: input channels follow the padded [x1 | x2 | x3] block layout.
    wfp = jnp.zeros((Cp, 3 * Cp, 3, 3), jnp.float32)
    for i in range(3):
        wfp = wfp.at[:cin, i * Cp:i * Cp + cin].set(
            fu["w"][:, i * cin:(i + 1) * cin])
    fuse_w = jnp.transpose(wfp, (2, 3, 0, 1)).reshape(9, Cp, 3 * Cp)

    sfv, ofv = _fold_bn(fu, eps)
    fscale = jnp.zeros((Cp,), jnp.float32).at[:cin].set(sfv)
    fbias = jnp.zeros((Cp,), jnp.float32).at[:cin].set(ofv)

    return dict(
        Cp=Cp,
        branch_w=branch_w,
        branch_scale=bscale.reshape(3 * Cp, 1),
        branch_bias=bbias.reshape(3 * Cp, 1),
        fuse_w=fuse_w,
        fuse_scale=fscale.reshape(Cp, 1),
        fuse_bias=fbias.reshape(Cp, 1),
        raw=dict(b1=b1, b2=b2, b3=b3, fuse=fu, eps=eps),   # for the reference
    )


# ----------------------------------------------------------------------------
# Pure-JAX reference (lax.conv, NCHW) for correctness checking.
# ----------------------------------------------------------------------------
def _ref_conv_bn(x, p, relu, eps):
    y = jax.lax.conv_general_dilated(
        x, p["w"], window_strides=(1, 1), padding="SAME",
        dimension_numbers=("NCHW", "OIHW", "NCHW"))
    y = y + p["b"][None, :, None, None]
    y = ((y - p["mean"][None, :, None, None])
         / jnp.sqrt(p["var"][None, :, None, None] + eps)
         * p["gamma"][None, :, None, None] + p["beta"][None, :, None, None])
    return jnp.maximum(y, 0.0) if relu else y


def multi_context_reference(x_nchw, params):
    r = params["raw"]
    eps = r["eps"]
    x1 = _ref_conv_bn(x_nchw, r["b1"], True, eps)
    x2 = _ref_conv_bn(x_nchw, r["b2"], True, eps)
    x3 = _ref_conv_bn(x_nchw, r["b3"], True, eps)
    xc = jnp.concatenate([x1, x2, x3], axis=1)
    return _ref_conv_bn(xc, r["fuse"], False, eps)


if __name__ == "__main__":
    key = jax.random.PRNGKey(0)
    kx, kp = jax.random.split(key)

    N, C, H, W = 2, 4, 16, 16   # NCHW, inchannels = 4
    x = jax.random.normal(kx, (N, C, H, W), jnp.float32)
    params = make_params(kp, C)

    ref = jax.block_until_ready(multi_context_reference(x, params))

    # f32-MXU path: tight check of geometry / masks / BN folding.
    out_f32 = jax.block_until_ready(
        multi_context_forward(x, params, use_bf16_matmul=False))
    assert out_f32.shape == (N, C, H, W), out_f32.shape
    err32 = float(jnp.max(jnp.abs(out_f32 - ref)))
    assert jnp.allclose(out_f32, ref, atol=1e-3, rtol=1e-3), err32

    # Default bf16-MXU path (f32 accumulate): expected ~1e-3 relative error.
    out_bf16 = jax.block_until_ready(multi_context_forward(x, params))
    assert out_bf16.shape == (N, C, H, W), out_bf16.shape
    rel = float(jnp.linalg.norm(out_bf16 - ref) / jnp.linalg.norm(ref))
    assert rel < 2e-2, rel

    print("KERNEL_OK")
</pallas_src>

<mosaic_0001>
module attributes {stable_mosaic.version = 11 : i64} {
  func.func @_multi_context_kernel(%arg0: i32, %arg1: memref<1x16x352xf32, #tpu.memory_space<vmem>>, %arg2: memref<5x256xf32, #tpu.memory_space<vmem>>, %arg3: memref<25x48x16xf32, #tpu.memory_space<vmem>>, %arg4: memref<48x1xf32, #tpu.memory_space<vmem>>, %arg5: memref<48x1xf32, #tpu.memory_space<vmem>>, %arg6: memref<9x16x48xf32, #tpu.memory_space<vmem>>, %arg7: memref<16x1xf32, #tpu.memory_space<vmem>>, %arg8: memref<16x1xf32, #tpu.memory_space<vmem>>, %arg9: memref<1x16x256xf32, #tpu.memory_space<vmem>>, %arg10: memref<48x256xf32, #tpu.memory_space<vmem>>, %arg11: memref<48x320xf32, #tpu.memory_space<vmem>>, %arg12: memref<16x256xf32, #tpu.memory_space<vmem>>) attributes {dimension_semantics = [#tpu.dimension_semantics<parallel>], iteration_bounds = array<i64: 2>, scalar_prefetch = 0 : i64, scratch_operands = 3 : i64, tpu.core_type = #tpu.core_type<tc>, window_params = [{transform_indices = @transform_0, window_bounds = array<i64: 1, 16, 352>}, {pipeline_mode = #tpu.pipeline_mode<synchronous>, transform_indices = @transform_1, window_bounds = array<i64: 5, 256>}, {pipeline_mode = #tpu.pipeline_mode<synchronous>, transform_indices = @transform_2, window_bounds = array<i64: 25, 48, 16>}, {pipeline_mode = #tpu.pipeline_mode<synchronous>, transform_indices = @transform_3, window_bounds = array<i64: 48, 1>}, {pipeline_mode = #tpu.pipeline_mode<synchronous>, transform_indices = @transform_4, window_bounds = array<i64: 48, 1>}, {pipeline_mode = #tpu.pipeline_mode<synchronous>, transform_indices = @transform_5, window_bounds = array<i64: 9, 16, 48>}, {pipeline_mode = #tpu.pipeline_mode<synchronous>, transform_indices = @transform_6, window_bounds = array<i64: 16, 1>}, {pipeline_mode = #tpu.pipeline_mode<synchronous>, transform_indices = @transform_7, window_bounds = array<i64: 16, 1>}, {transform_indices = @transform_8, window_bounds = array<i64: 1, 16, 256>}]} {
    %c0 = arith.constant 0 : index
    %c0_0 = arith.constant 0 : index
    %c0_1 = arith.constant 0 : index
    %0 = vector.load %arg1[%c0, %c0_0, %c0_1] : memref<1x16x352xf32, #tpu.memory_space<vmem>>, vector<1x16x352xf32>
    %1 = vector.shape_cast %0 : vector<1x16x352xf32> to vector<16x352xf32>
    %c0_2 = arith.constant 0 : index
    %c0_3 = arith.constant 0 : index
    %2 = vector.load %arg2[%c0_2, %c0_3] : memref<5x256xf32, #tpu.memory_space<vmem>>, vector<5x256xf32>
    %cst = arith.constant 0.000000e+00 : f32
    %3 = vector.broadcast %cst : f32 to vector<48x256xf32>
    %c0_4 = arith.constant 0 : index
    %c0_5 = arith.constant 0 : index
    %4 = vector.load %arg10[%c0_4, %c0_5] : memref<48x256xf32, #tpu.memory_space<vmem>>, vector<48x256xf32>
    tpu.vector_store %arg10[%c0_4, %c0_5], %3 {strides = array<i32>} : memref<48x256xf32, #tpu.memory_space<vmem>>, vector<48x256xf32>,
    %5 = vector.extract_strided_slice %1 {offsets = [0, 14], sizes = [16, 256], strides = [1, 1]} : vector<16x352xf32> to vector<16x256xf32>
    %6 = vector.extract_strided_slice %2 {offsets = [0, 0], sizes = [1, 256], strides = [1, 1]} : vector<5x256xf32> to vector<1x256xf32>
    %7 = vector.broadcast %6 : vector<1x256xf32> to vector<16x256xf32>
    %8 = arith.mulf %5, %7 : vector<16x256xf32>
    %c0_6 = arith.constant 0 : index
    %c0_7 = arith.constant 0 : index
    %9 = vector.load %arg10[%c0_6, %c0_7] : memref<48x256xf32, #tpu.memory_space<vmem>>, vector<48x256xf32>
    %c0_8 = arith.constant 0 : index
    %c0_9 = arith.constant 0 : index
    %c0_10 = arith.constant 0 : index
    %10 = vector.load %arg3[%c0_8, %c0_9, %c0_10] : memref<25x48x16xf32, #tpu.memory_space<vmem>>, vector<1x48x16xf32>
    %11 = vector.shape_cast %10 : vector<1x48x16xf32> to vector<48x16xf32>
    %cst_11 = arith.constant dense<0.000000e+00> : vector<48x256xf32>
    %12 = tpu.matmul %11, %8, %cst_11 {dimension_numbers = #tpu.dot_dimension_numbers<[1], [0], [0], [1], [0, 0, 1, 1], [], []>} : vector<48x16xf32>, vector<16x256xf32>, vector<48x256xf32> -> vector<48x256xf32>
    %13 = arith.addf %9, %12 : vector<48x256xf32>
    %c0_12 = arith.constant 0 : index
    %c0_13 = arith.constant 0 : index
    %14 = vector.load %arg10[%c0_12, %c0_13] : memref<48x256xf32, #tpu.memory_space<vmem>>, vector<48x256xf32>
    tpu.vector_store %arg10[%c0_12, %c0_13], %13 {strides = array<i32>} : memref<48x256xf32, #tpu.memory_space<vmem>>, vector<48x256xf32>,
    %15 = vector.extract_strided_slice %1 {offsets = [0, 15], sizes = [16, 256], strides = [1, 1]} : vector<16x352xf32> to vector<16x256xf32>
    %16 = vector.extract_strided_slice %2 {offsets = [1, 0], sizes = [1, 256], strides = [1, 1]} : vector<5x256xf32> to vector<1x256xf32>
    %17 = vector.broadcast %16 : vector<1x256xf32> to vector<16x256xf32>
    %18 = arith.mulf %15, %17 : vector<16x256xf32>
    %c0_14 = arith.constant 0 : index
    %c0_15 = arith.constant 0 : index
    %19 = vector.load %arg10[%c0_14, %c0_15] : memref<48x256xf32, #tpu.memory_space<vmem>>, vector<48x256xf32>
    %c1 = arith.constant 1 : index
    %c0_16 = arith.constant 0 : index
    %c0_17 = arith.constant 0 : index
    %20 = vector.load %arg3[%c1, %c0_16, %c0_17] : memref<25x48x16xf32, #tpu.memory_space<vmem>>, vector<1x48x16xf32>
    %21 = vector.shape_cast %20 : vector<1x48x16xf32> to vector<48x16xf32>
    %cst_18 = arith.constant dense<0.000000e+00> : vector<48x256xf32>
    %22 = tpu.matmul %21, %18, %cst_18 {dimension_numbers = #tpu.dot_dimension_numbers<[1], [0], [0], [1], [0, 0, 1, 1], [], []>} : vector<48x16xf32>, vector<16x256xf32>, vector<48x256xf32> -> vector<48x256xf32>
    %23 = arith.addf %19, %22 : vector<48x256xf32>
    %c0_19 = arith.constant 0 : index
    %c0_20 = arith.constant 0 : index
    %24 = vector.load %arg10[%c0_19, %c0_20] : memref<48x256xf32, #tpu.memory_space<vmem>>, vector<48x256xf32>
    tpu.vector_store %arg10[%c0_19, %c0_20], %23 {strides = array<i32>} : memref<48x256xf32, #tpu.memory_space<vmem>>, vector<48x256xf32>,
    %25 = vector.extract_strided_slice %1 {offsets = [0, 16], sizes = [16, 256], strides = [1, 1]} : vector<16x352xf32> to vector<16x256xf32>
    %c0_21 = arith.constant 0 : index
    %c0_22 = arith.constant 0 : index
    %26 = vector.load %arg10[%c0_21, %c0_22] : memref<48x256xf32, #tpu.memory_space<vmem>>, vector<48x256xf32>
    %c2 = arith.constant 2 : index
    %c0_23 = arith.constant 0 : index
    %c0_24 = arith.constant 0 : index
    %27 = vector.load %arg3[%c2, %c0_23, %c0_24] : memref<25x48x16xf32, #tpu.memory_space<vmem>>, vector<1x48x16xf32>
    %28 = vector.shape_cast %27 : vector<1x48x16xf32> to vector<48x16xf32>
    %cst_25 = arith.constant dense<0.000000e+00> : vector<48x256xf32>
    %29 = tpu.matmul %28, %25, %cst_25 {dimension_numbers = #tpu.dot_dimension_numbers<[1], [0], [0], [1], [0, 0, 1, 1], [], []>} : vector<48x16xf32>, vector<16x256xf32>, vector<48x256xf32> -> vector<48x256xf32>
    %30 = arith.addf %26, %29 : vector<48x256xf32>
    %c0_26 = arith.constant 0 : index
    %c0_27 = arith.constant 0 : index
    %31 = vector.load %arg10[%c0_26, %c0_27] : memref<48x256xf32, #tpu.memory_space<vmem>>, vector<48x256xf32>
    tpu.vector_store %arg10[%c0_26, %c0_27], %30 {strides = array<i32>} : memref<48x256xf32, #tpu.memory_space<vmem>>, vector<48x256xf32>,
    %32 = vector.extract_strided_slice %1 {offsets = [0, 17], sizes = [16, 256], strides = [1, 1]} : vector<16x352xf32> to vector<16x256xf32>
    %33 = vector.extract_strided_slice %2 {offsets = [3, 0], sizes = [1, 256], strides = [1, 1]} : vector<5x256xf32> to vector<1x256xf32>
    %34 = vector.broadcast %33 : vector<1x256xf32> to vector<16x256xf32>
    %35 = arith.mulf %32, %34 : vector<16x256xf32>
    %c0_28 = arith.constant 0 : index
    %c0_29 = arith.constant 0 : index
    %36 = vector.load %arg10[%c0_28, %c0_29] : memref<48x256xf32, #tpu.memory_space<vmem>>, vector<48x256xf32>
    %c3 = arith.constant 3 : index
    %c0_30 = arith.constant 0 : index
    %c0_31 = arith.constant 0 : index
    %37 = vector.load %arg3[%c3, %c0_30, %c0_31] : memref<25x48x16xf32, #tpu.memory_space<vmem>>, vector<1x48x16xf32>
    %38 = vector.shape_cast %37 : vector<1x48x16xf32> to vector<48x16xf32>
    %cst_32 = arith.constant dense<0.000000e+00> : vector<48x256xf32>
    %39 = tpu.matmul %38, %35, %cst_32 {dimension_numbers = #tpu.dot_dimension_numbers<[1], [0], [0], [1], [0, 0, 1, 1], [], []>} : vector<48x16xf32>, vector<16x256xf32>, vector<48x256xf32> -> vector<48x256xf32>
    %40 = arith.addf %36, %39 : vector<48x256xf32>
    %c0_33 = arith.constant 0 : index
    %c0_34 = arith.constant 0 : index
    %41 = vector.load %arg10[%c0_33, %c0_34] : memref<48x256xf32, #tpu.memory_space<vmem>>, vector<48x256xf32>
    tpu.vector_store %arg10[%c0_33, %c0_34], %40 {strides = array<i32>} : memref<48x256xf32, #tpu.memory_space<vmem>>, vector<48x256xf32>,
    %42 = vector.extract_strided_slice %1 {offsets = [0, 18], sizes = [16, 256], strides = [1, 1]} : vector<16x352xf32> to vector<16x256xf32>
    %43 = vector.extract_strided_slice %2 {offsets = [4, 0], sizes = [1, 256], strides = [1, 1]} : vector<5x256xf32> to vector<1x256xf32>
    %44 = vector.broadcast %43 : vector<1x256xf32> to vector<16x256xf32>
    %45 = arith.mulf %42, %44 : vector<16x256xf32>
    %c0_35 = arith.constant 0 : index
    %c0_36 = arith.constant 0 : index
    %46 = vector.load %arg10[%c0_35, %c0_36] : memref<48x256xf32, #tpu.memory_space<vmem>>, vector<48x256xf32>
    %c4 = arith.constant 4 : index
    %c0_37 = arith.constant 0 : index
    %c0_38 = arith.constant 0 : index
    %47 = vector.load %arg3[%c4, %c0_37, %c0_38] : memref<25x48x16xf32, #tpu.memory_space<vmem>>, vector<1x48x16xf32>
    %48 = vector.shape_cast %47 : vector<1x48x16xf32> to vector<48x16xf32>
    %cst_39 = arith.constant dense<0.000000e+00> : vector<48x256xf32>
    %49 = tpu.matmul %48, %45, %cst_39 {dimension_numbers = #tpu.dot_dimension_numbers<[1], [0], [0], [1], [0, 0, 1, 1], [], []>} : vector<48x16xf32>, vector<16x256xf32>, vector<48x256xf32> -> vector<48x256xf32>
    %50 = arith.addf %46, %49 : vector<48x256xf32>
    %c0_40 = arith.constant 0 : index
    %c0_41 = arith.constant 0 : index
    %51 = vector.load %arg10[%c0_40, %c0_41] : memref<48x256xf32, #tpu.memory_space<vmem>>, vector<48x256xf32>
    tpu.vector_store %arg10[%c0_40, %c0_41], %50 {strides = array<i32>} : memref<48x256xf32, #tpu.memory_space<vmem>>, vector<48x256xf32>,
    %52 = vector.extract_strided_slice %1 {offsets = [0, 30], sizes = [16, 256], strides = [1, 1]} : vector<16x352xf32> to vector<16x256xf32>
    %53 = vector.extract_strided_slice %2 {offsets = [0, 0], sizes = [1, 256], strides = [1, 1]} : vector<5x256xf32> to vector<1x256xf32>
    %54 = vector.broadcast %53 : vector<1x256xf32> to vector<16x256xf32>
    %55 = arith.mulf %52, %54 : vector<16x256xf32>
    %c0_42 = arith.constant 0 : index
    %c0_43 = arith.constant 0 : index
    %56 = vector.load %arg10[%c0_42, %c0_43] : memref<48x256xf32, #tpu.memory_space<vmem>>, vector<48x256xf32>
    %c5 = arith.constant 5 : index
    %c0_44 = arith.constant 0 : index
    %c0_45 = arith.constant 0 : index
    %57 = vector.load %arg3[%c5, %c0_44, %c0_45] : memref<25x48x16xf32, #tpu.memory_space<vmem>>, vector<1x48x16xf32>
    %58 = vector.shape_cast %57 : vector<1x48x16xf32> to vector<48x16xf32>
    %cst_46 = arith.constant dense<0.000000e+00> : vector<48x256xf32>
    %59 = tpu.matmul %58, %55, %cst_46 {dimension_numbers = #tpu.dot_dimension_numbers<[1], [0], [0], [1], [0, 0, 1, 1], [], []>} : vector<48x16xf32>, vector<16x256xf32>, vector<48x256xf32> -> vector<48x256xf32>
    %60 = arith.addf %56, %59 : vector<48x256xf32>
    %c0_47 = arith.constant 0 : index
    %c0_48 = arith.constant 0 : index
    %61 = vector.load %arg10[%c0_47, %c0_48] : memref<48x256xf32, #tpu.memory_space<vmem>>, vector<48x256xf32>
    tpu.vector_store %arg10[%c0_47, %c0_48], %60 {strides = array<i32>} : memref<48x256xf32, #tpu.memory_space<vmem>>, vector<48x256xf32>,
    %62 = vector.extract_strided_slice %1 {offsets = [0, 31], sizes = [16, 256], strides = [1, 1]} : vector<16x352xf32> to vector<16x256xf32>
    %63 = vector.extract_strided_slice %2 {offsets = [1, 0], sizes = [1, 256], strides = [1, 1]} : vector<5x256xf32> to vector<1x256xf32>
    %64 = vector.broadcast %63 : vector<1x256xf32> to vector<16x256xf32>
    %65 = arith.mulf %62, %64 : vector<16x256xf32>
    %c0_49 = arith.constant 0 : index
    %c0_50 = arith.constant 0 : index
    %66 = vector.load %arg10[%c0_49, %c0_50] : memref<48x256xf32, #tpu.memory_space<vmem>>, vector<48x256xf32>
    %c6 = arith.constant 6 : index
    %c0_51 = arith.constant 0 : index
    %c0_52 = arith.constant 0 : index
    %67 = vector.load %arg3[%c6, %c0_51, %c0_52] : memref<25x48x16xf32, #tpu.memory_space<vmem>>, vector<1x48x16xf32>
    %68 = vector.shape_cast %67 : vector<1x48x16xf32> to vector<48x16xf32>
    %cst_53 = arith.constant dense<0.000000e+00> : vector<48x256xf32>
    %69 = tpu.matmul %68, %65, %cst_53 {dimension_numbers = #tpu.dot_dimension_numbers<[1], [0], [0], [1], [0, 0, 1, 1], [], []>} : vector<48x16xf32>, vector<16x256xf32>, vector<48x256xf32> -> vector<48x256xf32>
    %70 = arith.addf %66, %69 : vector<48x256xf32>
    %c0_54 = arith.constant 0 : index
    %c0_55 = arith.constant 0 : index
    %71 = vector.load %arg10[%c0_54, %c0_55] : memref<48x256xf32, #tpu.memory_space<vmem>>, vector<48x256xf32>
    tpu.vector_store %arg10[%c0_54, %c0_55], %70 {strides = array<i32>} : memref<48x256xf32, #tpu.memory_space<vmem>>, vector<48x256xf32>,
    %72 = vector.extract_strided_slice %1 {offsets = [0, 32], sizes = [16, 256], strides = [1, 1]} : vector<16x352xf32> to vector<16x256xf32>
    %c0_56 = arith.constant 0 : index
    %c0_57 = arith.constant 0 : index
    %73 = vector.load %arg10[%c0_56, %c0_57] : memref<48x256xf32, #tpu.memory_space<vmem>>, vector<48x256xf32>
    %c7 = arith.constant 7 : index
    %c0_58 = arith.constant 0 : index
    %c0_59 = arith.constant 0 : index
    %74 = vector.load %arg3[%c7, %c0_58, %c0_59] : memref<25x48x16xf32, #tpu.memory_space<vmem>>, vector<1x48x16xf32>
    %75 = vector.shape_cast %74 : vector<1x48x16xf32> to vector<48x16xf32>
    %cst_60 = arith.constant dense<0.000000e+00> : vector<48x256xf32>
    %76 = tpu.matmul %75, %72, %cst_60 {dimension_numbers = #tpu.dot_dimension_numbers<[1], [0], [0], [1], [0, 0, 1, 1], [], []>} : vector<48x16xf32>, vector<16x256xf32>, vector<48x256xf32> -> vector<48x256xf32>
    %77 = arith.addf %73, %76 : vector<48x256xf32>
    %c0_61 = arith.constant 0 : index
    %c0_62 = arith.constant 0 : index
    %78 = vector.load %arg10[%c0_61, %c0_62] : memref<48x256xf32, #tpu.memory_space<vmem>>, vector<48x256xf32>
    tpu.vector_store %arg10[%c0_61, %c0_62], %77 {strides = array<i32>} : memref<48x256xf32, #tpu.memory_space<vmem>>, vector<48x256xf32>,
    %79 = vector.extract_strided_slice %1 {offsets = [0, 33], sizes = [16, 256], strides = [1, 1]} : vector<16x352xf32> to vector<16x256xf32>
    %80 = vector.extract_strided_slice %2 {offsets = [3, 0], sizes = [1, 256], strides = [1, 1]} : vector<5x256xf32> to vector<1x256xf32>
    %81 = vector.broadcast %80 : vector<1x256xf32> to vector<16x256xf32>
    %82 = arith.mulf %79, %81 : vector<16x256xf32>
    %c0_63 = arith.constant 0 : index
    %c0_64 = arith.constant 0 : index
    %83 = vector.load %arg10[%c0_63, %c0_64] : memref<48x256xf32, #tpu.memory_space<vmem>>, vector<48x256xf32>
    %c8 = arith.constant 8 : index
    %c0_65 = arith.constant 0 : index
    %c0_66 = arith.constant 0 : index
    %84 = vector.load %arg3[%c8, %c0_65, %c0_66] : memref<25x48x16xf32, #tpu.memory_space<vmem>>, vector<1x48x16xf32>
    %85 = vector.shape_cast %84 : vector<1x48x16xf32> to vector<48x16xf32>
    %cst_67 = arith.constant dense<0.000000e+00> : vector<48x256xf32>
    %86 = tpu.matmul %85, %82, %cst_67 {dimension_numbers = #tpu.dot_dimension_numbers<[1], [0], [0], [1], [0, 0, 1, 1], [], []>} : vector<48x16xf32>, vector<16x256xf32>, vector<48x256xf32> -> vector<48x256xf32>
    %87 = arith.addf %83, %86 : vector<48x256xf32>
    %c0_68 = arith.constant 0 : index
    %c0_69 = arith.constant 0 : index
    %88 = vector.load %arg10[%c0_68, %c0_69] : memref<48x256xf32, #tpu.memory_space<vmem>>, vector<48x256xf32>
    tpu.vector_store %arg10[%c0_68, %c0_69], %87 {strides = array<i32>} : memref<48x256xf32, #tpu.memory_space<vmem>>, vector<48x256xf32>,
    %89 = vector.extract_strided_slice %1 {offsets = [0, 34], sizes = [16, 256], strides = [1, 1]} : vector<16x352xf32> to vector<16x256xf32>
    %90 = vector.extract_strided_slice %2 {offsets = [4, 0], sizes = [1, 256], strides = [1, 1]} : vector<5x256xf32> to vector<1x256xf32>
    %91 = vector.broadcast %90 : vector<1x256xf32> to vector<16x256xf32>
    %92 = arith.mulf %89, %91 : vector<16x256xf32>
    %c0_70 = arith.constant 0 : index
    %c0_71 = arith.constant 0 : index
    %93 = vector.load %arg10[%c0_70, %c0_71] : memref<48x256xf32, #tpu.memory_space<vmem>>, vector<48x256xf32>
    %c9 = arith.constant 9 : index
    %c0_72 = arith.constant 0 : index
    %c0_73 = arith.constant 0 : index
    %94 = vector.load %arg3[%c9, %c0_72, %c0_73] : memref<25x48x16xf32, #tpu.memory_space<vmem>>, vector<1x48x16xf32>
    %95 = vector.shape_cast %94 : vector<1x48x16xf32> to vector<48x16xf32>
    %cst_74 = arith.constant dense<0.000000e+00> : vector<48x256xf32>
    %96 = tpu.matmul %95, %92, %cst_74 {dimension_numbers = #tpu.dot_dimension_numbers<[1], [0], [0], [1], [0, 0, 1, 1], [], []>} : vector<48x16xf32>, vector<16x256xf32>, vector<48x256xf32> -> vector<48x256xf32>
    %97 = arith.addf %93, %96 : vector<48x256xf32>
    %c0_75 = arith.constant 0 : index
    %c0_76 = arith.constant 0 : index
    %98 = vector.load %arg10[%c0_75, %c0_76] : memref<48x256xf32, #tpu.memory_space<vmem>>, vector<48x256xf32>
    tpu.vector_store %arg10[%c0_75, %c0_76], %97 {strides = array<i32>} : memref<48x256xf32, #tpu.memory_space<vmem>>, vector<48x256xf32>,
    %99 = vector.extract_strided_slice %1 {offsets = [0, 46], sizes = [16, 256], strides = [1, 1]} : vector<16x352xf32> to vector<16x256xf32>
    %100 = vector.extract_strided_slice %2 {offsets = [0, 0], sizes = [1, 256], strides = [1, 1]} : vector<5x256xf32> to vector<1x256xf32>
    %101 = vector.broadcast %100 : vector<1x256xf32> to vector<16x256xf32>
    %102 = arith.mulf %99, %101 : vector<16x256xf32>
    %c0_77 = arith.constant 0 : index
    %c0_78 = arith.constant 0 : index
    %103 = vector.load %arg10[%c0_77, %c0_78] : memref<48x256xf32, #tpu.memory_space<vmem>>, vector<48x256xf32>
    %c10 = arith.constant 10 : index
    %c0_79 = arith.constant 0 : index
    %c0_80 = arith.constant 0 : index
    %104 = vector.load %arg3[%c10, %c0_79, %c0_80] : memref<25x48x16xf32, #tpu.memory_space<vmem>>, vector<1x48x16xf32>
    %105 = vector.shape_cast %104 : vector<1x48x16xf32> to vector<48x16xf32>
    %cst_81 = arith.constant dense<0.000000e+00> : vector<48x256xf32>
    %106 = tpu.matmul %105, %102, %cst_81 {dimension_numbers = #tpu.dot_dimension_numbers<[1], [0], [0], [1], [0, 0, 1, 1], [], []>} : vector<48x16xf32>, vector<16x256xf32>, vector<48x256xf32> -> vector<48x256xf32>
    %107 = arith.addf %103, %106 : vector<48x256xf32>
    %c0_82 = arith.constant 0 : index
    %c0_83 = arith.constant 0 : index
    %108 = vector.load %arg10[%c0_82, %c0_83] : memref<48x256xf32, #tpu.memory_space<vmem>>, vector<48x256xf32>
    tpu.vector_store %arg10[%c0_82, %c0_83], %107 {strides = array<i32>} : memref<48x256xf32, #tpu.memory_space<vmem>>, vector<48x256xf32>,
    %109 = vector.extract_strided_slice %1 {offsets = [0, 47], sizes = [16, 256], strides = [1, 1]} : vector<16x352xf32> to vector<16x256xf32>
    %110 = vector.extract_strided_slice %2 {offsets = [1, 0], sizes = [1, 256], strides = [1, 1]} : vector<5x256xf32> to vector<1x256xf32>
    %111 = vector.broadcast %110 : vector<1x256xf32> to vector<16x256xf32>
    %112 = arith.mulf %109, %111 : vector<16x256xf32>
    %c0_84 = arith.constant 0 : index
    %c0_85 = arith.constant 0 : index
    %113 = vector.load %arg10[%c0_84, %c0_85] : memref<48x256xf32, #tpu.memory_space<vmem>>, vector<48x256xf32>
    %c11 = arith.constant 11 : index
    %c0_86 = arith.constant 0 : index
    %c0_87 = arith.constant 0 : index
    %114 = vector.load %arg3[%c11, %c0_86, %c0_87] : memref<25x48x16xf32, #tpu.memory_space<vmem>>, vector<1x48x16xf32>
    %115 = vector.shape_cast %114 : vector<1x48x16xf32> to vector<48x16xf32>
    %cst_88 = arith.constant dense<0.000000e+00> : vector<48x256xf32>
    %116 = tpu.matmul %115, %112, %cst_88 {dimension_numbers = #tpu.dot_dimension_numbers<[1], [0], [0], [1], [0, 0, 1, 1], [], []>} : vector<48x16xf32>, vector<16x256xf32>, vector<48x256xf32> -> vector<48x256xf32>
    %117 = arith.addf %113, %116 : vector<48x256xf32>
    %c0_89 = arith.constant 0 : index
    %c0_90 = arith.constant 0 : index
    %118 = vector.load %arg10[%c0_89, %c0_90] : memref<48x256xf32, #tpu.memory_space<vmem>>, vector<48x256xf32>
    tpu.vector_store %arg10[%c0_89, %c0_90], %117 {strides = array<i32>} : memref<48x256xf32, #tpu.memory_space<vmem>>, vector<48x256xf32>,
    %119 = vector.extract_strided_slice %1 {offsets = [0, 48], sizes = [16, 256], strides = [1, 1]} : vector<16x352xf32> to vector<16x256xf32>
    %c0_91 = arith.constant 0 : index
    %c0_92 = arith.constant 0 : index
    %120 = vector.load %arg10[%c0_91, %c0_92] : memref<48x256xf32, #tpu.memory_space<vmem>>, vector<48x256xf32>
    %c12 = arith.constant 12 : index
    %c0_93 = arith.constant 0 : index
    %c0_94 = arith.constant 0 : index
    %121 = vector.load %arg3[%c12, %c0_93, %c0_94] : memref<25x48x16xf32, #tpu.memory_space<vmem>>, vector<1x48x16xf32>
    %122 = vector.shape_cast %121 : vector<1x48x16xf32> to vector<48x16xf32>
    %cst_95 = arith.constant dense<0.000000e+00> : vector<48x256xf32>
    %123 = tpu.matmul %122, %119, %cst_95 {dimension_numbers = #tpu.dot_dimension_numbers<[1], [0], [0], [1], [0, 0, 1, 1], [], []>} : vector<48x16xf32>, vector<16x256xf32>, vector<48x256xf32> -> vector<48x256xf32>
    %124 = arith.addf %120, %123 : vector<48x256xf32>
    %c0_96 = arith.constant 0 : index
    %c0_97 = arith.constant 0 : index
    %125 = vector.load %arg10[%c0_96, %c0_97] : memref<48x256xf32, #tpu.memory_space<vmem>>, vector<48x256xf32>
    tpu.vector_store %arg10[%c0_96, %c0_97], %124 {strides = array<i32>} : memref<48x256xf32, #tpu.memory_space<vmem>>, vector<48x256xf32>,
    %126 = vector.extract_strided_slice %1 {offsets = [0, 49], sizes = [16, 256], strides = [1, 1]} : vector<16x352xf32> to vector<16x256xf32>
    %127 = vector.extract_strided_slice %2 {offsets = [3, 0], sizes = [1, 256], strides = [1, 1]} : vector<5x256xf32> to vector<1x256xf32>
    %128 = vector.broadcast %127 : vector<1x256xf32> to vector<16x256xf32>
    %129 = arith.mulf %126, %128 : vector<16x256xf32>
    %c0_98 = arith.constant 0 : index
    %c0_99 = arith.constant 0 : index
    %130 = vector.load %arg10[%c0_98, %c0_99] : memref<48x256xf32, #tpu.memory_space<vmem>>, vector<48x256xf32>
    %c13 = arith.constant 13 : index
    %c0_100 = arith.constant 0 : index
    %c0_101 = arith.constant 0 : index
    %131 = vector.load %arg3[%c13, %c0_100, %c0_101] : memref<25x48x16xf32, #tpu.memory_space<vmem>>, vector<1x48x16xf32>
    %132 = vector.shape_cast %131 : vector<1x48x16xf32> to vector<48x16xf32>
    %cst_102 = arith.constant dense<0.000000e+00> : vector<48x256xf32>
    %133 = tpu.matmul %132, %129, %cst_102 {dimension_numbers = #tpu.dot_dimension_numbers<[1], [0], [0], [1], [0, 0, 1, 1], [], []>} : vector<48x16xf32>, vector<16x256xf32>, vector<48x256xf32> -> vector<48x256xf32>
    %134 = arith.addf %130, %133 : vector<48x256xf32>
    %c0_103 = arith.constant 0 : index
    %c0_104 = arith.constant 0 : index
    %135 = vector.load %arg10[%c0_103, %c0_104] : memref<48x256xf32, #tpu.memory_space<vmem>>, vector<48x256xf32>
    tpu.vector_store %arg10[%c0_103, %c0_104], %134 {strides = array<i32>} : memref<48x256xf32, #tpu.memory_space<vmem>>, vector<48x256xf32>,
    %136 = vector.extract_strided_slice %1 {offsets = [0, 50], sizes = [16, 256], strides = [1, 1]} : vector<16x352xf32> to vector<16x256xf32>
    %137 = vector.extract_strided_slice %2 {offsets = [4, 0], sizes = [1, 256], strides = [1, 1]} : vector<5x256xf32> to vector<1x256xf32>
    %138 = vector.broadcast %137 : vector<1x256xf32> to vector<16x256xf32>
    %139 = arith.mulf %136, %138 : vector<16x256xf32>
    %c0_105 = arith.constant 0 : index
    %c0_106 = arith.constant 0 : index
    %140 = vector.load %arg10[%c0_105, %c0_106] : memref<48x256xf32, #tpu.memory_space<vmem>>, vector<48x256xf32>
    %c14 = arith.constant 14 : index
    %c0_107 = arith.constant 0 : index
    %c0_108 = arith.constant 0 : index
    %141 = vector.load %arg3[%c14, %c0_107, %c0_108] : memref<25x48x16xf32, #tpu.memory_space<vmem>>, vector<1x48x16xf32>
    %142 = vector.shape_cast %141 : vector<1x48x16xf32> to vector<48x16xf32>
    %cst_109 = arith.constant dense<0.000000e+00> : vector<48x256xf32>
    %143 = tpu.matmul %142, %139, %cst_109 {dimension_numbers = #tpu.dot_dimension_numbers<[1], [0], [0], [1], [0, 0, 1, 1], [], []>} : vector<48x16xf32>, vector<16x256xf32>, vector<48x256xf32> -> vector<48x256xf32>
    %144 = arith.addf %140, %143 : vector<48x256xf32>
    %c0_110 = arith.constant 0 : index
    %c0_111 = arith.constant 0 : index
    %145 = vector.load %arg10[%c0_110, %c0_111] : memref<48x256xf32, #tpu.memory_space<vmem>>, vector<48x256xf32>
    tpu.vector_store %arg10[%c0_110, %c0_111], %144 {strides = array<i32>} : memref<48x256xf32, #tpu.memory_space<vmem>>, vector<48x256xf32>,
    %146 = vector.extract_strided_slice %1 {offsets = [0, 62], sizes = [16, 256], strides = [1, 1]} : vector<16x352xf32> to vector<16x256xf32>
    %147 = vector.extract_strided_slice %2 {offsets = [0, 0], sizes = [1, 256], strides = [1, 1]} : vector<5x256xf32> to vector<1x256xf32>
    %148 = vector.broadcast %147 : vector<1x256xf32> to vector<16x256xf32>
    %149 = arith.mulf %146, %148 : vector<16x256xf32>
    %c0_112 = arith.constant 0 : index
    %c0_113 = arith.constant 0 : index
    %150 = vector.load %arg10[%c0_112, %c0_113] : memref<48x256xf32, #tpu.memory_space<vmem>>, vector<48x256xf32>
    %c15 = arith.constant 15 : index
    %c0_114 = arith.constant 0 : index
    %c0_115 = arith.constant 0 : index
    %151 = vector.load %arg3[%c15, %c0_114, %c0_115] : memref<25x48x16xf32, #tpu.memory_space<vmem>>, vector<1x48x16xf32>
    %152 = vector.shape_cast %151 : vector<1x48x16xf32> to vector<48x16xf32>
    %cst_116 = arith.constant dense<0.000000e+00> : vector<48x256xf32>
    %153 = tpu.matmul %152, %149, %cst_116 {dimension_numbers = #tpu.dot_dimension_numbers<[1], [0], [0], [1], [0, 0, 1, 1], [], []>} : vector<48x16xf32>, vector<16x256xf32>, vector<48x256xf32> -> vector<48x256xf32>
    %154 = arith.addf %150, %153 : vector<48x256xf32>
    %c0_117 = arith.constant 0 : index
    %c0_118 = arith.constant 0 : index
    %155 = vector.load %arg10[%c0_117, %c0_118] : memref<48x256xf32, #tpu.memory_space<vmem>>, vector<48x256xf32>
    tpu.vector_store %arg10[%c0_117, %c0_118], %154 {strides = array<i32>} : memref<48x256xf32, #tpu.memory_space<vmem>>, vector<48x256xf32>,
    %156 = vector.extract_strided_slice %1 {offsets = [0, 63], sizes = [16, 256], strides = [1, 1]} : vector<16x352xf32> to vector<16x256xf32>
    %157 = vector.extract_strided_slice %2 {offsets = [1, 0], sizes = [1, 256], strides = [1, 1]} : vector<5x256xf32> to vector<1x256xf32>
    %158 = vector.broadcast %157 : vector<1x256xf32> to vector<16x256xf32>
    %159 = arith.mulf %156, %158 : vector<16x256xf32>
    %c0_119 = arith.constant 0 : index
    %c0_120 = arith.constant 0 : index
    %160 = vector.load %arg10[%c0_119, %c0_120] : memref<48x256xf32, #tpu.memory_space<vmem>>, vector<48x256xf32>
    %c16 = arith.constant 16 : index
    %c0_121 = arith.constant 0 : index
    %c0_122 = arith.constant 0 : index
    %161 = vector.load %arg3[%c16, %c0_121, %c0_122] : memref<25x48x16xf32, #tpu.memory_space<vmem>>, vector<1x48x16xf32>
    %162 = vector.shape_cast %161 : vector<1x48x16xf32> to vector<48x16xf32>
    %cst_123 = arith.constant dense<0.000000e+00> : vector<48x256xf32>
    %163 = tpu.matmul %162, %159, %cst_123 {dimension_numbers = #tpu.dot_dimension_numbers<[1], [0], [0], [1], [0, 0, 1, 1], [], []>} : vector<48x16xf32>, vector<16x256xf32>, vector<48x256xf32> -> vector<48x256xf32>
    %164 = arith.addf %160, %163 : vector<48x256xf32>
    %c0_124 = arith.constant 0 : index
    %c0_125 = arith.constant 0 : index
    %165 = vector.load %arg10[%c0_124, %c0_125] : memref<48x256xf32, #tpu.memory_space<vmem>>, vector<48x256xf32>
    tpu.vector_store %arg10[%c0_124, %c0_125], %164 {strides = array<i32>} : memref<48x256xf32, #tpu.memory_space<vmem>>, vector<48x256xf32>,
    %166 = vector.extract_strided_slice %1 {offsets = [0, 64], sizes = [16, 256], strides = [1, 1]} : vector<16x352xf32> to vector<16x256xf32>
    %c0_126 = arith.constant 0 : index
    %c0_127 = arith.constant 0 : index
    %167 = vector.load %arg10[%c0_126, %c0_127] : memref<48x256xf32, #tpu.memory_space<vmem>>, vector<48x256xf32>
    %c17 = arith.constant 17 : index
    %c0_128 = arith.constant 0 : index
    %c0_129 = arith.constant 0 : index
    %168 = vector.load %arg3[%c17, %c0_128, %c0_129] : memref<25x48x16xf32, #tpu.memory_space<vmem>>, vector<1x48x16xf32>
    %169 = vector.shape_cast %168 : vector<1x48x16xf32> to vector<48x16xf32>
    %cst_130 = arith.constant dense<0.000000e+00> : vector<48x256xf32>
    %170 = tpu.matmul %169, %166, %cst_130 {dimension_numbers = #tpu.dot_dimension_numbers<[1], [0], [0], [1], [0, 0, 1, 1], [], []>} : vector<48x16xf32>, vector<16x256xf32>, vector<48x256xf32> -> vector<48x256xf32>
    %171 = arith.addf %167, %170 : vector<48x256xf32>
    %c0_131 = arith.constant 0 : index
    %c0_132 = arith.constant 0 : index
    %172 = vector.load %arg10[%c0_131, %c0_132] : memref<48x256xf32, #tpu.memory_space<vmem>>, vector<48x256xf32>
    tpu.vector_store %arg10[%c0_131, %c0_132], %171 {strides = array<i32>} : memref<48x256xf32, #tpu.memory_space<vmem>>, vector<48x256xf32>,
    %173 = vector.extract_strided_slice %1 {offsets = [0, 65], sizes = [16, 256], strides = [1, 1]} : vector<16x352xf32> to vector<16x256xf32>
    %174 = vector.extract_strided_slice %2 {offsets = [3, 0], sizes = [1, 256], strides = [1, 1]} : vector<5x256xf32> to vector<1x256xf32>
    %175 = vector.broadcast %174 : vector<1x256xf32> to vector<16x256xf32>
    %176 = arith.mulf %173, %175 : vector<16x256xf32>
    %c0_133 = arith.constant 0 : index
    %c0_134 = arith.constant 0 : index
    %177 = vector.load %arg10[%c0_133, %c0_134] : memref<48x256xf32, #tpu.memory_space<vmem>>, vector<48x256xf32>
    %c18 = arith.constant 18 : index
    %c0_135 = arith.constant 0 : index
    %c0_136 = arith.constant 0 : index
    %178 = vector.load %arg3[%c18, %c0_135, %c0_136] : memref<25x48x16xf32, #tpu.memory_space<vmem>>, vector<1x48x16xf32>
    %179 = vector.shape_cast %178 : vector<1x48x16xf32> to vector<48x16xf32>
    %cst_137 = arith.constant dense<0.000000e+00> : vector<48x256xf32>
    %180 = tpu.matmul %179, %176, %cst_137 {dimension_numbers = #tpu.dot_dimension_numbers<[1], [0], [0], [1], [0, 0, 1, 1], [], []>} : vector<48x16xf32>, vector<16x256xf32>, vector<48x256xf32> -> vector<48x256xf32>
    %181 = arith.addf %177, %180 : vector<48x256xf32>
    %c0_138 = arith.constant 0 : index
    %c0_139 = arith.constant 0 : index
    %182 = vector.load %arg10[%c0_138, %c0_139] : memref<48x256xf32, #tpu.memory_space<vmem>>, vector<48x256xf32>
    tpu.vector_store %arg10[%c0_138, %c0_139], %181 {strides = array<i32>} : memref<48x256xf32, #tpu.memory_space<vmem>>, vector<48x256xf32>,
    %183 = vector.extract_strided_slice %1 {offsets = [0, 66], sizes = [16, 256], strides = [1, 1]} : vector<16x352xf32> to vector<16x256xf32>
    %184 = vector.extract_strided_slice %2 {offsets = [4, 0], sizes = [1, 256], strides = [1, 1]} : vector<5x256xf32> to vector<1x256xf32>
    %185 = vector.broadcast %184 : vector<1x256xf32> to vector<16x256xf32>
    %186 = arith.mulf %183, %185 : vector<16x256xf32>
    %c0_140 = arith.constant 0 : index
    %c0_141 = arith.constant 0 : index
    %187 = vector.load %arg10[%c0_140, %c0_141] : memref<48x256xf32, #tpu.memory_space<vmem>>, vector<48x256xf32>
    %c19 = arith.constant 19 : index
    %c0_142 = arith.constant 0 : index
    %c0_143 = arith.constant 0 : index
    %188 = vector.load %arg3[%c19, %c0_142, %c0_143] : memref<25x48x16xf32, #tpu.memory_space<vmem>>, vector<1x48x16xf32>
    %189 = vector.shape_cast %188 : vector<1x48x16xf32> to vector<48x16xf32>
    %cst_144 = arith.constant dense<0.000000e+00> : vector<48x256xf32>
    %190 = tpu.matmul %189, %186, %cst_144 {dimension_numbers = #tpu.dot_dimension_numbers<[1], [0], [0], [1], [0, 0, 1, 1], [], []>} : vector<48x16xf32>, vector<16x256xf32>, vector<48x256xf32> -> vector<48x256xf32>
    %191 = arith.addf %187, %190 : vector<48x256xf32>
    %c0_145 = arith.constant 0 : index
    %c0_146 = arith.constant 0 : index
    %192 = vector.load %arg10[%c0_145, %c0_146] : memref<48x256xf32, #tpu.memory_space<vmem>>, vector<48x256xf32>
    tpu.vector_store %arg10[%c0_145, %c0_146], %191 {strides = array<i32>} : memref<48x256xf32, #tpu.memory_space<vmem>>, vector<48x256xf32>,
    %193 = vector.extract_strided_slice %1 {offsets = [0, 78], sizes = [16, 256], strides = [1, 1]} : vector<16x352xf32> to vector<16x256xf32>
    %194 = vector.extract_strided_slice %2 {offsets = [0, 0], sizes = [1, 256], strides = [1, 1]} : vector<5x256xf32> to vector<1x256xf32>
    %195 = vector.broadcast %194 : vector<1x256xf32> to vector<16x256xf32>
    %196 = arith.mulf %193, %195 : vector<16x256xf32>
    %c0_147 = arith.constant 0 : index
    %c0_148 = arith.constant 0 : index
    %197 = vector.load %arg10[%c0_147, %c0_148] : memref<48x256xf32, #tpu.memory_space<vmem>>, vector<48x256xf32>
    %c20 = arith.constant 20 : index
    %c0_149 = arith.constant 0 : index
    %c0_150 = arith.constant 0 : index
    %198 = vector.load %arg3[%c20, %c0_149, %c0_150] : memref<25x48x16xf32, #tpu.memory_space<vmem>>, vector<1x48x16xf32>
    %199 = vector.shape_cast %198 : vector<1x48x16xf32> to vector<48x16xf32>
    %cst_151 = arith.constant dense<0.000000e+00> : vector<48x256xf32>
    %200 = tpu.matmul %199, %196, %cst_151 {dimension_numbers = #tpu.dot_dimension_numbers<[1], [0], [0], [1], [0, 0, 1, 1], [], []>} : vector<48x16xf32>, vector<16x256xf32>, vector<48x256xf32> -> vector<48x256xf32>
    %201 = arith.addf %197, %200 : vector<48x256xf32>
    %c0_152 = arith.constant 0 : index
    %c0_153 = arith.constant 0 : index
    %202 = vector.load %arg10[%c0_152, %c0_153] : memref<48x256xf32, #tpu.memory_space<vmem>>, vector<48x256xf32>
    tpu.vector_store %arg10[%c0_152, %c0_153], %201 {strides = array<i32>} : memref<48x256xf32, #tpu.memory_space<vmem>>, vector<48x256xf32>,
    %203 = vector.extract_strided_slice %1 {offsets = [0, 79], sizes = [16, 256], strides = [1, 1]} : vector<16x352xf32> to vector<16x256xf32>
    %204 = vector.extract_strided_slice %2 {offsets = [1, 0], sizes = [1, 256], strides = [1, 1]} : vector<5x256xf32> to vector<1x256xf32>
    %205 = vector.broadcast %204 : vector<1x256xf32> to vector<16x256xf32>
    %206 = arith.mulf %203, %205 : vector<16x256xf32>
    %c0_154 = arith.constant 0 : index
    %c0_155 = arith.constant 0 : index
    %207 = vector.load %arg10[%c0_154, %c0_155] : memref<48x256xf32, #tpu.memory_space<vmem>>, vector<48x256xf32>
    %c21 = arith.constant 21 : index
    %c0_156 = arith.constant 0 : index
    %c0_157 = arith.constant 0 : index
    %208 = vector.load %arg3[%c21, %c0_156, %c0_157] : memref<25x48x16xf32, #tpu.memory_space<vmem>>, vector<1x48x16xf32>
    %209 = vector.shape_cast %208 : vector<1x48x16xf32> to vector<48x16xf32>
    %cst_158 = arith.constant dense<0.000000e+00> : vector<48x256xf32>
    %210 = tpu.matmul %209, %206, %cst_158 {dimension_numbers = #tpu.dot_dimension_numbers<[1], [0], [0], [1], [0, 0, 1, 1], [], []>} : vector<48x16xf32>, vector<16x256xf32>, vector<48x256xf32> -> vector<48x256xf32>
    %211 = arith.addf %207, %210 : vector<48x256xf32>
    %c0_159 = arith.constant 0 : index
    %c0_160 = arith.constant 0 : index
    %212 = vector.load %arg10[%c0_159, %c0_160] : memref<48x256xf32, #tpu.memory_space<vmem>>, vector<48x256xf32>
    tpu.vector_store %arg10[%c0_159, %c0_160], %211 {strides = array<i32>} : memref<48x256xf32, #tpu.memory_space<vmem>>, vector<48x256xf32>,
    %213 = vector.extract_strided_slice %1 {offsets = [0, 80], sizes = [16, 256], strides = [1, 1]} : vector<16x352xf32> to vector<16x256xf32>
    %c0_161 = arith.constant 0 : index
    %c0_162 = arith.constant 0 : index
    %214 = vector.load %arg10[%c0_161, %c0_162] : memref<48x256xf32, #tpu.memory_space<vmem>>, vector<48x256xf32>
    %c22 = arith.constant 22 : index
    %c0_163 = arith.constant 0 : index
    %c0_164 = arith.constant 0 : index
    %215 = vector.load %arg3[%c22, %c0_163, %c0_164] : memref<25x48x16xf32, #tpu.memory_space<vmem>>, vector<1x48x16xf32>
    %216 = vector.shape_cast %215 : vector<1x48x16xf32> to vector<48x16xf32>
    %cst_165 = arith.constant dense<0.000000e+00> : vector<48x256xf32>
    %217 = tpu.matmul %216, %213, %cst_165 {dimension_numbers = #tpu.dot_dimension_numbers<[1], [0], [0], [1], [0, 0, 1, 1], [], []>} : vector<48x16xf32>, vector<16x256xf32>, vector<48x256xf32> -> vector<48x256xf32>
    %218 = arith.addf %214, %217 : vector<48x256xf32>
    %c0_166 = arith.constant 0 : index
    %c0_167 = arith.constant 0 : index
    %219 = vector.load %arg10[%c0_166, %c0_167] : memref<48x256xf32, #tpu.memory_space<vmem>>, vector<48x256xf32>
    tpu.vector_store %arg10[%c0_166, %c0_167], %218 {strides = array<i32>} : memref<48x256xf32, #tpu.memory_space<vmem>>, vector<48x256xf32>,
    %220 = vector.extract_strided_slice %1 {offsets = [0, 81], sizes = [16, 256], strides = [1, 1]} : vector<16x352xf32> to vector<16x256xf32>
    %221 = vector.extract_strided_slice %2 {offsets = [3, 0], sizes = [1, 256], strides = [1, 1]} : vector<5x256xf32> to vector<1x256xf32>
    %222 = vector.broadcast %221 : vector<1x256xf32> to vector<16x256xf32>
    %223 = arith.mulf %220, %222 : vector<16x256xf32>
    %c0_168 = arith.constant 0 : index
    %c0_169 = arith.constant 0 : index
    %224 = vector.load %arg10[%c0_168, %c0_169] : memref<48x256xf32, #tpu.memory_space<vmem>>, vector<48x256xf32>
    %c23 = arith.constant 23 : index
    %c0_170 = arith.constant 0 : index
    %c0_171 = arith.constant 0 : index
    %225 = vector.load %arg3[%c23, %c0_170, %c0_171] : memref<25x48x16xf32, #tpu.memory_space<vmem>>, vector<1x48x16xf32>
    %226 = vector.shape_cast %225 : vector<1x48x16xf32> to vector<48x16xf32>
    %cst_172 = arith.constant dense<0.000000e+00> : vector<48x256xf32>
    %227 = tpu.matmul %226, %223, %cst_172 {dimension_numbers = #tpu.dot_dimension_numbers<[1], [0], [0], [1], [0, 0, 1, 1], [], []>} : vector<48x16xf32>, vector<16x256xf32>, vector<48x256xf32> -> vector<48x256xf32>
    %228 = arith.addf %224, %227 : vector<48x256xf32>
    %c0_173 = arith.constant 0 : index
    %c0_174 = arith.constant 0 : index
    %229 = vector.load %arg10[%c0_173, %c0_174] : memref<48x256xf32, #tpu.memory_space<vmem>>, vector<48x256xf32>
    tpu.vector_store %arg10[%c0_173, %c0_174], %228 {strides = array<i32>} : memref<48x256xf32, #tpu.memory_space<vmem>>, vector<48x256xf32>,
    %230 = vector.extract_strided_slice %1 {offsets = [0, 82], sizes = [16, 256], strides = [1, 1]} : vector<16x352xf32> to vector<16x256xf32>
    %231 = vector.extract_strided_slice %2 {offsets = [4, 0], sizes = [1, 256], strides = [1, 1]} : vector<5x256xf32> to vector<1x256xf32>
    %232 = vector.broadcast %231 : vector<1x256xf32> to vector<16x256xf32>
    %233 = arith.mulf %230, %232 : vector<16x256xf32>
    %c0_175 = arith.constant 0 : index
    %c0_176 = arith.constant 0 : index
    %234 = vector.load %arg10[%c0_175, %c0_176] : memref<48x256xf32, #tpu.memory_space<vmem>>, vector<48x256xf32>
    %c24 = arith.constant 24 : index
    %c0_177 = arith.constant 0 : index
    %c0_178 = arith.constant 0 : index
    %235 = vector.load %arg3[%c24, %c0_177, %c0_178] : memref<25x48x16xf32, #tpu.memory_space<vmem>>, vector<1x48x16xf32>
    %236 = vector.shape_cast %235 : vector<1x48x16xf32> to vector<48x16xf32>
    %cst_179 = arith.constant dense<0.000000e+00> : vector<48x256xf32>
    %237 = tpu.matmul %236, %233, %cst_179 {dimension_numbers = #tpu.dot_dimension_numbers<[1], [0], [0], [1], [0, 0, 1, 1], [], []>} : vector<48x16xf32>, vector<16x256xf32>, vector<48x256xf32> -> vector<48x256xf32>
    %238 = arith.addf %234, %237 : vector<48x256xf32>
    %c0_180 = arith.constant 0 : index
    %c0_181 = arith.constant 0 : index
    %239 = vector.load %arg10[%c0_180, %c0_181] : memref<48x256xf32, #tpu.memory_space<vmem>>, vector<48x256xf32>
    tpu.vector_store %arg10[%c0_180, %c0_181], %238 {strides = array<i32>} : memref<48x256xf32, #tpu.memory_space<vmem>>, vector<48x256xf32>,
    %c0_182 = arith.constant 0 : index
    %c0_183 = arith.constant 0 : index
    %240 = vector.load %arg10[%c0_182, %c0_183] : memref<48x256xf32, #tpu.memory_space<vmem>>, vector<48x256xf32>
    %c0_184 = arith.constant 0 : index
    %c0_185 = arith.constant 0 : index
    %241 = vector.load %arg4[%c0_184, %c0_185] : memref<48x1xf32, #tpu.memory_space<vmem>>, vector<48x1xf32>
    %242 = vector.broadcast %241 : vector<48x1xf32> to vector<48x256xf32>
    %243 = arith.mulf %240, %242 : vector<48x256xf32>
    %c0_186 = arith.constant 0 : index
    %c0_187 = arith.constant 0 : index
    %244 = vector.load %arg5[%c0_186, %c0_187] : memref<48x1xf32, #tpu.memory_space<vmem>>, vector<48x1xf32>
    %245 = vector.broadcast %244 : vector<48x1xf32> to vector<48x256xf32>
    %246 = arith.addf %243, %245 : vector<48x256xf32>
    %cst_188 = arith.constant 0.000000e+00 : f32
    %247 = vector.broadcast %cst_188 : f32 to vector<48x256xf32>
    %248 = arith.maximumf %246, %247 : vector<48x256xf32>
    %cst_189 = arith.constant 0.000000e+00 : f32
    %249 = vector.broadcast %cst_189 : f32 to vector<48x32xf32>
    %c0_190 = arith.constant 0 : index
    %c0_191 = arith.constant 0 : index
    %250 = vector.load %arg11[%c0_190, %c0_191] : memref<48x320xf32, #tpu.memory_space<vmem>>, vector<48x32xf32>
    tpu.vector_store %arg11[%c0_190, %c0_191], %249 {strides = array<i32>} : memref<48x320xf32, #tpu.memory_space<vmem>>, vector<48x32xf32>,
    %c0_192 = arith.constant 0 : index
    %c288 = arith.constant 288 : index
    %251 = vector.load %arg11[%c0_192, %c288] : memref<48x320xf32, #tpu.memory_space<vmem>>, vector<48x32xf32>
    tpu.vector_store %arg11[%c0_192, %c288], %249 {strides = array<i32>} : memref<48x320xf32, #tpu.memory_space<vmem>>, vector<48x32xf32>,
    %c0_193 = arith.constant 0 : index
    %c32 = arith.constant 32 : index
    %252 = vector.load %arg11[%c0_193, %c32] : memref<48x320xf32, #tpu.memory_space<vmem>>, vector<48x256xf32>
    tpu.vector_store %arg11[%c0_193, %c32], %248 {strides = array<i32>} : memref<48x320xf32, #tpu.memory_space<vmem>>, vector<48x256xf32>,
    %cst_194 = arith.constant 0.000000e+00 : f32
    %253 = vector.broadcast %cst_194 : f32 to vector<16x256xf32>
    %c0_195 = arith.constant 0 : index
    %c0_196 = arith.constant 0 : index
    %254 = vector.load %arg12[%c0_195, %c0_196] : memref<16x256xf32, #tpu.memory_space<vmem>>, vector<16x256xf32>
    tpu.vector_store %arg12[%c0_195, %c0_196], %253 {strides = array<i32>} : memref<16x256xf32, #tpu.memory_space<vmem>>, vector<16x256xf32>,
    %c0_197 = arith.constant 0 : index
    %c0_198 = arith.constant 0 : index
    %255 = vector.load %arg11[%c0_197, %c0_198] : memref<48x320xf32, #tpu.memory_space<vmem>>, vector<48x320xf32>
    %256 = vector.extract_strided_slice %255 {offsets = [0, 15], sizes = [48, 256], strides = [1, 1]} : vector<48x320xf32> to vector<48x256xf32>
    %257 = vector.extract_strided_slice %2 {offsets = [1, 0], sizes = [1, 256], strides = [1, 1]} : vector<5x256xf32> to vector<1x256xf32>
    %258 = vector.broadcast %257 : vector<1x256xf32> to vector<48x256xf32>
    %259 = arith.mulf %256, %258 : vector<48x256xf32>
    %c0_199 = arith.constant 0 : index
    %c0_200 = arith.constant 0 : index
    %260 = vector.load %arg12[%c0_199, %c0_200] : memref<16x256xf32, #tpu.memory_space<vmem>>, vector<16x256xf32>
    %c0_201 = arith.constant 0 : index
    %c0_202 = arith.constant 0 : index
    %c0_203 = arith.constant 0 : index
    %261 = vector.load %arg6[%c0_201, %c0_202, %c0_203] : memref<9x16x48xf32, #tpu.memory_space<vmem>>, vector<1x16x48xf32>
    %262 = vector.shape_cast %261 : vector<1x16x48xf32> to vector<16x48xf32>
    %cst_204 = arith.constant dense<0.000000e+00> : vector<16x256xf32>
    %263 = tpu.matmul %262, %259, %cst_204 {dimension_numbers = #tpu.dot_dimension_numbers<[1], [0], [0], [1], [0, 0, 1, 1], [], []>} : vector<16x48xf32>, vector<48x256xf32>, vector<16x256xf32> -> vector<16x256xf32>
    %264 = arith.addf %260, %263 : vector<16x256xf32>
    %c0_205 = arith.constant 0 : index
    %c0_206 = arith.constant 0 : index
    %265 = vector.load %arg12[%c0_205, %c0_206] : memref<16x256xf32, #tpu.memory_space<vmem>>, vector<16x256xf32>
    tpu.vector_store %arg12[%c0_205, %c0_206], %264 {strides = array<i32>} : memref<16x256xf32, #tpu.memory_space<vmem>>, vector<16x256xf32>,
    %266 = vector.extract_strided_slice %255 {offsets = [0, 16], sizes = [48, 256], strides = [1, 1]} : vector<48x320xf32> to vector<48x256xf32>
    %c0_207 = arith.constant 0 : index
    %c0_208 = arith.constant 0 : index
    %267 = vector.load %arg12[%c0_207, %c0_208] : memref<16x256xf32, #tpu.memory_space<vmem>>, vector<16x256xf32>
    %c1_209 = arith.constant 1 : index
    %c0_210 = arith.constant 0 : index
    %c0_211 = arith.constant 0 : index
    %268 = vector.load %arg6[%c1_209, %c0_210, %c0_211] : memref<9x16x48xf32, #tpu.memory_space<vmem>>, vector<1x16x48xf32>
    %269 = vector.shape_cast %268 : vector<1x16x48xf32> to vector<16x48xf32>
    %cst_212 = arith.constant dense<0.000000e+00> : vector<16x256xf32>
    %270 = tpu.matmul %269, %266, %cst_212 {dimension_numbers = #tpu.dot_dimension_numbers<[1], [0], [0], [1], [0, 0, 1, 1], [], []>} : vector<16x48xf32>, vector<48x256xf32>, vector<16x256xf32> -> vector<16x256xf32>
    %271 = arith.addf %267, %270 : vector<16x256xf32>
    %c0_213 = arith.constant 0 : index
    %c0_214 = arith.constant 0 : index
    %272 = vector.load %arg12[%c0_213, %c0_214] : memref<16x256xf32, #tpu.memory_space<vmem>>, vector<16x256xf32>
    tpu.vector_store %arg12[%c0_213, %c0_214], %271 {strides = array<i32>} : memref<16x256xf32, #tpu.memory_space<vmem>>, vector<16x256xf32>,
    %273 = vector.extract_strided_slice %255 {offsets = [0, 17], sizes = [48, 256], strides = [1, 1]} : vector<48x320xf32> to vector<48x256xf32>
    %274 = vector.extract_strided_slice %2 {offsets = [3, 0], sizes = [1, 256], strides = [1, 1]} : vector<5x256xf32> to vector<1x256xf32>
    %275 = vector.broadcast %274 : vector<1x256xf32> to vector<48x256xf32>
    %276 = arith.mulf %273, %275 : vector<48x256xf32>
    %c0_215 = arith.constant 0 : index
    %c0_216 = arith.constant 0 : index
    %277 = vector.load %arg12[%c0_215, %c0_216] : memref<16x256xf32, #tpu.memory_space<vmem>>, vector<16x256xf32>
    %c2_217 = arith.constant 2 : index
    %c0_218 = arith.constant 0 : index
    %c0_219 = arith.constant 0 : index
    %278 = vector.load %arg6[%c2_217, %c0_218, %c0_219] : memref<9x16x48xf32, #tpu.memory_space<vmem>>, vector<1x16x48xf32>
    %279 = vector.shape_cast %278 : vector<1x16x48xf32> to vector<16x48xf32>
    %cst_220 = arith.constant dense<0.000000e+00> : vector<16x256xf32>
    %280 = tpu.matmul %279, %276, %cst_220 {dimension_numbers = #tpu.dot_dimension_numbers<[1], [0], [0], [1], [0, 0, 1, 1], [], []>} : vector<16x48xf32>, vector<48x256xf32>, vector<16x256xf32> -> vector<16x256xf32>
    %281 = arith.addf %277, %280 : vector<16x256xf32>
    %c0_221 = arith.constant 0 : index
    %c0_222 = arith.constant 0 : index
    %282 = vector.load %arg12[%c0_221, %c0_222] : memref<16x256xf32, #tpu.memory_space<vmem>>, vector<16x256xf32>
    tpu.vector_store %arg12[%c0_221, %c0_222], %281 {strides = array<i32>} : memref<16x256xf32, #tpu.memory_space<vmem>>, vector<16x256xf32>,
    %283 = vector.extract_strided_slice %255 {offsets = [0, 31], sizes = [48, 256], strides = [1, 1]} : vector<48x320xf32> to vector<48x256xf32>
    %284 = vector.extract_strided_slice %2 {offsets = [1, 0], sizes = [1, 256], strides = [1, 1]} : vector<5x256xf32> to vector<1x256xf32>
    %285 = vector.broadcast %284 : vector<1x256xf32> to vector<48x256xf32>
    %286 = arith.mulf %283, %285 : vector<48x256xf32>
    %c0_223 = arith.constant 0 : index
    %c0_224 = arith.constant 0 : index
    %287 = vector.load %arg12[%c0_223, %c0_224] : memref<16x256xf32, #tpu.memory_space<vmem>>, vector<16x256xf32>
    %c3_225 = arith.constant 3 : index
    %c0_226 = arith.constant 0 : index
    %c0_227 = arith.constant 0 : index
    %288 = vector.load %arg6[%c3_225, %c0_226, %c0_227] : memref<9x16x48xf32, #tpu.memory_space<vmem>>, vector<1x16x48xf32>
    %289 = vector.shape_cast %288 : vector<1x16x48xf32> to vector<16x48xf32>
    %cst_228 = arith.constant dense<0.000000e+00> : vector<16x256xf32>
    %290 = tpu.matmul %289, %286, %cst_228 {dimension_numbers = #tpu.dot_dimension_numbers<[1], [0], [0], [1], [0, 0, 1, 1], [], []>} : vector<16x48xf32>, vector<48x256xf32>, vector<16x256xf32> -> vector<16x256xf32>
    %291 = arith.addf %287, %290 : vector<16x256xf32>
    %c0_229 = arith.constant 0 : index
    %c0_230 = arith.constant 0 : index
    %292 = vector.load %arg12[%c0_229, %c0_230] : memref<16x256xf32, #tpu.memory_space<vmem>>, vector<16x256xf32>
    tpu.vector_store %arg12[%c0_229, %c0_230], %291 {strides = array<i32>} : memref<16x256xf32, #tpu.memory_space<vmem>>, vector<16x256xf32>,
    %293 = vector.extract_strided_slice %255 {offsets = [0, 32], sizes = [48, 256], strides = [1, 1]} : vector<48x320xf32> to vector<48x256xf32>
    %c0_231 = arith.constant 0 : index
    %c0_232 = arith.constant 0 : index
    %294 = vector.load %arg12[%c0_231, %c0_232] : memref<16x256xf32, #tpu.memory_space<vmem>>, vector<16x256xf32>
    %c4_233 = arith.constant 4 : index
    %c0_234 = arith.constant 0 : index
    %c0_235 = arith.constant 0 : index
    %295 = vector.load %arg6[%c4_233, %c0_234, %c0_235] : memref<9x16x48xf32, #tpu.memory_space<vmem>>, vector<1x16x48xf32>
    %296 = vector.shape_cast %295 : vector<1x16x48xf32> to vector<16x48xf32>
    %cst_236 = arith.constant dense<0.000000e+00> : vector<16x256xf32>
    %297 = tpu.matmul %296, %293, %cst_236 {dimension_numbers = #tpu.dot_dimension_numbers<[1], [0], [0], [1], [0, 0, 1, 1], [], []>} : vector<16x48xf32>, vector<48x256xf32>, vector<16x256xf32> -> vector<16x256xf32>
    %298 = arith.addf %294, %297 : vector<16x256xf32>
    %c0_237 = arith.constant 0 : index
    %c0_238 = arith.constant 0 : index
    %299 = vector.load %arg12[%c0_237, %c0_238] : memref<16x256xf32, #tpu.memory_space<vmem>>, vector<16x256xf32>
    tpu.vector_store %arg12[%c0_237, %c0_238], %298 {strides = array<i32>} : memref<16x256xf32, #tpu.memory_space<vmem>>, vector<16x256xf32>,
    %300 = vector.extract_strided_slice %255 {offsets = [0, 33], sizes = [48, 256], strides = [1, 1]} : vector<48x320xf32> to vector<48x256xf32>
    %301 = vector.extract_strided_slice %2 {offsets = [3, 0], sizes = [1, 256], strides = [1, 1]} : vector<5x256xf32> to vector<1x256xf32>
    %302 = vector.broadcast %301 : vector<1x256xf32> to vector<48x256xf32>
    %303 = arith.mulf %300, %302 : vector<48x256xf32>
    %c0_239 = arith.constant 0 : index
    %c0_240 = arith.constant 0 : index
    %304 = vector.load %arg12[%c0_239, %c0_240] : memref<16x256xf32, #tpu.memory_space<vmem>>, vector<16x256xf32>
    %c5_241 = arith.constant 5 : index
    %c0_242 = arith.constant 0 : index
    %c0_243 = arith.constant 0 : index
    %305 = vector.load %arg6[%c5_241, %c0_242, %c0_243] : memref<9x16x48xf32, #tpu.memory_space<vmem>>, vector<1x16x48xf32>
    %306 = vector.shape_cast %305 : vector<1x16x48xf32> to vector<16x48xf32>
    %cst_244 = arith.constant dense<0.000000e+00> : vector<16x256xf32>
    %307 = tpu.matmul %306, %303, %cst_244 {dimension_numbers = #tpu.dot_dimension_numbers<[1], [0], [0], [1], [0, 0, 1, 1], [], []>} : vector<16x48xf32>, vector<48x256xf32>, vector<16x256xf32> -> vector<16x256xf32>
    %308 = arith.addf %304, %307 : vector<16x256xf32>
    %c0_245 = arith.constant 0 : index
    %c0_246 = arith.constant 0 : index
    %309 = vector.load %arg12[%c0_245, %c0_246] : memref<16x256xf32, #tpu.memory_space<vmem>>, vector<16x256xf32>
    tpu.vector_store %arg12[%c0_245, %c0_246], %308 {strides = array<i32>} : memref<16x256xf32, #tpu.memory_space<vmem>>, vector<16x256xf32>,
    %310 = vector.extract_strided_slice %255 {offsets = [0, 47], sizes = [48, 256], strides = [1, 1]} : vector<48x320xf32> to vector<48x256xf32>
    %311 = vector.extract_strided_slice %2 {offsets = [1, 0], sizes = [1, 256], strides = [1, 1]} : vector<5x256xf32> to vector<1x256xf32>
    %312 = vector.broadcast %311 : vector<1x256xf32> to vector<48x256xf32>
    %313 = arith.mulf %310, %312 : vector<48x256xf32>
    %c0_247 = arith.constant 0 : index
    %c0_248 = arith.constant 0 : index
    %314 = vector.load %arg12[%c0_247, %c0_248] : memref<16x256xf32, #tpu.memory_space<vmem>>, vector<16x256xf32>
    %c6_249 = arith.constant 6 : index
    %c0_250 = arith.constant 0 : index
    %c0_251 = arith.constant 0 : index
    %315 = vector.load %arg6[%c6_249, %c0_250, %c0_251] : memref<9x16x48xf32, #tpu.memory_space<vmem>>, vector<1x16x48xf32>
    %316 = vector.shape_cast %315 : vector<1x16x48xf32> to vector<16x48xf32>
    %cst_252 = arith.constant dense<0.000000e+00> : vector<16x256xf32>
    %317 = tpu.matmul %316, %313, %cst_252 {dimension_numbers = #tpu.dot_dimension_numbers<[1], [0], [0], [1], [0, 0, 1, 1], [], []>} : vector<16x48xf32>, vector<48x256xf32>, vector<16x256xf32> -> vector<16x256xf32>
    %318 = arith.addf %314, %317 : vector<16x256xf32>
    %c0_253 = arith.constant 0 : index
    %c0_254 = arith.constant 0 : index
    %319 = vector.load %arg12[%c0_253, %c0_254] : memref<16x256xf32, #tpu.memory_space<vmem>>, vector<16x256xf32>
    tpu.vector_store %arg12[%c0_253, %c0_254], %318 {strides = array<i32>} : memref<16x256xf32, #tpu.memory_space<vmem>>, vector<16x256xf32>,
    %320 = vector.extract_strided_slice %255 {offsets = [0, 48], sizes = [48, 256], strides = [1, 1]} : vector<48x320xf32> to vector<48x256xf32>
    %c0_255 = arith.constant 0 : index
    %c0_256 = arith.constant 0 : index
    %321 = vector.load %arg12[%c0_255, %c0_256] : memref<16x256xf32, #tpu.memory_space<vmem>>, vector<16x256xf32>
    %c7_257 = arith.constant 7 : index
    %c0_258 = arith.constant 0 : index
    %c0_259 = arith.constant 0 : index
    %322 = vector.load %arg6[%c7_257, %c0_258, %c0_259] : memref<9x16x48xf32, #tpu.memory_space<vmem>>, vector<1x16x48xf32>
    %323 = vector.shape_cast %322 : vector<1x16x48xf32> to vector<16x48xf32>
    %cst_260 = arith.constant dense<0.000000e+00> : vector<16x256xf32>
    %324 = tpu.matmul %323, %320, %cst_260 {dimension_numbers = #tpu.dot_dimension_numbers<[1], [0], [0], [1], [0, 0, 1, 1], [], []>} : vector<16x48xf32>, vector<48x256xf32>, vector<16x256xf32> -> vector<16x256xf32>
    %325 = arith.addf %321, %324 : vector<16x256xf32>
    %c0_261 = arith.constant 0 : index
    %c0_262 = arith.constant 0 : index
    %326 = vector.load %arg12[%c0_261, %c0_262] : memref<16x256xf32, #tpu.memory_space<vmem>>, vector<16x256xf32>
    tpu.vector_store %arg12[%c0_261, %c0_262], %325 {strides = array<i32>} : memref<16x256xf32, #tpu.memory_space<vmem>>, vector<16x256xf32>,
    %327 = vector.extract_strided_slice %255 {offsets = [0, 49], sizes = [48, 256], strides = [1, 1]} : vector<48x320xf32> to vector<48x256xf32>
    %328 = vector.extract_strided_slice %2 {offsets = [3, 0], sizes = [1, 256], strides = [1, 1]} : vector<5x256xf32> to vector<1x256xf32>
    %329 = vector.broadcast %328 : vector<1x256xf32> to vector<48x256xf32>
    %330 = arith.mulf %327, %329 : vector<48x256xf32>
    %c0_263 = arith.constant 0 : index
    %c0_264 = arith.constant 0 : index
    %331 = vector.load %arg12[%c0_263, %c0_264] : memref<16x256xf32, #tpu.memory_space<vmem>>, vector<16x256xf32>
    %c8_265 = arith.constant 8 : index
    %c0_266 = arith.constant 0 : index
    %c0_267 = arith.constant 0 : index
    %332 = vector.load %arg6[%c8_265, %c0_266, %c0_267] : memref<9x16x48xf32, #tpu.memory_space<vmem>>, vector<1x16x48xf32>
    %333 = vector.shape_cast %332 : vector<1x16x48xf32> to vector<16x48xf32>
    %cst_268 = arith.constant dense<0.000000e+00> : vector<16x256xf32>
    %334 = tpu.matmul %333, %330, %cst_268 {dimension_numbers = #tpu.dot_dimension_numbers<[1], [0], [0], [1], [0, 0, 1, 1], [], []>} : vector<16x48xf32>, vector<48x256xf32>, vector<16x256xf32> -> vector<16x256xf32>
    %335 = arith.addf %331, %334 : vector<16x256xf32>
    %c0_269 = arith.constant 0 : index
    %c0_270 = arith.constant 0 : index
    %336 = vector.load %arg12[%c0_269, %c0_270] : memref<16x256xf32, #tpu.memory_space<vmem>>, vector<16x256xf32>
    tpu.vector_store %arg12[%c0_269, %c0_270], %335 {strides = array<i32>} : memref<16x256xf32, #tpu.memory_space<vmem>>, vector<16x256xf32>,
    %c0_271 = arith.constant 0 : index
    %c0_272 = arith.constant 0 : index
    %337 = vector.load %arg12[%c0_271, %c0_272] : memref<16x256xf32, #tpu.memory_space<vmem>>, vector<16x256xf32>
    %c0_273 = arith.constant 0 : index
    %c0_274 = arith.constant 0 : index
    %338 = vector.load %arg7[%c0_273, %c0_274] : memref<16x1xf32, #tpu.memory_space<vmem>>, vector<16x1xf32>
    %339 = vector.broadcast %338 : vector<16x1xf32> to vector<16x256xf32>
    %340 = arith.mulf %337, %339 : vector<16x256xf32>
    %c0_275 = arith.constant 0 : index
    %c0_276 = arith.constant 0 : index
    %341 = vector.load %arg8[%c0_275, %c0_276] : memref<16x1xf32, #tpu.memory_space<vmem>>, vector<16x1xf32>
    %342 = vector.broadcast %341 : vector<16x1xf32> to vector<16x256xf32>
    %343 = arith.addf %340, %342 : vector<16x256xf32>
    %c0_277 = arith.constant 0 : index
    %c0_278 = arith.constant 0 : index
    %c0_279 = arith.constant 0 : index
    %344 = vector.load %arg9[%c0_277, %c0_278, %c0_279] : memref<1x16x256xf32, #tpu.memory_space<vmem>>, vector<1x16x256xf32>
    %345 = vector.shape_cast %344 : vector<1x16x256xf32> to vector<16x256xf32>
    %346 = vector.shape_cast %343 : vector<16x256xf32> to vector<1x16x256xf32>
    tpu.vector_store %arg9[%c0_277, %c0_278, %c0_279], %346 {strides = array<i32>} : memref<1x16x256xf32, #tpu.memory_space<vmem>>, vector<1x16x256xf32>,
    return
  }
  func.func @transform_0(%arg0: i32) -> (i32, i32, i32) {
    %c0_i32 = arith.constant 0 : i32
    %c0_i32_0 = arith.constant 0 : i32
    %c0_i32_1 = arith.constant 0 : i32
    return %arg0, %c0_i32, %c0_i32_0 : i32, i32, i32
  }
  func.func @transform_1(%arg0: i32) -> (i32, i32) {
    %c0_i32 = arith.constant 0 : i32
    %c0_i32_0 = arith.constant 0 : i32
    %c0_i32_1 = arith.constant 0 : i32
    return %c0_i32, %c0_i32_0 : i32, i32
  }
  func.func @transform_2(%arg0: i32) -> (i32, i32, i32) {
    %c0_i32 = arith.constant 0 : i32
    %c0_i32_0 = arith.constant 0 : i32
    %c0_i32_1 = arith.constant 0 : i32
    %c0_i32_2 = arith.constant 0 : i32
    return %c0_i32, %c0_i32_0, %c0_i32_1 : i32, i32, i32
  }
  func.func @transform_3(%arg0: i32) -> (i32, i32) {
    %c0_i32 = arith.constant 0 : i32
    %c0_i32_0 = arith.constant 0 : i32
    %c0_i32_1 = arith.constant 0 : i32
    return %c0_i32, %c0_i32_0 : i32, i32
  }
  func.func @transform_4(%arg0: i32) -> (i32, i32) {
    %c0_i32 = arith.constant 0 : i32
    %c0_i32_0 = arith.constant 0 : i32
    %c0_i32_1 = arith.constant 0 : i32
    return %c0_i32, %c0_i32_0 : i32, i32
  }
  func.func @transform_5(%arg0: i32) -> (i32, i32, i32) {
    %c0_i32 = arith.constant 0 : i32
    %c0_i32_0 = arith.constant 0 : i32
    %c0_i32_1 = arith.constant 0 : i32
    %c0_i32_2 = arith.constant 0 : i32
    return %c0_i32, %c0_i32_0, %c0_i32_1 : i32, i32, i32
  }
  func.func @transform_6(%arg0: i32) -> (i32, i32) {
    %c0_i32 = arith.constant 0 : i32
    %c0_i32_0 = arith.constant 0 : i32
    %c0_i32_1 = arith.constant 0 : i32
    return %c0_i32, %c0_i32_0 : i32, i32
  }
  func.func @transform_7(%arg0: i32) -> (i32, i32) {
    %c0_i32 = arith.constant 0 : i32
    %c0_i32_0 = arith.constant 0 : i32
    %c0_i32_1 = arith.constant 0 : i32
    return %c0_i32, %c0_i32_0 : i32, i32
  }
  func.func @transform_8(%arg0: i32) -> (i32, i32, i32) {
    %c0_i32 = arith.constant 0 : i32
    %c0_i32_0 = arith.constant 0 : i32
    %c0_i32_1 = arith.constant 0 : i32
    return %arg0, %c0_i32, %c0_i32_0 : i32, i32, i32
  }
}

</mosaic_0001>

<llo_original>
// kernel: tpu_custom_call.1
$region0: #{tpu_custom_call.1}
  #allocation0 [shape = 'u32[]', space=smem, size = 0x4, offset = 0x4, fixed_abs, tag = 'smem constant byte address 0x4 - core index']
  #allocation1 [shape = 'u32[144,128]{1,0:T(1,128)}', space=vmem, size = 0x12000, scoped, tag = 'internal scratch']
  #allocation2 [shape = 'f32[48,256]{1,0:T(8,128)}', space=vmem, size = 0xc000, scoped, tag = 'scratch operand']
  #allocation3 [shape = 'f32[48,320]{1,0:T(8,128)}', space=vmem, size = 0x12000, scoped, tag = 'scratch operand']
  #allocation4 [shape = 'f32[16,256]{1,0:T(8,128)}', space=vmem, size = 0x4000, scoped, tag = 'scratch operand']
  %s0 = inlined_call_operand.vmem [shape: f32[2,16,352], index: 0, kind: input, shape index: {}]
  %s1 = inlined_call_operand.vmem [shape: f32[5,256], index: 1, kind: input, shape index: {}]
  %s2 = inlined_call_operand.vmem [shape: f32[25,48,16], index: 2, kind: input, shape index: {}]
  %s3 = inlined_call_operand.vmem [shape: f32[48,1], index: 3, kind: input, shape index: {}]
  %s4 = inlined_call_operand.vmem [shape: f32[48,1], index: 4, kind: input, shape index: {}]
  %s5 = inlined_call_operand.vmem [shape: f32[9,16,48], index: 5, kind: input, shape index: {}]
  %s6 = inlined_call_operand.vmem [shape: f32[16,1], index: 6, kind: input, shape index: {}]
  %s7 = inlined_call_operand.vmem [shape: f32[16,1], index: 7, kind: input, shape index: {}]
  %s8 = inlined_call_operand.hbm [shape: f32[2,16,256], index: 8, kind: output, shape index: {}]
  %s9 = sld [smem:[#allocation0]]
  $region65: #{tpu_custom_call.1} parent=0
    _
  %s11 = ssub.s32 1, %s9
  %s12 = scalar_select 0, %s11, %s9
  $region1: #{tpu_custom_call.1} parent=0
    #allocation5 [shape = 'u8[32768]{0}', space=vmem, size = 0x8000, scoped, tag = 'output window, operand 0']
    #allocation6 [shape = 's32[2]{0}', space=sflag, size = 0x8, scoped, tag = 'scoped memory for tpu_custom_call.1']
    %13 = vsyncpa [#allocation6], 0
    %s14 = scalar_lea.sflag [#allocation6], 1
    %15 = vsyncpa %s14, 0
    loop: start=0, step=1, limit=4
    $region2: #{tpu_custom_call.1} parent=1 // loop_pre_header
      _
    $region3: #{tpu_custom_call.1} parent=1 // loop_header
      %s17 = sphi 0, %s21
      %p18 = scmp.ge.s32.totalorder %s17, 4
      %s27 = sphi 0, %s29
      %s30 = sphi 0, %s27
      %s31 = sphi 0, %s30
      %s47 = sphi 0, %s31
      %s51 = sphi 0, %s51
      %s53 = sphi 0, %s51
      %s54 = sphi 0, %s53
      %s68 = sphi 0, %s54
      %s72 = sphi 0, %s72
      %s74 = sphi 0, %s72
      %s75 = sphi 0, %s74
      %s89 = sphi 0, %s75
      %s93 = sphi 0, %s93
      %s95 = sphi 0, %s93
      %s96 = sphi 0, %s95
      %s110 = sphi 0, %s96
      %s114 = sphi 0, %s114
      %s116 = sphi 0, %s114
      %s117 = sphi 0, %s116
      %s131 = sphi 0, %s117
      %s135 = sphi 0, %s135
      %s137 = sphi 0, %s135
      %s138 = sphi 0, %s137
      %s152 = sphi 0, %s138
      %s156 = sphi 0, %s156
      %s158 = sphi 0, %s156
      %s159 = sphi 0, %s158
      %s173 = sphi 0, %s159
      %s177 = sphi 0, %s177
      %s179 = sphi 0, %s177
      %s180 = sphi 0, %s179
      %s194 = sphi 0, %s180
      %s200 = sphi 0, %s202
      %s203 = sphi 0, %s200
      %s204 = sphi 0, %s203
      %s220 = sphi 0, %s204
    $region4: #{tpu_custom_call.1} parent=1 // loop_header_branch
      %20 = sbr.rel (%p18) target = $region8
    $region5: #{tpu_custom_call.1} parent=1 // loop_body
      %s22 = ssub.s32 %s17, 1
      %s23 = ssub.s32 %s17, 2
      %s24 = sadd.s32 %s17, 1
      %s25 = ssub.s32 %s17, %s24
      %p26 = scmp.eq.s32.totalorder %s25, 0
      %s28 = sadd.s32 %s27, 1
      %s29 = scalar_select %p26, %s27, %s28
      %p32 = pneg %p26
      %p33 = scmp.eq.s32.totalorder %s17, 1
      %p34 = por %p32, %p33
      %p35 = scmp.ne.s32.totalorder %s27, %s30
      %p36 = scmp.eq.s32.totalorder %s17, 0
      %p37 = por %p35, %p36
      %p38 = scmp.ne.s32.totalorder %s27, %s30
      %p39 = scmp.eq.s32.totalorder %s22, 1
      %p40 = por %p38, %p39
      %p41 = scmp.ne.s32.totalorder %s30, %s31
      %p42 = scmp.eq.s32.totalorder %s22, 0
      %p43 = por %p41, %p42
      %p44 = scmp.ne.s32.totalorder %s30, %s31
      %p45 = scmp.eq.s32.totalorder %s23, 1
      %p46 = por %p44, %p45
      %p48 = scmp.ne.s32.totalorder %s31, %s47
      %p49 = scmp.eq.s32.totalorder %s23, 0
      %p50 = por %p48, %p49
      %s52 = sadd.s32 %s51, 1
      %p55 = scmp.eq.s32.totalorder %s17, 1
      %p56 = scmp.ne.s32.totalorder %s51, %s53
      %p57 = scmp.eq.s32.totalorder %s17, 0
      %p58 = por %p56, %p57
      %p59 = scmp.ne.s32.totalorder %s51, %s53
      %p60 = scmp.eq.s32.totalorder %s22, 1
      %p61 = por %p59, %p60
      %p62 = scmp.ne.s32.totalorder %s53, %s54
      %p63 = scmp.eq.s32.totalorder %s22, 0
      %p64 = por %p62, %p63
      %p65 = scmp.ne.s32.totalorder %s53, %s54
      %p66 = scmp.eq.s32.totalorder %s23, 1
      %p67 = por %p65, %p66
      %p69 = scmp.ne.s32.totalorder %s54, %s68
      %p70 = scmp.eq.s32.totalorder %s23, 0
      %p71 = por %p69, %p70
      %s73 = sadd.s32 %s72, 1
      %p76 = scmp.eq.s32.totalorder %s17, 1
      %p77 = scmp.ne.s32.totalorder %s72, %s74
      %p78 = scmp.eq.s32.totalorder %s17, 0
      %p79 = por %p77, %p78
      %p80 = scmp.ne.s32.totalorder %s72, %s74
      %p81 = scmp.eq.s32.totalorder %s22, 1
      %p82 = por %p80, %p81
      %p83 = scmp.ne.s32.totalorder %s74, %s75
      %p84 = scmp.eq.s32.totalorder %s22, 0
      %p85 = por %p83, %p84
      %p86 = scmp.ne.s32.totalorder %s74, %s75
      %p87 = scmp.eq.s32.totalorder %s23, 1
      %p88 = por %p86, %p87
      %p90 = scmp.ne.s32.totalorder %s75, %s89
      %p91 = scmp.eq.s32.totalorder %s23, 0
      %p92 = por %p90, %p91
      %s94 = sadd.s32 %s93, 1
      %p97 = scmp.eq.s32.totalorder %s17, 1
      %p98 = scmp.ne.s32.totalorder %s93, %s95
      %p99 = scmp.eq.s32.totalorder %s17, 0
      %p100 = por %p98, %p99
      %p101 = scmp.ne.s32.totalorder %s93, %s95
      %p102 = scmp.eq.s32.totalorder %s22, 1
      %p103 = por %p101, %p102
      %p104 = scmp.ne.s32.totalorder %s95, %s96
      %p105 = scmp.eq.s32.totalorder %s22, 0
      %p106 = por %p104, %p105
      %p107 = scmp.ne.s32.totalorder %s95, %s96
      %p108 = scmp.eq.s32.totalorder %s23, 1
      %p109 = por %p107, %p108
      %p111 = scmp.ne.s32.totalorder %s96, %s110
      %p112 = scmp.eq.s32.totalorder %s23, 0
      %p113 = por %p111, %p112
      %s115 = sadd.s32 %s114, 1
      %p118 = scmp.eq.s32.totalorder %s17, 1
      %p119 = scmp.ne.s32.totalorder %s114, %s116
      %p120 = scmp.eq.s32.totalorder %s17, 0
      %p121 = por %p119, %p120
      %p122 = scmp.ne.s32.totalorder %s114, %s116
      %p123 = scmp.eq.s32.totalorder %s22, 1
      %p124 = por %p122, %p123
      %p125 = scmp.ne.s32.totalorder %s116, %s117
      %p126 = scmp.eq.s32.totalorder %s22, 0
      %p127 = por %p125, %p126
      %p128 = scmp.ne.s32.totalorder %s116, %s117
      %p129 = scmp.eq.s32.totalorder %s23, 1
      %p130 = por %p128, %p129
      %p132 = scmp.ne.s32.totalorder %s117, %s131
      %p133 = scmp.eq.s32.totalorder %s23, 0
      %p134 = por %p132, %p133
      %s136 = sadd.s32 %s135, 1
      %p139 = scmp.eq.s32.totalorder %s17, 1
      %p140 = scmp.ne.s32.totalorder %s135, %s137
      %p141 = scmp.eq.s32.totalorder %s17, 0
      %p142 = por %p140, %p141
      %p143 = scmp.ne.s32.totalorder %s135, %s137
      %p144 = scmp.eq.s32.totalorder %s22, 1
      %p145 = por %p143, %p144
      %p146 = scmp.ne.s32.totalorder %s137, %s138
      %p147 = scmp.eq.s32.totalorder %s22, 0
      %p148 = por %p146, %p147
      %p149 = scmp.ne.s32.totalorder %s137, %s138
      %p150 = scmp.eq.s32.totalorder %s23, 1
      %p151 = por %p149, %p150
      %p153 = scmp.ne.s32.totalorder %s138, %s152
      %p154 = scmp.eq.s32.totalorder %s23, 0
      %p155 = por %p153, %p154
      %s157 = sadd.s32 %s156, 1
      %p160 = scmp.eq.s32.totalorder %s17, 1
      %p161 = scmp.ne.s32.totalorder %s156, %s158
      %p162 = scmp.eq.s32.totalorder %s17, 0
      %p163 = por %p161, %p162
      %p164 = scmp.ne.s32.totalorder %s156, %s158
      %p165 = scmp.eq.s32.totalorder %s22, 1
      %p166 = por %p164, %p165
      %p167 = scmp.ne.s32.totalorder %s158, %s159
      %p168 = scmp.eq.s32.totalorder %s22, 0
      %p169 = por %p167, %p168
      %p170 = scmp.ne.s32.totalorder %s158, %s159
      %p171 = scmp.eq.s32.totalorder %s23, 1
      %p172 = por %p170, %p171
      %p174 = scmp.ne.s32.totalorder %s159, %s173
      %p175 = scmp.eq.s32.totalorder %s23, 0
      %p176 = por %p174, %p175
      %s178 = sadd.s32 %s177, 1
      %p181 = scmp.eq.s32.totalorder %s17, 1
      %p182 = scmp.ne.s32.totalorder %s177, %s179
      %p183 = scmp.eq.s32.totalorder %s17, 0
      %p184 = por %p182, %p183
      %p185 = scmp.ne.s32.totalorder %s177, %s179
      %p186 = scmp.eq.s32.totalorder %s22, 1
      %p187 = por %p185, %p186
      %p188 = scmp.ne.s32.totalorder %s179, %s180
      %p189 = scmp.eq.s32.totalorder %s22, 0
      %p190 = por %p188, %p189
      %p191 = scmp.ne.s32.totalorder %s179, %s180
      %p192 = scmp.eq.s32.totalorder %s23, 1
      %p193 = por %p191, %p192
      %p195 = scmp.ne.s32.totalorder %s180, %s194
      %p196 = scmp.eq.s32.totalorder %s23, 0
      %p197 = por %p195, %p196
      %s198 = ssub.s32 %s17, %s24
      %p199 = scmp.eq.s32.totalorder %s198, 0
      %s201 = sadd.s32 %s200, 1
      %s202 = scalar_select %p199, %s200, %s201
      %p205 = pneg %p199
      %p206 = scmp.eq.s32.totalorder %s17, 1
      %p207 = por %p205, %p206
      %p208 = scmp.ne.s32.totalorder %s200, %s203
      %p209 = scmp.eq.s32.totalorder %s17, 0
      %p210 = por %p208, %p209
      %p211 = scmp.ne.s32.totalorder %s200, %s203
      %p212 = scmp.eq.s32.totalorder %s22, 1
      %p213 = por %p211, %p212
      %p214 = scmp.ne.s32.totalorder %s203, %s204
      %p215 = scmp.eq.s32.totalorder %s22, 0
      %p216 = por %p214, %p215
      %p217 = scmp.ne.s32.totalorder %s203, %s204
      %p218 = scmp.eq.s32.totalorder %s23, 1
      %p219 = por %p217, %p218
      %p221 = scmp.ne.s32.totalorder %s204, %s220
      %p222 = scmp.eq.s32.totalorder %s23, 0
      %p223 = por %p221, %p222
      %p224 = scmp.le.s32.totalorder 1, %s17
      %p225 = scmp.lt.s32.totalorder %s17, 3
      %p226 = pnand %p224, %p225
      %p227 = pneg %p226
      // Predicated region
      $region9: #{tpu_custom_call.1} parent=5 // pred_check
        _
      $region10: #{tpu_custom_call.1} parent=5 // pred_check_branch
        %229 = sbr.rel (%p226) target = $region12
      $region11: #{tpu_custom_call.1} parent=5 // pred_region
        %s230 = ssub.s32 %s17, 1
        // Predicated region
        $region13: #{tpu_custom_call.1} parent=11 // pred_check
          %p231 = pneg %p64
        $region14: #{tpu_custom_call.1} parent=11 // pred_check_branch
          %233 = sbr.rel (%p231) target = $region16
        $region15: #{tpu_custom_call.1} parent=11 // pred_region
          _
        $region16: #{tpu_custom_call.1} parent=11 // pred_fallthru
          _
        // Predicated region
        $region17: #{tpu_custom_call.1} parent=11 // pred_check
          %p234 = pneg %p85
        $region18: #{tpu_custom_call.1} parent=11 // pred_check_branch
          %236 = sbr.rel (%p234) target = $region20
        $region19: #{tpu_custom_call.1} parent=11 // pred_region
          _
        $region20: #{tpu_custom_call.1} parent=11 // pred_fallthru
          _
        // Predicated region
        $region21: #{tpu_custom_call.1} parent=11 // pred_check
          %p237 = pneg %p106
        $region22: #{tpu_custom_call.1} parent=11 // pred_check_branch
          %239 = sbr.rel (%p237) target = $region24
        $region23: #{tpu_custom_call.1} parent=11 // pred_region
          _
        $region24: #{tpu_custom_call.1} parent=11 // pred_fallthru
          _
        // Predicated region
        $region25: #{tpu_custom_call.1} parent=11 // pred_check
          %p240 = pneg %p127
        $region26: #{tpu_custom_call.1} parent=11 // pred_check_branch
          %242 = sbr.rel (%p240) target = $region28
        $region27: #{tpu_custom_call.1} parent=11 // pred_region
          _
        $region28: #{tpu_custom_call.1} parent=11 // pred_fallthru
          _
        // Predicated region
        $region29: #{tpu_custom_call.1} parent=11 // pred_check
          %p243 = pneg %p148
        $region30: #{tpu_custom_call.1} parent=11 // pred_check_branch
          %245 = sbr.rel (%p243) target = $region32
        $region31: #{tpu_custom_call.1} parent=11 // pred_region
          _
        $region32: #{tpu_custom_call.1} parent=11 // pred_fallthru
          _
        // Predicated region
        $region33: #{tpu_custom_call.1} parent=11 // pred_check
          %p246 = pneg %p169
        $region34: #{tpu_custom_call.1} parent=11 // pred_check_branch
          %248 = sbr.rel (%p246) target = $region36
        $region35: #{tpu_custom_call.1} parent=11 // pred_region
          _
        $region36: #{tpu_custom_call.1} parent=11 // pred_fallthru
          _
        // Predicated region
        $region37: #{tpu_custom_call.1} parent=11 // pred_check
          %p249 = pneg %p190
        $region38: #{tpu_custom_call.1} parent=11 // pred_check_branch
          %251 = sbr.rel (%p249) target = $region40
        $region39: #{tpu_custom_call.1} parent=11 // pred_region
          _
        $region40: #{tpu_custom_call.1} parent=11 // pred_fallthru
          _
      $region12: #{tpu_custom_call.1} parent=5 // pred_fallthru
        _
      %p252 = scmp.lt.s32.totalorder %s17, 2
      // Predicated region
      $region41: #{tpu_custom_call.1} parent=5 // pred_check
        %p253 = pneg %p252
      $region42: #{tpu_custom_call.1} parent=5 // pred_check_branch
        %255 = sbr.rel (%p253) target = $region44
      $region43: #{tpu_custom_call.1} parent=5 // pred_region
        // Predicated region
        $region45: #{tpu_custom_call.1} parent=43 // pred_check
          %p256 = pneg %p37
        $region46: #{tpu_custom_call.1} parent=43 // pred_check_branch
          %258 = sbr.rel (%p256) target = $region48
        $region47: #{tpu_custom_call.1} parent=43 // pred_region
          %p259 = scmp.lt.s32.totalorder %s17, 1
          %s260 = scalar_select %p259, %s17, 1
          %s261 = smul.addr %s260, 6
          %s262 = smul.addr %s261, 8
          %s263 = scalar_lea.vmem %s0, %s262
        $region48: #{tpu_custom_call.1} parent=43 // pred_fallthru
          _
      $region44: #{tpu_custom_call.1} parent=5 // pred_fallthru
        _
      %p264 = scmp.le.s32.totalorder 1, %s17
      %p265 = scmp.lt.s32.totalorder %s17, 3
      %p266 = pnand %p264, %p265
      %p267 = pneg %p266
      // Predicated region
      $region49: #{tpu_custom_call.1} parent=5 // pred_check
        _
      $region50: #{tpu_custom_call.1} parent=5 // pred_check_branch
        %269 = sbr.rel (%p266) target = $region52
      $region51: #{tpu_custom_call.1} parent=5 // pred_region
        %s270 = ssub.s32 %s17, 1
        %p271 = scmp.lt.s32.totalorder %s22, 1
        %s272 = scalar_select %p271, %s22, 1
        %s273 = smul.addr %s272, 6
        %s274 = smul.addr %s273, 8
        %s275 = scalar_lea.vmem %s0, %s274
        %p276 = pneg %p43
        %p277 = pneg %p40
        %p278 = pneg %p64
        %p279 = pneg %p61
        %p280 = pneg %p85
        %p281 = pneg %p82
        %p282 = pneg %p106
        %p283 = pneg %p103
        %p284 = pneg %p127
        %p285 = pneg %p124
        %p286 = pneg %p148
        %p287 = pneg %p145
        %p288 = pneg %p169
        %p289 = pneg %p166
        %p290 = pneg %p190
        %p291 = pneg %p187
        %p292 = pneg %p216
        %p293 = pneg %p213
        %s294 = sand.u32 %s203, 1
        %s295 = scalar_lea.sflag [#allocation6], %s294
        %s296 = sand.u32 %s203, 1
        %s297 = smul.addr %s296, 32
        %s298 = scalar_lea.vmem [#allocation5], %s297
        %p299 = scmp.lt.s32.totalorder %s22, 1
        %s300 = scalar_select %p299, %s22, 1
        %s301 = smul.addr %s300, 6
        %s302 = smul.addr %s301, 8
        %s303 = scalar_lea.vmem %s0, %s302
        %v304 = vld [vmem:[%s303] sm:$0xff]
        %v305 = vld [vmem:[%s303 + $0x8] sm:$0xff]
        %v306 = vld [vmem:[%s303 + $0x10] sm:$0xff]
        %v307 = vld [vmem:[%s303 + $0x18] sm:$0xff]
        %v308 = vld [vmem:[%s303 + $0x20] sm:$0xff]
        %v309 = vld [vmem:[%s303 + $0x28] sm:$0xff]
        %v310 = vld [vmem:[%s1] sm:$0x1f]
        %v311 = vld [vmem:[%s1 + $0x8] sm:$0x1f]
        %312 = vst [vmem:[#allocation2] sm:$0xff] 0.0
        %313 = vst [vmem:[#allocation2 + $0x8] sm:$0xff] 0.0
        %314 = vst [vmem:[#allocation2 + $0x10] sm:$0xff] 0.0
        %315 = vst [vmem:[#allocation2 + $0x18] sm:$0xff] 0.0
        %316 = vst [vmem:[#allocation2 + $0x20] sm:$0xff] 0.0
        %317 = vst [vmem:[#allocation2 + $0x28] sm:$0xff] 0.0
        %318 = vst [vmem:[#allocation2 + $0x30] sm:$0xff] 0.0
        %319 = vst [vmem:[#allocation2 + $0x38] sm:$0xff] 0.0
        %320 = vst [vmem:[#allocation2 + $0x40] sm:$0xff] 0.0
        %321 = vst [vmem:[#allocation2 + $0x48] sm:$0xff] 0.0
        %322 = vst [vmem:[#allocation2 + $0x50] sm:$0xff] 0.0
        %323 = vst [vmem:[#allocation2 + $0x58] sm:$0xff] 0.0
        %v324 = vlaneseq
        %v325 = vshrl.u32 %v324, 7
        %v326 = vsub.s32 0, %v325
        %v327 = vrot.slane %v310, %v326
        %v328 = vlaneseq
        %v329 = vshrl.u32 %v328, 7
        %v330 = vsub.s32 0, %v329
        %v331 = vrot.slane %v311, %v330
        %334 = vrot.lane.b32.xlu0 %v327, 14
        %v335 = vpop.permute.xlu0 %334
        %336 = vrot.lane.b32.xlu0 %v331, 14
        %v337 = vpop.permute.xlu0 %336
        %vm338 = vcmask 113664
        %v339 = vsel %vm338, %v335, %v337
        %v343 = vmul.f32 %v304, %v335
        %v344 = vmul.f32 %v305, %v339
        %v345 = vmul.f32 %v306, %v337
        %v346 = vmul.f32 %v307, %v335
        %v347 = vmul.f32 %v308, %v339
        %v348 = vmul.f32 %v309, %v337
        %v349 = vld [vmem:[#allocation2] sm:$0xff]
        %v350 = vld [vmem:[#allocation2 + $0x8] sm:$0xff]
        %v351 = vld [vmem:[#allocation2 + $0x10] sm:$0xff]
        %v352 = vld [vmem:[#allocation2 + $0x18] sm:$0xff]
        %v353 = vld [vmem:[#allocation2 + $0x20] sm:$0xff]
        %v354 = vld [vmem:[#allocation2 + $0x28] sm:$0xff]
        %v355 = vld [vmem:[#allocation2 + $0x30] sm:$0xff]
        %v356 = vld [vmem:[#allocation2 + $0x38] sm:$0xff]
        %v357 = vld [vmem:[#allocation2 + $0x40] sm:$0xff]
        %v358 = vld [vmem:[#allocation2 + $0x48] sm:$0xff]
        %v359 = vld [vmem:[#allocation2 + $0x50] sm:$0xff]
        %v360 = vld [vmem:[#allocation2 + $0x58] sm:$0xff]
        %v361 = vld [vmem:[%s2] sm:$0xff]
        %v362 = vld [vmem:[%s2 + $0x8] sm:$0xff]
        %v363 = vld [vmem:[%s2 + $0x10] sm:$0xff]
        %v364 = vld [vmem:[%s2 + $0x18] sm:$0xff]
        %v365 = vld [vmem:[%s2 + $0x20] sm:$0xff]
        %v366 = vld [vmem:[%s2 + $0x28] sm:$0xff]
        %373 = vrot.lane.b32.xlu0 %v343, 114
        %v374 = vpop.permute.xlu0 %373
        %375 = vrot.lane.b32.xlu0 %v344, 114
        %v376 = vpop.permute.xlu0 %375
        %377 = vrot.lane.b32.xlu0 %v345, 114
        %v378 = vpop.permute.xlu0 %377
        %379 = vrot.lane.b32.xlu0 %v346, 114
        %v380 = vpop.permute.xlu0 %379
        %381 = vrot.lane.b32.xlu0 %v347, 114
        %v382 = vpop.permute.xlu0 %381
        %383 = vrot.lane.b32.xlu0 %v348, 114
        %v384 = vpop.permute.xlu0 %383
        %vm385 = vcmask 932864
        %v386 = vsel %vm385, %v374, %v376
        %v387 = vsel %vm385, %v376, %v378
        %v388 = vsel %vm385, %v380, %v382
        %v389 = vsel %vm385, %v382, %v384
        %vm394 = vcmask 130048
        %v396 = vsel %vm394, %v361, 0
        %v399 = vsel %vm394, %v362, 0
        %v402 = vsel %vm394, %v363, 0
        %v405 = vsel %vm394, %v364, 0
        %v408 = vsel %vm394, %v365, 0
        %v411 = vsel %vm394, %v366, 0
        %413 = vmatprep.subr.mxu0 %v387
        %414 = vmatpush1.msra.mxu0 %v386
        %415 = vmatprep.subr.mxu0 %v389
        %416 = vmatpush1.msra.mxu0 %v388
        %417 = vmatprep.subr.mxu0 0.0
        %418 = vmatpush1.msra.mxu0 0.0
        %419 = vmatprep.subr.mxu0 0.0
        %420 = vmatpush1.msra.mxu0 0.0
        %421 = vmatprep.subr.mxu0 0.0
        %422 = vmatpush1.msra.mxu0 0.0
        %423 = vmatprep.subr.mxu0 0.0
        %424 = vmatpush1.msra.mxu0 0.0
        %425 = vmatprep.subr.mxu0 0.0
        %426 = vmatpush1.msra.mxu0 0.0
        %427 = vmatprep.subr.mxu0 0.0
        %428 = vmatpush1.msra.mxu0 0.0
        %429 = vmatprep.subr.mxu0 0.0
        %430 = vmatpush1.msra.mxu0 0.0
        %431 = vmatprep.subr.mxu0 0.0
        %432 = vmatpush1.msra.mxu0 0.0
        %433 = vmatprep.subr.mxu0 0.0
        %434 = vmatpush1.msra.mxu0 0.0
        %435 = vmatprep.subr.mxu0 0.0
        %436 = vmatpush1.msra.mxu0 0.0
        %437 = vmatprep.subr.mxu0 0.0
        %438 = vmatpush1.msra.mxu0 0.0
        %439 = vmatprep.subr.mxu0 0.0
        %440 = vmatpush1.msra.mxu0 0.0
        %441 = vmatprep.subr.mxu0 0.0
        %442 = vmatpush1.msra.mxu0 0.0
        %443 = vmatprep.subr.mxu0 0.0
        %444 = vmatpush1.msra.mxu0 0.0
        %445 = vmatprep.subr.mxu0 0.0
        %446 = vmatpush1.msra.mxu0 0.0
        %447 = vmatprep.subr.mxu0 0.0
        %448 = vmatpush1.msra.mxu0 0.0
        %449 = vmatprep.subr.mxu0 0.0
        %450 = vmatpush1.msra.mxu0 0.0
        %451 = vmatprep.subr.mxu0 0.0
        %452 = vmatpush1.msra.mxu0 0.0
        %453 = vmatprep.subr.mxu0 0.0
        %454 = vmatpush1.msra.mxu0 0.0
        %455 = vmatprep.subr.mxu0 0.0
        %456 = vmatpush1.msra.mxu0 0.0
        %457 = vmatprep.subr.mxu0 0.0
        %458 = vmatpush1.msra.mxu0 0.0
        %459 = vmatprep.subr.mxu0 0.0
        %460 = vmatpush1.msra.mxu0 0.0
        %461 = vmatprep.subr.mxu0 0.0
        %462 = vmatpush1.msra.mxu0 0.0
        %463 = vmatprep.subr.mxu0 0.0
        %464 = vmatpush1.msra.mxu0 0.0
        %465 = vmatprep.subr.mxu0 0.0
        %466 = vmatpush1.msra.mxu0 0.0
        %467 = vmatprep.subr.mxu0 0.0
        %468 = vmatpush1.msra.mxu0 0.0
        %469 = vmatprep.subr.mxu0 0.0
        %470 = vmatpush1.msra.mxu0 0.0
        %471 = vmatprep.subr.mxu0 0.0
        %472 = vmatpush1.msra.mxu0 0.0
        %473 = vmatprep.subr.mxu0 0.0
        %474 = vmatpush1.msra.mxu0 0.0
        %475 = vmatprep.subr.mxu0 0.0
        %476 = vmatpush1.msra.mxu0 0.0
        %477 = vmatprep.mubr.f32.mxu0 0.0
        %478 = vmatmul.mubr.f32.gmra.mrb[0].mxu0 %v396
        %v479 = vpop.f32.mrb[0].mxu0
        %v480 = vadd.f32 0.0, %v479
        %v481 = vpop.f32.mrb[0].mxu0
        %v482 = vadd.f32 0.0, %v481
        %483 = vmatprep.mubr.f32.mxu0 0.0
        %484 = vmatmul.mubr.f32.gmra.mrb[0].mxu0 %v399
        %v485 = vpop.f32.mrb[0].mxu0
        %v486 = vadd.f32 0.0, %v485
        %v487 = vpop.f32.mrb[0].mxu0
        %v488 = vadd.f32 0.0, %v487
        %489 = vmatprep.mubr.f32.mxu0 0.0
        %490 = vmatmul.mubr.f32.gmra.mrb[0].mxu0 %v402
        %v491 = vpop.f32.mrb[0].mxu0
        %v492 = vadd.f32 0.0, %v491
        %v493 = vpop.f32.mrb[0].mxu0
        %v494 = vadd.f32 0.0, %v493
        %495 = vmatprep.mubr.f32.mxu0 0.0
        %496 = vmatmul.mubr.f32.gmra.mrb[0].mxu0 %v405
        %v497 = vpop.f32.mrb[0].mxu0
        %v498 = vadd.f32 0.0, %v497
        %v499 = vpop.f32.mrb[0].mxu0
        %v500 = vadd.f32 0.0, %v499
        %501 = vmatprep.mubr.f32.mxu0 0.0
        %502 = vmatmul.mubr.f32.gmra.mrb[0].mxu0 %v408
        %v503 = vpop.f32.mrb[0].mxu0
        %v504 = vadd.f32 0.0, %v503
        %v505 = vpop.f32.mrb[0].mxu0
        %v506 = vadd.f32 0.0, %v505
        %507 = vmatprep.mubr.f32.mxu0 0.0
        %508 = vmatmul.mubr.f32.gmra.mrb[0].mxu0 %v411
        %v509 = vpop.f32.mrb[0].mxu0
        %v510 = vadd.f32 0.0, %v509
        %v511 = vpop.f32.mrb[0].mxu0
        %v512 = vadd.f32 0.0, %v511
        %513 = vdwg.mxu0
        %v514 = vadd.f32 %v349, %v480
        %v515 = vadd.f32 %v350, %v482
        %v516 = vadd.f32 %v351, %v486
        %v517 = vadd.f32 %v352, %v488
        %v518 = vadd.f32 %v353, %v492
        %v519 = vadd.f32 %v354, %v494
        %v520 = vadd.f32 %v355, %v498
        %v521 = vadd.f32 %v356, %v500
        %v522 = vadd.f32 %v357, %v504
        %v523 = vadd.f32 %v358, %v506
        %v524 = vadd.f32 %v359, %v510
        %v525 = vadd.f32 %v360, %v512
        %526 = vst [vmem:[#allocation2] sm:$0xff] %v514
        %527 = vst [vmem:[#allocation2 + $0x8] sm:$0xff] %v515
        %528 = vst [vmem:[#allocation2 + $0x10] sm:$0xff] %v516
        %529 = vst [vmem:[#allocation2 + $0x18] sm:$0xff] %v517
        %530 = vst [vmem:[#allocation2 + $0x20] sm:$0xff] %v518
        %531 = vst [vmem:[#allocation2 + $0x28] sm:$0xff] %v519
        %532 = vst [vmem:[#allocation2 + $0x30] sm:$0xff] %v520
        %533 = vst [vmem:[#allocation2 + $0x38] sm:$0xff] %v521
        %534 = vst [vmem:[#allocation2 + $0x40] sm:$0xff] %v522
        %535 = vst [vmem:[#allocation2 + $0x48] sm:$0xff] %v523
        %536 = vst [vmem:[#allocation2 + $0x50] sm:$0xff] %v524
        %537 = vst [vmem:[#allocation2 + $0x58] sm:$0xff] %v525
        %v538 = vlaneseq
        %v539 = vshrl.u32 %v538, 7
        %v540 = vsub.s32 1, %v539
        %v541 = vrot.slane %v310, %v540
        %v542 = vlaneseq
        %v543 = vshrl.u32 %v542, 7
        %v544 = vsub.s32 1, %v543
        %v545 = vrot.slane %v311, %v544
        %548 = vrot.lane.b32.xlu0 %v541, 15
        %v549 = vpop.permute.xlu0 %548
        %550 = vrot.lane.b32.xlu0 %v545, 15
        %v551 = vpop.permute.xlu0 %550
        %vm552 = vcmask 121856
        %v553 = vsel %vm552, %v549, %v551
        %v557 = vmul.f32 %v304, %v549
        %v558 = vmul.f32 %v305, %v553
        %v559 = vmul.f32 %v306, %v551
        %v560 = vmul.f32 %v307, %v549
        %v561 = vmul.f32 %v308, %v553
        %v562 = vmul.f32 %v309, %v551
        %v563 = vld [vmem:[#allocation2] sm:$0xff]
        %v564 = vld [vmem:[#allocation2 + $0x8] sm:$0xff]
        %v565 = vld [vmem:[#allocation2 + $0x10] sm:$0xff]
        %v566 = vld [vmem:[#allocation2 + $0x18] sm:$0xff]
        %v567 = vld [vmem:[#allocation2 + $0x20] sm:$0xff]
        %v568 = vld [vmem:[#allocation2 + $0x28] sm:$0xff]
        %v569 = vld [vmem:[#allocation2 + $0x30] sm:$0xff]
        %v570 = vld [vmem:[#allocation2 + $0x38] sm:$0xff]
        %v571 = vld [vmem:[#allocation2 + $0x40] sm:$0xff]
        %v572 = vld [vmem:[#allocation2 + $0x48] sm:$0xff]
        %v573 = vld [vmem:[#allocation2 + $0x50] sm:$0xff]
        %v574 = vld [vmem:[#allocation2 + $0x58] sm:$0xff]
        %s575 = scalar_lea.vmem %s2, 48
        %v576 = vld [vmem:[%s575] sm:$0xff]
        %v577 = vld [vmem:[%s575 + $0x8] sm:$0xff]
        %v578 = vld [vmem:[%s575 + $0x10] sm:$0xff]
        %v579 = vld [vmem:[%s575 + $0x18] sm:$0xff]
        %v580 = vld [vmem:[%s575 + $0x20] sm:$0xff]
        %v581 = vld [vmem:[%s575 + $0x28] sm:$0xff]
        %588 = vrot.lane.b32.xlu0 %v557, 113
        %v589 = vpop.permute.xlu0 %588
        %590 = vrot.lane.b32.xlu0 %v558, 113
        %v591 = vpop.permute.xlu0 %590
        %592 = vrot.lane.b32.xlu0 %v559, 113
        %v593 = vpop.permute.xlu0 %592
        %594 = vrot.lane.b32.xlu0 %v560, 113
        %v595 = vpop.permute.xlu0 %594
        %596 = vrot.lane.b32.xlu0 %v561, 113
        %v597 = vpop.permute.xlu0 %596
        %598 = vrot.lane.b32.xlu0 %v562, 113
        %v599 = vpop.permute.xlu0 %598
        %vm600 = vcmask 924672
        %v601 = vsel %vm600, %v589, %v591
        %v602 = vsel %vm600, %v591, %v593
        %v603 = vsel %vm600, %v595, %v597
        %v604 = vsel %vm600, %v597, %v599
        %v610 = vsel %vm394, %v576, 0
        %v613 = vsel %vm394, %v577, 0
        %v616 = vsel %vm394, %v578, 0
        %v619 = vsel %vm394, %v579, 0
        %v622 = vsel %vm394, %v580, 0
        %v625 = vsel %vm394, %v581, 0
        %627 = vmatprep.subr.mxu0 %v602
        %628 = vmatpush1.msra.mxu0 %v601
        %629 = vmatprep.subr.mxu0 %v604
        %630 = vmatpush1.msra.mxu0 %v603
        %631 = vmatprep.subr.mxu0 0.0
        %632 = vmatpush1.msra.mxu0 0.0
        %633 = vmatprep.subr.mxu0 0.0
        %634 = vmatpush1.msra.mxu0 0.0
        %635 = vmatprep.subr.mxu0 0.0
        %636 = vmatpush1.msra.mxu0 0.0
        %637 = vmatprep.subr.mxu0 0.0
        %638 = vmatpush1.msra.mxu0 0.0
        %639 = vmatprep.subr.mxu0 0.0
        %640 = vmatpush1.msra.mxu0 0.0
        %641 = vmatprep.subr.mxu0 0.0
        %642 = vmatpush1.msra.mxu0 0.0
        %643 = vmatprep.subr.mxu0 0.0
        %644 = vmatpush1.msra.mxu0 0.0
        %645 = vmatprep.subr.mxu0 0.0
        %646 = vmatpush1.msra.mxu0 0.0
        %647 = vmatprep.subr.mxu0 0.0
        %648 = vmatpush1.msra.mxu0 0.0
        %649 = vmatprep.subr.mxu0 0.0
        %650 = vmatpush1.msra.mxu0 0.0
        %651 = vmatprep.subr.mxu0 0.0
        %652 = vmatpush1.msra.mxu0 0.0
        %653 = vmatprep.subr.mxu0 0.0
        %654 = vmatpush1.msra.mxu0 0.0
        %655 = vmatprep.subr.mxu0 0.0
        %656 = vmatpush1.msra.mxu0 0.0
        %657 = vmatprep.subr.mxu0 0.0
        %658 = vmatpush1.msra.mxu0 0.0
        %659 = vmatprep.subr.mxu0 0.0
        %660 = vmatpush1.msra.mxu0 0.0
        %661 = vmatprep.subr.mxu0 0.0
        %662 = vmatpush1.msra.mxu0 0.0
        %663 = vmatprep.subr.mxu0 0.0
        %664 = vmatpush1.msra.mxu0 0.0
        %665 = vmatprep.subr.mxu0 0.0
        %666 = vmatpush1.msra.mxu0 0.0
        %667 = vmatprep.subr.mxu0 0.0
        %668 = vmatpush1.msra.mxu0 0.0
        %669 = vmatprep.subr.mxu0 0.0
        %670 = vmatpush1.msra.mxu0 0.0
        %671 = vmatprep.subr.mxu0 0.0
        %672 = vmatpush1.msra.mxu0 0.0
        %673 = vmatprep.subr.mxu0 0.0
        %674 = vmatpush1.msra.mxu0 0.0
        %675 = vmatprep.subr.mxu0 0.0
        %676 = vmatpush1.msra.mxu0 0.0
        %677 = vmatprep.subr.mxu0 0.0
        %678 = vmatpush1.msra.mxu0 0.0
        %679 = vmatprep.subr.mxu0 0.0
        %680 = vmatpush1.msra.mxu0 0.0
        %681 = vmatprep.subr.mxu0 0.0
        %682 = vmatpush1.msra.mxu0 0.0
        %683 = vmatprep.subr.mxu0 0.0
        %684 = vmatpush1.msra.mxu0 0.0
        %685 = vmatprep.subr.mxu0 0.0
        %686 = vmatpush1.msra.mxu0 0.0
        %687 = vmatprep.subr.mxu0 0.0
        %688 = vmatpush1.msra.mxu0 0.0
        %689 = vmatprep.subr.mxu0 0.0
        %690 = vmatpush1.msra.mxu0 0.0
        %691 = vmatprep.mubr.f32.mxu0 0.0
        %692 = vmatmul.mubr.f32.gmra.mrb[0].mxu0 %v610
        %v693 = vpop.f32.mrb[0].mxu0
        %v694 = vadd.f32 0.0, %v693
        %v695 = vpop.f32.mrb[0].mxu0
        %v696 = vadd.f32 0.0, %v695
        %697 = vmatprep.mubr.f32.mxu0 0.0
        %698 = vmatmul.mubr.f32.gmra.mrb[0].mxu0 %v613
        %v699 = vpop.f32.mrb[0].mxu0
        %v700 = vadd.f32 0.0, %v699
        %v701 = vpop.f32.mrb[0].mxu0
        %v702 = vadd.f32 0.0, %v701
        %703 = vmatprep.mubr.f32.mxu0 0.0
        %704 = vmatmul.mubr.f32.gmra.mrb[0].mxu0 %v616
        %v705 = vpop.f32.mrb[0].mxu0
        %v706 = vadd.f32 0.0, %v705
        %v707 = vpop.f32.mrb[0].mxu0
        %v708 = vadd.f32 0.0, %v707
        %709 = vmatprep.mubr.f32.mxu0 0.0
        %710 = vmatmul.mubr.f32.gmra.mrb[0].mxu0 %v619
        %v711 = vpop.f32.mrb[0].mxu0
        %v712 = vadd.f32 0.0, %v711
        %v713 = vpop.f32.mrb[0].mxu0
        %v714 = vadd.f32 0.0, %v713
        %715 = vmatprep.mubr.f32.mxu0 0.0
        %716 = vmatmul.mubr.f32.gmra.mrb[0].mxu0 %v622
        %v717 = vpop.f32.mrb[0].mxu0
        %v718 = vadd.f32 0.0, %v717
        %v719 = vpop.f32.mrb[0].mxu0
        %v720 = vadd.f32 0.0, %v719
        %721 = vmatprep.mubr.f32.mxu0 0.0
        %722 = vmatmul.mubr.f32.gmra.mrb[0].mxu0 %v625
        %v723 = vpop.f32.mrb[0].mxu0
        %v724 = vadd.f32 0.0, %v723
        %v725 = vpop.f32.mrb[0].mxu0
        %v726 = vadd.f32 0.0, %v725
        %727 = vdwg.mxu0
        %v728 = vadd.f32 %v563, %v694
        %v729 = vadd.f32 %v564, %v696
        %v730 = vadd.f32 %v565, %v700
        %v731 = vadd.f32 %v566, %v702
        %v732 = vadd.f32 %v567, %v706
        %v733 = vadd.f32 %v568, %v708
        %v734 = vadd.f32 %v569, %v712
        %v735 = vadd.f32 %v570, %v714
        %v736 = vadd.f32 %v571, %v718
        %v737 = vadd.f32 %v572, %v720
        %v738 = vadd.f32 %v573, %v724
        %v739 = vadd.f32 %v574, %v726
        %740 = vst [vmem:[#allocation2] sm:$0xff] %v728
        %741 = vst [vmem:[#allocation2 + $0x8] sm:$0xff] %v729
        %742 = vst [vmem:[#allocation2 + $0x10] sm:$0xff] %v730
        %743 = vst [vmem:[#allocation2 + $0x18] sm:$0xff] %v731
        %744 = vst [vmem:[#allocation2 + $0x20] sm:$0xff] %v732
        %745 = vst [vmem:[#allocation2 + $0x28] sm:$0xff] %v733
        %746 = vst [vmem:[#allocation2 + $0x30] sm:$0xff] %v734
        %747 = vst [vmem:[#allocation2 + $0x38] sm:$0xff] %v735
        %748 = vst [vmem:[#allocation2 + $0x40] sm:$0xff] %v736
        %749 = vst [vmem:[#allocation2 + $0x48] sm:$0xff] %v737
        %750 = vst [vmem:[#allocation2 + $0x50] sm:$0xff] %v738
        %751 = vst [vmem:[#allocation2 + $0x58] sm:$0xff] %v739
        %v752 = vld [vmem:[#allocation2] sm:$0xff]
        %v753 = vld [vmem:[#allocation2 + $0x8] sm:$0xff]
        %v754 = vld [vmem:[#allocation2 + $0x10] sm:$0xff]
        %v755 = vld [vmem:[#allocation2 + $0x18] sm:$0xff]
        %v756 = vld [vmem:[#allocation2 + $0x20] sm:$0xff]
        %v757 = vld [vmem:[#allocation2 + $0x28] sm:$0xff]
        %v758 = vld [vmem:[#allocation2 + $0x30] sm:$0xff]
        %v759 = vld [vmem:[#allocation2 + $0x38] sm:$0xff]
        %v760 = vld [vmem:[#allocation2 + $0x40] sm:$0xff]
        %v761 = vld [vmem:[#allocation2 + $0x48] sm:$0xff]
        %v762 = vld [vmem:[#allocation2 + $0x50] sm:$0xff]
        %v763 = vld [vmem:[#allocation2 + $0x58] sm:$0xff]
        %s764 = scalar_lea.vmem %s2, 96
        %v765 = vld [vmem:[%s764] sm:$0xff]
        %v766 = vld [vmem:[%s764 + $0x8] sm:$0xff]
        %v767 = vld [vmem:[%s764 + $0x10] sm:$0xff]
        %v768 = vld [vmem:[%s764 + $0x18] sm:$0xff]
        %v769 = vld [vmem:[%s764 + $0x20] sm:$0xff]
        %v770 = vld [vmem:[%s764 + $0x28] sm:$0xff]
        %777 = vrot.lane.b32.xlu0 %v304, 112
        %v778 = vpop.permute.xlu0 %777
        %779 = vrot.lane.b32.xlu0 %v305, 112
        %v780 = vpop.permute.xlu0 %779
        %781 = vrot.lane.b32.xlu0 %v306, 112
        %v782 = vpop.permute.xlu0 %781
        %783 = vrot.lane.b32.xlu0 %v307, 112
        %v784 = vpop.permute.xlu0 %783
        %785 = vrot.lane.b32.xlu0 %v308, 112
        %v786 = vpop.permute.xlu0 %785
        %787 = vrot.lane.b32.xlu0 %v309, 112
        %v788 = vpop.permute.xlu0 %787
        %vm789 = vcmask 916480
        %v790 = vsel %vm789, %v778, %v780
        %v791 = vsel %vm789, %v780, %v782
        %v792 = vsel %vm789, %v784, %v786
        %v793 = vsel %vm789, %v786, %v788
        %v799 = vsel %vm394, %v765, 0
        %v802 = vsel %vm394, %v766, 0
        %v805 = vsel %vm394, %v767, 0
        %v808 = vsel %vm394, %v768, 0
        %v811 = vsel %vm394, %v769, 0
        %v814 = vsel %vm394, %v770, 0
        %816 = vmatprep.subr.mxu0 %v791
        %817 = vmatpush1.msra.mxu0 %v790
        %818 = vmatprep.subr.mxu0 %v793
        %819 = vmatpush1.msra.mxu0 %v792
        %820 = vmatprep.subr.mxu0 0.0
        %821 = vmatpush1.msra.mxu0 0.0
        %822 = vmatprep.subr.mxu0 0.0
        %823 = vmatpush1.msra.mxu0 0.0
        %824 = vmatprep.subr.mxu0 0.0
        %825 = vmatpush1.msra.mxu0 0.0
        %826 = vmatprep.subr.mxu0 0.0
        %827 = vmatpush1.msra.mxu0 0.0
        %828 = vmatprep.subr.mxu0 0.0
        %829 = vmatpush1.msra.mxu0 0.0
        %830 = vmatprep.subr.mxu0 0.0
        %831 = vmatpush1.msra.mxu0 0.0
        %832 = vmatprep.subr.mxu0 0.0
        %833 = vmatpush1.msra.mxu0 0.0
        %834 = vmatprep.subr.mxu0 0.0
        %835 = vmatpush1.msra.mxu0 0.0
        %836 = vmatprep.subr.mxu0 0.0
        %837 = vmatpush1.msra.mxu0 0.0
        %838 = vmatprep.subr.mxu0 0.0
        %839 = vmatpush1.msra.mxu0 0.0
        %840 = vmatprep.subr.mxu0 0.0
        %841 = vmatpush1.msra.mxu0 0.0
        %842 = vmatprep.subr.mxu0 0.0
        %843 = vmatpush1.msra.mxu0 0.0
        %844 = vmatprep.subr.mxu0 0.0
        %845 = vmatpush1.msra.mxu0 0.0
        %846 = vmatprep.subr.mxu0 0.0
        %847 = vmatpush1.msra.mxu0 0.0
        %848 = vmatprep.subr.mxu0 0.0
        %849 = vmatpush1.msra.mxu0 0.0
        %850 = vmatprep.subr.mxu0 0.0
        %851 = vmatpush1.msra.mxu0 0.0
        %852 = vmatprep.subr.mxu0 0.0
        %853 = vmatpush1.msra.mxu0 0.0
        %854 = vmatprep.subr.mxu0 0.0
        %855 = vmatpush1.msra.mxu0 0.0
        %856 = vmatprep.subr.mxu0 0.0
        %857 = vmatpush1.msra.mxu0 0.0
        %858 = vmatprep.subr.mxu0 0.0
        %859 = vmatpush1.msra.mxu0 0.0
        %860 = vmatprep.subr.mxu0 0.0
        %861 = vmatpush1.msra.mxu0 0.0
        %862 = vmatprep.subr.mxu0 0.0
        %863 = vmatpush1.msra.mxu0 0.0
        %864 = vmatprep.subr.mxu0 0.0
        %865 = vmatpush1.msra.mxu0 0.0
        %866 = vmatprep.subr.mxu0 0.0
        %867 = vmatpush1.msra.mxu0 0.0
        %868 = vmatprep.subr.mxu0 0.0
        %869 = vmatpush1.msra.mxu0 0.0
        %870 = vmatprep.subr.mxu0 0.0
        %871 = vmatpush1.msra.mxu0 0.0
        %872 = vmatprep.subr.mxu0 0.0
        %873 = vmatpush1.msra.mxu0 0.0
        %874 = vmatprep.subr.mxu0 0.0
        %875 = vmatpush1.msra.mxu0 0.0
        %876 = vmatprep.subr.mxu0 0.0
        %877 = vmatpush1.msra.mxu0 0.0
        %878 = vmatprep.subr.mxu0 0.0
        %879 = vmatpush1.msra.mxu0 0.0
        %880 = vmatprep.mubr.f32.mxu0 0.0
        %881 = vmatmul.mubr.f32.gmra.mrb[0].mxu0 %v799
        %v882 = vpop.f32.mrb[0].mxu0
        %v883 = vadd.f32 0.0, %v882
        %v884 = vpop.f32.mrb[0].mxu0
        %v885 = vadd.f32 0.0, %v884
        %886 = vmatprep.mubr.f32.mxu0 0.0
        %887 = vmatmul.mubr.f32.gmra.mrb[0].mxu0 %v802
        %v888 = vpop.f32.mrb[0].mxu0
        %v889 = vadd.f32 0.0, %v888
        %v890 = vpop.f32.mrb[0].mxu0
        %v891 = vadd.f32 0.0, %v890
        %892 = vmatprep.mubr.f32.mxu0 0.0
        %893 = vmatmul.mubr.f32.gmra.mrb[0].mxu0 %v805
        %v894 = vpop.f32.mrb[0].mxu0
        %v895 = vadd.f32 0.0, %v894
        %v896 = vpop.f32.mrb[0].mxu0
        %v897 = vadd.f32 0.0, %v896
        %898 = vmatprep.mubr.f32.mxu0 0.0
        %899 = vmatmul.mubr.f32.gmra.mrb[0].mxu0 %v808
        %v900 = vpop.f32.mrb[0].mxu0
        %v901 = vadd.f32 0.0, %v900
        %v902 = vpop.f32.mrb[0].mxu0
        %v903 = vadd.f32 0.0, %v902
        %904 = vmatprep.mubr.f32.mxu0 0.0
        %905 = vmatmul.mubr.f32.gmra.mrb[0].mxu0 %v811
        %v906 = vpop.f32.mrb[0].mxu0
        %v907 = vadd.f32 0.0, %v906
        %v908 = vpop.f32.mrb[0].mxu0
        %v909 = vadd.f32 0.0, %v908
        %910 = vmatprep.mubr.f32.mxu0 0.0
        %911 = vmatmul.mubr.f32.gmra.mrb[0].mxu0 %v814
        %v912 = vpop.f32.mrb[0].mxu0
        %v913 = vadd.f32 0.0, %v912
        %v914 = vpop.f32.mrb[0].mxu0
        %v915 = vadd.f32 0.0, %v914
        %916 = vdwg.mxu0
        %v917 = vadd.f32 %v752, %v883
        %v918 = vadd.f32 %v753, %v885
        %v919 = vadd.f32 %v754, %v889
        %v920 = vadd.f32 %v755, %v891
        %v921 = vadd.f32 %v756, %v895
        %v922 = vadd.f32 %v757, %v897
        %v923 = vadd.f32 %v758, %v901
        %v924 = vadd.f32 %v759, %v903
        %v925 = vadd.f32 %v760, %v907
        %v926 = vadd.f32 %v761, %v909
        %v927 = vadd.f32 %v762, %v913
        %v928 = vadd.f32 %v763, %v915
        %929 = vst [vmem:[#allocation2] sm:$0xff] %v917
        %930 = vst [vmem:[#allocation2 + $0x8] sm:$0xff] %v918
        %931 = vst [vmem:[#allocation2 + $0x10] sm:$0xff] %v919
        %932 = vst [vmem:[#allocation2 + $0x18] sm:$0xff] %v920
        %933 = vst [vmem:[#allocation2 + $0x20] sm:$0xff] %v921
        %934 = vst [vmem:[#allocation2 + $0x28] sm:$0xff] %v922
        %935 = vst [vmem:[#allocation2 + $0x30] sm:$0xff] %v923
        %936 = vst [vmem:[#allocation2 + $0x38] sm:$0xff] %v924
        %937 = vst [vmem:[#allocation2 + $0x40] sm:$0xff] %v925
        %938 = vst [vmem:[#allocation2 + $0x48] sm:$0xff] %v926
        %939 = vst [vmem:[#allocation2 + $0x50] sm:$0xff] %v927
        %940 = vst [vmem:[#allocation2 + $0x58] sm:$0xff] %v928
        %v941 = vlaneseq
        %v942 = vshrl.u32 %v941, 7
        %v943 = vsub.s32 3, %v942
        %v944 = vrot.slane %v310, %v943
        %v945 = vlaneseq
        %v946 = vshrl.u32 %v945, 7
        %v947 = vsub.s32 3, %v946
        %v948 = vrot.slane %v311, %v947
        %951 = vrot.lane.b32.xlu0 %v944, 17
        %v952 = vpop.permute.xlu0 %951
        %953 = vrot.lane.b32.xlu0 %v948, 17
        %v954 = vpop.permute.xlu0 %953
        %vm955 = vcmask 138240
        %v956 = vsel %vm955, %v952, %v954
        %v960 = vmul.f32 %v304, %v952
        %v961 = vmul.f32 %v305, %v956
        %v962 = vmul.f32 %v306, %v954
        %v963 = vmul.f32 %v307, %v952
        %v964 = vmul.f32 %v308, %v956
        %v965 = vmul.f32 %v309, %v954
        %v966 = vld [vmem:[#allocation2] sm:$0xff]
        %v967 = vld [vmem:[#allocation2 + $0x8] sm:$0xff]
        %v968 = vld [vmem:[#allocation2 + $0x10] sm:$0xff]
        %v969 = vld [vmem:[#allocation2 + $0x18] sm:$0xff]
        %v970 = vld [vmem:[#allocation2 + $0x20] sm:$0xff]
        %v971 = vld [vmem:[#allocation2 + $0x28] sm:$0xff]
        %v972 = vld [vmem:[#allocation2 + $0x30] sm:$0xff]
        %v973 = vld [vmem:[#allocation2 + $0x38] sm:$0xff]
        %v974 = vld [vmem:[#allocation2 + $0x40] sm:$0xff]
        %v975 = vld [vmem:[#allocation2 + $0x48] sm:$0xff]
        %v976 = vld [vmem:[#allocation2 + $0x50] sm:$0xff]
        %v977 = vld [vmem:[#allocation2 + $0x58] sm:$0xff]
        %s978 = scalar_lea.vmem %s2, 144
        %v979 = vld [vmem:[%s978] sm:$0xff]
        %v980 = vld [vmem:[%s978 + $0x8] sm:$0xff]
        %v981 = vld [vmem:[%s978 + $0x10] sm:$0xff]
        %v982 = vld [vmem:[%s978 + $0x18] sm:$0xff]
        %v983 = vld [vmem:[%s978 + $0x20] sm:$0xff]
        %v984 = vld [vmem:[%s978 + $0x28] sm:$0xff]
        %991 = vrot.lane.b32.xlu0 %v960, 111
        %v992 = vpop.permute.xlu0 %991
        %993 = vrot.lane.b32.xlu0 %v961, 111
        %v994 = vpop.permute.xlu0 %993
        %995 = vrot.lane.b32.xlu0 %v962, 111
        %v996 = vpop.permute.xlu0 %995
        %997 = vrot.lane.b32.xlu0 %v963, 111
        %v998 = vpop.permute.xlu0 %997
        %999 = vrot.lane.b32.xlu0 %v964, 111
        %v1000 = vpop.permute.xlu0 %999
        %1001 = vrot.lane.b32.xlu0 %v965, 111
        %v1002 = vpop.permute.xlu0 %1001
        %vm1003 = vcmask 908288
        %v1004 = vsel %vm1003, %v992, %v994
        %v1005 = vsel %vm1003, %v994, %v996
        %v1006 = vsel %vm1003, %v998, %v1000
        %v1007 = vsel %vm1003, %v1000, %v1002
        %v1013 = vsel %vm394, %v979, 0
        %v1016 = vsel %vm394, %v980, 0
        %v1019 = vsel %vm394, %v981, 0
        %v1022 = vsel %vm394, %v982, 0
        %v1025 = vsel %vm394, %v983, 0
        %v1028 = vsel %vm394, %v984, 0
        %1030 = vmatprep.subr.mxu0 %v1005
        %1031 = vmatpush1.msra.mxu0 %v1004
        %1032 = vmatprep.subr.mxu0 %v1007
        %1033 = vmatpush1.msra.mxu0 %v1006
        %1034 = vmatprep.subr.mxu0 0.0
        %1035 = vmatpush1.msra.mxu0 0.0
        %1036 = vmatprep.subr.mxu0 0.0
        %1037 = vmatpush1.msra.mxu0 0.0
        %1038 = vmatprep.subr.mxu0 0.0
        %1039 = vmatpush1.msra.mxu0 0.0
        %1040 = vmatprep.subr.mxu0 0.0
        %1041 = vmatpush1.msra.mxu0 0.0
        %1042 = vmatprep.subr.mxu0 0.0
        %1043 = vmatpush1.msra.mxu0 0.0
        %1044 = vmatprep.subr.mxu0 0.0
        %1045 = vmatpush1.msra.mxu0 0.0
        %1046 = vmatprep.subr.mxu0 0.0
        %1047 = vmatpush1.msra.mxu0 0.0
        %1048 = vmatprep.subr.mxu0 0.0
        %1049 = vmatpush1.msra.mxu0 0.0
        %1050 = vmatprep.subr.mxu0 0.0
        %1051 = vmatpush1.msra.mxu0 0.0
        %1052 = vmatprep.subr.mxu0 0.0
        %1053 = vmatpush1.msra.mxu0 0.0
        %1054 = vmatprep.subr.mxu0 0.0
        %1055 = vmatpush1.msra.mxu0 0.0
        %1056 = vmatprep.subr.mxu0 0.0
        %1057 = vmatpush1.msra.mxu0 0.0
        %1058 = vmatprep.subr.mxu0 0.0
        %1059 = vmatpush1.msra.mxu0 0.0
        %1060 = vmatprep.subr.mxu0 0.0
        %1061 = vmatpush1.msra.mxu0 0.0
        %1062 = vmatprep.subr.mxu0 0.0
        %1063 = vmatpush1.msra.mxu0 0.0
        %1064 = vmatprep.subr.mxu0 0.0
        %1065 = vmatpush1.msra.mxu0 0.0
        %1066 = vmatprep.subr.mxu0 0.0
        %1067 = vmatpush1.msra.mxu0 0.0
        %1068 = vmatprep.subr.mxu0 0.0
        %1069 = vmatpush1.msra.mxu0 0.0
        %1070 = vmatprep.subr.mxu0 0.0
        %1071 = vmatpush1.msra.mxu0 0.0
        %1072 = vmatprep.subr.mxu0 0.0
        %1073 = vmatpush1.msra.mxu0 0.0
        %1074 = vmatprep.subr.mxu0 0.0
        %1075 = vmatpush1.msra.mxu0 0.0
        %1076 = vmatprep.subr.mxu0 0.0
        %1077 = vmatpush1.msra.mxu0 0.0
        %1078 = vmatprep.subr.mxu0 0.0
        %1079 = vmatpush1.msra.mxu0 0.0
        %1080 = vmatprep.subr.mxu0 0.0
        %1081 = vmatpush1.msra.mxu0 0.0
        %1082 = vmatprep.subr.mxu0 0.0
        %1083 = vmatpush1.msra.mxu0 0.0
        %1084 = vmatprep.subr.mxu0 0.0
        %1085 = vmatpush1.msra.mxu0 0.0
        %1086 = vmatprep.subr.mxu0 0.0
        %1087 = vmatpush1.msra.mxu0 0.0
        %1088 = vmatprep.subr.mxu0 0.0
        %1089 = vmatpush1.msra.mxu0 0.0
        %1090 = vmatprep.subr.mxu0 0.0
        %1091 = vmatpush1.msra.mxu0 0.0
        %1092 = vmatprep.subr.mxu0 0.0
        %1093 = vmatpush1.msra.mxu0 0.0
        %1094 = vmatprep.mubr.f32.mxu0 0.0
        %1095 = vmatmul.mubr.f32.gmra.mrb[0].mxu0 %v1013
        %v1096 = vpop.f32.mrb[0].mxu0
        %v1097 = vadd.f32 0.0, %v1096
        %v1098 = vpop.f32.mrb[0].mxu0
        %v1099 = vadd.f32 0.0, %v1098
        %1100 = vmatprep.mubr.f32.mxu0 0.0
        %1101 = vmatmul.mubr.f32.gmra.mrb[0].mxu0 %v1016
        %v1102 = vpop.f32.mrb[0].mxu0
        %v1103 = vadd.f32 0.0, %v1102
        %v1104 = vpop.f32.mrb[0].mxu0
        %v1105 = vadd.f32 0.0, %v1104
        %1106 = vmatprep.mubr.f32.mxu0 0.0
        %1107 = vmatmul.mubr.f32.gmra.mrb[0].mxu0 %v1019
        %v1108 = vpop.f32.mrb[0].mxu0
        %v1109 = vadd.f32 0.0, %v1108
        %v1110 = vpop.f32.mrb[0].mxu0
        %v1111 = vadd.f32 0.0, %v1110
        %1112 = vmatprep.mubr.f32.mxu0 0.0
        %1113 = vmatmul.mubr.f32.gmra.mrb[0].mxu0 %v1022
        %v1114 = vpop.f32.mrb[0].mxu0
        %v1115 = vadd.f32 0.0, %v1114
        %v1116 = vpop.f32.mrb[0].mxu0
        %v1117 = vadd.f32 0.0, %v1116
        %1118 = vmatprep.mubr.f32.mxu0 0.0
        %1119 = vmatmul.mubr.f32.gmra.mrb[0].mxu0 %v1025
        %v1120 = vpop.f32.mrb[0].mxu0
        %v1121 = vadd.f32 0.0, %v1120
        %v1122 = vpop.f32.mrb[0].mxu0
        %v1123 = vadd.f32 0.0, %v1122
        %1124 = vmatprep.mubr.f32.mxu0 0.0
        %1125 = vmatmul.mubr.f32.gmra.mrb[0].mxu0 %v1028
        %v1126 = vpop.f32.mrb[0].mxu0
        %v1127 = vadd.f32 0.0, %v1126
        %v1128 = vpop.f32.mrb[0].mxu0
        %v1129 = vadd.f32 0.0, %v1128
        %1130 = vdwg.mxu0
        %v1131 = vadd.f32 %v966, %v1097
        %v1132 = vadd.f32 %v967, %v1099
        %v1133 = vadd.f32 %v968, %v1103
        %v1134 = vadd.f32 %v969, %v1105
        %v1135 = vadd.f32 %v970, %v1109
        %v1136 = vadd.f32 %v971, %v1111
        %v1137 = vadd.f32 %v972, %v1115
        %v1138 = vadd.f32 %v973, %v1117
        %v1139 = vadd.f32 %v974, %v1121
        %v1140 = vadd.f32 %v975, %v1123
        %v1141 = vadd.f32 %v976, %v1127
        %v1142 = vadd.f32 %v977, %v1129
        %1143 = vst [vmem:[#allocation2] sm:$0xff] %v1131
        %1144 = vst [vmem:[#allocation2 + $0x8] sm:$0xff] %v1132
        %1145 = vst [vmem:[#allocation2 + $0x10] sm:$0xff] %v1133
        %1146 = vst [vmem:[#allocation2 + $0x18] sm:$0xff] %v1134
        %1147 = vst [vmem:[#allocation2 + $0x20] sm:$0xff] %v1135
        %1148 = vst [vmem:[#allocation2 + $0x28] sm:$0xff] %v1136
        %1149 = vst [vmem:[#allocation2 + $0x30] sm:$0xff] %v1137
        %1150 = vst [vmem:[#allocation2 + $0x38] sm:$0xff] %v1138
        %1151 = vst [vmem:[#allocation2 + $0x40] sm:$0xff] %v1139
        %1152 = vst [vmem:[#allocation2 + $0x48] sm:$0xff] %v1140
        %1153 = vst [vmem:[#allocation2 + $0x50] sm:$0xff] %v1141
        %1154 = vst [vmem:[#allocation2 + $0x58] sm:$0xff] %v1142
        %v1155 = vlaneseq
        %v1156 = vshrl.u32 %v1155, 7
        %v1157 = vsub.s32 4, %v1156
        %v1158 = vrot.slane %v310, %v1157
        %v1159 = vlaneseq
        %v1160 = vshrl.u32 %v1159, 7
        %v1161 = vsub.s32 4, %v1160
        %v1162 = vrot.slane %v311, %v1161
        %1165 = vrot.lane.b32.xlu0 %v1158, 18
        %v1166 = vpop.permute.xlu0 %1165
        %1167 = vrot.lane.b32.xlu0 %v1162, 18
        %v1168 = vpop.permute.xlu0 %1167
        %vm1169 = vcmask 146432
        %v1170 = vsel %vm1169, %v1166, %v1168
        %v1174 = vmul.f32 %v304, %v1166
        %v1175 = vmul.f32 %v305, %v1170
        %v1176 = vmul.f32 %v306, %v1168
        %v1177 = vmul.f32 %v307, %v1166
        %v1178 = vmul.f32 %v308, %v1170
        %v1179 = vmul.f32 %v309, %v1168
        %v1180 = vld [vmem:[#allocation2] sm:$0xff]
        %v1181 = vld [vmem:[#allocation2 + $0x8] sm:$0xff]
        %v1182 = vld [vmem:[#allocation2 + $0x10] sm:$0xff]
        %v1183 = vld [vmem:[#allocation2 + $0x18] sm:$0xff]
        %v1184 = vld [vmem:[#allocation2 + $0x20] sm:$0xff]
        %v1185 = vld [vmem:[#allocation2 + $0x28] sm:$0xff]
        %v1186 = vld [vmem:[#allocation2 + $0x30] sm:$0xff]
        %v1187 = vld [vmem:[#allocation2 + $0x38] sm:$0xff]
        %v1188 = vld [vmem:[#allocation2 + $0x40] sm:$0xff]
        %v1189 = vld [vmem:[#allocation2 + $0x48] sm:$0xff]
        %v1190 = vld [vmem:[#allocation2 + $0x50] sm:$0xff]
        %v1191 = vld [vmem:[#allocation2 + $0x58] sm:$0xff]
        %s1192 = scalar_lea.vmem %s2, 192
        %v1193 = vld [vmem:[%s1192] sm:$0xff]
        %v1194 = vld [vmem:[%s1192 + $0x8] sm:$0xff]
        %v1195 = vld [vmem:[%s1192 + $0x10] sm:$0xff]
        %v1196 = vld [vmem:[%s1192 + $0x18] sm:$0xff]
        %v1197 = vld [vmem:[%s1192 + $0x20] sm:$0xff]
        %v1198 = vld [vmem:[%s1192 + $0x28] sm:$0xff]
        %1205 = vrot.lane.b32.xlu0 %v1174, 110
        %v1206 = vpop.permute.xlu0 %1205
        %1207 = vrot.lane.b32.xlu0 %v1175, 110
        %v1208 = vpop.permute.xlu0 %1207
        %1209 = vrot.lane.b32.xlu0 %v1176, 110
        %v1210 = vpop.permute.xlu0 %1209
        %1211 = vrot.lane.b32.xlu0 %v1177, 110
        %v1212 = vpop.permute.xlu0 %1211
        %1213 = vrot.lane.b32.xlu0 %v1178, 110
        %v1214 = vpop.permute.xlu0 %1213
        %1215 = vrot.lane.b32.xlu0 %v1179, 110
        %v1216 = vpop.permute.xlu0 %1215
        %vm1217 = vcmask 900096
        %v1218 = vsel %vm1217, %v1206, %v1208
        %v1219 = vsel %vm1217, %v1208, %v1210
        %v1220 = vsel %vm1217, %v1212, %v1214
        %v1221 = vsel %vm1217, %v1214, %v1216
        %v1227 = vsel %vm394, %v1193, 0
        %v1230 = vsel %vm394, %v1194, 0
        %v1233 = vsel %vm394, %v1195, 0
        %v1236 = vsel %vm394, %v1196, 0
        %v1239 = vsel %vm394, %v1197, 0
        %v1242 = vsel %vm394, %v1198, 0
        %1244 = vmatprep.subr.mxu0 %v1219
        %1245 = vmatpush1.msra.mxu0 %v1218
        %1246 = vmatprep.subr.mxu0 %v1221
        %1247 = vmatpush1.msra.mxu0 %v1220
        %1248 = vmatprep.subr.mxu0 0.0
        %1249 = vmatpush1.msra.mxu0 0.0
        %1250 = vmatprep.subr.mxu0 0.0
        %1251 = vmatpush1.msra.mxu0 0.0
        %1252 = vmatprep.subr.mxu0 0.0
        %1253 = vmatpush1.msra.mxu0 0.0
        %1254 = vmatprep.subr.mxu0 0.0
        %1255 = vmatpush1.msra.mxu0 0.0
        %1256 = vmatprep.subr.mxu0 0.0
        %1257 = vmatpush1.msra.mxu0 0.0
        %1258 = vmatprep.subr.mxu0 0.0
        %1259 = vmatpush1.msra.mxu0 0.0
        %1260 = vmatprep.subr.mxu0 0.0
        %1261 = vmatpush1.msra.mxu0 0.0
        %1262 = vmatprep.subr.mxu0 0.0
        %1263 = vmatpush1.msra.mxu0 0.0
        %1264 = vmatprep.subr.mxu0 0.0
        %1265 = vmatpush1.msra.mxu0 0.0
        %1266 = vmatprep.subr.mxu0 0.0
        %1267 = vmatpush1.msra.mxu0 0.0
        %1268 = vmatprep.subr.mxu0 0.0
        %1269 = vmatpush1.msra.mxu0 0.0
        %1270 = vmatprep.subr.mxu0 0.0
        %1271 = vmatpush1.msra.mxu0 0.0
        %1272 = vmatprep.subr.mxu0 0.0
        %1273 = vmatpush1.msra.mxu0 0.0
        %1274 = vmatprep.subr.mxu0 0.0
        %1275 = vmatpush1.msra.mxu0 0.0
        %1276 = vmatprep.subr.mxu0 0.0
        %1277 = vmatpush1.msra.mxu0 0.0
        %1278 = vmatprep.subr.mxu0 0.0
        %1279 = vmatpush1.msra.mxu0 0.0
        %1280 = vmatprep.subr.mxu0 0.0
        %1281 = vmatpush1.msra.mxu0 0.0
        %1282 = vmatprep.subr.mxu0 0.0
        %1283 = vmatpush1.msra.mxu0 0.0
        %1284 = vmatprep.subr.mxu0 0.0
        %1285 = vmatpush1.msra.mxu0 0.0
        %1286 = vmatprep.subr.mxu0 0.0
        %1287 = vmatpush1.msra.mxu0 0.0
        %1288 = vmatprep.subr.mxu0 0.0
        %1289 = vmatpush1.msra.mxu0 0.0
        %1290 = vmatprep.subr.mxu0 0.0
        %1291 = vmatpush1.msra.mxu0 0.0
        %1292 = vmatprep.subr.mxu0 0.0
        %1293 = vmatpush1.msra.mxu0 0.0
        %1294 = vmatprep.subr.mxu0 0.0
        %1295 = vmatpush1.msra.mxu0 0.0
        %1296 = vmatprep.subr.mxu0 0.0
        %1297 = vmatpush1.msra.mxu0 0.0
        %1298 = vmatprep.subr.mxu0 0.0
        %1299 = vmatpush1.msra.mxu0 0.0
        %1300 = vmatprep.subr.mxu0 0.0
        %1301 = vmatpush1.msra.mxu0 0.0
        %1302 = vmatprep.subr.mxu0 0.0
        %1303 = vmatpush1.msra.mxu0 0.0
        %1304 = vmatprep.subr.mxu0 0.0
        %1305 = vmatpush1.msra.mxu0 0.0
        %1306 = vmatprep.subr.mxu0 0.0
        %1307 = vmatpush1.msra.mxu0 0.0
        %1308 = vmatprep.mubr.f32.mxu0 0.0
        %1309 = vmatmul.mubr.f32.gmra.mrb[0].mxu0 %v1227
        %v1310 = vpop.f32.mrb[0].mxu0
        %v1311 = vadd.f32 0.0, %v1310
        %v1312 = vpop.f32.mrb[0].mxu0
        %v1313 = vadd.f32 0.0, %v1312
        %1314 = vmatprep.mubr.f32.mxu0 0.0
        %1315 = vmatmul.mubr.f32.gmra.mrb[0].mxu0 %v1230
        %v1316 = vpop.f32.mrb[0].mxu0
        %v1317 = vadd.f32 0.0, %v1316
        %v1318 = vpop.f32.mrb[0].mxu0
        %v1319 = vadd.f32 0.0, %v1318
        %1320 = vmatprep.mubr.f32.mxu0 0.0
        %1321 = vmatmul.mubr.f32.gmra.mrb[0].mxu0 %v1233
        %v1322 = vpop.f32.mrb[0].mxu0
        %v1323 = vadd.f32 0.0, %v1322
        %v1324 = vpop.f32.mrb[0].mxu0
        %v1325 = vadd.f32 0.0, %v1324
        %1326 = vmatprep.mubr.f32.mxu0 0.0
        %1327 = vmatmul.mubr.f32.gmra.mrb[0].mxu0 %v1236
        %v1328 = vpop.f32.mrb[0].mxu0
        %v1329 = vadd.f32 0.0, %v1328
        %v1330 = vpop.f32.mrb[0].mxu0
        %v1331 = vadd.f32 0.0, %v1330
        %1332 = vmatprep.mubr.f32.mxu0 0.0
        %1333 = vmatmul.mubr.f32.gmra.mrb[0].mxu0 %v1239
        %v1334 = vpop.f32.mrb[0].mxu0
        %v1335 = vadd.f32 0.0, %v1334
        %v1336 = vpop.f32.mrb[0].mxu0
        %v1337 = vadd.f32 0.0, %v1336
        %1338 = vmatprep.mubr.f32.mxu0 0.0
        %1339 = vmatmul.mubr.f32.gmra.mrb[0].mxu0 %v1242
        %v1340 = vpop.f32.mrb[0].mxu0
        %v1341 = vadd.f32 0.0, %v1340
        %v1342 = vpop.f32.mrb[0].mxu0
        %v1343 = vadd.f32 0.0, %v1342
        %1344 = vdwg.mxu0
        %v1345 = vadd.f32 %v1180, %v1311
        %v1346 = vadd.f32 %v1181, %v1313
        %v1347 = vadd.f32 %v1182, %v1317
        %v1348 = vadd.f32 %v1183, %v1319
        %v1349 = vadd.f32 %v1184, %v1323
        %v1350 = vadd.f32 %v1185, %v1325
        %v1351 = vadd.f32 %v1186, %v1329
        %v1352 = vadd.f32 %v1187, %v1331
        %v1353 = vadd.f32 %v1188, %v1335
        %v1354 = vadd.f32 %v1189, %v1337
        %v1355 = vadd.f32 %v1190, %v1341
        %v1356 = vadd.f32 %v1191, %v1343
        %1357 = vst [vmem:[#allocation2] sm:$0xff] %v1345
        %1358 = vst [vmem:[#allocation2 + $0x8] sm:$0xff] %v1346
        %1359 = vst [vmem:[#allocation2 + $0x10] sm:$0xff] %v1347
        %1360 = vst [vmem:[#allocation2 + $0x18] sm:$0xff] %v1348
        %1361 = vst [vmem:[#allocation2 + $0x20] sm:$0xff] %v1349
        %1362 = vst [vmem:[#allocation2 + $0x28] sm:$0xff] %v1350
        %1363 = vst [vmem:[#allocation2 + $0x30] sm:$0xff] %v1351
        %1364 = vst [vmem:[#allocation2 + $0x38] sm:$0xff] %v1352
        %1365 = vst [vmem:[#allocation2 + $0x40] sm:$0xff] %v1353
        %1366 = vst [vmem:[#allocation2 + $0x48] sm:$0xff] %v1354
        %1367 = vst [vmem:[#allocation2 + $0x50] sm:$0xff] %v1355
        %1368 = vst [vmem:[#allocation2 + $0x58] sm:$0xff] %v1356
        %1369 = vrot.lane.b32.xlu0 %v327, 30
        %v1370 = vpop.permute.xlu0 %1369
        %1371 = vrot.lane.b32.xlu0 %v331, 30
        %v1372 = vpop.permute.xlu0 %1371
        %vm1373 = vcmask 244736
        %v1374 = vsel %vm1373, %v1370, %v1372
        %v1378 = vmul.f32 %v304, %v1370
        %v1379 = vmul.f32 %v305, %v1374
        %v1380 = vmul.f32 %v306, %v1372
        %v1381 = vmul.f32 %v307, %v1370
        %v1382 = vmul.f32 %v308, %v1374
        %v1383 = vmul.f32 %v309, %v1372
        %v1384 = vld [vmem:[#allocation2] sm:$0xff]
        %v1385 = vld [vmem:[#allocation2 + $0x8] sm:$0xff]
        %v1386 = vld [vmem:[#allocation2 + $0x10] sm:$0xff]
        %v1387 = vld [vmem:[#allocation2 + $0x18] sm:$0xff]
        %v1388 = vld [vmem:[#allocation2 + $0x20] sm:$0xff]
        %v1389 = vld [vmem:[#allocation2 + $0x28] sm:$0xff]
        %v1390 = vld [vmem:[#allocation2 + $0x30] sm:$0xff]
        %v1391 = vld [vmem:[#allocation2 + $0x38] sm:$0xff]
        %v1392 = vld [vmem:[#allocation2 + $0x40] sm:$0xff]
        %v1393 = vld [vmem:[#allocation2 + $0x48] sm:$0xff]
        %v1394 = vld [vmem:[#allocation2 + $0x50] sm:$0xff]
        %v1395 = vld [vmem:[#allocation2 + $0x58] sm:$0xff]
        %s1396 = scalar_lea.vmem %s2, 240
        %v1397 = vld [vmem:[%s1396] sm:$0xff]
        %v1398 = vld [vmem:[%s1396 + $0x8] sm:$0xff]
        %v1399 = vld [vmem:[%s1396 + $0x10] sm:$0xff]
        %v1400 = vld [vmem:[%s1396 + $0x18] sm:$0xff]
        %v1401 = vld [vmem:[%s1396 + $0x20] sm:$0xff]
        %v1402 = vld [vmem:[%s1396 + $0x28] sm:$0xff]
        %1409 = vrot.lane.b32.xlu0 %v1378, 98
        %v1410 = vpop.permute.xlu0 %1409
        %1411 = vrot.lane.b32.xlu0 %v1379, 98
        %v1412 = vpop.permute.xlu0 %1411
        %1413 = vrot.lane.b32.xlu0 %v1380, 98
        %v1414 = vpop.permute.xlu0 %1413
        %1415 = vrot.lane.b32.xlu0 %v1381, 98
        %v1416 = vpop.permute.xlu0 %1415
        %1417 = vrot.lane.b32.xlu0 %v1382, 98
        %v1418 = vpop.permute.xlu0 %1417
        %1419 = vrot.lane.b32.xlu0 %v1383, 98
        %v1420 = vpop.permute.xlu0 %1419
        %vm1421 = vcmask 801792
        %v1422 = vsel %vm1421, %v1410, %v1412
        %v1423 = vsel %vm1421, %v1412, %v1414
        %v1424 = vsel %vm1421, %v1416, %v1418
        %v1425 = vsel %vm1421, %v1418, %v1420
        %v1431 = vsel %vm394, %v1397, 0
        %v1434 = vsel %vm394, %v1398, 0
        %v1437 = vsel %vm394, %v1399, 0
        %v1440 = vsel %vm394, %v1400, 0
        %v1443 = vsel %vm394, %v1401, 0
        %v1446 = vsel %vm394, %v1402, 0
        %1448 = vmatprep.subr.mxu0 %v1423
        %1449 = vmatpush1.msra.mxu0 %v1422
        %1450 = vmatprep.subr.mxu0 %v1425
        %1451 = vmatpush1.msra.mxu0 %v1424
        %1452 = vmatprep.subr.mxu0 0.0
        %1453 = vmatpush1.msra.mxu0 0.0
        %1454 = vmatprep.subr.mxu0 0.0
        %1455 = vmatpush1.msra.mxu0 0.0
        %1456 = vmatprep.subr.mxu0 0.0
        %1457 = vmatpush1.msra.mxu0 0.0
        %1458 = vmatprep.subr.mxu0 0.0
        %1459 = vmatpush1.msra.mxu0 0.0
        %1460 = vmatprep.subr.mxu0 0.0
        %1461 = vmatpush1.msra.mxu0 0.0
        %1462 = vmatprep.subr.mxu0 0.0
        %1463 = vmatpush1.msra.mxu0 0.0
        %1464 = vmatprep.subr.mxu0 0.0
        %1465 = vmatpush1.msra.mxu0 0.0
        %1466 = vmatprep.subr.mxu0 0.0
        %1467 = vmatpush1.msra.mxu0 0.0
        %1468 = vmatprep.subr.mxu0 0.0
        %1469 = vmatpush1.msra.mxu0 0.0
        %1470 = vmatprep.subr.mxu0 0.0
        %1471 = vmatpush1.msra.mxu0 0.0
        %1472 = vmatprep.subr.mxu0 0.0
        %1473 = vmatpush1.msra.mxu0 0.0
        %1474 = vmatprep.subr.mxu0 0.0
        %1475 = vmatpush1.msra.mxu0 0.0
        %1476 = vmatprep.subr.mxu0 0.0
        %1477 = vmatpush1.msra.mxu0 0.0
        %1478 = vmatprep.subr.mxu0 0.0
        %1479 = vmatpush1.msra.mxu0 0.0
        %1480 = vmatprep.subr.mxu0 0.0
        %1481 = vmatpush1.msra.mxu0 0.0
        %1482 = vmatprep.subr.mxu0 0.0
        %1483 = vmatpush1.msra.mxu0 0.0
        %1484 = vmatprep.subr.mxu0 0.0
        %1485 = vmatpush1.msra.mxu0 0.0
        %1486 = vmatprep.subr.mxu0 0.0
        %1487 = vmatpush1.msra.mxu0 0.0
        %1488 = vmatprep.subr.mxu0 0.0
        %1489 = vmatpush1.msra.mxu0 0.0
        %1490 = vmatprep.subr.mxu0 0.0
        %1491 = vmatpush1.msra.mxu0 0.0
        %1492 = vmatprep.subr.mxu0 0.0
        %1493 = vmatpush1.msra.mxu0 0.0
        %1494 = vmatprep.subr.mxu0 0.0
        %1495 = vmatpush1.msra.mxu0 0.0
        %1496 = vmatprep.subr.mxu0 0.0
        %1497 = vmatpush1.msra.mxu0 0.0
        %1498 = vmatprep.subr.mxu0 0.0
        %1499 = vmatpush1.msra.mxu0 0.0
        %1500 = vmatprep.subr.mxu0 0.0
        %1501 = vmatpush1.msra.mxu0 0.0
        %1502 = vmatprep.subr.mxu0 0.0
        %1503 = vmatpush1.msra.mxu0 0.0
        %1504 = vmatprep.subr.mxu0 0.0
        %1505 = vmatpush1.msra.mxu0 0.0
        %1506 = vmatprep.subr.mxu0 0.0
        %1507 = vmatpush1.msra.mxu0 0.0
        %1508 = vmatprep.subr.mxu0 0.0
        %1509 = vmatpush1.msra.mxu0 0.0
        %1510 = vmatprep.subr.mxu0 0.0
        %1511 = vmatpush1.msra.mxu0 0.0
        %1512 = vmatprep.mubr.f32.mxu0 0.0
        %1513 = vmatmul.mubr.f32.gmra.mrb[0].mxu0 %v1431
        %v1514 = vpop.f32.mrb[0].mxu0
        %v1515 = vadd.f32 0.0, %v1514
        %v1516 = vpop.f32.mrb[0].mxu0
        %v1517 = vadd.f32 0.0, %v1516
        %1518 = vmatprep.mubr.f32.mxu0 0.0
        %1519 = vmatmul.mubr.f32.gmra.mrb[0].mxu0 %v1434
        %v1520 = vpop.f32.mrb[0].mxu0
        %v1521 = vadd.f32 0.0, %v1520
        %v1522 = vpop.f32.mrb[0].mxu0
        %v1523 = vadd.f32 0.0, %v1522
        %1524 = vmatprep.mubr.f32.mxu0 0.0
        %1525 = vmatmul.mubr.f32.gmra.mrb[0].mxu0 %v1437
        %v1526 = vpop.f32.mrb[0].mxu0
        %v1527 = vadd.f32 0.0, %v1526
        %v1528 = vpop.f32.mrb[0].mxu0
        %v1529 = vadd.f32 0.0, %v1528
        %1530 = vmatprep.mubr.f32.mxu0 0.0
        %1531 = vmatmul.mubr.f32.gmra.mrb[0].mxu0 %v1440
        %v1532 = vpop.f32.mrb[0].mxu0
        %v1533 = vadd.f32 0.0, %v1532
        %v1534 = vpop.f32.mrb[0].mxu0
        %v1535 = vadd.f32 0.0, %v1534
        %1536 = vmatprep.mubr.f32.mxu0 0.0
        %1537 = vmatmul.mubr.f32.gmra.mrb[0].mxu0 %v1443
        %v1538 = vpop.f32.mrb[0].mxu0
        %v1539 = vadd.f32 0.0, %v1538
        %v1540 = vpop.f32.mrb[0].mxu0
        %v1541 = vadd.f32 0.0, %v1540
        %1542 = vmatprep.mubr.f32.mxu0 0.0
        %1543 = vmatmul.mubr.f32.gmra.mrb[0].mxu0 %v1446
        %v1544 = vpop.f32.mrb[0].mxu0
        %v1545 = vadd.f32 0.0, %v1544
        %v1546 = vpop.f32.mrb[0].mxu0
        %v1547 = vadd.f32 0.0, %v1546
        %1548 = vdwg.mxu0
        %v1549 = vadd.f32 %v1384, %v1515
        %v1550 = vadd.f32 %v1385, %v1517
        %v1551 = vadd.f32 %v1386, %v1521
        %v1552 = vadd.f32 %v1387, %v1523
        %v1553 = vadd.f32 %v1388, %v1527
        %v1554 = vadd.f32 %v1389, %v1529
        %v1555 = vadd.f32 %v1390, %v1533
        %v1556 = vadd.f32 %v1391, %v1535
        %v1557 = vadd.f32 %v1392, %v1539
        %v1558 = vadd.f32 %v1393, %v1541
        %v1559 = vadd.f32 %v1394, %v1545
        %v1560 = vadd.f32 %v1395, %v1547
        %1561 = vst [vmem:[#allocation2] sm:$0xff] %v1549
        %1562 = vst [vmem:[#allocation2 + $0x8] sm:$0xff] %v1550
        %1563 = vst [vmem:[#allocation2 + $0x10] sm:$0xff] %v1551
        %1564 = vst [vmem:[#allocation2 + $0x18] sm:$0xff] %v1552
        %1565 = vst [vmem:[#allocation2 + $0x20] sm:$0xff] %v1553
        %1566 = vst [vmem:[#allocation2 + $0x28] sm:$0xff] %v1554
        %1567 = vst [vmem:[#allocation2 + $0x30] sm:$0xff] %v1555
        %1568 = vst [vmem:[#allocation2 + $0x38] sm:$0xff] %v1556
        %1569 = vst [vmem:[#allocation2 + $0x40] sm:$0xff] %v1557
        %1570 = vst [vmem:[#allocation2 + $0x48] sm:$0xff] %v1558
        %1571 = vst [vmem:[#allocation2 + $0x50] sm:$0xff] %v1559
        %1572 = vst [vmem:[#allocation2 + $0x58] sm:$0xff] %v1560
        %1573 = vrot.lane.b32.xlu0 %v541, 31
        %v1574 = vpop.permute.xlu0 %1573
        %1575 = vrot.lane.b32.xlu0 %v545, 31
        %v1576 = vpop.permute.xlu0 %1575
        %vm1577 = vcmask 252928
        %v1578 = vsel %vm1577, %v1574, %v1576
        %v1582 = vmul.f32 %v304, %v1574
        %v1583 = vmul.f32 %v305, %v1578
        %v1584 = vmul.f32 %v306, %v1576
        %v1585 = vmul.f32 %v307, %v1574
        %v1586 = vmul.f32 %v308, %v1578
        %v1587 = vmul.f32 %v309, %v1576
        %v1588 = vld [vmem:[#allocation2] sm:$0xff]
        %v1589 = vld [vmem:[#allocation2 + $0x8] sm:$0xff]
        %v1590 = vld [vmem:[#allocation2 + $0x10] sm:$0xff]
        %v1591 = vld [vmem:[#allocation2 + $0x18] sm:$0xff]
        %v1592 = vld [vmem:[#allocation2 + $0x20] sm:$0xff]
        %v1593 = vld [vmem:[#allocation2 + $0x28] sm:$0xff]
        %v1594 = vld [vmem:[#allocation2 + $0x30] sm:$0xff]
        %v1595 = vld [vmem:[#allocation2 + $0x38] sm:$0xff]
        %v1596 = vld [vmem:[#allocation2 + $0x40] sm:$0xff]
        %v1597 = vld [vmem:[#allocation2 + $0x48] sm:$0xff]
        %v1598 = vld [vmem:[#allocation2 + $0x50] sm:$0xff]
        %v1599 = vld [vmem:[#allocation2 + $0x58] sm:$0xff]
        %s1600 = scalar_lea.vmem %s2, 288
        %v1601 = vld [vmem:[%s1600] sm:$0xff]
        %v1602 = vld [vmem:[%s1600 + $0x8] sm:$0xff]
        %v1603 = vld [vmem:[%s1600 + $0x10] sm:$0xff]
        %v1604 = vld [vmem:[%s1600 + $0x18] sm:$0xff]
        %v1605 = vld [vmem:[%s1600 + $0x20] sm:$0xff]
        %v1606 = vld [vmem:[%s1600 + $0x28] sm:$0xff]
        %1613 = vrot.lane.b32.xlu0 %v1582, 97
        %v1614 = vpop.permute.xlu0 %1613
        %1615 = vrot.lane.b32.xlu0 %v1583, 97
        %v1616 = vpop.permute.xlu0 %1615
        %1617 = vrot.lane.b32.xlu0 %v1584, 97
        %v1618 = vpop.permute.xlu0 %1617
        %1619 = vrot.lane.b32.xlu0 %v1585, 97
        %v1620 = vpop.permute.xlu0 %1619
        %1621 = vrot.lane.b32.xlu0 %v1586, 97
        %v1622 = vpop.permute.xlu0 %1621
        %1623 = vrot.lane.b32.xlu0 %v1587, 97
        %v1624 = vpop.permute.xlu0 %1623
        %vm1625 = vcmask 793600
        %v1626 = vsel %vm1625, %v1614, %v1616
        %v1627 = vsel %vm1625, %v1616, %v1618
        %v1628 = vsel %vm1625, %v1620, %v1622
        %v1629 = vsel %vm1625, %v1622, %v1624
        %v1635 = vsel %vm394, %v1601, 0
        %v1638 = vsel %vm394, %v1602, 0
        %v1641 = vsel %vm394, %v1603, 0
        %v1644 = vsel %vm394, %v1604, 0
        %v1647 = vsel %vm394, %v1605, 0
        %v1650 = vsel %vm394, %v1606, 0
        %1652 = vmatprep.subr.mxu0 %v1627
        %1653 = vmatpush1.msra.mxu0 %v1626
        %1654 = vmatprep.subr.mxu0 %v1629
        %1655 = vmatpush1.msra.mxu0 %v1628
        %1656 = vmatprep.subr.mxu0 0.0
        %1657 = vmatpush1.msra.mxu0 0.0
        %1658 = vmatprep.subr.mxu0 0.0
        %1659 = vmatpush1.msra.mxu0 0.0
        %1660 = vmatprep.subr.mxu0 0.0
        %1661 = vmatpush1.msra.mxu0 0.0
        %1662 = vmatprep.subr.mxu0 0.0
        %1663 = vmatpush1.msra.mxu0 0.0
        %1664 = vmatprep.subr.mxu0 0.0
        %1665 = vmatpush1.msra.mxu0 0.0
        %1666 = vmatprep.subr.mxu0 0.0
        %1667 = vmatpush1.msra.mxu0 0.0
        %1668 = vmatprep.subr.mxu0 0.0
        %1669 = vmatpush1.msra.mxu0 0.0
        %1670 = vmatprep.subr.mxu0 0.0
        %1671 = vmatpush1.msra.mxu0 0.0
        %1672 = vmatprep.subr.mxu0 0.0
        %1673 = vmatpush1.msra.mxu0 0.0
        %1674 = vmatprep.subr.mxu0 0.0
        %1675 = vmatpush1.msra.mxu0 0.0
        %1676 = vmatprep.subr.mxu0 0.0
        %1677 = vmatpush1.msra.mxu0 0.0
        %1678 = vmatprep.subr.mxu0 0.0
        %1679 = vmatpush1.msra.mxu0 0.0
        %1680 = vmatprep.subr.mxu0 0.0
        %1681 = vmatpush1.msra.mxu0 0.0
        %1682 = vmatprep.subr.mxu0 0.0
        %1683 = vmatpush1.msra.mxu0 0.0
        %1684 = vmatprep.subr.mxu0 0.0
        %1685 = vmatpush1.msra.mxu0 0.0
        %1686 = vmatprep.subr.mxu0 0.0
        %1687 = vmatpush1.msra.mxu0 0.0
        %1688 = vmatprep.subr.mxu0 0.0
        %1689 = vmatpush1.msra.mxu0 0.0
        %1690 = vmatprep.subr.mxu0 0.0
        %1691 = vmatpush1.msra.mxu0 0.0
        %1692 = vmatprep.subr.mxu0 0.0
        %1693 = vmatpush1.msra.mxu0 0.0
        %1694 = vmatprep.subr.mxu0 0.0
        %1695 = vmatpush1.msra.mxu0 0.0
        %1696 = vmatprep.subr.mxu0 0.0
        %1697 = vmatpush1.msra.mxu0 0.0
        %1698 = vmatprep.subr.mxu0 0.0
        %1699 = vmatpush1.msra.mxu0 0.0
        %1700 = vmatprep.subr.mxu0 0.0
        %1701 = vmatpush1.msra.mxu0 0.0
        %1702 = vmatprep.subr.mxu0 0.0
        %1703 = vmatpush1.msra.mxu0 0.0
        %1704 = vmatprep.subr.mxu0 0.0
        %1705 = vmatpush1.msra.mxu0 0.0
        %1706 = vmatprep.subr.mxu0 0.0
        %1707 = vmatpush1.msra.mxu0 0.0
        %1708 = vmatprep.subr.mxu0 0.0
        %1709 = vmatpush1.msra.mxu0 0.0
        %1710 = vmatprep.subr.mxu0 0.0
        %1711 = vmatpush1.msra.mxu0 0.0
        %1712 = vmatprep.subr.mxu0 0.0
        %1713 = vmatpush1.msra.mxu0 0.0
        %1714 = vmatprep.subr.mxu0 0.0
        %1715 = vmatpush1.msra.mxu0 0.0
        %1716 = vmatprep.mubr.f32.mxu0 0.0
        %1717 = vmatmul.mubr.f32.gmra.mrb[0].mxu0 %v1635
        %v1718 = vpop.f32.mrb[0].mxu0
        %v1719 = vadd.f32 0.0, %v1718
        %v1720 = vpop.f32.mrb[0].mxu0
        %v1721 = vadd.f32 0.0, %v1720
        %1722 = vmatprep.mubr.f32.mxu0 0.0
        %1723 = vmatmul.mubr.f32.gmra.mrb[0].mxu0 %v1638
        %v1724 = vpop.f32.mrb[0].mxu0
        %v1725 = vadd.f32 0.0, %v1724
        %v1726 = vpop.f32.mrb[0].mxu0
        %v1727 = vadd.f32 0.0, %v1726
        %1728 = vmatprep.mubr.f32.mxu0 0.0
        %1729 = vmatmul.mubr.f32.gmra.mrb[0].mxu0 %v1641
        %v1730 = vpop.f32.mrb[0].mxu0
        %v1731 = vadd.f32 0.0, %v1730
        %v1732 = vpop.f32.mrb[0].mxu0
        %v1733 = vadd.f32 0.0, %v1732
        %1734 = vmatprep.mubr.f32.mxu0 0.0
        %1735 = vmatmul.mubr.f32.gmra.mrb[0].mxu0 %v1644
        %v1736 = vpop.f32.mrb[0].mxu0
        %v1737 = vadd.f32 0.0, %v1736
        %v1738 = vpop.f32.mrb[0].mxu0
        %v1739 = vadd.f32 0.0, %v1738
        %1740 = vmatprep.mubr.f32.mxu0 0.0
        %1741 = vmatmul.mubr.f32.gmra.mrb[0].mxu0 %v1647
        %v1742 = vpop.f32.mrb[0].mxu0
        %v1743 = vadd.f32 0.0, %v1742
        %v1744 = vpop.f32.mrb[0].mxu0
        %v1745 = vadd.f32 0.0, %v1744
        %1746 = vmatprep.mubr.f32.mxu0 0.0
        %1747 = vmatmul.mubr.f32.gmra.mrb[0].mxu0 %v1650
        %v1748 = vpop.f32.mrb[0].mxu0
        %v1749 = vadd.f32 0.0, %v1748
        %v1750 = vpop.f32.mrb[0].mxu0
        %v1751 = vadd.f32 0.0, %v1750
        %1752 = vdwg.mxu0
        %v1753 = vadd.f32 %v1588, %v1719
        %v1754 = vadd.f32 %v1589, %v1721
        %v1755 = vadd.f32 %v1590, %v1725
        %v1756 = vadd.f32 %v1591, %v1727
        %v1757 = vadd.f32 %v1592, %v1731
        %v1758 = vadd.f32 %v1593, %v1733
        %v1759 = vadd.f32 %v1594, %v1737
        %v1760 = vadd.f32 %v1595, %v1739
        %v1761 = vadd.f32 %v1596, %v1743
        %v1762 = vadd.f32 %v1597, %v1745
        %v1763 = vadd.f32 %v1598, %v1749
        %v1764 = vadd.f32 %v1599, %v1751
        %1765 = vst [vmem:[#allocation2] sm:$0xff] %v1753
        %1766 = vst [vmem:[#allocation2 + $0x8] sm:$0xff] %v1754
        %1767 = vst [vmem:[#allocation2 + $0x10] sm:$0xff] %v1755
        %1768 = vst [vmem:[#allocation2 + $0x18] sm:$0xff] %v1756
        %1769 = vst [vmem:[#allocation2 + $0x20] sm:$0xff] %v1757
        %1770 = vst [vmem:[#allocation2 + $0x28] sm:$0xff] %v1758
        %1771 = vst [vmem:[#allocation2 + $0x30] sm:$0xff] %v1759
        %1772 = vst [vmem:[#allocation2 + $0x38] sm:$0xff] %v1760
        %1773 = vst [vmem:[#allocation2 + $0x40] sm:$0xff] %v1761
        %1774 = vst [vmem:[#allocation2 + $0x48] sm:$0xff] %v1762
        %1775 = vst [vmem:[#allocation2 + $0x50] sm:$0xff] %v1763
        %1776 = vst [vmem:[#allocation2 + $0x58] sm:$0xff] %v1764
        %v1777 = vld [vmem:[#allocation2] sm:$0xff]
        %v1778 = vld [vmem:[#allocation2 + $0x8] sm:$0xff]
        %v1779 = vld [vmem:[#allocation2 + $0x10] sm:$0xff]
        %v1780 = vld [vmem:[#allocation2 + $0x18] sm:$0xff]
        %v1781 = vld [vmem:[#allocation2 + $0x20] sm:$0xff]
        %v1782 = vld [vmem:[#allocation2 + $0x28] sm:$0xff]
        %v1783 = vld [vmem:[#allocation2 + $0x30] sm:$0xff]
        %v1784 = vld [vmem:[#allocation2 + $0x38] sm:$0xff]
        %v1785 = vld [vmem:[#allocation2 + $0x40] sm:$0xff]
        %v1786 = vld [vmem:[#allocation2 + $0x48] sm:$0xff]
        %v1787 = vld [vmem:[#allocation2 + $0x50] sm:$0xff]
        %v1788 = vld [vmem:[#allocation2 + $0x58] sm:$0xff]
        %s1789 = scalar_lea.vmem %s2, 336
        %v1790 = vld [vmem:[%s1789] sm:$0xff]
        %v1791 = vld [vmem:[%s1789 + $0x8] sm:$0xff]
        %v1792 = vld [vmem:[%s1789 + $0x10] sm:$0xff]
        %v1793 = vld [vmem:[%s1789 + $0x18] sm:$0xff]
        %v1794 = vld [vmem:[%s1789 + $0x20] sm:$0xff]
        %v1795 = vld [vmem:[%s1789 + $0x28] sm:$0xff]
        %1796 = vrot.lane.b32.xlu0 %v304, 96
        %v1797 = vpop.permute.xlu0 %1796
        %1798 = vrot.lane.b32.xlu0 %v305, 96
        %v1799 = vpop.permute.xlu0 %1798
        %1800 = vrot.lane.b32.xlu0 %v306, 96
        %v1801 = vpop.permute.xlu0 %1800
        %1802 = vrot.lane.b32.xlu0 %v307, 96
        %v1803 = vpop.permute.xlu0 %1802
        %1804 = vrot.lane.b32.xlu0 %v308, 96
        %v1805 = vpop.permute.xlu0 %1804
        %1806 = vrot.lane.b32.xlu0 %v309, 96
        %v1807 = vpop.permute.xlu0 %1806
        %vm1808 = vcmask 785408
        %v1809 = vsel %vm1808, %v1797, %v1799
        %v1810 = vsel %vm1808, %v1799, %v1801
        %v1811 = vsel %vm1808, %v1803, %v1805
        %v1812 = vsel %vm1808, %v1805, %v1807
        %v1818 = vsel %vm394, %v1790, 0
        %v1821 = vsel %vm394, %v1791, 0
        %v1824 = vsel %vm394, %v1792, 0
        %v1827 = vsel %vm394, %v1793, 0
        %v1830 = vsel %vm394, %v1794, 0
        %v1833 = vsel %vm394, %v1795, 0
        %1835 = vmatprep.subr.mxu0 %v1810
        %1836 = vmatpush1.msra.mxu0 %v1809
        %1837 = vmatprep.subr.mxu0 %v1812
        %1838 = vmatpush1.msra.mxu0 %v1811
        %1839 = vmatprep.subr.mxu0 0.0
        %1840 = vmatpush1.msra.mxu0 0.0
        %1841 = vmatprep.subr.mxu0 0.0
        %1842 = vmatpush1.msra.mxu0 0.0
        %1843 = vmatprep.subr.mxu0 0.0
        %1844 = vmatpush1.msra.mxu0 0.0
        %1845 = vmatprep.subr.mxu0 0.0
        %1846 = vmatpush1.msra.mxu0 0.0
        %1847 = vmatprep.subr.mxu0 0.0
        %1848 = vmatpush1.msra.mxu0 0.0
        %1849 = vmatprep.subr.mxu0 0.0
        %1850 = vmatpush1.msra.mxu0 0.0
        %1851 = vmatprep.subr.mxu0 0.0
        %1852 = vmatpush1.msra.mxu0 0.0
        %1853 = vmatprep.subr.mxu0 0.0
        %1854 = vmatpush1.msra.mxu0 0.0
        %1855 = vmatprep.subr.mxu0 0.0
        %1856 = vmatpush1.msra.mxu0 0.0
        %1857 = vmatprep.subr.mxu0 0.0
        %1858 = vmatpush1.msra.mxu0 0.0
        %1859 = vmatprep.subr.mxu0 0.0
        %1860 = vmatpush1.msra.mxu0 0.0
        %1861 = vmatprep.subr.mxu0 0.0
        %1862 = vmatpush1.msra.mxu0 0.0
        %1863 = vmatprep.subr.mxu0 0.0
        %1864 = vmatpush1.msra.mxu0 0.0
        %1865 = vmatprep.subr.mxu0 0.0
        %1866 = vmatpush1.msra.mxu0 0.0
        %1867 = vmatprep.subr.mxu0 0.0
        %1868 = vmatpush1.msra.mxu0 0.0
        %1869 = vmatprep.subr.mxu0 0.0
        %1870 = vmatpush1.msra.mxu0 0.0
        %1871 = vmatprep.subr.mxu0 0.0
        %1872 = vmatpush1.msra.mxu0 0.0
        %1873 = vmatprep.subr.mxu0 0.0
        %1874 = vmatpush1.msra.mxu0 0.0
        %1875 = vmatprep.subr.mxu0 0.0
        %1876 = vmatpush1.msra.mxu0 0.0
        %1877 = vmatprep.subr.mxu0 0.0
        %1878 = vmatpush1.msra.mxu0 0.0
        %1879 = vmatprep.subr.mxu0 0.0
        %1880 = vmatpush1.msra.mxu0 0.0
        %1881 = vmatprep.subr.mxu0 0.0
        %1882 = vmatpush1.msra.mxu0 0.0
        %1883 = vmatprep.subr.mxu0 0.0
        %1884 = vmatpush1.msra.mxu0 0.0
        %1885 = vmatprep.subr.mxu0 0.0
        %1886 = vmatpush1.msra.mxu0 0.0
        %1887 = vmatprep.subr.mxu0 0.0
        %1888 = vmatpush1.msra.mxu0 0.0
        %1889 = vmatprep.subr.mxu0 0.0
        %1890 = vmatpush1.msra.mxu0 0.0
        %1891 = vmatprep.subr.mxu0 0.0
        %1892 = vmatpush1.msra.mxu0 0.0
        %1893 = vmatprep.subr.mxu0 0.0
        %1894 = vmatpush1.msra.mxu0 0.0
        %1895 = vmatprep.subr.mxu0 0.0
        %1896 = vmatpush1.msra.mxu0 0.0
        %1897 = vmatprep.subr.mxu0 0.0
        %1898 = vmatpush1.msra.mxu0 0.0
        %1899 = vmatprep.mubr.f32.mxu0 0.0
        %1900 = vmatmul.mubr.f32.gmra.mrb[0].mxu0 %v1818
        %v1901 = vpop.f32.mrb[0].mxu0
        %v1902 = vadd.f32 0.0, %v1901
        %v1903 = vpop.f32.mrb[0].mxu0
        %v1904 = vadd.f32 0.0, %v1903
        %1905 = vmatprep.mubr.f32.mxu0 0.0
        %1906 = vmatmul.mubr.f32.gmra.mrb[0].mxu0 %v1821
        %v1907 = vpop.f32.mrb[0].mxu0
        %v1908 = vadd.f32 0.0, %v1907
        %v1909 = vpop.f32.mrb[0].mxu0
        %v1910 = vadd.f32 0.0, %v1909
        %1911 = vmatprep.mubr.f32.mxu0 0.0
        %1912 = vmatmul.mubr.f32.gmra.mrb[0].mxu0 %v1824
        %v1913 = vpop.f32.mrb[0].mxu0
        %v1914 = vadd.f32 0.0, %v1913
        %v1915 = vpop.f32.mrb[0].mxu0
        %v1916 = vadd.f32 0.0, %v1915
        %1917 = vmatprep.mubr.f32.mxu0 0.0
        %1918 = vmatmul.mubr.f32.gmra.mrb[0].mxu0 %v1827
        %v1919 = vpop.f32.mrb[0].mxu0
        %v1920 = vadd.f32 0.0, %v1919
        %v1921 = vpop.f32.mrb[0].mxu0
        %v1922 = vadd.f32 0.0, %v1921
        %1923 = vmatprep.mubr.f32.mxu0 0.0
        %1924 = vmatmul.mubr.f32.gmra.mrb[0].mxu0 %v1830
        %v1925 = vpop.f32.mrb[0].mxu0
        %v1926 = vadd.f32 0.0, %v1925
        %v1927 = vpop.f32.mrb[0].mxu0
        %v1928 = vadd.f32 0.0, %v1927
        %1929 = vmatprep.mubr.f32.mxu0 0.0
        %1930 = vmatmul.mubr.f32.gmra.mrb[0].mxu0 %v1833
        %v1931 = vpop.f32.mrb[0].mxu0
        %v1932 = vadd.f32 0.0, %v1931
        %v1933 = vpop.f32.mrb[0].mxu0
        %v1934 = vadd.f32 0.0, %v1933
        %1935 = vdwg.mxu0
        %v1936 = vadd.f32 %v1777, %v1902
        %v1937 = vadd.f32 %v1778, %v1904
        %v1938 = vadd.f32 %v1779, %v1908
        %v1939 = vadd.f32 %v1780, %v1910
        %v1940 = vadd.f32 %v1781, %v1914
        %v1941 = vadd.f32 %v1782, %v1916
        %v1942 = vadd.f32 %v1783, %v1920
        %v1943 = vadd.f32 %v1784, %v1922
        %v1944 = vadd.f32 %v1785, %v1926
        %v1945 = vadd.f32 %v1786, %v1928
        %v1946 = vadd.f32 %v1787, %v1932
        %v1947 = vadd.f32 %v1788, %v1934
        %1948 = vst [vmem:[#allocation2] sm:$0xff] %v1936
        %1949 = vst [vmem:[#allocation2 + $0x8] sm:$0xff] %v1937
        %1950 = vst [vmem:[#allocation2 + $0x10] sm:$0xff] %v1938
        %1951 = vst [vmem:[#allocation2 + $0x18] sm:$0xff] %v1939
        %1952 = vst [vmem:[#allocation2 + $0x20] sm:$0xff] %v1940
        %1953 = vst [vmem:[#allocation2 + $0x28] sm:$0xff] %v1941
        %1954 = vst [vmem:[#allocation2 + $0x30] sm:$0xff] %v1942
        %1955 = vst [vmem:[#allocation2 + $0x38] sm:$0xff] %v1943
        %1956 = vst [vmem:[#allocation2 + $0x40] sm:$0xff] %v1944
        %1957 = vst [vmem:[#allocation2 + $0x48] sm:$0xff] %v1945
        %1958 = vst [vmem:[#allocation2 + $0x50] sm:$0xff] %v1946
        %1959 = vst [vmem:[#allocation2 + $0x58] sm:$0xff] %v1947
        %1960 = vrot.lane.b32.xlu0 %v944, 33
        %v1961 = vpop.permute.xlu0 %1960
        %1962 = vrot.lane.b32.xlu0 %v948, 33
        %v1963 = vpop.permute.xlu0 %1962
        %vm1964 = vcmask 269312
        %v1965 = vsel %vm1964, %v1961, %v1963
        %v1969 = vmul.f32 %v304, %v1961
        %v1970 = vmul.f32 %v305, %v1965
        %v1971 = vmul.f32 %v306, %v1963
        %v1972 = vmul.f32 %v307, %v1961
        %v1973 = vmul.f32 %v308, %v1965
        %v1974 = vmul.f32 %v309, %v1963
        %v1975 = vld [vmem:[#allocation2] sm:$0xff]
        %v1976 = vld [vmem:[#allocation2 + $0x8] sm:$0xff]
        %v1977 = vld [vmem:[#allocation2 + $0x10] sm:$0xff]
        %v1978 = vld [vmem:[#allocation2 + $0x18] sm:$0xff]
        %v1979 = vld [vmem:[#allocation2 + $0x20] sm:$0xff]
        %v1980 = vld [vmem:[#allocation2 + $0x28] sm:$0xff]
        %v1981 = vld [vmem:[#allocation2 + $0x30] sm:$0xff]
        %v1982 = vld [vmem:[#allocation2 + $0x38] sm:$0xff]
        %v1983 = vld [vmem:[#allocation2 + $0x40] sm:$0xff]
        %v1984 = vld [vmem:[#allocation2 + $0x48] sm:$0xff]
        %v1985 = vld [vmem:[#allocation2 + $0x50] sm:$0xff]
        %v1986 = vld [vmem:[#allocation2 + $0x58] sm:$0xff]
        %s1987 = scalar_lea.vmem %s2, 384
        %v1988 = vld [vmem:[%s1987] sm:$0xff]
        %v1989 = vld [vmem:[%s1987 + $0x8] sm:$0xff]
        %v1990 = vld [vmem:[%s1987 + $0x10] sm:$0xff]
        %v1991 = vld [vmem:[%s1987 + $0x18] sm:$0xff]
        %v1992 = vld [vmem:[%s1987 + $0x20] sm:$0xff]
        %v1993 = vld [vmem:[%s1987 + $0x28] sm:$0xff]
        %2000 = vrot.lane.b32.xlu0 %v1969, 95
        %v2001 = vpop.permute.xlu0 %2000
        %2002 = vrot.lane.b32.xlu0 %v1970, 95
        %v2003 = vpop.permute.xlu0 %2002
        %2004 = vrot.lane.b32.xlu0 %v1971, 95
        %v2005 = vpop.permute.xlu0 %2004
        %2006 = vrot.lane.b32.xlu0 %v1972, 95
        %v2007 = vpop.permute.xlu0 %2006
        %2008 = vrot.lane.b32.xlu0 %v1973, 95
        %v2009 = vpop.permute.xlu0 %2008
        %2010 = vrot.lane.b32.xlu0 %v1974, 95
        %v2011 = vpop.permute.xlu0 %2010
        %vm2012 = vcmask 777216
        %v2013 = vsel %vm2012, %v2001, %v2003
        %v2014 = vsel %vm2012, %v2003, %v2005
        %v2015 = vsel %vm2012, %v2007, %v2009
        %v2016 = vsel %vm2012, %v2009, %v2011
        %v2022 = vsel %vm394, %v1988, 0
        %v2025 = vsel %vm394, %v1989, 0
        %v2028 = vsel %vm394, %v1990, 0
        %v2031 = vsel %vm394, %v1991, 0
        %v2034 = vsel %vm394, %v1992, 0
        %v2037 = vsel %vm394, %v1993, 0
        %2039 = vmatprep.subr.mxu0 %v2014
        %2040 = vmatpush1.msra.mxu0 %v2013
        %2041 = vmatprep.subr.mxu0 %v2016
        %2042 = vmatpush1.msra.mxu0 %v2015
        %2043 = vmatprep.subr.mxu0 0.0
        %2044 = vmatpush1.msra.mxu0 0.0
        %2045 = vmatprep.subr.mxu0 0.0
        %2046 = vmatpush1.msra.mxu0 0.0
        %2047 = vmatprep.subr.mxu0 0.0
        %2048 = vmatpush1.msra.mxu0 0.0
        %2049 = vmatprep.subr.mxu0 0.0
        %2050 = vmatpush1.msra.mxu0 0.0
        %2051 = vmatprep.subr.mxu0 0.0
        %2052 = vmatpush1.msra.mxu0 0.0
        %2053 = vmatprep.subr.mxu0 0.0
        %2054 = vmatpush1.msra.mxu0 0.0
        %2055 = vmatprep.subr.mxu0 0.0
        %2056 = vmatpush1.msra.mxu0 0.0
        %2057 = vmatprep.subr.mxu0 0.0
        %2058 = vmatpush1.msra.mxu0 0.0
        %2059 = vmatprep.subr.mxu0 0.0
        %2060 = vmatpush1.msra.mxu0 0.0
        %2061 = vmatprep.subr.mxu0 0.0
        %2062 = vmatpush1.msra.mxu0 0.0
        %2063 = vmatprep.subr.mxu0 0.0
        %2064 = vmatpush1.msra.mxu0 0.0
        %2065 = vmatprep.subr.mxu0 0.0
        %2066 = vmatpush1.msra.mxu0 0.0
        %2067 = vmatprep.subr.mxu0 0.0
        %2068 = vmatpush1.msra.mxu0 0.0
        %2069 = vmatprep.subr.mxu0 0.0
        %2070 = vmatpush1.msra.mxu0 0.0
        %2071 = vmatprep.subr.mxu0 0.0
        %2072 = vmatpush1.msra.mxu0 0.0
        %2073 = vmatprep.subr.mxu0 0.0
        %2074 = vmatpush1.msra.mxu0 0.0
        %2075 = vmatprep.subr.mxu0 0.0
        %2076 = vmatpush1.msra.mxu0 0.0
        %2077 = vmatprep.subr.mxu0 0.0
        %2078 = vmatpush1.msra.mxu0 0.0
        %2079 = vmatprep.subr.mxu0 0.0
        %2080 = vmatpush1.msra.mxu0 0.0
        %2081 = vmatprep.subr.mxu0 0.0
        %2082 = vmatpush1.msra.mxu0 0.0
        %2083 = vmatprep.subr.mxu0 0.0
        %2084 = vmatpush1.msra.mxu0 0.0
        %2085 = vmatprep.subr.mxu0 0.0
        %2086 = vmatpush1.msra.mxu0 0.0
        %2087 = vmatprep.subr.mxu0 0.0
        %2088 = vmatpush1.msra.mxu0 0.0
        %2089 = vmatprep.subr.mxu0 0.0
        %2090 = vmatpush1.msra.mxu0 0.0
        %2091 = vmatprep.subr.mxu0 0.0
        %2092 = vmatpush1.msra.mxu0 0.0
        %2093 = vmatprep.subr.mxu0 0.0
        %2094 = vmatpush1.msra.mxu0 0.0
        %2095 = vmatprep.subr.mxu0 0.0
        %2096 = vmatpush1.msra.mxu0 0.0
        %2097 = vmatprep.subr.mxu0 0.0
        %2098 = vmatpush1.msra.mxu0 0.0
        %2099 = vmatprep.subr.mxu0 0.0
        %2100 = vmatpush1.msra.mxu0 0.0
        %2101 = vmatprep.subr.mxu0 0.0
        %2102 = vmatpush1.msra.mxu0 0.0
        %2103 = vmatprep.mubr.f32.mxu0 0.0
        %2104 = vmatmul.mubr.f32.gmra.mrb[0].mxu0 %v2022
        %v2105 = vpop.f32.mrb[0].mxu0
        %v2106 = vadd.f32 0.0, %v2105
        %v2107 = vpop.f32.mrb[0].mxu0
        %v2108 = vadd.f32 0.0, %v2107
        %2109 = vmatprep.mubr.f32.mxu0 0.0
        %2110 = vmatmul.mubr.f32.gmra.mrb[0].mxu0 %v2025
        %v2111 = vpop.f32.mrb[0].mxu0
        %v2112 = vadd.f32 0.0, %v2111
        %v2113 = vpop.f32.mrb[0].mxu0
        %v2114 = vadd.f32 0.0, %v2113
        %2115 = vmatprep.mubr.f32.mxu0 0.0
        %2116 = vmatmul.mubr.f32.gmra.mrb[0].mxu0 %v2028
        %v2117 = vpop.f32.mrb[0].mxu0
        %v2118 = vadd.f32 0.0, %v2117
        %v2119 = vpop.f32.mrb[0].mxu0
        %v2120 = vadd.f32 0.0, %v2119
        %2121 = vmatprep.mubr.f32.mxu0 0.0
        %2122 = vmatmul.mubr.f32.gmra.mrb[0].mxu0 %v2031
        %v2123 = vpop.f32.mrb[0].mxu0
        %v2124 = vadd.f32 0.0, %v2123
        %v2125 = vpop.f32.mrb[0].mxu0
        %v2126 = vadd.f32 0.0, %v2125
        %2127 = vmatprep.mubr.f32.mxu0 0.0
        %2128 = vmatmul.mubr.f32.gmra.mrb[0].mxu0 %v2034
        %v2129 = vpop.f32.mrb[0].mxu0
        %v2130 = vadd.f32 0.0, %v2129
        %v2131 = vpop.f32.mrb[0].mxu0
        %v2132 = vadd.f32 0.0, %v2131
        %2133 = vmatprep.mubr.f32.mxu0 0.0
        %2134 = vmatmul.mubr.f32.gmra.mrb[0].mxu0 %v2037
        %v2135 = vpop.f32.mrb[0].mxu0
        %v2136 = vadd.f32 0.0, %v2135
        %v2137 = vpop.f32.mrb[0].mxu0
        %v2138 = vadd.f32 0.0, %v2137
        %2139 = vdwg.mxu0
        %v2140 = vadd.f32 %v1975, %v2106
        %v2141 = vadd.f32 %v1976, %v2108
        %v2142 = vadd.f32 %v1977, %v2112
        %v2143 = vadd.f32 %v1978, %v2114
        %v2144 = vadd.f32 %v1979, %v2118
        %v2145 = vadd.f32 %v1980, %v2120
        %v2146 = vadd.f32 %v1981, %v2124
        %v2147 = vadd.f32 %v1982, %v2126
        %v2148 = vadd.f32 %v1983, %v2130
        %v2149 = vadd.f32 %v1984, %v2132
        %v2150 = vadd.f32 %v1985, %v2136
        %v2151 = vadd.f32 %v1986, %v2138
        %2152 = vst [vmem:[#allocation2] sm:$0xff] %v2140
        %2153 = vst [vmem:[#allocation2 + $0x8] sm:$0xff] %v2141
        %2154 = vst [vmem:[#allocation2 + $0x10] sm:$0xff] %v2142
        %2155 = vst [vmem:[#allocation2 + $0x18] sm:$0xff] %v2143
        %2156 = vst [vmem:[#allocation2 + $0x20] sm:$0xff] %v2144
        %2157 = vst [vmem:[#allocation2 + $0x28] sm:$0xff] %v2145
        %2158 = vst [vmem:[#allocation2 + $0x30] sm:$0xff] %v2146
        %2159 = vst [vmem:[#allocation2 + $0x38] sm:$0xff] %v2147
        %2160 = vst [vmem:[#allocation2 + $0x40] sm:$0xff] %v2148
        %2161 = vst [vmem:[#allocation2 + $0x48] sm:$0xff] %v2149
        %2162 = vst [vmem:[#allocation2 + $0x50] sm:$0xff] %v2150
        %2163 = vst [vmem:[#allocation2 + $0x58] sm:$0xff] %v2151
        %2164 = vrot.lane.b32.xlu0 %v1158, 34
        %v2165 = vpop.permute.xlu0 %2164
        %2166 = vrot.lane.b32.xlu0 %v1162, 34
        %v2167 = vpop.permute.xlu0 %2166
        %vm2168 = vcmask 277504
        %v2169 = vsel %vm2168, %v2165, %v2167
        %v2173 = vmul.f32 %v304, %v2165
        %v2174 = vmul.f32 %v305, %v2169
        %v2175 = vmul.f32 %v306, %v2167
        %v2176 = vmul.f32 %v307, %v2165
        %v2177 = vmul.f32 %v308, %v2169
        %v2178 = vmul.f32 %v309, %v2167
        %v2179 = vld [vmem:[#allocation2] sm:$0xff]
        %v2180 = vld [vmem:[#allocation2 + $0x8] sm:$0xff]
        %v2181 = vld [vmem:[#allocation2 + $0x10] sm:$0xff]
        %v2182 = vld [vmem:[#allocation2 + $0x18] sm:$0xff]
        %v2183 = vld [vmem:[#allocation2 + $0x20] sm:$0xff]
        %v2184 = vld [vmem:[#allocation2 + $0x28] sm:$0xff]
        %v2185 = vld [vmem:[#allocation2 + $0x30] sm:$0xff]
        %v2186 = vld [vmem:[#allocation2 + $0x38] sm:$0xff]
        %v2187 = vld [vmem:[#allocation2 + $0x40] sm:$0xff]
        %v2188 = vld [vmem:[#allocation2 + $0x48] sm:$0xff]
        %v2189 = vld [vmem:[#allocation2 + $0x50] sm:$0xff]
        %v2190 = vld [vmem:[#allocation2 + $0x58] sm:$0xff]
        %s2191 = scalar_lea.vmem %s2, 432
        %v2192 = vld [vmem:[%s2191] sm:$0xff]
        %v2193 = vld [vmem:[%s2191 + $0x8] sm:$0xff]
        %v2194 = vld [vmem:[%s2191 + $0x10] sm:$0xff]
        %v2195 = vld [vmem:[%s2191 + $0x18] sm:$0xff]
        %v2196 = vld [vmem:[%s2191 + $0x20] sm:$0xff]
        %v2197 = vld [vmem:[%s2191 + $0x28] sm:$0xff]
        %2204 = vrot.lane.b32.xlu0 %v2173, 94
        %v2205 = vpop.permute.xlu0 %2204
        %2206 = vrot.lane.b32.xlu0 %v2174, 94
        %v2207 = vpop.permute.xlu0 %2206
        %2208 = vrot.lane.b32.xlu0 %v2175, 94
        %v2209 = vpop.permute.xlu0 %2208
        %2210 = vrot.lane.b32.xlu0 %v2176, 94
        %v2211 = vpop.permute.xlu0 %2210
        %2212 = vrot.lane.b32.xlu0 %v2177, 94
        %v2213 = vpop.permute.xlu0 %2212
        %2214 = vrot.lane.b32.xlu0 %v2178, 94
        %v2215 = vpop.permute.xlu0 %2214
        %vm2216 = vcmask 769024
        %v2217 = vsel %vm2216, %v2205, %v2207
        %v2218 = vsel %vm2216, %v2207, %v2209
        %v2219 = vsel %vm2216, %v2211, %v2213
        %v2220 = vsel %vm2216, %v2213, %v2215
        %v2226 = vsel %vm394, %v2192, 0
        %v2229 = vsel %vm394, %v2193, 0
        %v2232 = vsel %vm394, %v2194, 0
        %v2235 = vsel %vm394, %v2195, 0
        %v2238 = vsel %vm394, %v2196, 0
        %v2241 = vsel %vm394, %v2197, 0
        %2243 = vmatprep.subr.mxu0 %v2218
        %2244 = vmatpush1.msra.mxu0 %v2217
        %2245 = vmatprep.subr.mxu0 %v2220
        %2246 = vmatpush1.msra.mxu0 %v2219
        %2247 = vmatprep.subr.mxu0 0.0
        %2248 = vmatpush1.msra.mxu0 0.0
        %2249 = vmatprep.subr.mxu0 0.0
        %2250 = vmatpush1.msra.mxu0 0.0
        %2251 = vmatprep.subr.mxu0 0.0
        %2252 = vmatpush1.msra.mxu0 0.0
        %2253 = vmatprep.subr.mxu0 0.0
        %2254 = vmatpush1.msra.mxu0 0.0
        %2255 = vmatprep.subr.mxu0 0.0
        %2256 = vmatpush1.msra.mxu0 0.0
        %2257 = vmatprep.subr.mxu0 0.0
        %2258 = vmatpush1.msra.mxu0 0.0
        %2259 = vmatprep.subr.mxu0 0.0
        %2260 = vmatpush1.msra.mxu0 0.0
        %2261 = vmatprep.subr.mxu0 0.0
        %2262 = vmatpush1.msra.mxu0 0.0
        %2263 = vmatprep.subr.mxu0 0.0
        %2264 = vmatpush1.msra.mxu0 0.0
        %2265 = vmatprep.subr.mxu0 0.0
        %2266 = vmatpush1.msra.mxu0 0.0
        %2267 = vmatprep.subr.mxu0 0.0
        %2268 = vmatpush1.msra.mxu0 0.0
        %2269 = vmatprep.subr.mxu0 0.0
        %2270 = vmatpush1.msra.mxu0 0.0
        %2271 = vmatprep.subr.mxu0 0.0
        %2272 = vmatpush1.msra.mxu0 0.0
        %2273 = vmatprep.subr.mxu0 0.0
        %2274 = vmatpush1.msra.mxu0 0.0
        %2275 = vmatprep.subr.mxu0 0.0
        %2276 = vmatpush1.msra.mxu0 0.0
        %2277 = vmatprep.subr.mxu0 0.0
        %2278 = vmatpush1.msra.mxu0 0.0
        %2279 = vmatprep.subr.mxu0 0.0
        %2280 = vmatpush1.msra.mxu0 0.0
        %2281 = vmatprep.subr.mxu0 0.0
        %2282 = vmatpush1.msra.mxu0 0.0
        %2283 = vmatprep.subr.mxu0 0.0
        %2284 = vmatpush1.msra.mxu0 0.0
        %2285 = vmatprep.subr.mxu0 0.0
        %2286 = vmatpush1.msra.mxu0 0.0
        %2287 = vmatprep.subr.mxu0 0.0
        %2288 = vmatpush1.msra.mxu0 0.0
        %2289 = vmatprep.subr.mxu0 0.0
        %2290 = vmatpush1.msra.mxu0 0.0
        %2291 = vmatprep.subr.mxu0 0.0
        %2292 = vmatpush1.msra.mxu0 0.0
        %2293 = vmatprep.subr.mxu0 0.0
        %2294 = vmatpush1.msra.mxu0 0.0
        %2295 = vmatprep.subr.mxu0 0.0
        %2296 = vmatpush1.msra.mxu0 0.0
        %2297 = vmatprep.subr.mxu0 0.0
        %2298 = vmatpush1.msra.mxu0 0.0
        %2299 = vmatprep.subr.mxu0 0.0
        %2300 = vmatpush1.msra.mxu0 0.0
        %2301 = vmatprep.subr.mxu0 0.0
        %2302 = vmatpush1.msra.mxu0 0.0
        %2303 = vmatprep.subr.mxu0 0.0
        %2304 = vmatpush1.msra.mxu0 0.0
        %2305 = vmatprep.subr.mxu0 0.0
        %2306 = vmatpush1.msra.mxu0 0.0
        %2307 = vmatprep.mubr.f32.mxu0 0.0
        %2308 = vmatmul.mubr.f32.gmra.mrb[0].mxu0 %v2226
        %v2309 = vpop.f32.mrb[0].mxu0
        %v2310 = vadd.f32 0.0, %v2309
        %v2311 = vpop.f32.mrb[0].mxu0
        %v2312 = vadd.f32 0.0, %v2311
        %2313 = vmatprep.mubr.f32.mxu0 0.0
        %2314 = vmatmul.mubr.f32.gmra.mrb[0].mxu0 %v2229
        %v2315 = vpop.f32.mrb[0].mxu0
        %v2316 = vadd.f32 0.0, %v2315
        %v2317 = vpop.f32.mrb[0].mxu0
        %v2318 = vadd.f32 0.0, %v2317
        %2319 = vmatprep.mubr.f32.mxu0 0.0
        %2320 = vmatmul.mubr.f32.gmra.mrb[0].mxu0 %v2232
        %v2321 = vpop.f32.mrb[0].mxu0
        %v2322 = vadd.f32 0.0, %v2321
        %v2323 = vpop.f32.mrb[0].mxu0
        %v2324 = vadd.f32 0.0, %v2323
        %2325 = vmatprep.mubr.f32.mxu0 0.0
        %2326 = vmatmul.mubr.f32.gmra.mrb[0].mxu0 %v2235
        %v2327 = vpop.f32.mrb[0].mxu0
        %v2328 = vadd.f32 0.0, %v2327
        %v2329 = vpop.f32.mrb[0].mxu0
        %v2330 = vadd.f32 0.0, %v2329
        %2331 = vmatprep.mubr.f32.mxu0 0.0
        %2332 = vmatmul.mubr.f32.gmra.mrb[0].mxu0 %v2238
        %v2333 = vpop.f32.mrb[0].mxu0
        %v2334 = vadd.f32 0.0, %v2333
        %v2335 = vpop.f32.mrb[0].mxu0
        %v2336 = vadd.f32 0.0, %v2335
        %2337 = vmatprep.mubr.f32.mxu0 0.0
        %2338 = vmatmul.mubr.f32.gmra.mrb[0].mxu0 %v2241
        %v2339 = vpop.f32.mrb[0].mxu0
        %v2340 = vadd.f32 0.0, %v2339
        %v2341 = vpop.f32.mrb[0].mxu0
        %v2342 = vadd.f32 0.0, %v2341
        %2343 = vdwg.mxu0
        %v2344 = vadd.f32 %v2179, %v2310
        %v2345 = vadd.f32 %v2180, %v2312
        %v2346 = vadd.f32 %v2181, %v2316
        %v2347 = vadd.f32 %v2182, %v2318
        %v2348 = vadd.f32 %v2183, %v2322
        %v2349 = vadd.f32 %v2184, %v2324
        %v2350 = vadd.f32 %v2185, %v2328
        %v2351 = vadd.f32 %v2186, %v2330
        %v2352 = vadd.f32 %v2187, %v2334
        %v2353 = vadd.f32 %v2188, %v2336
        %v2354 = vadd.f32 %v2189, %v2340
        %v2355 = vadd.f32 %v2190, %v2342
        %2356 = vst [vmem:[#allocation2] sm:$0xff] %v2344
        %2357 = vst [vmem:[#allocation2 + $0x8] sm:$0xff] %v2345
        %2358 = vst [vmem:[#allocation2 + $0x10] sm:$0xff] %v2346
        %2359 = vst [vmem:[#allocation2 + $0x18] sm:$0xff] %v2347
        %2360 = vst [vmem:[#allocation2 + $0x20] sm:$0xff] %v2348
        %2361 = vst [vmem:[#allocation2 + $0x28] sm:$0xff] %v2349
        %2362 = vst [vmem:[#allocation2 + $0x30] sm:$0xff] %v2350
        %2363 = vst [vmem:[#allocation2 + $0x38] sm:$0xff] %v2351
        %2364 = vst [vmem:[#allocation2 + $0x40] sm:$0xff] %v2352
        %2365 = vst [vmem:[#allocation2 + $0x48] sm:$0xff] %v2353
        %2366 = vst [vmem:[#allocation2 + $0x50] sm:$0xff] %v2354
        %2367 = vst [vmem:[#allocation2 + $0x58] sm:$0xff] %v2355
        %2368 = vrot.lane.b32.xlu0 %v327, 46
        %v2369 = vpop.permute.xlu0 %2368
        %2370 = vrot.lane.b32.xlu0 %v331, 46
        %v2371 = vpop.permute.xlu0 %2370
        %vm2372 = vcmask 375808
        %v2373 = vsel %vm2372, %v2369, %v2371
        %v2377 = vmul.f32 %v304, %v2369
        %v2378 = vmul.f32 %v305, %v2373
        %v2379 = vmul.f32 %v306, %v2371
        %v2380 = vmul.f32 %v307, %v2369
        %v2381 = vmul.f32 %v308, %v2373
        %v2382 = vmul.f32 %v309, %v2371
        %v2383 = vld [vmem:[#allocation2] sm:$0xff]
        %v2384 = vld [vmem:[#allocation2 + $0x8] sm:$0xff]
        %v2385 = vld [vmem:[#allocation2 + $0x10] sm:$0xff]
        %v2386 = vld [vmem:[#allocation2 + $0x18] sm:$0xff]
        %v2387 = vld [vmem:[#allocation2 + $0x20] sm:$0xff]
        %v2388 = vld [vmem:[#allocation2 + $0x28] sm:$0xff]
        %v2389 = vld [vmem:[#allocation2 + $0x30] sm:$0xff]
        %v2390 = vld [vmem:[#allocation2 + $0x38] sm:$0xff]
        %v2391 = vld [vmem:[#allocation2 + $0x40] sm:$0xff]
        %v2392 = vld [vmem:[#allocation2 + $0x48] sm:$0xff]
        %v2393 = vld [vmem:[#allocation2 + $0x50] sm:$0xff]
        %v2394 = vld [vmem:[#allocation2 + $0x58] sm:$0xff]
        %s2395 = scalar_lea.vmem %s2, 480
        %v2396 = vld [vmem:[%s2395] sm:$0xff]
        %v2397 = vld [vmem:[%s2395 + $0x8] sm:$0xff]
        %v2398 = vld [vmem:[%s2395 + $0x10] sm:$0xff]
        %v2399 = vld [vmem:[%s2395 + $0x18] sm:$0xff]
        %v2400 = vld [vmem:[%s2395 + $0x20] sm:$0xff]
        %v2401 = vld [vmem:[%s2395 + $0x28] sm:$0xff]
        %2408 = vrot.lane.b32.xlu0 %v2377, 82
        %v2409 = vpop.permute.xlu0 %2408
        %2410 = vrot.lane.b32.xlu0 %v2378, 82
        %v2411 = vpop.permute.xlu0 %2410
        %2412 = vrot.lane.b32.xlu0 %v2379, 82
        %v2413 = vpop.permute.xlu0 %2412
        %2414 = vrot.lane.b32.xlu0 %v2380, 82
        %v2415 = vpop.permute.xlu0 %2414
        %2416 = vrot.lane.b32.xlu0 %v2381, 82
        %v2417 = vpop.permute.xlu0 %2416
        %2418 = vrot.lane.b32.xlu0 %v2382, 82
        %v2419 = vpop.permute.xlu0 %2418
        %vm2420 = vcmask 670720
        %v2421 = vsel %vm2420, %v2409, %v2411
        %v2422 = vsel %vm2420, %v2411, %v2413
        %v2423 = vsel %vm2420, %v2415, %v2417
        %v2424 = vsel %vm2420, %v2417, %v2419
        %v2430 = vsel %vm394, %v2396, 0
        %v2433 = vsel %vm394, %v2397, 0
        %v2436 = vsel %vm394, %v2398, 0
        %v2439 = vsel %vm394, %v2399, 0
        %v2442 = vsel %vm394, %v2400, 0
        %v2445 = vsel %vm394, %v2401, 0
        %2447 = vmatprep.subr.mxu0 %v2422
        %2448 = vmatpush1.msra.mxu0 %v2421
        %2449 = vmatprep.subr.mxu0 %v2424
        %2450 = vmatpush1.msra.mxu0 %v2423
        %2451 = vmatprep.subr.mxu0 0.0
        %2452 = vmatpush1.msra.mxu0 0.0
        %2453 = vmatprep.subr.mxu0 0.0
        %2454 = vmatpush1.msra.mxu0 0.0
        %2455 = vmatprep.subr.mxu0 0.0
        %2456 = vmatpush1.msra.mxu0 0.0
        %2457 = vmatprep.subr.mxu0 0.0
        %2458 = vmatpush1.msra.mxu0 0.0
        %2459 = vmatprep.subr.mxu0 0.0
        %2460 = vmatpush1.msra.mxu0 0.0
        %2461 = vmatprep.subr.mxu0 0.0
        %2462 = vmatpush1.msra.mxu0 0.0
        %2463 = vmatprep.subr.mxu0 0.0
        %2464 = vmatpush1.msra.mxu0 0.0
        %2465 = vmatprep.subr.mxu0 0.0
        %2466 = vmatpush1.msra.mxu0 0.0
        %2467 = vmatprep.subr.mxu0 0.0
        %2468 = vmatpush1.msra.mxu0 0.0
        %2469 = vmatprep.subr.mxu0 0.0
        %2470 = vmatpush1.msra.mxu0 0.0
        %2471 = vmatprep.subr.mxu0 0.0
        %2472 = vmatpush1.msra.mxu0 0.0
        %2473 = vmatprep.subr.mxu0 0.0
        %2474 = vmatpush1.msra.mxu0 0.0
        %2475 = vmatprep.subr.mxu0 0.0
        %2476 = vmatpush1.msra.mxu0 0.0
        %2477 = vmatprep.subr.mxu0 0.0
        %2478 = vmatpush1.msra.mxu0 0.0
        %2479 = vmatprep.subr.mxu0 0.0
        %2480 = vmatpush1.msra.mxu0 0.0
        %2481 = vmatprep.subr.mxu0 0.0
        %2482 = vmatpush1.msra.mxu0 0.0
        %2483 = vmatprep.subr.mxu0 0.0
        %2484 = vmatpush1.msra.mxu0 0.0
        %2485 = vmatprep.subr.mxu0 0.0
        %2486 = vmatpush1.msra.mxu0 0.0
        %2487 = vmatprep.subr.mxu0 0.0
        %2488 = vmatpush1.msra.mxu0 0.0
        %2489 = vmatprep.subr.mxu0 0.0
        %2490 = vmatpush1.msra.mxu0 0.0
        %2491 = vmatprep.subr.mxu0 0.0
        %2492 = vmatpush1.msra.mxu0 0.0
        %2493 = vmatprep.subr.mxu0 0.0
        %2494 = vmatpush1.msra.mxu0 0.0
        %2495 = vmatprep.subr.mxu0 0.0
        %2496 = vmatpush1.msra.mxu0 0.0
        %2497 = vmatprep.subr.mxu0 0.0
        %2498 = vmatpush1.msra.mxu0 0.0
        %2499 = vmatprep.subr.mxu0 0.0
        %2500 = vmatpush1.msra.mxu0 0.0
        %2501 = vmatprep.subr.mxu0 0.0
        %2502 = vmatpush1.msra.mxu0 0.0
        %2503 = vmatprep.subr.mxu0 0.0
        %2504 = vmatpush1.msra.mxu0 0.0
        %2505 = vmatprep.subr.mxu0 0.0
        %2506 = vmatpush1.msra.mxu0 0.0
        %2507 = vmatprep.subr.mxu0 0.0
        %2508 = vmatpush1.msra.mxu0 0.0
        %2509 = vmatprep.subr.mxu0 0.0
        %2510 = vmatpush1.msra.mxu0 0.0
        %2511 = vmatprep.mubr.f32.mxu0 0.0
        %2512 = vmatmul.mubr.f32.gmra.mrb[0].mxu0 %v2430
        %v2513 = vpop.f32.mrb[0].mxu0
        %v2514 = vadd.f32 0.0, %v2513
        %v2515 = vpop.f32.mrb[0].mxu0
        %v2516 = vadd.f32 0.0, %v2515
        %2517 = vmatprep.mubr.f32.mxu0 0.0
        %2518 = vmatmul.mubr.f32.gmra.mrb[0].mxu0 %v2433
        %v2519 = vpop.f32.mrb[0].mxu0
        %v2520 = vadd.f32 0.0, %v2519
        %v2521 = vpop.f32.mrb[0].mxu0
        %v2522 = vadd.f32 0.0, %v2521
        %2523 = vmatprep.mubr.f32.mxu0 0.0
        %2524 = vmatmul.mubr.f32.gmra.mrb[0].mxu0 %v2436
        %v2525 = vpop.f32.mrb[0].mxu0
        %v2526 = vadd.f32 0.0, %v2525
        %v2527 = vpop.f32.mrb[0].mxu0
        %v2528 = vadd.f32 0.0, %v2527
        %2529 = vmatprep.mubr.f32.mxu0 0.0
        %2530 = vmatmul.mubr.f32.gmra.mrb[0].mxu0 %v2439
        %v2531 = vpop.f32.mrb[0].mxu0
        %v2532 = vadd.f32 0.0, %v2531
        %v2533 = vpop.f32.mrb[0].mxu0
        %v2534 = vadd.f32 0.0, %v2533
        %2535 = vmatprep.mubr.f32.mxu0 0.0
        %2536 = vmatmul.mubr.f32.gmra.mrb[0].mxu0 %v2442
        %v2537 = vpop.f32.mrb[0].mxu0
        %v2538 = vadd.f32 0.0, %v2537
        %v2539 = vpop.f32.mrb[0].mxu0
        %v2540 = vadd.f32 0.0, %v2539
        %2541 = vmatprep.mubr.f32.mxu0 0.0
        %2542 = vmatmul.mubr.f32.gmra.mrb[0].mxu0 %v2445
        %v2543 = vpop.f32.mrb[0].mxu0
        %v2544 = vadd.f32 0.0, %v2543
        %v2545 = vpop.f32.mrb[0].mxu0
        %v2546 = vadd.f32 0.0, %v2545
        %2547 = vdwg.mxu0
        %v2548 = vadd.f32 %v2383, %v2514
        %v2549 = vadd.f32 %v2384, %v2516
        %v2550 = vadd.f32 %v2385, %v2520
        %v2551 = vadd.f32 %v2386, %v2522
        %v2552 = vadd.f32 %v2387, %v2526
        %v2553 = vadd.f32 %v2388, %v2528
        %v2554 = vadd.f32 %v2389, %v2532
        %v2555 = vadd.f32 %v2390, %v2534
        %v2556 = vadd.f32 %v2391, %v2538
        %v2557 = vadd.f32 %v2392, %v2540
        %v2558 = vadd.f32 %v2393, %v2544
        %v2559 = vadd.f32 %v2394, %v2546
        %2560 = vst [vmem:[#allocation2] sm:$0xff] %v2548
        %2561 = vst [vmem:[#allocation2 + $0x8] sm:$0xff] %v2549
        %2562 = vst [vmem:[#allocation2 + $0x10] sm:$0xff] %v2550
        %2563 = vst [vmem:[#allocation2 + $0x18] sm:$0xff] %v2551
        %2564 = vst [vmem:[#allocation2 + $0x20] sm:$0xff] %v2552
        %2565 = vst [vmem:[#allocation2 + $0x28] sm:$0xff] %v2553
        %2566 = vst [vmem:[#allocation2 + $0x30] sm:$0xff] %v2554
        %2567 = vst [vmem:[#allocation2 + $0x38] sm:$0xff] %v2555
        %2568 = vst [vmem:[#allocation2 + $0x40] sm:$0xff] %v2556
        %2569 = vst [vmem:[#allocation2 + $0x48] sm:$0xff] %v2557
        %2570 = vst [vmem:[#allocation2 + $0x50] sm:$0xff] %v2558
        %2571 = vst [vmem:[#allocation2 + $0x58] sm:$0xff] %v2559
        %2572 = vrot.lane.b32.xlu0 %v541, 47
        %v2573 = vpop.permute.xlu0 %2572
        %2574 = vrot.lane.b32.xlu0 %v545, 47
        %v2575 = vpop.permute.xlu0 %2574
        %vm2576 = vcmask 384000
        %v2577 = vsel %vm2576, %v2573, %v2575
        %v2581 = vmul.f32 %v304, %v2573
        %v2582 = vmul.f32 %v305, %v2577
        %v2583 = vmul.f32 %v306, %v2575
        %v2584 = vmul.f32 %v307, %v2573
        %v2585 = vmul.f32 %v308, %v2577
        %v2586 = vmul.f32 %v309, %v2575
        %v2587 = vld [vmem:[#allocation2] sm:$0xff]
        %v2588 = vld [vmem:[#allocation2 + $0x8] sm:$0xff]
        %v2589 = vld [vmem:[#allocation2 + $0x10] sm:$0xff]
        %v2590 = vld [vmem:[#allocation2 + $0x18] sm:$0xff]
        %v2591 = vld [vmem:[#allocation2 + $0x20] sm:$0xff]
        %v2592 = vld [vmem:[#allocation2 + $0x28] sm:$0xff]
        %v2593 = vld [vmem:[#allocation2 + $0x30] sm:$0xff]
        %v2594 = vld [vmem:[#allocation2 + $0x38] sm:$0xff]
        %v2595 = vld [vmem:[#allocation2 + $0x40] sm:$0xff]
        %v2596 = vld [vmem:[#allocation2 + $0x48] sm:$0xff]
        %v2597 = vld [vmem:[#allocation2 + $0x50] sm:$0xff]
        %v2598 = vld [vmem:[#allocation2 + $0x58] sm:$0xff]
        %s2599 = scalar_lea.vmem %s2, 528
        %v2600 = vld [vmem:[%s2599] sm:$0xff]
        %v2601 = vld [vmem:[%s2599 + $0x8] sm:$0xff]
        %v2602 = vld [vmem:[%s2599 + $0x10] sm:$0xff]
        %v2603 = vld [vmem:[%s2599 + $0x18] sm:$0xff]
        %v2604 = vld [vmem:[%s2599 + $0x20] sm:$0xff]
        %v2605 = vld [vmem:[%s2599 + $0x28] sm:$0xff]
        %2612 = vrot.lane.b32.xlu0 %v2581, 81
        %v2613 = vpop.permute.xlu0 %2612
        %2614 = vrot.lane.b32.xlu0 %v2582, 81
        %v2615 = vpop.permute.xlu0 %2614
        %2616 = vrot.lane.b32.xlu0 %v2583, 81
        %v2617 = vpop.permute.xlu0 %2616
        %2618 = vrot.lane.b32.xlu0 %v2584, 81
        %v2619 = vpop.permute.xlu0 %2618
        %2620 = vrot.lane.b32.xlu0 %v2585, 81
        %v2621 = vpop.permute.xlu0 %2620
        %2622 = vrot.lane.b32.xlu0 %v2586, 81
        %v2623 = vpop.permute.xlu0 %2622
        %vm2624 = vcmask 662528
        %v2625 = vsel %vm2624, %v2613, %v2615
        %v2626 = vsel %vm2624, %v2615, %v2617
        %v2627 = vsel %vm2624, %v2619, %v2621
        %v2628 = vsel %vm2624, %v2621, %v2623
        %v2634 = vsel %vm394, %v2600, 0
        %v2637 = vsel %vm394, %v2601, 0
        %v2640 = vsel %vm394, %v2602, 0
        %v2643 = vsel %vm394, %v2603, 0
        %v2646 = vsel %vm394, %v2604, 0
        %v2649 = vsel %vm394, %v2605, 0
        %2651 = vmatprep.subr.mxu0 %v2626
        %2652 = vmatpush1.msra.mxu0 %v2625
        %2653 = vmatprep.subr.mxu0 %v2628
        %2654 = vmatpush1.msra.mxu0 %v2627
        %2655 = vmatprep.subr.mxu0 0.0
        %2656 = vmatpush1.msra.mxu0 0.0
        %2657 = vmatprep.subr.mxu0 0.0
        %2658 = vmatpush1.msra.mxu0 0.0
        %2659 = vmatprep.subr.mxu0 0.0
        %2660 = vmatpush1.msra.mxu0 0.0
        %2661 = vmatprep.subr.mxu0 0.0
        %2662 = vmatpush1.msra.mxu0 0.0
        %2663 = vmatprep.subr.mxu0 0.0
        %2664 = vmatpush1.msra.mxu0 0.0
        %2665 = vmatprep.subr.mxu0 0.0
        %2666 = vmatpush1.msra.mxu0 0.0
        %2667 = vmatprep.subr.mxu0 0.0
        %2668 = vmatpush1.msra.mxu0 0.0
        %2669 = vmatprep.subr.mxu0 0.0
        %2670 = vmatpush1.msra.mxu0 0.0
        %2671 = vmatprep.subr.mxu0 0.0
        %2672 = vmatpush1.msra.mxu0 0.0
        %2673 = vmatprep.subr.mxu0 0.0
        %2674 = vmatpush1.msra.mxu0 0.0
        %2675 = vmatprep.subr.mxu0 0.0
        %2676 = vmatpush1.msra.mxu0 0.0
        %2677 = vmatprep.subr.mxu0 0.0
        %2678 = vmatpush1.msra.mxu0 0.0
        %2679 = vmatprep.subr.mxu0 0.0
        %2680 = vmatpush1.msra.mxu0 0.0
        %2681 = vmatprep.subr.mxu0 0.0
        %2682 = vmatpush1.msra.mxu0 0.0
        %2683 = vmatprep.subr.mxu0 0.0
        %2684 = vmatpush1.msra.mxu0 0.0
        %2685 = vmatprep.subr.mxu0 0.0
        %2686 = vmatpush1.msra.mxu0 0.0
        %2687 = vmatprep.subr.mxu0 0.0
        %2688 = vmatpush1.msra.mxu0 0.0
        %2689 = vmatprep.subr.mxu0 0.0
        %2690 = vmatpush1.msra.mxu0 0.0
        %2691 = vmatprep.subr.mxu0 0.0
        %2692 = vmatpush1.msra.mxu0 0.0
        %2693 = vmatprep.subr.mxu0 0.0
        %2694 = vmatpush1.msra.mxu0 0.0
        %2695 = vmatprep.subr.mxu0 0.0
        %2696 = vmatpush1.msra.mxu0 0.0
        %2697 = vmatprep.subr.mxu0 0.0
        %2698 = vmatpush1.msra.mxu0 0.0
        %2699 = vmatprep.subr.mxu0 0.0
        %2700 = vmatpush1.msra.mxu0 0.0
        %2701 = vmatprep.subr.mxu0 0.0
        %2702 = vmatpush1.msra.mxu0 0.0
        %2703 = vmatprep.subr.mxu0 0.0
        %2704 = vmatpush1.msra.mxu0 0.0
        %2705 = vmatprep.subr.mxu0 0.0
        %2706 = vmatpush1.msra.mxu0 0.0
        %2707 = vmatprep.subr.mxu0 0.0
        %2708 = vmatpush1.msra.mxu0 0.0
        %2709 = vmatprep.subr.mxu0 0.0
        %2710 = vmatpush1.msra.mxu0 0.0
        %2711 = vmatprep.subr.mxu0 0.0
        %2712 = vmatpush1.msra.mxu0 0.0
        %2713 = vmatprep.subr.mxu0 0.0
        %2714 = vmatpush1.msra.mxu0 0.0
        %2715 = vmatprep.mubr.f32.mxu0 0.0
        %2716 = vmatmul.mubr.f32.gmra.mrb[0].mxu0 %v2634
        %v2717 = vpop.f32.mrb[0].mxu0
        %v2718 = vadd.f32 0.0, %v2717
        %v2719 = vpop.f32.mrb[0].mxu0
        %v2720 = vadd.f32 0.0, %v2719
        %2721 = vmatprep.mubr.f32.mxu0 0.0
        %2722 = vmatmul.mubr.f32.gmra.mrb[0].mxu0 %v2637
        %v2723 = vpop.f32.mrb[0].mxu0
        %v2724 = vadd.f32 0.0, %v2723
        %v2725 = vpop.f32.mrb[0].mxu0
        %v2726 = vadd.f32 0.0, %v2725
        %2727 = vmatprep.mubr.f32.mxu0 0.0
        %2728 = vmatmul.mubr.f32.gmra.mrb[0].mxu0 %v2640
        %v2729 = vpop.f32.mrb[0].mxu0
        %v2730 = vadd.f32 0.0, %v2729
        %v2731 = vpop.f32.mrb[0].mxu0
        %v2732 = vadd.f32 0.0, %v2731
        %2733 = vmatprep.mubr.f32.mxu0 0.0
        %2734 = vmatmul.mubr.f32.gmra.mrb[0].mxu0 %v2643
        %v2735 = vpop.f32.mrb[0].mxu0
        %v2736 = vadd.f32 0.0, %v2735
        %v2737 = vpop.f32.mrb[0].mxu0
        %v2738 = vadd.f32 0.0, %v2737
        %2739 = vmatprep.mubr.f32.mxu0 0.0
        %2740 = vmatmul.mubr.f32.gmra.mrb[0].mxu0 %v2646
        %v2741 = vpop.f32.mrb[0].mxu0
        %v2742 = vadd.f32 0.0, %v2741
        %v2743 = vpop.f32.mrb[0].mxu0
        %v2744 = vadd.f32 0.0, %v2743
        %2745 = vmatprep.mubr.f32.mxu0 0.0
        %2746 = vmatmul.mubr.f32.gmra.mrb[0].mxu0 %v2649
        %v2747 = vpop.f32.mrb[0].mxu0
        %v2748 = vadd.f32 0.0, %v2747
        %v2749 = vpop.f32.mrb[0].mxu0
        %v2750 = vadd.f32 0.0, %v2749
        %2751 = vdwg.mxu0
        %v2752 = vadd.f32 %v2587, %v2718
        %v2753 = vadd.f32 %v2588, %v2720
        %v2754 = vadd.f32 %v2589, %v2724
        %v2755 = vadd.f32 %v2590, %v2726
        %v2756 = vadd.f32 %v2591, %v2730
        %v2757 = vadd.f32 %v2592, %v2732
        %v2758 = vadd.f32 %v2593, %v2736
        %v2759 = vadd.f32 %v2594, %v2738
        %v2760 = vadd.f32 %v2595, %v2742
        %v2761 = vadd.f32 %v2596, %v2744
        %v2762 = vadd.f32 %v2597, %v2748
        %v2763 = vadd.f32 %v2598, %v2750
        %2764 = vst [vmem:[#allocation2] sm:$0xff] %v2752
        %2765 = vst [vmem:[#allocation2 + $0x8] sm:$0xff] %v2753
        %2766 = vst [vmem:[#allocation2 + $0x10] sm:$0xff] %v2754
        %2767 = vst [vmem:[#allocation2 + $0x18] sm:$0xff] %v2755
        %2768 = vst [vmem:[#allocation2 + $0x20] sm:$0xff] %v2756
        %2769 = vst [vmem:[#allocation2 + $0x28] sm:$0xff] %v2757
        %2770 = vst [vmem:[#allocation2 + $0x30] sm:$0xff] %v2758
        %2771 = vst [vmem:[#allocation2 + $0x38] sm:$0xff] %v2759
        %2772 = vst [vmem:[#allocation2 + $0x40] sm:$0xff] %v2760
        %2773 = vst [vmem:[#allocation2 + $0x48] sm:$0xff] %v2761
        %2774 = vst [vmem:[#allocation2 + $0x50] sm:$0xff] %v2762
        %2775 = vst [vmem:[#allocation2 + $0x58] sm:$0xff] %v2763
        %v2776 = vld [vmem:[#allocation2] sm:$0xff]
        %v2777 = vld [vmem:[#allocation2 + $0x8] sm:$0xff]
        %v2778 = vld [vmem:[#allocation2 + $0x10] sm:$0xff]
        %v2779 = vld [vmem:[#allocation2 + $0x18] sm:$0xff]
        %v2780 = vld [vmem:[#allocation2 + $0x20] sm:$0xff]
        %v2781 = vld [vmem:[#allocation2 + $0x28] sm:$0xff]
        %v2782 = vld [vmem:[#allocation2 + $0x30] sm:$0xff]
        %v2783 = vld [vmem:[#allocation2 + $0x38] sm:$0xff]
        %v2784 = vld [vmem:[#allocation2 + $0x40] sm:$0xff]
        %v2785 = vld [vmem:[#allocation2 + $0x48] sm:$0xff]
        %v2786 = vld [vmem:[#allocation2 + $0x50] sm:$0xff]
        %v2787 = vld [vmem:[#allocation2 + $0x58] sm:$0xff]
        %s2788 = scalar_lea.vmem %s2, 576
        %v2789 = vld [vmem:[%s2788] sm:$0xff]
        %v2790 = vld [vmem:[%s2788 + $0x8] sm:$0xff]
        %v2791 = vld [vmem:[%s2788 + $0x10] sm:$0xff]
        %v2792 = vld [vmem:[%s2788 + $0x18] sm:$0xff]
        %v2793 = vld [vmem:[%s2788 + $0x20] sm:$0xff]
        %v2794 = vld [vmem:[%s2788 + $0x28] sm:$0xff]
        %2795 = vrot.lane.b32.xlu0 %v304, 80
        %v2796 = vpop.permute.xlu0 %2795
        %2797 = vrot.lane.b32.xlu0 %v305, 80
        %v2798 = vpop.permute.xlu0 %2797
        %2799 = vrot.lane.b32.xlu0 %v306, 80
        %v2800 = vpop.permute.xlu0 %2799
        %2801 = vrot.lane.b32.xlu0 %v307, 80
        %v2802 = vpop.permute.xlu0 %2801
        %2803 = vrot.lane.b32.xlu0 %v308, 80
        %v2804 = vpop.permute.xlu0 %2803
        %2805 = vrot.lane.b32.xlu0 %v309, 80
        %v2806 = vpop.permute.xlu0 %2805
        %vm2807 = vcmask 654336
        %v2808 = vsel %vm2807, %v2796, %v2798
        %v2809 = vsel %vm2807, %v2798, %v2800
        %v2810 = vsel %vm2807, %v2802, %v2804
        %v2811 = vsel %vm2807, %v2804, %v2806
        %v2817 = vsel %vm394, %v2789, 0
        %v2820 = vsel %vm394, %v2790, 0
        %v2823 = vsel %vm394, %v2791, 0
        %v2826 = vsel %vm394, %v2792, 0
        %v2829 = vsel %vm394, %v2793, 0
        %v2832 = vsel %vm394, %v2794, 0
        %2834 = vmatprep.subr.mxu0 %v2809
        %2835 = vmatpush1.msra.mxu0 %v2808
        %2836 = vmatprep.subr.mxu0 %v2811
        %2837 = vmatpush1.msra.mxu0 %v2810
        %2838 = vmatprep.subr.mxu0 0.0
        %2839 = vmatpush1.msra.mxu0 0.0
        %2840 = vmatprep.subr.mxu0 0.0
        %2841 = vmatpush1.msra.mxu0 0.0
        %2842 = vmatprep.subr.mxu0 0.0
        %2843 = vmatpush1.msra.mxu0 0.0
        %2844 = vmatprep.subr.mxu0 0.0
        %2845 = vmatpush1.msra.mxu0 0.0
        %2846 = vmatprep.subr.mxu0 0.0
        %2847 = vmatpush1.msra.mxu0 0.0
        %2848 = vmatprep.subr.mxu0 0.0
        %2849 = vmatpush1.msra.mxu0 0.0
        %2850 = vmatprep.subr.mxu0 0.0
        %2851 = vmatpush1.msra.mxu0 0.0
        %2852 = vmatprep.subr.mxu0 0.0
        %2853 = vmatpush1.msra.mxu0 0.0
        %2854 = vmatprep.subr.mxu0 0.0
        %2855 = vmatpush1.msra.mxu0 0.0
        %2856 = vmatprep.subr.mxu0 0.0
        %2857 = vmatpush1.msra.mxu0 0.0
        %2858 = vmatprep.subr.mxu0 0.0
        %2859 = vmatpush1.msra.mxu0 0.0
        %2860 = vmatprep.subr.mxu0 0.0
        %2861 = vmatpush1.msra.mxu0 0.0
        %2862 = vmatprep.subr.mxu0 0.0
        %2863 = vmatpush1.msra.mxu0 0.0
        %2864 = vmatprep.subr.mxu0 0.0
        %2865 = vmatpush1.msra.mxu0 0.0
        %2866 = vmatprep.subr.mxu0 0.0
        %2867 = vmatpush1.msra.mxu0 0.0
        %2868 = vmatprep.subr.mxu0 0.0
        %2869 = vmatpush1.msra.mxu0 0.0
        %2870 = vmatprep.subr.mxu0 0.0
        %2871 = vmatpush1.msra.mxu0 0.0
        %2872 = vmatprep.subr.mxu0 0.0
        %2873 = vmatpush1.msra.mxu0 0.0
        %2874 = vmatprep.subr.mxu0 0.0
        %2875 = vmatpush1.msra.mxu0 0.0
        %2876 = vmatprep.subr.mxu0 0.0
        %2877 = vmatpush1.msra.mxu0 0.0
        %2878 = vmatprep.subr.mxu0 0.0
        %2879 = vmatpush1.msra.mxu0 0.0
        %2880 = vmatprep.subr.mxu0 0.0
        %2881 = vmatpush1.msra.mxu0 0.0
        %2882 = vmatprep.subr.mxu0 0.0
        %2883 = vmatpush1.msra.mxu0 0.0
        %2884 = vmatprep.subr.mxu0 0.0
        %2885 = vmatpush1.msra.mxu0 0.0
        %2886 = vmatprep.subr.mxu0 0.0
        %2887 = vmatpush1.msra.mxu0 0.0
        %2888 = vmatprep.subr.mxu0 0.0
        %2889 = vmatpush1.msra.mxu0 0.0
        %2890 = vmatprep.subr.mxu0 0.0
        %2891 = vmatpush1.msra.mxu0 0.0
        %2892 = vmatprep.subr.mxu0 0.0
        %2893 = vmatpush1.msra.mxu0 0.0
        %2894 = vmatprep.subr.mxu0 0.0
        %2895 = vmatpush1.msra.mxu0 0.0
        %2896 = vmatprep.subr.mxu0 0.0
        %2897 = vmatpush1.msra.mxu0 0.0
        %2898 = vmatprep.mubr.f32.mxu0 0.0
        %2899 = vmatmul.mubr.f32.gmra.mrb[0].mxu0 %v2817
        %v2900 = vpop.f32.mrb[0].mxu0
        %v2901 = vadd.f32 0.0, %v2900
        %v2902 = vpop.f32.mrb[0].mxu0
        %v2903 = vadd.f32 0.0, %v2902
        %2904 = vmatprep.mubr.f32.mxu0 0.0
        %2905 = vmatmul.mubr.f32.gmra.mrb[0].mxu0 %v2820
        %v2906 = vpop.f32.mrb[0].mxu0
        %v2907 = vadd.f32 0.0, %v2906
        %v2908 = vpop.f32.mrb[0].mxu0
        %v2909 = vadd.f32 0.0, %v2908
        %2910 = vmatprep.mubr.f32.mxu0 0.0
        %2911 = vmatmul.mubr.f32.gmra.mrb[0].mxu0 %v2823
        %v2912 = vpop.f32.mrb[0].mxu0
        %v2913 = vadd.f32 0.0, %v2912
        %v2914 = vpop.f32.mrb[0].mxu0
        %v2915 = vadd.f32 0.0, %v2914
        %2916 = vmatprep.mubr.f32.mxu0 0.0
        %2917 = vmatmul.mubr.f32.gmra.mrb[0].mxu0 %v2826
        %v2918 = vpop.f32.mrb[0].mxu0
        %v2919 = vadd.f32 0.0, %v2918
        %v2920 = vpop.f32.mrb[0].mxu0
        %v2921 = vadd.f32 0.0, %v2920
        %2922 = vmatprep.mubr.f32.mxu0 0.0
        %2923 = vmatmul.mubr.f32.gmra.mrb[0].mxu0 %v2829
        %v2924 = vpop.f32.mrb[0].mxu0
        %v2925 = vadd.f32 0.0, %v2924
        %v2926 = vpop.f32.mrb[0].mxu0
        %v2927 = vadd.f32 0.0, %v2926
        %2928 = vmatprep.mubr.f32.mxu0 0.0
        %2929 = vmatmul.mubr.f32.gmra.mrb[0].mxu0 %v2832
        %v2930 = vpop.f32.mrb[0].mxu0
        %v2931 = vadd.f32 0.0, %v2930
        %v2932 = vpop.f32.mrb[0].mxu0
        %v2933 = vadd.f32 0.0, %v2932
        %2934 = vdwg.mxu0
        %v2935 = vadd.f32 %v2776, %v2901
        %v2936 = vadd.f32 %v2777, %v2903
        %v2937 = vadd.f32 %v2778, %v2907
        %v2938 = vadd.f32 %v2779, %v2909
        %v2939 = vadd.f32 %v2780, %v2913
        %v2940 = vadd.f32 %v2781, %v2915
        %v2941 = vadd.f32 %v2782, %v2919
        %v2942 = vadd.f32 %v2783, %v2921
        %v2943 = vadd.f32 %v2784, %v2925
        %v2944 = vadd.f32 %v2785, %v2927
        %v2945 = vadd.f32 %v2786, %v2931
        %v2946 = vadd.f32 %v2787, %v2933
        %2947 = vst [vmem:[#allocation2] sm:$0xff] %v2935
        %2948 = vst [vmem:[#allocation2 + $0x8] sm:$0xff] %v2936
        %2949 = vst [vmem:[#allocation2 + $0x10] sm:$0xff] %v2937
        %2950 = vst [vmem:[#allocation2 + $0x18] sm:$0xff] %v2938
        %2951 = vst [vmem:[#allocation2 + $0x20] sm:$0xff] %v2939
        %2952 = vst [vmem:[#allocation2 + $0x28] sm:$0xff] %v2940
        %2953 = vst [vmem:[#allocation2 + $0x30] sm:$0xff] %v2941
        %2954 = vst [vmem:[#allocation2 + $0x38] sm:$0xff] %v2942
        %2955 = vst [vmem:[#allocation2 + $0x40] sm:$0xff] %v2943
        %2956 = vst [vmem:[#allocation2 + $0x48] sm:$0xff] %v2944
        %2957 = vst [vmem:[#allocation2 + $0x50] sm:$0xff] %v2945
        %2958 = vst [vmem:[#allocation2 + $0x58] sm:$0xff] %v2946
        %2959 = vrot.lane.b32.xlu0 %v944, 49
        %v2960 = vpop.permute.xlu0 %2959
        %2961 = vrot.lane.b32.xlu0 %v948, 49
        %v2962 = vpop.permute.xlu0 %2961
        %vm2963 = vcmask 400384
        %v2964 = vsel %vm2963, %v2960, %v2962
        %v2968 = vmul.f32 %v304, %v2960
        %v2969 = vmul.f32 %v305, %v2964
        %v2970 = vmul.f32 %v306, %v2962
        %v2971 = vmul.f32 %v307, %v2960
        %v2972 = vmul.f32 %v308, %v2964
        %v2973 = vmul.f32 %v309, %v2962
        %v2974 = vld [vmem:[#allocation2] sm:$0xff]
        %v2975 = vld [vmem:[#allocation2 + $0x8] sm:$0xff]
        %v2976 = vld [vmem:[#allocation2 + $0x10] sm:$0xff]
        %v2977 = vld [vmem:[#allocation2 + $0x18] sm:$0xff]
        %v2978 = vld [vmem:[#allocation2 + $0x20] sm:$0xff]
        %v2979 = vld [vmem:[#allocation2 + $0x28] sm:$0xff]
        %v2980 = vld [vmem:[#allocation2 + $0x30] sm:$0xff]
        %v2981 = vld [vmem:[#allocation2 + $0x38] sm:$0xff]
        %v2982 = vld [vmem:[#allocation2 + $0x40] sm:$0xff]
        %v2983 = vld [vmem:[#allocation2 + $0x48] sm:$0xff]
        %v2984 = vld [vmem:[#allocation2 + $0x50] sm:$0xff]
        %v2985 = vld [vmem:[#allocation2 + $0x58] sm:$0xff]
        %s2986 = scalar_lea.vmem %s2, 624
        %v2987 = vld [vmem:[%s2986] sm:$0xff]
        %v2988 = vld [vmem:[%s2986 + $0x8] sm:$0xff]
        %v2989 = vld [vmem:[%s2986 + $0x10] sm:$0xff]
        %v2990 = vld [vmem:[%s2986 + $0x18] sm:$0xff]
        %v2991 = vld [vmem:[%s2986 + $0x20] sm:$0xff]
        %v2992 = vld [vmem:[%s2986 + $0x28] sm:$0xff]
        %2999 = vrot.lane.b32.xlu0 %v2968, 79
        %v3000 = vpop.permute.xlu0 %2999
        %3001 = vrot.lane.b32.xlu0 %v2969, 79
        %v3002 = vpop.permute.xlu0 %3001
        %3003 = vrot.lane.b32.xlu0 %v2970, 79
        %v3004 = vpop.permute.xlu0 %3003
        %3005 = vrot.lane.b32.xlu0 %v2971, 79
        %v3006 = vpop.permute.xlu0 %3005
        %3007 = vrot.lane.b32.xlu0 %v2972, 79
        %v3008 = vpop.permute.xlu0 %3007
        %3009 = vrot.lane.b32.xlu0 %v2973, 79
        %v3010 = vpop.permute.xlu0 %3009
        %vm3011 = vcmask 646144
        %v3012 = vsel %vm3011, %v3000, %v3002
        %v3013 = vsel %vm3011, %v3002, %v3004
        %v3014 = vsel %vm3011, %v3006, %v3008
        %v3015 = vsel %vm3011, %v3008, %v3010
        %v3021 = vsel %vm394, %v2987, 0
        %v3024 = vsel %vm394, %v2988, 0
        %v3027 = vsel %vm394, %v2989, 0
        %v3030 = vsel %vm394, %v2990, 0
        %v3033 = vsel %vm394, %v2991, 0
        %v3036 = vsel %vm394, %v2992, 0
        %3038 = vmatprep.subr.mxu0 %v3013
        %3039 = vmatpush1.msra.mxu0 %v3012
        %3040 = vmatprep.subr.mxu0 %v3015
        %3041 = vmatpush1.msra.mxu0 %v3014
        %3042 = vmatprep.subr.mxu0 0.0
        %3043 = vmatpush1.msra.mxu0 0.0
        %3044 = vmatprep.subr.mxu0 0.0
        %3045 = vmatpush1.msra.mxu0 0.0
        %3046 = vmatprep.subr.mxu0 0.0
        %3047 = vmatpush1.msra.mxu0 0.0
        %3048 = vmatprep.subr.mxu0 0.0
        %3049 = vmatpush1.msra.mxu0 0.0
        %3050 = vmatprep.subr.mxu0 0.0
        %3051 = vmatpush1.msra.mxu0 0.0
        %3052 = vmatprep.subr.mxu0 0.0
        %3053 = vmatpush1.msra.mxu0 0.0
        %3054 = vmatprep.subr.mxu0 0.0
        %3055 = vmatpush1.msra.mxu0 0.0
        %3056 = vmatprep.subr.mxu0 0.0
        %3057 = vmatpush1.msra.mxu0 0.0
        %3058 = vmatprep.subr.mxu0 0.0
        %3059 = vmatpush1.msra.mxu0 0.0
        %3060 = vmatprep.subr.mxu0 0.0
        %3061 = vmatpush1.msra.mxu0 0.0
        %3062 = vmatprep.subr.mxu0 0.0
        %3063 = vmatpush1.msra.mxu0 0.0
        %3064 = vmatprep.subr.mxu0 0.0
        %3065 = vmatpush1.msra.mxu0 0.0
        %3066 = vmatprep.subr.mxu0 0.0
        %3067 = vmatpush1.msra.mxu0 0.0
        %3068 = vmatprep.subr.mxu0 0.0
        %3069 = vmatpush1.msra.mxu0 0.0
        %3070 = vmatprep.subr.mxu0 0.0
        %3071 = vmatpush1.msra.mxu0 0.0
        %3072 = vmatprep.subr.mxu0 0.0
        %3073 = vmatpush1.msra.mxu0 0.0
        %3074 = vmatprep.subr.mxu0 0.0
        %3075 = vmatpush1.msra.mxu0 0.0
        %3076 = vmatprep.subr.mxu0 0.0
        %3077 = vmatpush1.msra.mxu0 0.0
        %3078 = vmatprep.subr.mxu0 0.0
        %3079 = vmatpush1.msra.mxu0 0.0
        %3080 = vmatprep.subr.mxu0 0.0
        %3081 = vmatpush1.msra.mxu0 0.0
        %3082 = vmatprep.subr.mxu0 0.0
        %3083 = vmatpush1.msra.mxu0 0.0
        %3084 = vmatprep.subr.mxu0 0.0
        %3085 = vmatpush1.msra.mxu0 0.0
        %3086 = vmatprep.subr.mxu0 0.0
        %3087 = vmatpush1.msra.mxu0 0.0
        %3088 = vmatprep.subr.mxu0 0.0
        %3089 = vmatpush1.msra.mxu0 0.0
        %3090 = vmatprep.subr.mxu0 0.0
        %3091 = vmatpush1.msra.mxu0 0.0
        %3092 = vmatprep.subr.mxu0 0.0
        %3093 = vmatpush1.msra.mxu0 0.0
        %3094 = vmatprep.subr.mxu0 0.0
        %3095 = vmatpush1.msra.mxu0 0.0
        %3096 = vmatprep.subr.mxu0 0.0
        %3097 = vmatpush1.msra.mxu0 0.0
        %3098 = vmatprep.subr.mxu0 0.0
        %3099 = vmatpush1.msra.mxu0 0.0
        %3100 = vmatprep.subr.mxu0 0.0
        %3101 = vmatpush1.msra.mxu0 0.0
        %3102 = vmatprep.mubr.f32.mxu0 0.0
        %3103 = vmatmul.mubr.f32.gmra.mrb[0].mxu0 %v3021
        %v3104 = vpop.f32.mrb[0].mxu0
        %v3105 = vadd.f32 0.0, %v3104
        %v3106 = vpop.f32.mrb[0].mxu0
        %v3107 = vadd.f32 0.0, %v3106
        %3108 = vmatprep.mubr.f32.mxu0 0.0
        %3109 = vmatmul.mubr.f32.gmra.mrb[0].mxu0 %v3024
        %v3110 = vpop.f32.mrb[0].mxu0
        %v3111 = vadd.f32 0.0, %v3110
        %v3112 = vpop.f32.mrb[0].mxu0
        %v3113 = vadd.f32 0.0, %v3112
        %3114 = vmatprep.mubr.f32.mxu0 0.0
        %3115 = vmatmul.mubr.f32.gmra.mrb[0].mxu0 %v3027
        %v3116 = vpop.f32.mrb[0].mxu0
        %v3117 = vadd.f32 0.0, %v3116
        %v3118 = vpop.f32.mrb[0].mxu0
        %v3119 = vadd.f32 0.0, %v3118
        %3120 = vmatprep.mubr.f32.mxu0 0.0
        %3121 = vmatmul.mubr.f32.gmra.mrb[0].mxu0 %v3030
        %v3122 = vpop.f32.mrb[0].mxu0
        %v3123 = vadd.f32 0.0, %v3122
        %v3124 = vpop.f32.mrb[0].mxu0
        %v3125 = vadd.f32 0.0, %v3124
        %3126 = vmatprep.mubr.f32.mxu0 0.0
        %3127 = vmatmul.mubr.f32.gmra.mrb[0].mxu0 %v3033
        %v3128 = vpop.f32.mrb[0].mxu0
        %v3129 = vadd.f32 0.0, %v3128
        %v3130 = vpop.f32.mrb[0].mxu0
        %v3131 = vadd.f32 0.0, %v3130
        %3132 = vmatprep.mubr.f32.mxu0 0.0
        %3133 = vmatmul.mubr.f32.gmra.mrb[0].mxu0 %v3036
        %v3134 = vpop.f32.mrb[0].mxu0
        %v3135 = vadd.f32 0.0, %v3134
        %v3136 = vpop.f32.mrb[0].mxu0
        %v3137 = vadd.f32 0.0, %v3136
        %3138 = vdwg.mxu0
        %v3139 = vadd.f32 %v2974, %v3105
        %v3140 = vadd.f32 %v2975, %v3107
        %v3141 = vadd.f32 %v2976, %v3111
        %v3142 = vadd.f32 %v2977, %v3113
        %v3143 = vadd.f32 %v2978, %v3117
        %v3144 = vadd.f32 %v2979, %v3119
        %v3145 = vadd.f32 %v2980, %v3123
        %v3146 = vadd.f32 %v2981, %v3125
        %v3147 = vadd.f32 %v2982, %v3129
        %v3148 = vadd.f32 %v2983, %v3131
        %v3149 = vadd.f32 %v2984, %v3135
        %v3150 = vadd.f32 %v2985, %v3137
        %3151 = vst [vmem:[#allocation2] sm:$0xff] %v3139
        %3152 = vst [vmem:[#allocation2 + $0x8] sm:$0xff] %v3140
        %3153 = vst [vmem:[#allocation2 + $0x10] sm:$0xff] %v3141
        %3154 = vst [vmem:[#allocation2 + $0x18] sm:$0xff] %v3142
        %3155 = vst [vmem:[#allocation2 + $0x20] sm:$0xff] %v3143
        %3156 = vst [vmem:[#allocation2 + $0x28] sm:$0xff] %v3144
        %3157 = vst [vmem:[#allocation2 + $0x30] sm:$0xff] %v3145
        %3158 = vst [vmem:[#allocation2 + $0x38] sm:$0xff] %v3146
        %3159 = vst [vmem:[#allocation2 + $0x40] sm:$0xff] %v3147
        %3160 = vst [vmem:[#allocation2 + $0x48] sm:$0xff] %v3148
        %3161 = vst [vmem:[#allocation2 + $0x50] sm:$0xff] %v3149
        %3162 = vst [vmem:[#allocation2 + $0x58] sm:$0xff] %v3150
        %3163 = vrot.lane.b32.xlu0 %v1158, 50
        %v3164 = vpop.permute.xlu0 %3163
        %3165 = vrot.lane.b32.xlu0 %v1162, 50
        %v3166 = vpop.permute.xlu0 %3165
        %vm3167 = vcmask 408576
        %v3168 = vsel %vm3167, %v3164, %v3166
        %v3172 = vmul.f32 %v304, %v3164
        %v3173 = vmul.f32 %v305, %v3168
        %v3174 = vmul.f32 %v306, %v3166
        %v3175 = vmul.f32 %v307, %v3164
        %v3176 = vmul.f32 %v308, %v3168
        %v3177 = vmul.f32 %v309, %v3166
        %v3178 = vld [vmem:[#allocation2] sm:$0xff]
        %v3179 = vld [vmem:[#allocation2 + $0x8] sm:$0xff]
        %v3180 = vld [vmem:[#allocation2 + $0x10] sm:$0xff]
        %v3181 = vld [vmem:[#allocation2 + $0x18] sm:$0xff]
        %v3182 = vld [vmem:[#allocation2 + $0x20] sm:$0xff]
        %v3183 = vld [vmem:[#allocation2 + $0x28] sm:$0xff]
        %v3184 = vld [vmem:[#allocation2 + $0x30] sm:$0xff]
        %v3185 = vld [vmem:[#allocation2 + $0x38] sm:$0xff]
        %v3186 = vld [vmem:[#allocation2 + $0x40] sm:$0xff]
        %v3187 = vld [vmem:[#allocation2 + $0x48] sm:$0xff]
        %v3188 = vld [vmem:[#allocation2 + $0x50] sm:$0xff]
        %v3189 = vld [vmem:[#allocation2 + $0x58] sm:$0xff]
        %s3190 = scalar_lea.vmem %s2, 672
        %v3191 = vld [vmem:[%s3190] sm:$0xff]
        %v3192 = vld [vmem:[%s3190 + $0x8] sm:$0xff]
        %v3193 = vld [vmem:[%s3190 + $0x10] sm:$0xff]
        %v3194 = vld [vmem:[%s3190 + $0x18] sm:$0xff]
        %v3195 = vld [vmem:[%s3190 + $0x20] sm:$0xff]
        %v3196 = vld [vmem:[%s3190 + $0x28] sm:$0xff]
        %3203 = vrot.lane.b32.xlu0 %v3172, 78
        %v3204 = vpop.permute.xlu0 %3203
        %3205 = vrot.lane.b32.xlu0 %v3173, 78
        %v3206 = vpop.permute.xlu0 %3205
        %3207 = vrot.lane.b32.xlu0 %v3174, 78
        %v3208 = vpop.permute.xlu0 %3207
        %3209 = vrot.lane.b32.xlu0 %v3175, 78
        %v3210 = vpop.permute.xlu0 %3209
        %3211 = vrot.lane.b32.xlu0 %v3176, 78
        %v3212 = vpop.permute.xlu0 %3211
        %3213 = vrot.lane.b32.xlu0 %v3177, 78
        %v3214 = vpop.permute.xlu0 %3213
        %vm3215 = vcmask 637952
        %v3216 = vsel %vm3215, %v3204, %v3206
        %v3217 = vsel %vm3215, %v3206, %v3208
        %v3218 = vsel %vm3215, %v3210, %v3212
        %v3219 = vsel %vm3215, %v3212, %v3214
        %v3225 = vsel %vm394, %v3191, 0
        %v3228 = vsel %vm394, %v3192, 0
        %v3231 = vsel %vm394, %v3193, 0
        %v3234 = vsel %vm394, %v3194, 0
        %v3237 = vsel %vm394, %v3195, 0
        %v3240 = vsel %vm394, %v3196, 0
        %3242 = vmatprep.subr.mxu0 %v3217
        %3243 = vmatpush1.msra.mxu0 %v3216
        %3244 = vmatprep.subr.mxu0 %v3219
        %3245 = vmatpush1.msra.mxu0 %v3218
        %3246 = vmatprep.subr.mxu0 0.0
        %3247 = vmatpush1.msra.mxu0 0.0
        %3248 = vmatprep.subr.mxu0 0.0
        %3249 = vmatpush1.msra.mxu0 0.0
        %3250 = vmatprep.subr.mxu0 0.0
        %3251 = vmatpush1.msra.mxu0 0.0
        %3252 = vmatprep.subr.mxu0 0.0
        %3253 = vmatpush1.msra.mxu0 0.0
        %3254 = vmatprep.subr.mxu0 0.0
        %3255 = vmatpush1.msra.mxu0 0.0
        %3256 = vmatprep.subr.mxu0 0.0
        %3257 = vmatpush1.msra.mxu0 0.0
        %3258 = vmatprep.subr.mxu0 0.0
        %3259 = vmatpush1.msra.mxu0 0.0
        %3260 = vmatprep.subr.mxu0 0.0
        %3261 = vmatpush1.msra.mxu0 0.0
        %3262 = vmatprep.subr.mxu0 0.0
        %3263 = vmatpush1.msra.mxu0 0.0
        %3264 = vmatprep.subr.mxu0 0.0
        %3265 = vmatpush1.msra.mxu0 0.0
        %3266 = vmatprep.subr.mxu0 0.0
        %3267 = vmatpush1.msra.mxu0 0.0
        %3268 = vmatprep.subr.mxu0 0.0
        %3269 = vmatpush1.msra.mxu0 0.0
        %3270 = vmatprep.subr.mxu0 0.0
        %3271 = vmatpush1.msra.mxu0 0.0
        %3272 = vmatprep.subr.mxu0 0.0
        %3273 = vmatpush1.msra.mxu0 0.0
        %3274 = vmatprep.subr.mxu0 0.0
        %3275 = vmatpush1.msra.mxu0 0.0
        %3276 = vmatprep.subr.mxu0 0.0
        %3277 = vmatpush1.msra.mxu0 0.0
        %3278 = vmatprep.subr.mxu0 0.0
        %3279 = vmatpush1.msra.mxu0 0.0
        %3280 = vmatprep.subr.mxu0 0.0
        %3281 = vmatpush1.msra.mxu0 0.0
        %3282 = vmatprep.subr.mxu0 0.0
        %3283 = vmatpush1.msra.mxu0 0.0
        %3284 = vmatprep.subr.mxu0 0.0
        %3285 = vmatpush1.msra.mxu0 0.0
        %3286 = vmatprep.subr.mxu0 0.0
        %3287 = vmatpush1.msra.mxu0 0.0
        %3288 = vmatprep.subr.mxu0 0.0
        %3289 = vmatpush1.msra.mxu0 0.0
        %3290 = vmatprep.subr.mxu0 0.0
        %3291 = vmatpush1.msra.mxu0 0.0
        %3292 = vmatprep.subr.mxu0 0.0
        %3293 = vmatpush1.msra.mxu0 0.0
        %3294 = vmatprep.subr.mxu0 0.0
        %3295 = vmatpush1.msra.mxu0 0.0
        %3296 = vmatprep.subr.mxu0 0.0
        %3297 = vmatpush1.msra.mxu0 0.0
        %3298 = vmatprep.subr.mxu0 0.0
        %3299 = vmatpush1.msra.mxu0 0.0
        %3300 = vmatprep.subr.mxu0 0.0
        %3301 = vmatpush1.msra.mxu0 0.0
        %3302 = vmatprep.subr.mxu0 0.0
        %3303 = vmatpush1.msra.mxu0 0.0
        %3304 = vmatprep.subr.mxu0 0.0
        %3305 = vmatpush1.msra.mxu0 0.0
        %3306 = vmatprep.mubr.f32.mxu0 0.0
        %3307 = vmatmul.mubr.f32.gmra.mrb[0].mxu0 %v3225
        %v3308 = vpop.f32.mrb[0].mxu0
        %v3309 = vadd.f32 0.0, %v3308
        %v3310 = vpop.f32.mrb[0].mxu0
        %v3311 = vadd.f32 0.0, %v3310
        %3312 = vmatprep.mubr.f32.mxu0 0.0
        %3313 = vmatmul.mubr.f32.gmra.mrb[0].mxu0 %v3228
        %v3314 = vpop.f32.mrb[0].mxu0
        %v3315 = vadd.f32 0.0, %v3314
        %v3316 = vpop.f32.mrb[0].mxu0
        %v3317 = vadd.f32 0.0, %v3316
        %3318 = vmatprep.mubr.f32.mxu0 0.0
        %3319 = vmatmul.mubr.f32.gmra.mrb[0].mxu0 %v3231
        %v3320 = vpop.f32.mrb[0].mxu0
        %v3321 = vadd.f32 0.0, %v3320
        %v3322 = vpop.f32.mrb[0].mxu0
        %v3323 = vadd.f32 0.0, %v3322
        %3324 = vmatprep.mubr.f32.mxu0 0.0
        %3325 = vmatmul.mubr.f32.gmra.mrb[0].mxu0 %v3234
        %v3326 = vpop.f32.mrb[0].mxu0
        %v3327 = vadd.f32 0.0, %v3326
        %v3328 = vpop.f32.mrb[0].mxu0
        %v3329 = vadd.f32 0.0, %v3328
        %3330 = vmatprep.mubr.f32.mxu0 0.0
        %3331 = vmatmul.mubr.f32.gmra.mrb[0].mxu0 %v3237
        %v3332 = vpop.f32.mrb[0].mxu0
        %v3333 = vadd.f32 0.0, %v3332
        %v3334 = vpop.f32.mrb[0].mxu0
        %v3335 = vadd.f32 0.0, %v3334
        %3336 = vmatprep.mubr.f32.mxu0 0.0
        %3337 = vmatmul.mubr.f32.gmra.mrb[0].mxu0 %v3240
        %v3338 = vpop.f32.mrb[0].mxu0
        %v3339 = vadd.f32 0.0, %v3338
        %v3340 = vpop.f32.mrb[0].mxu0
        %v3341 = vadd.f32 0.0, %v3340
        %3342 = vdwg.mxu0
        %v3343 = vadd.f32 %v3178, %v3309
        %v3344 = vadd.f32 %v3179, %v3311
        %v3345 = vadd.f32 %v3180, %v3315
        %v3346 = vadd.f32 %v3181, %v3317
        %v3347 = vadd.f32 %v3182, %v3321
        %v3348 = vadd.f32 %v3183, %v3323
        %v3349 = vadd.f32 %v3184, %v3327
        %v3350 = vadd.f32 %v3185, %v3329
        %v3351 = vadd.f32 %v3186, %v3333
        %v3352 = vadd.f32 %v3187, %v3335
        %v3353 = vadd.f32 %v3188, %v3339
        %v3354 = vadd.f32 %v3189, %v3341
        %3355 = vst [vmem:[#allocation2] sm:$0xff] %v3343
        %3356 = vst [vmem:[#allocation2 + $0x8] sm:$0xff] %v3344
        %3357 = vst [vmem:[#allocation2 + $0x10] sm:$0xff] %v3345
        %3358 = vst [vmem:[#allocation2 + $0x18] sm:$0xff] %v3346
        %3359 = vst [vmem:[#allocation2 + $0x20] sm:$0xff] %v3347
        %3360 = vst [vmem:[#allocation2 + $0x28] sm:$0xff] %v3348
        %3361 = vst [vmem:[#allocation2 + $0x30] sm:$0xff] %v3349
        %3362 = vst [vmem:[#allocation2 + $0x38] sm:$0xff] %v3350
        %3363 = vst [vmem:[#allocation2 + $0x40] sm:$0xff] %v3351
        %3364 = vst [vmem:[#allocation2 + $0x48] sm:$0xff] %v3352
        %3365 = vst [vmem:[#allocation2 + $0x50] sm:$0xff] %v3353
        %3366 = vst [vmem:[#allocation2 + $0x58] sm:$0xff] %v3354
        %3367 = vrot.lane.b32.xlu0 %v327, 62
        %v3368 = vpop.permute.xlu0 %3367
        %3369 = vrot.lane.b32.xlu0 %v331, 62
        %v3370 = vpop.permute.xlu0 %3369
        %vm3371 = vcmask 506880
        %v3372 = vsel %vm3371, %v3368, %v3370
        %v3376 = vmul.f32 %v304, %v3368
        %v3377 = vmul.f32 %v305, %v3372
        %v3378 = vmul.f32 %v306, %v3370
        %v3379 = vmul.f32 %v307, %v3368
        %v3380 = vmul.f32 %v308, %v3372
        %v3381 = vmul.f32 %v309, %v3370
        %v3382 = vld [vmem:[#allocation2] sm:$0xff]
        %v3383 = vld [vmem:[#allocation2 + $0x8] sm:$0xff]
        %v3384 = vld [vmem:[#allocation2 + $0x10] sm:$0xff]
        %v3385 = vld [vmem:[#allocation2 + $0x18] sm:$0xff]
        %v3386 = vld [vmem:[#allocation2 + $0x20] sm:$0xff]
        %v3387 = vld [vmem:[#allocation2 + $0x28] sm:$0xff]
        %v3388 = vld [vmem:[#allocation2 + $0x30] sm:$0xff]
        %v3389 = vld [vmem:[#allocation2 + $0x38] sm:$0xff]
        %v3390 = vld [vmem:[#allocation2 + $0x40] sm:$0xff]
        %v3391 = vld [vmem:[#allocation2 + $0x48] sm:$0xff]
        %v3392 = vld [vmem:[#allocation2 + $0x50] sm:$0xff]
        %v3393 = vld [vmem:[#allocation2 + $0x58] sm:$0xff]
        %s3394 = scalar_lea.vmem %s2, 720
        %v3395 = vld [vmem:[%s3394] sm:$0xff]
        %v3396 = vld [vmem:[%s3394 + $0x8] sm:$0xff]
        %v3397 = vld [vmem:[%s3394 + $0x10] sm:$0xff]
        %v3398 = vld [vmem:[%s3394 + $0x18] sm:$0xff]
        %v3399 = vld [vmem:[%s3394 + $0x20] sm:$0xff]
        %v3400 = vld [vmem:[%s3394 + $0x28] sm:$0xff]
        %3407 = vrot.lane.b32.xlu0 %v3376, 66
        %v3408 = vpop.permute.xlu0 %3407
        %3409 = vrot.lane.b32.xlu0 %v3377, 66
        %v3410 = vpop.permute.xlu0 %3409
        %3411 = vrot.lane.b32.xlu0 %v3378, 66
        %v3412 = vpop.permute.xlu0 %3411
        %3413 = vrot.lane.b32.xlu0 %v3379, 66
        %v3414 = vpop.permute.xlu0 %3413
        %3415 = vrot.lane.b32.xlu0 %v3380, 66
        %v3416 = vpop.permute.xlu0 %3415
        %3417 = vrot.lane.b32.xlu0 %v3381, 66
        %v3418 = vpop.permute.xlu0 %3417
        %vm3419 = vcmask 539648
        %v3420 = vsel %vm3419, %v3408, %v3410
        %v3421 = vsel %vm3419, %v3410, %v3412
        %v3422 = vsel %vm3419, %v3414, %v3416
        %v3423 = vsel %vm3419, %v3416, %v3418
        %v3429 = vsel %vm394, %v3395, 0
        %v3432 = vsel %vm394, %v3396, 0
        %v3435 = vsel %vm394, %v3397, 0
        %v3438 = vsel %vm394, %v3398, 0
        %v3441 = vsel %vm394, %v3399, 0
        %v3444 = vsel %vm394, %v3400, 0
        %3446 = vmatprep.subr.mxu0 %v3421
        %3447 = vmatpush1.msra.mxu0 %v3420
        %3448 = vmatprep.subr.mxu0 %v3423
        %3449 = vmatpush1.msra.mxu0 %v3422
        %3450 = vmatprep.subr.mxu0 0.0
        %3451 = vmatpush1.msra.mxu0 0.0
        %3452 = vmatprep.subr.mxu0 0.0
        %3453 = vmatpush1.msra.mxu0 0.0
        %3454 = vmatprep.subr.mxu0 0.0
        %3455 = vmatpush1.msra.mxu0 0.0
        %3456 = vmatprep.subr.mxu0 0.0
        %3457 = vmatpush1.msra.mxu0 0.0
        %3458 = vmatprep.subr.mxu0 0.0
        %3459 = vmatpush1.msra.mxu0 0.0
        %3460 = vmatprep.subr.mxu0 0.0
        %3461 = vmatpush1.msra.mxu0 0.0
        %3462 = vmatprep.subr.mxu0 0.0
        %3463 = vmatpush1.msra.mxu0 0.0
        %3464 = vmatprep.subr.mxu0 0.0
        %3465 = vmatpush1.msra.mxu0 0.0
        %3466 = vmatprep.subr.mxu0 0.0
        %3467 = vmatpush1.msra.mxu0 0.0
        %3468 = vmatprep.subr.mxu0 0.0
        %3469 = vmatpush1.msra.mxu0 0.0
        %3470 = vmatprep.subr.mxu0 0.0
        %3471 = vmatpush1.msra.mxu0 0.0
        %3472 = vmatprep.subr.mxu0 0.0
        %3473 = vmatpush1.msra.mxu0 0.0
        %3474 = vmatprep.subr.mxu0 0.0
        %3475 = vmatpush1.msra.mxu0 0.0
        %3476 = vmatprep.subr.mxu0 0.0
        %3477 = vmatpush1.msra.mxu0 0.0
        %3478 = vmatprep.subr.mxu0 0.0
        %3479 = vmatpush1.msra.mxu0 0.0
        %3480 = vmatprep.subr.mxu0 0.0
        %3481 = vmatpush1.msra.mxu0 0.0
        %3482 = vmatprep.subr.mxu0 0.0
        %3483 = vmatpush1.msra.mxu0 0.0
        %3484 = vmatprep.subr.mxu0 0.0
        %3485 = vmatpush1.msra.mxu0 0.0
        %3486 = vmatprep.subr.mxu0 0.0
        %3487 = vmatpush1.msra.mxu0 0.0
        %3488 = vmatprep.subr.mxu0 0.0
        %3489 = vmatpush1.msra.mxu0 0.0
        %3490 = vmatprep.subr.mxu0 0.0
        %3491 = vmatpush1.msra.mxu0 0.0
        %3492 = vmatprep.subr.mxu0 0.0
        %3493 = vmatpush1.msra.mxu0 0.0
        %3494 = vmatprep.subr.mxu0 0.0
        %3495 = vmatpush1.msra.mxu0 0.0
        %3496 = vmatprep.subr.mxu0 0.0
        %3497 = vmatpush1.msra.mxu0 0.0
        %3498 = vmatprep.subr.mxu0 0.0
        %3499 = vmatpush1.msra.mxu0 0.0
        %3500 = vmatprep.subr.mxu0 0.0
        %3501 = vmatpush1.msra.mxu0 0.0
        %3502 = vmatprep.subr.mxu0 0.0
        %3503 = vmatpush1.msra.mxu0 0.0
        %3504 = vmatprep.subr.mxu0 0.0
        %3505 = vmatpush1.msra.mxu0 0.0
        %3506 = vmatprep.subr.mxu0 0.0
        %3507 = vmatpush1.msra.mxu0 0.0
        %3508 = vmatprep.subr.mxu0 0.0
        %3509 = vmatpush1.msra.mxu0 0.0
        %3510 = vmatprep.mubr.f32.mxu0 0.0
        %3511 = vmatmul.mubr.f32.gmra.mrb[0].mxu0 %v3429
        %v3512 = vpop.f32.mrb[0].mxu0
        %v3513 = vadd.f32 0.0, %v3512
        %v3514 = vpop.f32.mrb[0].mxu0
        %v3515 = vadd.f32 0.0, %v3514
        %3516 = vmatprep.mubr.f32.mxu0 0.0
        %3517 = vmatmul.mubr.f32.gmra.mrb[0].mxu0 %v3432
        %v3518 = vpop.f32.mrb[0].mxu0
        %v3519 = vadd.f32 0.0, %v3518
        %v3520 = vpop.f32.mrb[0].mxu0
        %v3521 = vadd.f32 0.0, %v3520
        %3522 = vmatprep.mubr.f32.mxu0 0.0
        %3523 = vmatmul.mubr.f32.gmra.mrb[0].mxu0 %v3435
        %v3524 = vpop.f32.mrb[0].mxu0
        %v3525 = vadd.f32 0.0, %v3524
        %v3526 = vpop.f32.mrb[0].mxu0
        %v3527 = vadd.f32 0.0, %v3526
        %3528 = vmatprep.mubr.f32.mxu0 0.0
        %3529 = vmatmul.mubr.f32.gmra.mrb[0].mxu0 %v3438
        %v3530 = vpop.f32.mrb[0].mxu0
        %v3531 = vadd.f32 0.0, %v3530
        %v3532 = vpop.f32.mrb[0].mxu0
        %v3533 = vadd.f32 0.0, %v3532
        %3534 = vmatprep.mubr.f32.mxu0 0.0
        %3535 = vmatmul.mubr.f32.gmra.mrb[0].mxu0 %v3441
        %v3536 = vpop.f32.mrb[0].mxu0
        %v3537 = vadd.f32 0.0, %v3536
        %v3538 = vpop.f32.mrb[0].mxu0
        %v3539 = vadd.f32 0.0, %v3538
        %3540 = vmatprep.mubr.f32.mxu0 0.0
        %3541 = vmatmul.mubr.f32.gmra.mrb[0].mxu0 %v3444
        %v3542 = vpop.f32.mrb[0].mxu0
        %v3543 = vadd.f32 0.0, %v3542
        %v3544 = vpop.f32.mrb[0].mxu0
        %v3545 = vadd.f32 0.0, %v3544
        %3546 = vdwg.mxu0
        %v3547 = vadd.f32 %v3382, %v3513
        %v3548 = vadd.f32 %v3383, %v3515
        %v3549 = vadd.f32 %v3384, %v3519
        %v3550 = vadd.f32 %v3385, %v3521
        %v3551 = vadd.f32 %v3386, %v3525
        %v3552 = vadd.f32 %v3387, %v3527
        %v3553 = vadd.f32 %v3388, %v3531
        %v3554 = vadd.f32 %v3389, %v3533
        %v3555 = vadd.f32 %v3390, %v3537
        %v3556 = vadd.f32 %v3391, %v3539
        %v3557 = vadd.f32 %v3392, %v3543
        %v3558 = vadd.f32 %v3393, %v3545
        %3559 = vst [vmem:[#allocation2] sm:$0xff] %v3547
        %3560 = vst [vmem:[#allocation2 + $0x8] sm:$0xff] %v3548
        %3561 = vst [vmem:[#allocation2 + $0x10] sm:$0xff] %v3549
        %3562 = vst [vmem:[#allocation2 + $0x18] sm:$0xff] %v3550
        %3563 = vst [vmem:[#allocation2 + $0x20] sm:$0xff] %v3551
        %3564 = vst [vmem:[#allocation2 + $0x28] sm:$0xff] %v3552
        %3565 = vst [vmem:[#allocation2 + $0x30] sm:$0xff] %v3553
        %3566 = vst [vmem:[#allocation2 + $0x38] sm:$0xff] %v3554
        %3567 = vst [vmem:[#allocation2 + $0x40] sm:$0xff] %v3555
        %3568 = vst [vmem:[#allocation2 + $0x48] sm:$0xff] %v3556
        %3569 = vst [vmem:[#allocation2 + $0x50] sm:$0xff] %v3557
        %3570 = vst [vmem:[#allocation2 + $0x58] sm:$0xff] %v3558
        %3571 = vrot.lane.b32.xlu0 %v541, 63
        %v3572 = vpop.permute.xlu0 %3571
        %3573 = vrot.lane.b32.xlu0 %v545, 63
        %v3574 = vpop.permute.xlu0 %3573
        %vm3575 = vcmask 515072
        %v3576 = vsel %vm3575, %v3572, %v3574
        %v3580 = vmul.f32 %v304, %v3572
        %v3581 = vmul.f32 %v305, %v3576
        %v3582 = vmul.f32 %v306, %v3574
        %v3583 = vmul.f32 %v307, %v3572
        %v3584 = vmul.f32 %v308, %v3576
        %v3585 = vmul.f32 %v309, %v3574
        %v3586 = vld [vmem:[#allocation2] sm:$0xff]
        %v3587 = vld [vmem:[#allocation2 + $0x8] sm:$0xff]
        %v3588 = vld [vmem:[#allocation2 + $0x10] sm:$0xff]
        %v3589 = vld [vmem:[#allocation2 + $0x18] sm:$0xff]
        %v3590 = vld [vmem:[#allocation2 + $0x20] sm:$0xff]
        %v3591 = vld [vmem:[#allocation2 + $0x28] sm:$0xff]
        %v3592 = vld [vmem:[#allocation2 + $0x30] sm:$0xff]
        %v3593 = vld [vmem:[#allocation2 + $0x38] sm:$0xff]
        %v3594 = vld [vmem:[#allocation2 + $0x40] sm:$0xff]
        %v3595 = vld [vmem:[#allocation2 + $0x48] sm:$0xff]
        %v3596 = vld [vmem:[#allocation2 + $0x50] sm:$0xff]
        %v3597 = vld [vmem:[#allocation2 + $0x58] sm:$0xff]
        %s3598 = scalar_lea.vmem %s2, 768
        %v3599 = vld [vmem:[%s3598] sm:$0xff]
        %v3600 = vld [vmem:[%s3598 + $0x8] sm:$0xff]
        %v3601 = vld [vmem:[%s3598 + $0x10] sm:$0xff]
        %v3602 = vld [vmem:[%s3598 + $0x18] sm:$0xff]
        %v3603 = vld [vmem:[%s3598 + $0x20] sm:$0xff]
        %v3604 = vld [vmem:[%s3598 + $0x28] sm:$0xff]
        %3611 = vrot.lane.b32.xlu0 %v3580, 65
        %v3612 = vpop.permute.xlu0 %3611
        %3613 = vrot.lane.b32.xlu0 %v3581, 65
        %v3614 = vpop.permute.xlu0 %3613
        %3615 = vrot.lane.b32.xlu0 %v3582, 65
        %v3616 = vpop.permute.xlu0 %3615
        %3617 = vrot.lane.b32.xlu0 %v3583, 65
        %v3618 = vpop.permute.xlu0 %3617
        %3619 = vrot.lane.b32.xlu0 %v3584, 65
        %v3620 = vpop.permute.xlu0 %3619
        %3621 = vrot.lane.b32.xlu0 %v3585, 65
        %v3622 = vpop.permute.xlu0 %3621
        %vm3623 = vcmask 531456
        %v3624 = vsel %vm3623, %v3612, %v3614
        %v3625 = vsel %vm3623, %v3614, %v3616
        %v3626 = vsel %vm3623, %v3618, %v3620
        %v3627 = vsel %vm3623, %v3620, %v3622
        %v3633 = vsel %vm394, %v3599, 0
        %v3636 = vsel %vm394, %v3600, 0
        %v3639 = vsel %vm394, %v3601, 0
        %v3642 = vsel %vm394, %v3602, 0
        %v3645 = vsel %vm394, %v3603, 0
        %v3648 = vsel %vm394, %v3604, 0
        %3650 = vmatprep.subr.mxu0 %v3625
        %3651 = vmatpush1.msra.mxu0 %v3624
        %3652 = vmatprep.subr.mxu0 %v3627
        %3653 = vmatpush1.msra.mxu0 %v3626
        %3654 = vmatprep.subr.mxu0 0.0
        %3655 = vmatpush1.msra.mxu0 0.0
        %3656 = vmatprep.subr.mxu0 0.0
        %3657 = vmatpush1.msra.mxu0 0.0
        %3658 = vmatprep.subr.mxu0 0.0
        %3659 = vmatpush1.msra.mxu0 0.0
        %3660 = vmatprep.subr.mxu0 0.0
        %3661 = vmatpush1.msra.mxu0 0.0
        %3662 = vmatprep.subr.mxu0 0.0
        %3663 = vmatpush1.msra.mxu0 0.0
        %3664 = vmatprep.subr.mxu0 0.0
        %3665 = vmatpush1.msra.mxu0 0.0
        %3666 = vmatprep.subr.mxu0 0.0
        %3667 = vmatpush1.msra.mxu0 0.0
        %3668 = vmatprep.subr.mxu0 0.0
        %3669 = vmatpush1.msra.mxu0 0.0
        %3670 = vmatprep.subr.mxu0 0.0
        %3671 = vmatpush1.msra.mxu0 0.0
        %3672 = vmatprep.subr.mxu0 0.0
        %3673 = vmatpush1.msra.mxu0 0.0
        %3674 = vmatprep.subr.mxu0 0.0
        %3675 = vmatpush1.msra.mxu0 0.0
        %3676 = vmatprep.subr.mxu0 0.0
        %3677 = vmatpush1.msra.mxu0 0.0
        %3678 = vmatprep.subr.mxu0 0.0
        %3679 = vmatpush1.msra.mxu0 0.0
        %3680 = vmatprep.subr.mxu0 0.0
        %3681 = vmatpush1.msra.mxu0 0.0
        %3682 = vmatprep.subr.mxu0 0.0
        %3683 = vmatpush1.msra.mxu0 0.0
        %3684 = vmatprep.subr.mxu0 0.0
        %3685 = vmatpush1.msra.mxu0 0.0
        %3686 = vmatprep.subr.mxu0 0.0
        %3687 = vmatpush1.msra.mxu0 0.0
        %3688 = vmatprep.subr.mxu0 0.0
        %3689 = vmatpush1.msra.mxu0 0.0
        %3690 = vmatprep.subr.mxu0 0.0
        %3691 = vmatpush1.msra.mxu0 0.0
        %3692 = vmatprep.subr.mxu0 0.0
        %3693 = vmatpush1.msra.mxu0 0.0
        %3694 = vmatprep.subr.mxu0 0.0
        %3695 = vmatpush1.msra.mxu0 0.0
        %3696 = vmatprep.subr.mxu0 0.0
        %3697 = vmatpush1.msra.mxu0 0.0
        %3698 = vmatprep.subr.mxu0 0.0
        %3699 = vmatpush1.msra.mxu0 0.0
        %3700 = vmatprep.subr.mxu0 0.0
        %3701 = vmatpush1.msra.mxu0 0.0
        %3702 = vmatprep.subr.mxu0 0.0
        %3703 = vmatpush1.msra.mxu0 0.0
        %3704 = vmatprep.subr.mxu0 0.0
        %3705 = vmatpush1.msra.mxu0 0.0
        %3706 = vmatprep.subr.mxu0 0.0
        %3707 = vmatpush1.msra.mxu0 0.0
        %3708 = vmatprep.subr.mxu0 0.0
        %3709 = vmatpush1.msra.mxu0 0.0
        %3710 = vmatprep.subr.mxu0 0.0
        %3711 = vmatpush1.msra.mxu0 0.0
        %3712 = vmatprep.subr.mxu0 0.0
        %3713 = vmatpush1.msra.mxu0 0.0
        %3714 = vmatprep.mubr.f32.mxu0 0.0
        %3715 = vmatmul.mubr.f32.gmra.mrb[0].mxu0 %v3633
        %v3716 = vpop.f32.mrb[0].mxu0
        %v3717 = vadd.f32 0.0, %v3716
        %v3718 = vpop.f32.mrb[0].mxu0
        %v3719 = vadd.f32 0.0, %v3718
        %3720 = vmatprep.mubr.f32.mxu0 0.0
        %3721 = vmatmul.mubr.f32.gmra.mrb[0].mxu0 %v3636
        %v3722 = vpop.f32.mrb[0].mxu0
        %v3723 = vadd.f32 0.0, %v3722
        %v3724 = vpop.f32.mrb[0].mxu0
        %v3725 = vadd.f32 0.0, %v3724
        %3726 = vmatprep.mubr.f32.mxu0 0.0
        %3727 = vmatmul.mubr.f32.gmra.mrb[0].mxu0 %v3639
        %v3728 = vpop.f32.mrb[0].mxu0
        %v3729 = vadd.f32 0.0, %v3728
        %v3730 = vpop.f32.mrb[0].mxu0
        %v3731 = vadd.f32 0.0, %v3730
        %3732 = vmatprep.mubr.f32.mxu0 0.0
        %3733 = vmatmul.mubr.f32.gmra.mrb[0].mxu0 %v3642
        %v3734 = vpop.f32.mrb[0].mxu0
        %v3735 = vadd.f32 0.0, %v3734
        %v3736 = vpop.f32.mrb[0].mxu0
        %v3737 = vadd.f32 0.0, %v3736
        %3738 = vmatprep.mubr.f32.mxu0 0.0
        %3739 = vmatmul.mubr.f32.gmra.mrb[0].mxu0 %v3645
        %v3740 = vpop.f32.mrb[0].mxu0
        %v3741 = vadd.f32 0.0, %v3740
        %v3742 = vpop.f32.mrb[0].mxu0
        %v3743 = vadd.f32 0.0, %v3742
        %3744 = vmatprep.mubr.f32.mxu0 0.0
        %3745 = vmatmul.mubr.f32.gmra.mrb[0].mxu0 %v3648
        %v3746 = vpop.f32.mrb[0].mxu0
        %v3747 = vadd.f32 0.0, %v3746
        %v3748 = vpop.f32.mrb[0].mxu0
        %v3749 = vadd.f32 0.0, %v3748
        %3750 = vdwg.mxu0
        %v3751 = vadd.f32 %v3586, %v3717
        %v3752 = vadd.f32 %v3587, %v3719
        %v3753 = vadd.f32 %v3588, %v3723
        %v3754 = vadd.f32 %v3589, %v3725
        %v3755 = vadd.f32 %v3590, %v3729
        %v3756 = vadd.f32 %v3591, %v3731
        %v3757 = vadd.f32 %v3592, %v3735
        %v3758 = vadd.f32 %v3593, %v3737
        %v3759 = vadd.f32 %v3594, %v3741
        %v3760 = vadd.f32 %v3595, %v3743
        %v3761 = vadd.f32 %v3596, %v3747
        %v3762 = vadd.f32 %v3597, %v3749
        %3763 = vst [vmem:[#allocation2] sm:$0xff] %v3751
        %3764 = vst [vmem:[#allocation2 + $0x8] sm:$0xff] %v3752
        %3765 = vst [vmem:[#allocation2 + $0x10] sm:$0xff] %v3753
        %3766 = vst [vmem:[#allocation2 + $0x18] sm:$0xff] %v3754
        %3767 = vst [vmem:[#allocation2 + $0x20] sm:$0xff] %v3755
        %3768 = vst [vmem:[#allocation2 + $0x28] sm:$0xff] %v3756
        %3769 = vst [vmem:[#allocation2 + $0x30] sm:$0xff] %v3757
        %3770 = vst [vmem:[#allocation2 + $0x38] sm:$0xff] %v3758
        %3771 = vst [vmem:[#allocation2 + $0x40] sm:$0xff] %v3759
        %3772 = vst [vmem:[#allocation2 + $0x48] sm:$0xff] %v3760
        %3773 = vst [vmem:[#allocation2 + $0x50] sm:$0xff] %v3761
        %3774 = vst [vmem:[#allocation2 + $0x58] sm:$0xff] %v3762
        %v3775 = vld [vmem:[#allocation2] sm:$0xff]
        %v3776 = vld [vmem:[#allocation2 + $0x8] sm:$0xff]
        %v3777 = vld [vmem:[#allocation2 + $0x10] sm:$0xff]
        %v3778 = vld [vmem:[#allocation2 + $0x18] sm:$0xff]
        %v3779 = vld [vmem:[#allocation2 + $0x20] sm:$0xff]
        %v3780 = vld [vmem:[#allocation2 + $0x28] sm:$0xff]
        %v3781 = vld [vmem:[#allocation2 + $0x30] sm:$0xff]
        %v3782 = vld [vmem:[#allocation2 + $0x38] sm:$0xff]
        %v3783 = vld [vmem:[#allocation2 + $0x40] sm:$0xff]
        %v3784 = vld [vmem:[#allocation2 + $0x48] sm:$0xff]
        %v3785 = vld [vmem:[#allocation2 + $0x50] sm:$0xff]
        %v3786 = vld [vmem:[#allocation2 + $0x58] sm:$0xff]
        %s3787 = scalar_lea.vmem %s2, 816
        %v3788 = vld [vmem:[%s3787] sm:$0xff]
        %v3789 = vld [vmem:[%s3787 + $0x8] sm:$0xff]
        %v3790 = vld [vmem:[%s3787 + $0x10] sm:$0xff]
        %v3791 = vld [vmem:[%s3787 + $0x18] sm:$0xff]
        %v3792 = vld [vmem:[%s3787 + $0x20] sm:$0xff]
        %v3793 = vld [vmem:[%s3787 + $0x28] sm:$0xff]
        %3794 = vrot.lane.b32.xlu0 %v304, 64
        %v3795 = vpop.permute.xlu0 %3794
        %3796 = vrot.lane.b32.xlu0 %v305, 64
        %v3797 = vpop.permute.xlu0 %3796
        %3798 = vrot.lane.b32.xlu0 %v306, 64
        %v3799 = vpop.permute.xlu0 %3798
        %3800 = vrot.lane.b32.xlu0 %v307, 64
        %v3801 = vpop.permute.xlu0 %3800
        %3802 = vrot.lane.b32.xlu0 %v308, 64
        %v3803 = vpop.permute.xlu0 %3802
        %3804 = vrot.lane.b32.xlu0 %v309, 64
        %v3805 = vpop.permute.xlu0 %3804
        %vm3806 = vcmask 523264
        %v3807 = vsel %vm3806, %v3795, %v3797
        %v3808 = vsel %vm3806, %v3797, %v3799
        %v3809 = vsel %vm3806, %v3801, %v3803
        %v3810 = vsel %vm3806, %v3803, %v3805
        %v3816 = vsel %vm394, %v3788, 0
        %v3819 = vsel %vm394, %v3789, 0
        %v3822 = vsel %vm394, %v3790, 0
        %v3825 = vsel %vm394, %v3791, 0
        %v3828 = vsel %vm394, %v3792, 0
        %v3831 = vsel %vm394, %v3793, 0
        %3833 = vmatprep.subr.mxu0 %v3808
        %3834 = vmatpush1.msra.mxu0 %v3807
        %3835 = vmatprep.subr.mxu0 %v3810
        %3836 = vmatpush1.msra.mxu0 %v3809
        %3837 = vmatprep.subr.mxu0 0.0
        %3838 = vmatpush1.msra.mxu0 0.0
        %3839 = vmatprep.subr.mxu0 0.0
        %3840 = vmatpush1.msra.mxu0 0.0
        %3841 = vmatprep.subr.mxu0 0.0
        %3842 = vmatpush1.msra.mxu0 0.0
        %3843 = vmatprep.subr.mxu0 0.0
        %3844 = vmatpush1.msra.mxu0 0.0
        %3845 = vmatprep.subr.mxu0 0.0
        %3846 = vmatpush1.msra.mxu0 0.0
        %3847 = vmatprep.subr.mxu0 0.0
        %3848 = vmatpush1.msra.mxu0 0.0
        %3849 = vmatprep.subr.mxu0 0.0
        %3850 = vmatpush1.msra.mxu0 0.0
        %3851 = vmatprep.subr.mxu0 0.0
        %3852 = vmatpush1.msra.mxu0 0.0
        %3853 = vmatprep.subr.mxu0 0.0
        %3854 = vmatpush1.msra.mxu0 0.0
        %3855 = vmatprep.subr.mxu0 0.0
        %3856 = vmatpush1.msra.mxu0 0.0
        %3857 = vmatprep.subr.mxu0 0.0
        %3858 = vmatpush1.msra.mxu0 0.0
        %3859 = vmatprep.subr.mxu0 0.0
        %3860 = vmatpush1.msra.mxu0 0.0
        %3861 = vmatprep.subr.mxu0 0.0
        %3862 = vmatpush1.msra.mxu0 0.0
        %3863 = vmatprep.subr.mxu0 0.0
        %3864 = vmatpush1.msra.mxu0 0.0
        %3865 = vmatprep.subr.mxu0 0.0
        %3866 = vmatpush1.msra.mxu0 0.0
        %3867 = vmatprep.subr.mxu0 0.0
        %3868 = vmatpush1.msra.mxu0 0.0
        %3869 = vmatprep.subr.mxu0 0.0
        %3870 = vmatpush1.msra.mxu0 0.0
        %3871 = vmatprep.subr.mxu0 0.0
        %3872 = vmatpush1.msra.mxu0 0.0
        %3873 = vmatprep.subr.mxu0 0.0
        %3874 = vmatpush1.msra.mxu0 0.0
        %3875 = vmatprep.subr.mxu0 0.0
        %3876 = vmatpush1.msra.mxu0 0.0
        %3877 = vmatprep.subr.mxu0 0.0
        %3878 = vmatpush1.msra.mxu0 0.0
        %3879 = vmatprep.subr.mxu0 0.0
        %3880 = vmatpush1.msra.mxu0 0.0
        %3881 = vmatprep.subr.mxu0 0.0
        %3882 = vmatpush1.msra.mxu0 0.0
        %3883 = vmatprep.subr.mxu0 0.0
        %3884 = vmatpush1.msra.mxu0 0.0
        %3885 = vmatprep.subr.mxu0 0.0
        %3886 = vmatpush1.msra.mxu0 0.0
        %3887 = vmatprep.subr.mxu0 0.0
        %3888 = vmatpush1.msra.mxu0 0.0
        %3889 = vmatprep.subr.mxu0 0.0
        %3890 = vmatpush1.msra.mxu0 0.0
        %3891 = vmatprep.subr.mxu0 0.0
        %3892 = vmatpush1.msra.mxu0 0.0
        %3893 = vmatprep.subr.mxu0 0.0
        %3894 = vmatpush1.msra.mxu0 0.0
        %3895 = vmatprep.subr.mxu0 0.0
        %3896 = vmatpush1.msra.mxu0 0.0
        %3897 = vmatprep.mubr.f32.mxu0 0.0
        %3898 = vmatmul.mubr.f32.gmra.mrb[0].mxu0 %v3816
        %v3899 = vpop.f32.mrb[0].mxu0
        %v3900 = vadd.f32 0.0, %v3899
        %v3901 = vpop.f32.mrb[0].mxu0
        %v3902 = vadd.f32 0.0, %v3901
        %3903 = vmatprep.mubr.f32.mxu0 0.0
        %3904 = vmatmul.mubr.f32.gmra.mrb[0].mxu0 %v3819
        %v3905 = vpop.f32.mrb[0].mxu0
        %v3906 = vadd.f32 0.0, %v3905
        %v3907 = vpop.f32.mrb[0].mxu0
        %v3908 = vadd.f32 0.0, %v3907
        %3909 = vmatprep.mubr.f32.mxu0 0.0
        %3910 = vmatmul.mubr.f32.gmra.mrb[0].mxu0 %v3822
        %v3911 = vpop.f32.mrb[0].mxu0
        %v3912 = vadd.f32 0.0, %v3911
        %v3913 = vpop.f32.mrb[0].mxu0
        %v3914 = vadd.f32 0.0, %v3913
        %3915 = vmatprep.mubr.f32.mxu0 0.0
        %3916 = vmatmul.mubr.f32.gmra.mrb[0].mxu0 %v3825
        %v3917 = vpop.f32.mrb[0].mxu0
        %v3918 = vadd.f32 0.0, %v3917
        %v3919 = vpop.f32.mrb[0].mxu0
        %v3920 = vadd.f32 0.0, %v3919
        %3921 = vmatprep.mubr.f32.mxu0 0.0
        %3922 = vmatmul.mubr.f32.gmra.mrb[0].mxu0 %v3828
        %v3923 = vpop.f32.mrb[0].mxu0
        %v3924 = vadd.f32 0.0, %v3923
        %v3925 = vpop.f32.mrb[0].mxu0
        %v3926 = vadd.f32 0.0, %v3925
        %3927 = vmatprep.mubr.f32.mxu0 0.0
        %3928 = vmatmul.mubr.f32.gmra.mrb[0].mxu0 %v3831
        %v3929 = vpop.f32.mrb[0].mxu0
        %v3930 = vadd.f32 0.0, %v3929
        %v3931 = vpop.f32.mrb[0].mxu0
        %v3932 = vadd.f32 0.0, %v3931
        %3933 = vdwg.mxu0
        %v3934 = vadd.f32 %v3775, %v3900
        %v3935 = vadd.f32 %v3776, %v3902
        %v3936 = vadd.f32 %v3777, %v3906
        %v3937 = vadd.f32 %v3778, %v3908
        %v3938 = vadd.f32 %v3779, %v3912
        %v3939 = vadd.f32 %v3780, %v3914
        %v3940 = vadd.f32 %v3781, %v3918
        %v3941 = vadd.f32 %v3782, %v3920
        %v3942 = vadd.f32 %v3783, %v3924
        %v3943 = vadd.f32 %v3784, %v3926
        %v3944 = vadd.f32 %v3785, %v3930
        %v3945 = vadd.f32 %v3786, %v3932
        %3946 = vst [vmem:[#allocation2] sm:$0xff] %v3934
        %3947 = vst [vmem:[#allocation2 + $0x8] sm:$0xff] %v3935
        %3948 = vst [vmem:[#allocation2 + $0x10] sm:$0xff] %v3936
        %3949 = vst [vmem:[#allocation2 + $0x18] sm:$0xff] %v3937
        %3950 = vst [vmem:[#allocation2 + $0x20] sm:$0xff] %v3938
        %3951 = vst [vmem:[#allocation2 + $0x28] sm:$0xff] %v3939
        %3952 = vst [vmem:[#allocation2 + $0x30] sm:$0xff] %v3940
        %3953 = vst [vmem:[#allocation2 + $0x38] sm:$0xff] %v3941
        %3954 = vst [vmem:[#allocation2 + $0x40] sm:$0xff] %v3942
        %3955 = vst [vmem:[#allocation2 + $0x48] sm:$0xff] %v3943
        %3956 = vst [vmem:[#allocation2 + $0x50] sm:$0xff] %v3944
        %3957 = vst [vmem:[#allocation2 + $0x58] sm:$0xff] %v3945
        %3958 = vrot.lane.b32.xlu0 %v944, 65
        %v3959 = vpop.permute.xlu0 %3958
        %3960 = vrot.lane.b32.xlu0 %v948, 65
        %v3961 = vpop.permute.xlu0 %3960
        %v3962 = vsel %vm3623, %v3959, %v3961
        %v3966 = vmul.f32 %v304, %v3959
        %v3967 = vmul.f32 %v305, %v3962
        %v3968 = vmul.f32 %v306, %v3961
        %v3969 = vmul.f32 %v307, %v3959
        %v3970 = vmul.f32 %v308, %v3962
        %v3971 = vmul.f32 %v309, %v3961
        %v3972 = vld [vmem:[#allocation2] sm:$0xff]
        %v3973 = vld [vmem:[#allocation2 + $0x8] sm:$0xff]
        %v3974 = vld [vmem:[#allocation2 + $0x10] sm:$0xff]
        %v3975 = vld [vmem:[#allocation2 + $0x18] sm:$0xff]
        %v3976 = vld [vmem:[#allocation2 + $0x20] sm:$0xff]
        %v3977 = vld [vmem:[#allocation2 + $0x28] sm:$0xff]
        %v3978 = vld [vmem:[#allocation2 + $0x30] sm:$0xff]
        %v3979 = vld [vmem:[#allocation2 + $0x38] sm:$0xff]
        %v3980 = vld [vmem:[#allocation2 + $0x40] sm:$0xff]
        %v3981 = vld [vmem:[#allocation2 + $0x48] sm:$0xff]
        %v3982 = vld [vmem:[#allocation2 + $0x50] sm:$0xff]
        %v3983 = vld [vmem:[#allocation2 + $0x58] sm:$0xff]
        %s3984 = scalar_lea.vmem %s2, 864
        %v3985 = vld [vmem:[%s3984] sm:$0xff]
        %v3986 = vld [vmem:[%s3984 + $0x8] sm:$0xff]
        %v3987 = vld [vmem:[%s3984 + $0x10] sm:$0xff]
        %v3988 = vld [vmem:[%s3984 + $0x18] sm:$0xff]
        %v3989 = vld [vmem:[%s3984 + $0x20] sm:$0xff]
        %v3990 = vld [vmem:[%s3984 + $0x28] sm:$0xff]
        %3997 = vrot.lane.b32.xlu0 %v3966, 63
        %v3998 = vpop.permute.xlu0 %3997
        %3999 = vrot.lane.b32.xlu0 %v3967, 63
        %v4000 = vpop.permute.xlu0 %3999
        %4001 = vrot.lane.b32.xlu0 %v3968, 63
        %v4002 = vpop.permute.xlu0 %4001
        %4003 = vrot.lane.b32.xlu0 %v3969, 63
        %v4004 = vpop.permute.xlu0 %4003
        %4005 = vrot.lane.b32.xlu0 %v3970, 63
        %v4006 = vpop.permute.xlu0 %4005
        %4007 = vrot.lane.b32.xlu0 %v3971, 63
        %v4008 = vpop.permute.xlu0 %4007
        %v4009 = vsel %vm3575, %v3998, %v4000
        %v4010 = vsel %vm3575, %v4000, %v4002
        %v4011 = vsel %vm3575, %v4004, %v4006
        %v4012 = vsel %vm3575, %v4006, %v4008
        %v4018 = vsel %vm394, %v3985, 0
        %v4021 = vsel %vm394, %v3986, 0
        %v4024 = vsel %vm394, %v3987, 0
        %v4027 = vsel %vm394, %v3988, 0
        %v4030 = vsel %vm394, %v3989, 0
        %v4033 = vsel %vm394, %v3990, 0
        %4035 = vmatprep.subr.mxu0 %v4010
        %4036 = vmatpush1.msra.mxu0 %v4009
        %4037 = vmatprep.subr.mxu0 %v4012
        %4038 = vmatpush1.msra.mxu0 %v4011
        %4039 = vmatprep.subr.mxu0 0.0
        %4040 = vmatpush1.msra.mxu0 0.0
        %4041 = vmatprep.subr.mxu0 0.0
        %4042 = vmatpush1.msra.mxu0 0.0
        %4043 = vmatprep.subr.mxu0 0.0
        %4044 = vmatpush1.msra.mxu0 0.0
        %4045 = vmatprep.subr.mxu0 0.0
        %4046 = vmatpush1.msra.mxu0 0.0
        %4047 = vmatprep.subr.mxu0 0.0
        %4048 = vmatpush1.msra.mxu0 0.0
        %4049 = vmatprep.subr.mxu0 0.0
        %4050 = vmatpush1.msra.mxu0 0.0
        %4051 = vmatprep.subr.mxu0 0.0
        %4052 = vmatpush1.msra.mxu0 0.0
        %4053 = vmatprep.subr.mxu0 0.0
        %4054 = vmatpush1.msra.mxu0 0.0
        %4055 = vmatprep.subr.mxu0 0.0
        %4056 = vmatpush1.msra.mxu0 0.0
        %4057 = vmatprep.subr.mxu0 0.0
        %4058 = vmatpush1.msra.mxu0 0.0
        %4059 = vmatprep.subr.mxu0 0.0
        %4060 = vmatpush1.msra.mxu0 0.0
        %4061 = vmatprep.subr.mxu0 0.0
        %4062 = vmatpush1.msra.mxu0 0.0
        %4063 = vmatprep.subr.mxu0 0.0
        %4064 = vmatpush1.msra.mxu0 0.0
        %4065 = vmatprep.subr.mxu0 0.0
        %4066 = vmatpush1.msra.mxu0 0.0
        %4067 = vmatprep.subr.mxu0 0.0
        %4068 = vmatpush1.msra.mxu0 0.0
        %4069 = vmatprep.subr.mxu0 0.0
        %4070 = vmatpush1.msra.mxu0 0.0
        %4071 = vmatprep.subr.mxu0 0.0
        %4072 = vmatpush1.msra.mxu0 0.0
        %4073 = vmatprep.subr.mxu0 0.0
        %4074 = vmatpush1.msra.mxu0 0.0
        %4075 = vmatprep.subr.mxu0 0.0
        %4076 = vmatpush1.msra.mxu0 0.0
        %4077 = vmatprep.subr.mxu0 0.0
        %4078 = vmatpush1.msra.mxu0 0.0
        %4079 = vmatprep.subr.mxu0 0.0
        %4080 = vmatpush1.msra.mxu0 0.0
        %4081 = vmatprep.subr.mxu0 0.0
        %4082 = vmatpush1.msra.mxu0 0.0
        %4083 = vmatprep.subr.mxu0 0.0
        %4084 = vmatpush1.msra.mxu0 0.0
        %4085 = vmatprep.subr.mxu0 0.0
        %4086 = vmatpush1.msra.mxu0 0.0
        %4087 = vmatprep.subr.mxu0 0.0
        %4088 = vmatpush1.msra.mxu0 0.0
        %4089 = vmatprep.subr.mxu0 0.0
        %4090 = vmatpush1.msra.mxu0 0.0
        %4091 = vmatprep.subr.mxu0 0.0
        %4092 = vmatpush1.msra.mxu0 0.0
        %4093 = vmatprep.subr.mxu0 0.0
        %4094 = vmatpush1.msra.mxu0 0.0
        %4095 = vmatprep.subr.mxu0 0.0
        %4096 = vmatpush1.msra.mxu0 0.0
        %4097 = vmatprep.subr.mxu0 0.0
        %4098 = vmatpush1.msra.mxu0 0.0
        %4099 = vmatprep.mubr.f32.mxu0 0.0
        %4100 = vmatmul.mubr.f32.gmra.mrb[0].mxu0 %v4018
        %v4101 = vpop.f32.mrb[0].mxu0
        %v4102 = vadd.f32 0.0, %v4101
        %v4103 = vpop.f32.mrb[0].mxu0
        %v4104 = vadd.f32 0.0, %v4103
        %4105 = vmatprep.mubr.f32.mxu0 0.0
        %4106 = vmatmul.mubr.f32.gmra.mrb[0].mxu0 %v4021
        %v4107 = vpop.f32.mrb[0].mxu0
        %v4108 = vadd.f32 0.0, %v4107
        %v4109 = vpop.f32.mrb[0].mxu0
        %v4110 = vadd.f32 0.0, %v4109
        %4111 = vmatprep.mubr.f32.mxu0 0.0
        %4112 = vmatmul.mubr.f32.gmra.mrb[0].mxu0 %v4024
        %v4113 = vpop.f32.mrb[0].mxu0
        %v4114 = vadd.f32 0.0, %v4113
        %v4115 = vpop.f32.mrb[0].mxu0
        %v4116 = vadd.f32 0.0, %v4115
        %4117 = vmatprep.mubr.f32.mxu0 0.0
        %4118 = vmatmul.mubr.f32.gmra.mrb[0].mxu0 %v4027
        %v4119 = vpop.f32.mrb[0].mxu0
        %v4120 = vadd.f32 0.0, %v4119
        %v4121 = vpop.f32.mrb[0].mxu0
        %v4122 = vadd.f32 0.0, %v4121
        %4123 = vmatprep.mubr.f32.mxu0 0.0
        %4124 = vmatmul.mubr.f32.gmra.mrb[0].mxu0 %v4030
        %v4125 = vpop.f32.mrb[0].mxu0
        %v4126 = vadd.f32 0.0, %v4125
        %v4127 = vpop.f32.mrb[0].mxu0
        %v4128 = vadd.f32 0.0, %v4127
        %4129 = vmatprep.mubr.f32.mxu0 0.0
        %4130 = vmatmul.mubr.f32.gmra.mrb[0].mxu0 %v4033
        %v4131 = vpop.f32.mrb[0].mxu0
        %v4132 = vadd.f32 0.0, %v4131
        %v4133 = vpop.f32.mrb[0].mxu0
        %v4134 = vadd.f32 0.0, %v4133
        %4135 = vdwg.mxu0
        %v4136 = vadd.f32 %v3972, %v4102
        %v4137 = vadd.f32 %v3973, %v4104
        %v4138 = vadd.f32 %v3974, %v4108
        %v4139 = vadd.f32 %v3975, %v4110
        %v4140 = vadd.f32 %v3976, %v4114
        %v4141 = vadd.f32 %v3977, %v4116
        %v4142 = vadd.f32 %v3978, %v4120
        %v4143 = vadd.f32 %v3979, %v4122
        %v4144 = vadd.f32 %v3980, %v4126
        %v4145 = vadd.f32 %v3981, %v4128
        %v4146 = vadd.f32 %v3982, %v4132
        %v4147 = vadd.f32 %v3983, %v4134
        %4148 = vst [vmem:[#allocation2] sm:$0xff] %v4136
        %4149 = vst [vmem:[#allocation2 + $0x8] sm:$0xff] %v4137
        %4150 = vst [vmem:[#allocation2 + $0x10] sm:$0xff] %v4138
        %4151 = vst [vmem:[#allocation2 + $0x18] sm:$0xff] %v4139
        %4152 = vst [vmem:[#allocation2 + $0x20] sm:$0xff] %v4140
        %4153 = vst [vmem:[#allocation2 + $0x28] sm:$0xff] %v4141
        %4154 = vst [vmem:[#allocation2 + $0x30] sm:$0xff] %v4142
        %4155 = vst [vmem:[#allocation2 + $0x38] sm:$0xff] %v4143
        %4156 = vst [vmem:[#allocation2 + $0x40] sm:$0xff] %v4144
        %4157 = vst [vmem:[#allocation2 + $0x48] sm:$0xff] %v4145
        %4158 = vst [vmem:[#allocation2 + $0x50] sm:$0xff] %v4146
        %4159 = vst [vmem:[#allocation2 + $0x58] sm:$0xff] %v4147
        %4160 = vrot.lane.b32.xlu0 %v1158, 66
        %v4161 = vpop.permute.xlu0 %4160
        %4162 = vrot.lane.b32.xlu0 %v1162, 66
        %v4163 = vpop.permute.xlu0 %4162
        %v4164 = vsel %vm3419, %v4161, %v4163
        %v4168 = vmul.f32 %v304, %v4161
        %v4169 = vmul.f32 %v305, %v4164
        %v4170 = vmul.f32 %v306, %v4163
        %v4171 = vmul.f32 %v307, %v4161
        %v4172 = vmul.f32 %v308, %v4164
        %v4173 = vmul.f32 %v309, %v4163
        %v4174 = vld [vmem:[#allocation2] sm:$0xff]
        %v4175 = vld [vmem:[#allocation2 + $0x8] sm:$0xff]
        %v4176 = vld [vmem:[#allocation2 + $0x10] sm:$0xff]
        %v4177 = vld [vmem:[#allocation2 + $0x18] sm:$0xff]
        %v4178 = vld [vmem:[#allocation2 + $0x20] sm:$0xff]
        %v4179 = vld [vmem:[#allocation2 + $0x28] sm:$0xff]
        %v4180 = vld [vmem:[#allocation2 + $0x30] sm:$0xff]
        %v4181 = vld [vmem:[#allocation2 + $0x38] sm:$0xff]
        %v4182 = vld [vmem:[#allocation2 + $0x40] sm:$0xff]
        %v4183 = vld [vmem:[#allocation2 + $0x48] sm:$0xff]
        %v4184 = vld [vmem:[#allocation2 + $0x50] sm:$0xff]
        %v4185 = vld [vmem:[#allocation2 + $0x58] sm:$0xff]
        %s4186 = scalar_lea.vmem %s2, 912
        %v4187 = vld [vmem:[%s4186] sm:$0xff]
        %v4188 = vld [vmem:[%s4186 + $0x8] sm:$0xff]
        %v4189 = vld [vmem:[%s4186 + $0x10] sm:$0xff]
        %v4190 = vld [vmem:[%s4186 + $0x18] sm:$0xff]
        %v4191 = vld [vmem:[%s4186 + $0x20] sm:$0xff]
        %v4192 = vld [vmem:[%s4186 + $0x28] sm:$0xff]
        %4199 = vrot.lane.b32.xlu0 %v4168, 62
        %v4200 = vpop.permute.xlu0 %4199
        %4201 = vrot.lane.b32.xlu0 %v4169, 62
        %v4202 = vpop.permute.xlu0 %4201
        %4203 = vrot.lane.b32.xlu0 %v4170, 62
        %v4204 = vpop.permute.xlu0 %4203
        %4205 = vrot.lane.b32.xlu0 %v4171, 62
        %v4206 = vpop.permute.xlu0 %4205
        %4207 = vrot.lane.b32.xlu0 %v4172, 62
        %v4208 = vpop.permute.xlu0 %4207
        %4209 = vrot.lane.b32.xlu0 %v4173, 62
        %v4210 = vpop.permute.xlu0 %4209
        %v4211 = vsel %vm3371, %v4200, %v4202
        %v4212 = vsel %vm3371, %v4202, %v4204
        %v4213 = vsel %vm3371, %v4206, %v4208
        %v4214 = vsel %vm3371, %v4208, %v4210
        %v4220 = vsel %vm394, %v4187, 0
        %v4223 = vsel %vm394, %v4188, 0
        %v4226 = vsel %vm394, %v4189, 0
        %v4229 = vsel %vm394, %v4190, 0
        %v4232 = vsel %vm394, %v4191, 0
        %v4235 = vsel %vm394, %v4192, 0
        %4237 = vmatprep.subr.mxu0 %v4212
        %4238 = vmatpush1.msra.mxu0 %v4211
        %4239 = vmatprep.subr.mxu0 %v4214
        %4240 = vmatpush1.msra.mxu0 %v4213
        %4241 = vmatprep.subr.mxu0 0.0
        %4242 = vmatpush1.msra.mxu0 0.0
        %4243 = vmatprep.subr.mxu0 0.0
        %4244 = vmatpush1.msra.mxu0 0.0
        %4245 = vmatprep.subr.mxu0 0.0
        %4246 = vmatpush1.msra.mxu0 0.0
        %4247 = vmatprep.subr.mxu0 0.0
        %4248 = vmatpush1.msra.mxu0 0.0
        %4249 = vmatprep.subr.mxu0 0.0
        %4250 = vmatpush1.msra.mxu0 0.0
        %4251 = vmatprep.subr.mxu0 0.0
        %4252 = vmatpush1.msra.mxu0 0.0
        %4253 = vmatprep.subr.mxu0 0.0
        %4254 = vmatpush1.msra.mxu0 0.0
        %4255 = vmatprep.subr.mxu0 0.0
        %4256 = vmatpush1.msra.mxu0 0.0
        %4257 = vmatprep.subr.mxu0 0.0
        %4258 = vmatpush1.msra.mxu0 0.0
        %4259 = vmatprep.subr.mxu0 0.0
        %4260 = vmatpush1.msra.mxu0 0.0
        %4261 = vmatprep.subr.mxu0 0.0
        %4262 = vmatpush1.msra.mxu0 0.0
        %4263 = vmatprep.subr.mxu0 0.0
        %4264 = vmatpush1.msra.mxu0 0.0
        %4265 = vmatprep.subr.mxu0 0.0
        %4266 = vmatpush1.msra.mxu0 0.0
        %4267 = vmatprep.subr.mxu0 0.0
        %4268 = vmatpush1.msra.mxu0 0.0
        %4269 = vmatprep.subr.mxu0 0.0
        %4270 = vmatpush1.msra.mxu0 0.0
        %4271 = vmatprep.subr.mxu0 0.0
        %4272 = vmatpush1.msra.mxu0 0.0
        %4273 = vmatprep.subr.mxu0 0.0
        %4274 = vmatpush1.msra.mxu0 0.0
        %4275 = vmatprep.subr.mxu0 0.0
        %4276 = vmatpush1.msra.mxu0 0.0
        %4277 = vmatprep.subr.mxu0 0.0
        %4278 = vmatpush1.msra.mxu0 0.0
        %4279 = vmatprep.subr.mxu0 0.0
        %4280 = vmatpush1.msra.mxu0 0.0
        %4281 = vmatprep.subr.mxu0 0.0
        %4282 = vmatpush1.msra.mxu0 0.0
        %4283 = vmatprep.subr.mxu0 0.0
        %4284 = vmatpush1.msra.mxu0 0.0
        %4285 = vmatprep.subr.mxu0 0.0
        %4286 = vmatpush1.msra.mxu0 0.0
        %4287 = vmatprep.subr.mxu0 0.0
        %4288 = vmatpush1.msra.mxu0 0.0
        %4289 = vmatprep.subr.mxu0 0.0
        %4290 = vmatpush1.msra.mxu0 0.0
        %4291 = vmatprep.subr.mxu0 0.0
        %4292 = vmatpush1.msra.mxu0 0.0
        %4293 = vmatprep.subr.mxu0 0.0
        %4294 = vmatpush1.msra.mxu0 0.0
        %4295 = vmatprep.subr.mxu0 0.0
        %4296 = vmatpush1.msra.mxu0 0.0
        %4297 = vmatprep.subr.mxu0 0.0
        %4298 = vmatpush1.msra.mxu0 0.0
        %4299 = vmatprep.subr.mxu0 0.0
        %4300 = vmatpush1.msra.mxu0 0.0
        %4301 = vmatprep.mubr.f32.mxu0 0.0
        %4302 = vmatmul.mubr.f32.gmra.mrb[0].mxu0 %v4220
        %v4303 = vpop.f32.mrb[0].mxu0
        %v4304 = vadd.f32 0.0, %v4303
        %v4305 = vpop.f32.mrb[0].mxu0
        %v4306 = vadd.f32 0.0, %v4305
        %4307 = vmatprep.mubr.f32.mxu0 0.0
        %4308 = vmatmul.mubr.f32.gmra.mrb[0].mxu0 %v4223
        %v4309 = vpop.f32.mrb[0].mxu0
        %v4310 = vadd.f32 0.0, %v4309
        %v4311 = vpop.f32.mrb[0].mxu0
        %v4312 = vadd.f32 0.0, %v4311
        %4313 = vmatprep.mubr.f32.mxu0 0.0
        %4314 = vmatmul.mubr.f32.gmra.mrb[0].mxu0 %v4226
        %v4315 = vpop.f32.mrb[0].mxu0
        %v4316 = vadd.f32 0.0, %v4315
        %v4317 = vpop.f32.mrb[0].mxu0
        %v4318 = vadd.f32 0.0, %v4317
        %4319 = vmatprep.mubr.f32.mxu0 0.0
        %4320 = vmatmul.mubr.f32.gmra.mrb[0].mxu0 %v4229
        %v4321 = vpop.f32.mrb[0].mxu0
        %v4322 = vadd.f32 0.0, %v4321
        %v4323 = vpop.f32.mrb[0].mxu0
        %v4324 = vadd.f32 0.0, %v4323
        %4325 = vmatprep.mubr.f32.mxu0 0.0
        %4326 = vmatmul.mubr.f32.gmra.mrb[0].mxu0 %v4232
        %v4327 = vpop.f32.mrb[0].mxu0
        %v4328 = vadd.f32 0.0, %v4327
        %v4329 = vpop.f32.mrb[0].mxu0
        %v4330 = vadd.f32 0.0, %v4329
        %4331 = vmatprep.mubr.f32.mxu0 0.0
        %4332 = vmatmul.mubr.f32.gmra.mrb[0].mxu0 %v4235
        %v4333 = vpop.f32.mrb[0].mxu0
        %v4334 = vadd.f32 0.0, %v4333
        %v4335 = vpop.f32.mrb[0].mxu0
        %v4336 = vadd.f32 0.0, %v4335
        %4337 = vdwg.mxu0
        %v4338 = vadd.f32 %v4174, %v4304
        %v4339 = vadd.f32 %v4175, %v4306
        %v4340 = vadd.f32 %v4176, %v4310
        %v4341 = vadd.f32 %v4177, %v4312
        %v4342 = vadd.f32 %v4178, %v4316
        %v4343 = vadd.f32 %v4179, %v4318
        %v4344 = vadd.f32 %v4180, %v4322
        %v4345 = vadd.f32 %v4181, %v4324
        %v4346 = vadd.f32 %v4182, %v4328
        %v4347 = vadd.f32 %v4183, %v4330
        %v4348 = vadd.f32 %v4184, %v4334
        %v4349 = vadd.f32 %v4185, %v4336
        %4350 = vst [vmem:[#allocation2] sm:$0xff] %v4338
        %4351 = vst [vmem:[#allocation2 + $0x8] sm:$0xff] %v4339
        %4352 = vst [vmem:[#allocation2 + $0x10] sm:$0xff] %v4340
        %4353 = vst [vmem:[#allocation2 + $0x18] sm:$0xff] %v4341
        %4354 = vst [vmem:[#allocation2 + $0x20] sm:$0xff] %v4342
        %4355 = vst [vmem:[#allocation2 + $0x28] sm:$0xff] %v4343
        %4356 = vst [vmem:[#allocation2 + $0x30] sm:$0xff] %v4344
        %4357 = vst [vmem:[#allocation2 + $0x38] sm:$0xff] %v4345
        %4358 = vst [vmem:[#allocation2 + $0x40] sm:$0xff] %v4346
        %4359 = vst [vmem:[#allocation2 + $0x48] sm:$0xff] %v4347
        %4360 = vst [vmem:[#allocation2 + $0x50] sm:$0xff] %v4348
        %4361 = vst [vmem:[#allocation2 + $0x58] sm:$0xff] %v4349
        %4362 = vrot.lane.b32.xlu0 %v327, 78
        %v4363 = vpop.permute.xlu0 %4362
        %4364 = vrot.lane.b32.xlu0 %v331, 78
        %v4365 = vpop.permute.xlu0 %4364
        %v4366 = vsel %vm3215, %v4363, %v4365
        %v4370 = vmul.f32 %v304, %v4363
        %v4371 = vmul.f32 %v305, %v4366
        %v4372 = vmul.f32 %v306, %v4365
        %v4373 = vmul.f32 %v307, %v4363
        %v4374 = vmul.f32 %v308, %v4366
        %v4375 = vmul.f32 %v309, %v4365
        %v4376 = vld [vmem:[#allocation2] sm:$0xff]
        %v4377 = vld [vmem:[#allocation2 + $0x8] sm:$0xff]
        %v4378 = vld [vmem:[#allocation2 + $0x10] sm:$0xff]
        %v4379 = vld [vmem:[#allocation2 + $0x18] sm:$0xff]
        %v4380 = vld [vmem:[#allocation2 + $0x20] sm:$0xff]
        %v4381 = vld [vmem:[#allocation2 + $0x28] sm:$0xff]
        %v4382 = vld [vmem:[#allocation2 + $0x30] sm:$0xff]
        %v4383 = vld [vmem:[#allocation2 + $0x38] sm:$0xff]
        %v4384 = vld [vmem:[#allocation2 + $0x40] sm:$0xff]
        %v4385 = vld [vmem:[#allocation2 + $0x48] sm:$0xff]
        %v4386 = vld [vmem:[#allocation2 + $0x50] sm:$0xff]
        %v4387 = vld [vmem:[#allocation2 + $0x58] sm:$0xff]
        %s4388 = scalar_lea.vmem %s2, 960
        %v4389 = vld [vmem:[%s4388] sm:$0xff]
        %v4390 = vld [vmem:[%s4388 + $0x8] sm:$0xff]
        %v4391 = vld [vmem:[%s4388 + $0x10] sm:$0xff]
        %v4392 = vld [vmem:[%s4388 + $0x18] sm:$0xff]
        %v4393 = vld [vmem:[%s4388 + $0x20] sm:$0xff]
        %v4394 = vld [vmem:[%s4388 + $0x28] sm:$0xff]
        %4401 = vrot.lane.b32.xlu0 %v4370, 50
        %v4402 = vpop.permute.xlu0 %4401
        %4403 = vrot.lane.b32.xlu0 %v4371, 50
        %v4404 = vpop.permute.xlu0 %4403
        %4405 = vrot.lane.b32.xlu0 %v4372, 50
        %v4406 = vpop.permute.xlu0 %4405
        %4407 = vrot.lane.b32.xlu0 %v4373, 50
        %v4408 = vpop.permute.xlu0 %4407
        %4409 = vrot.lane.b32.xlu0 %v4374, 50
        %v4410 = vpop.permute.xlu0 %4409
        %4411 = vrot.lane.b32.xlu0 %v4375, 50
        %v4412 = vpop.permute.xlu0 %4411
        %v4413 = vsel %vm3167, %v4402, %v4404
        %v4414 = vsel %vm3167, %v4404, %v4406
        %v4415 = vsel %vm3167, %v4408, %v4410
        %v4416 = vsel %vm3167, %v4410, %v4412
        %v4422 = vsel %vm394, %v4389, 0
        %v4425 = vsel %vm394, %v4390, 0
        %v4428 = vsel %vm394, %v4391, 0
        %v4431 = vsel %vm394, %v4392, 0
        %v4434 = vsel %vm394, %v4393, 0
        %v4437 = vsel %vm394, %v4394, 0
        %4439 = vmatprep.subr.mxu0 %v4414
        %4440 = vmatpush1.msra.mxu0 %v4413
        %4441 = vmatprep.subr.mxu0 %v4416
        %4442 = vmatpush1.msra.mxu0 %v4415
        %4443 = vmatprep.subr.mxu0 0.0
        %4444 = vmatpush1.msra.mxu0 0.0
        %4445 = vmatprep.subr.mxu0 0.0
        %4446 = vmatpush1.msra.mxu0 0.0
        %4447 = vmatprep.subr.mxu0 0.0
        %4448 = vmatpush1.msra.mxu0 0.0
        %4449 = vmatprep.subr.mxu0 0.0
        %4450 = vmatpush1.msra.mxu0 0.0
        %4451 = vmatprep.subr.mxu0 0.0
        %4452 = vmatpush1.msra.mxu0 0.0
        %4453 = vmatprep.subr.mxu0 0.0
        %4454 = vmatpush1.msra.mxu0 0.0
        %4455 = vmatprep.subr.mxu0 0.0
        %4456 = vmatpush1.msra.mxu0 0.0
        %4457 = vmatprep.subr.mxu0 0.0
        %4458 = vmatpush1.msra.mxu0 0.0
        %4459 = vmatprep.subr.mxu0 0.0
        %4460 = vmatpush1.msra.mxu0 0.0
        %4461 = vmatprep.subr.mxu0 0.0
        %4462 = vmatpush1.msra.mxu0 0.0
        %4463 = vmatprep.subr.mxu0 0.0
        %4464 = vmatpush1.msra.mxu0 0.0
        %4465 = vmatprep.subr.mxu0 0.0
        %4466 = vmatpush1.msra.mxu0 0.0
        %4467 = vmatprep.subr.mxu0 0.0
        %4468 = vmatpush1.msra.mxu0 0.0
        %4469 = vmatprep.subr.mxu0 0.0
        %4470 = vmatpush1.msra.mxu0 0.0
        %4471 = vmatprep.subr.mxu0 0.0
        %4472 = vmatpush1.msra.mxu0 0.0
        %4473 = vmatprep.subr.mxu0 0.0
        %4474 = vmatpush1.msra.mxu0 0.0
        %4475 = vmatprep.subr.mxu0 0.0
        %4476 = vmatpush1.msra.mxu0 0.0
        %4477 = vmatprep.subr.mxu0 0.0
        %4478 = vmatpush1.msra.mxu0 0.0
        %4479 = vmatprep.subr.mxu0 0.0
        %4480 = vmatpush1.msra.mxu0 0.0
        %4481 = vmatprep.subr.mxu0 0.0
        %4482 = vmatpush1.msra.mxu0 0.0
        %4483 = vmatprep.subr.mxu0 0.0
        %4484 = vmatpush1.msra.mxu0 0.0
        %4485 = vmatprep.subr.mxu0 0.0
        %4486 = vmatpush1.msra.mxu0 0.0
        %4487 = vmatprep.subr.mxu0 0.0
        %4488 = vmatpush1.msra.mxu0 0.0
        %4489 = vmatprep.subr.mxu0 0.0
        %4490 = vmatpush1.msra.mxu0 0.0
        %4491 = vmatprep.subr.mxu0 0.0
        %4492 = vmatpush1.msra.mxu0 0.0
        %4493 = vmatprep.subr.mxu0 0.0
        %4494 = vmatpush1.msra.mxu0 0.0
        %4495 = vmatprep.subr.mxu0 0.0
        %4496 = vmatpush1.msra.mxu0 0.0
        %4497 = vmatprep.subr.mxu0 0.0
        %4498 = vmatpush1.msra.mxu0 0.0
        %4499 = vmatprep.subr.mxu0 0.0
        %4500 = vmatpush1.msra.mxu0 0.0
        %4501 = vmatprep.subr.mxu0 0.0
        %4502 = vmatpush1.msra.mxu0 0.0
        %4503 = vmatprep.mubr.f32.mxu0 0.0
        %4504 = vmatmul.mubr.f32.gmra.mrb[0].mxu0 %v4422
        %v4505 = vpop.f32.mrb[0].mxu0
        %v4506 = vadd.f32 0.0, %v4505
        %v4507 = vpop.f32.mrb[0].mxu0
        %v4508 = vadd.f32 0.0, %v4507
        %4509 = vmatprep.mubr.f32.mxu0 0.0
        %4510 = vmatmul.mubr.f32.gmra.mrb[0].mxu0 %v4425
        %v4511 = vpop.f32.mrb[0].mxu0
        %v4512 = vadd.f32 0.0, %v4511
        %v4513 = vpop.f32.mrb[0].mxu0
        %v4514 = vadd.f32 0.0, %v4513
        %4515 = vmatprep.mubr.f32.mxu0 0.0
        %4516 = vmatmul.mubr.f32.gmra.mrb[0].mxu0 %v4428
        %v4517 = vpop.f32.mrb[0].mxu0
        %v4518 = vadd.f32 0.0, %v4517
        %v4519 = vpop.f32.mrb[0].mxu0
        %v4520 = vadd.f32 0.0, %v4519
        %4521 = vmatprep.mubr.f32.mxu0 0.0
        %4522 = vmatmul.mubr.f32.gmra.mrb[0].mxu0 %v4431
        %v4523 = vpop.f32.mrb[0].mxu0
        %v4524 = vadd.f32 0.0, %v4523
        %v4525 = vpop.f32.mrb[0].mxu0
        %v4526 = vadd.f32 0.0, %v4525
        %4527 = vmatprep.mubr.f32.mxu0 0.0
        %4528 = vmatmul.mubr.f32.gmra.mrb[0].mxu0 %v4434
        %v4529 = vpop.f32.mrb[0].mxu0
        %v4530 = vadd.f32 0.0, %v4529
        %v4531 = vpop.f32.mrb[0].mxu0
        %v4532 = vadd.f32 0.0, %v4531
        %4533 = vmatprep.mubr.f32.mxu0 0.0
        %4534 = vmatmul.mubr.f32.gmra.mrb[0].mxu0 %v4437
        %v4535 = vpop.f32.mrb[0].mxu0
        %v4536 = vadd.f32 0.0, %v4535
        %v4537 = vpop.f32.mrb[0].mxu0
        %v4538 = vadd.f32 0.0, %v4537
        %4539 = vdwg.mxu0
        %v4540 = vadd.f32 %v4376, %v4506
        %v4541 = vadd.f32 %v4377, %v4508
        %v4542 = vadd.f32 %v4378, %v4512
        %v4543 = vadd.f32 %v4379, %v4514
        %v4544 = vadd.f32 %v4380, %v4518
        %v4545 = vadd.f32 %v4381, %v4520
        %v4546 = vadd.f32 %v4382, %v4524
        %v4547 = vadd.f32 %v4383, %v4526
        %v4548 = vadd.f32 %v4384, %v4530
        %v4549 = vadd.f32 %v4385, %v4532
        %v4550 = vadd.f32 %v4386, %v4536
        %v4551 = vadd.f32 %v4387, %v4538
        %4552 = vst [vmem:[#allocation2] sm:$0xff] %v4540
        %4553 = vst [vmem:[#allocation2 + $0x8] sm:$0xff] %v4541
        %4554 = vst [vmem:[#allocation2 + $0x10] sm:$0xff] %v4542
        %4555 = vst [vmem:[#allocation2 + $0x18] sm:$0xff] %v4543
        %4556 = vst [vmem:[#allocation2 + $0x20] sm:$0xff] %v4544
        %4557 = vst [vmem:[#allocation2 + $0x28] sm:$0xff] %v4545
        %4558 = vst [vmem:[#allocation2 + $0x30] sm:$0xff] %v4546
        %4559 = vst [vmem:[#allocation2 + $0x38] sm:$0xff] %v4547
        %4560 = vst [vmem:[#allocation2 + $0x40] sm:$0xff] %v4548
        %4561 = vst [vmem:[#allocation2 + $0x48] sm:$0xff] %v4549
        %4562 = vst [vmem:[#allocation2 + $0x50] sm:$0xff] %v4550
        %4563 = vst [vmem:[#allocation2 + $0x58] sm:$0xff] %v4551
        %4564 = vrot.lane.b32.xlu0 %v541, 79
        %v4565 = vpop.permute.xlu0 %4564
        %4566 = vrot.lane.b32.xlu0 %v545, 79
        %v4567 = vpop.permute.xlu0 %4566
        %v4568 = vsel %vm3011, %v4565, %v4567
        %v4572 = vmul.f32 %v304, %v4565
        %v4573 = vmul.f32 %v305, %v4568
        %v4574 = vmul.f32 %v306, %v4567
        %v4575 = vmul.f32 %v307, %v4565
        %v4576 = vmul.f32 %v308, %v4568
        %v4577 = vmul.f32 %v309, %v4567
        %v4578 = vld [vmem:[#allocation2] sm:$0xff]
        %v4579 = vld [vmem:[#allocation2 + $0x8] sm:$0xff]
        %v4580 = vld [vmem:[#allocation2 + $0x10] sm:$0xff]
        %v4581 = vld [vmem:[#allocation2 + $0x18] sm:$0xff]
        %v4582 = vld [vmem:[#allocation2 + $0x20] sm:$0xff]
        %v4583 = vld [vmem:[#allocation2 + $0x28] sm:$0xff]
        %v4584 = vld [vmem:[#allocation2 + $0x30] sm:$0xff]
        %v4585 = vld [vmem:[#allocation2 + $0x38] sm:$0xff]
        %v4586 = vld [vmem:[#allocation2 + $0x40] sm:$0xff]
        %v4587 = vld [vmem:[#allocation2 + $0x48] sm:$0xff]
        %v4588 = vld [vmem:[#allocation2 + $0x50] sm:$0xff]
        %v4589 = vld [vmem:[#allocation2 + $0x58] sm:$0xff]
        %s4590 = scalar_lea.vmem %s2, 1008
        %v4591 = vld [vmem:[%s4590] sm:$0xff]
        %v4592 = vld [vmem:[%s4590 + $0x8] sm:$0xff]
        %v4593 = vld [vmem:[%s4590 + $0x10] sm:$0xff]
        %v4594 = vld [vmem:[%s4590 + $0x18] sm:$0xff]
        %v4595 = vld [vmem:[%s4590 + $0x20] sm:$0xff]
        %v4596 = vld [vmem:[%s4590 + $0x28] sm:$0xff]
        %4603 = vrot.lane.b32.xlu0 %v4572, 49
        %v4604 = vpop.permute.xlu0 %4603
        %4605 = vrot.lane.b32.xlu0 %v4573, 49
        %v4606 = vpop.permute.xlu0 %4605
        %4607 = vrot.lane.b32.xlu0 %v4574, 49
        %v4608 = vpop.permute.xlu0 %4607
        %4609 = vrot.lane.b32.xlu0 %v4575, 49
        %v4610 = vpop.permute.xlu0 %4609
        %4611 = vrot.lane.b32.xlu0 %v4576, 49
        %v4612 = vpop.permute.xlu0 %4611
        %4613 = vrot.lane.b32.xlu0 %v4577, 49
        %v4614 = vpop.permute.xlu0 %4613
        %v4615 = vsel %vm2963, %v4604, %v4606
        %v4616 = vsel %vm2963, %v4606, %v4608
        %v4617 = vsel %vm2963, %v4610, %v4612
        %v4618 = vsel %vm2963, %v4612, %v4614
        %v4624 = vsel %vm394, %v4591, 0
        %v4627 = vsel %vm394, %v4592, 0
        %v4630 = vsel %vm394, %v4593, 0
        %v4633 = vsel %vm394, %v4594, 0
        %v4636 = vsel %vm394, %v4595, 0
        %v4639 = vsel %vm394, %v4596, 0
        %4641 = vmatprep.subr.mxu0 %v4616
        %4642 = vmatpush1.msra.mxu0 %v4615
        %4643 = vmatprep.subr.mxu0 %v4618
        %4644 = vmatpush1.msra.mxu0 %v4617
        %4645 = vmatprep.subr.mxu0 0.0
        %4646 = vmatpush1.msra.mxu0 0.0
        %4647 = vmatprep.subr.mxu0 0.0
        %4648 = vmatpush1.msra.mxu0 0.0
        %4649 = vmatprep.subr.mxu0 0.0
        %4650 = vmatpush1.msra.mxu0 0.0
        %4651 = vmatprep.subr.mxu0 0.0
        %4652 = vmatpush1.msra.mxu0 0.0
        %4653 = vmatprep.subr.mxu0 0.0
        %4654 = vmatpush1.msra.mxu0 0.0
        %4655 = vmatprep.subr.mxu0 0.0
        %4656 = vmatpush1.msra.mxu0 0.0
        %4657 = vmatprep.subr.mxu0 0.0
        %4658 = vmatpush1.msra.mxu0 0.0
        %4659 = vmatprep.subr.mxu0 0.0
        %4660 = vmatpush1.msra.mxu0 0.0
        %4661 = vmatprep.subr.mxu0 0.0
        %4662 = vmatpush1.msra.mxu0 0.0
        %4663 = vmatprep.subr.mxu0 0.0
        %4664 = vmatpush1.msra.mxu0 0.0
        %4665 = vmatprep.subr.mxu0 0.0
        %4666 = vmatpush1.msra.mxu0 0.0
        %4667 = vmatprep.subr.mxu0 0.0
        %4668 = vmatpush1.msra.mxu0 0.0
        %4669 = vmatprep.subr.mxu0 0.0
        %4670 = vmatpush1.msra.mxu0 0.0
        %4671 = vmatprep.subr.mxu0 0.0
        %4672 = vmatpush1.msra.mxu0 0.0
        %4673 = vmatprep.subr.mxu0 0.0
        %4674 = vmatpush1.msra.mxu0 0.0
        %4675 = vmatprep.subr.mxu0 0.0
        %4676 = vmatpush1.msra.mxu0 0.0
        %4677 = vmatprep.subr.mxu0 0.0
        %4678 = vmatpush1.msra.mxu0 0.0
        %4679 = vmatprep.subr.mxu0 0.0
        %4680 = vmatpush1.msra.mxu0 0.0
        %4681 = vmatprep.subr.mxu0 0.0
        %4682 = vmatpush1.msra.mxu0 0.0
        %4683 = vmatprep.subr.mxu0 0.0
        %4684 = vmatpush1.msra.mxu0 0.0
        %4685 = vmatprep.subr.mxu0 0.0
        %4686 = vmatpush1.msra.mxu0 0.0
        %4687 = vmatprep.subr.mxu0 0.0
        %4688 = vmatpush1.msra.mxu0 0.0
        %4689 = vmatprep.subr.mxu0 0.0
        %4690 = vmatpush1.msra.mxu0 0.0
        %4691 = vmatprep.subr.mxu0 0.0
        %4692 = vmatpush1.msra.mxu0 0.0
        %4693 = vmatprep.subr.mxu0 0.0
        %4694 = vmatpush1.msra.mxu0 0.0
        %4695 = vmatprep.subr.mxu0 0.0
        %4696 = vmatpush1.msra.mxu0 0.0
        %4697 = vmatprep.subr.mxu0 0.0
        %4698 = vmatpush1.msra.mxu0 0.0
        %4699 = vmatprep.subr.mxu0 0.0
        %4700 = vmatpush1.msra.mxu0 0.0
        %4701 = vmatprep.subr.mxu0 0.0
        %4702 = vmatpush1.msra.mxu0 0.0
        %4703 = vmatprep.subr.mxu0 0.0
        %4704 = vmatpush1.msra.mxu0 0.0
        %4705 = vmatprep.mubr.f32.mxu0 0.0
        %4706 = vmatmul.mubr.f32.gmra.mrb[0].mxu0 %v4624
        %v4707 = vpop.f32.mrb[0].mxu0
        %v4708 = vadd.f32 0.0, %v4707
        %v4709 = vpop.f32.mrb[0].mxu0
        %v4710 = vadd.f32 0.0, %v4709
        %4711 = vmatprep.mubr.f32.mxu0 0.0
        %4712 = vmatmul.mubr.f32.gmra.mrb[0].mxu0 %v4627
        %v4713 = vpop.f32.mrb[0].mxu0
        %v4714 = vadd.f32 0.0, %v4713
        %v4715 = vpop.f32.mrb[0].mxu0
        %v4716 = vadd.f32 0.0, %v4715
        %4717 = vmatprep.mubr.f32.mxu0 0.0
        %4718 = vmatmul.mubr.f32.gmra.mrb[0].mxu0 %v4630
        %v4719 = vpop.f32.mrb[0].mxu0
        %v4720 = vadd.f32 0.0, %v4719
        %v4721 = vpop.f32.mrb[0].mxu0
        %v4722 = vadd.f32 0.0, %v4721
        %4723 = vmatprep.mubr.f32.mxu0 0.0
        %4724 = vmatmul.mubr.f32.gmra.mrb[0].mxu0 %v4633
        %v4725 = vpop.f32.mrb[0].mxu0
        %v4726 = vadd.f32 0.0, %v4725
        %v4727 = vpop.f32.mrb[0].mxu0
        %v4728 = vadd.f32 0.0, %v4727
        %4729 = vmatprep.mubr.f32.mxu0 0.0
        %4730 = vmatmul.mubr.f32.gmra.mrb[0].mxu0 %v4636
        %v4731 = vpop.f32.mrb[0].mxu0
        %v4732 = vadd.f32 0.0, %v4731
        %v4733 = vpop.f32.mrb[0].mxu0
        %v4734 = vadd.f32 0.0, %v4733
        %4735 = vmatprep.mubr.f32.mxu0 0.0
        %4736 = vmatmul.mubr.f32.gmra.mrb[0].mxu0 %v4639
        %v4737 = vpop.f32.mrb[0].mxu0
        %v4738 = vadd.f32 0.0, %v4737
        %v4739 = vpop.f32.mrb[0].mxu0
        %v4740 = vadd.f32 0.0, %v4739
        %4741 = vdwg.mxu0
        %v4742 = vadd.f32 %v4578, %v4708
        %v4743 = vadd.f32 %v4579, %v4710
        %v4744 = vadd.f32 %v4580, %v4714
        %v4745 = vadd.f32 %v4581, %v4716
        %v4746 = vadd.f32 %v4582, %v4720
        %v4747 = vadd.f32 %v4583, %v4722
        %v4748 = vadd.f32 %v4584, %v4726
        %v4749 = vadd.f32 %v4585, %v4728
        %v4750 = vadd.f32 %v4586, %v4732
        %v4751 = vadd.f32 %v4587, %v4734
        %v4752 = vadd.f32 %v4588, %v4738
        %v4753 = vadd.f32 %v4589, %v4740
        %4754 = vst [vmem:[#allocation2] sm:$0xff] %v4742
        %4755 = vst [vmem:[#allocation2 + $0x8] sm:$0xff] %v4743
        %4756 = vst [vmem:[#allocation2 + $0x10] sm:$0xff] %v4744
        %4757 = vst [vmem:[#allocation2 + $0x18] sm:$0xff] %v4745
        %4758 = vst [vmem:[#allocation2 + $0x20] sm:$0xff] %v4746
        %4759 = vst [vmem:[#allocation2 + $0x28] sm:$0xff] %v4747
        %4760 = vst [vmem:[#allocation2 + $0x30] sm:$0xff] %v4748
        %4761 = vst [vmem:[#allocation2 + $0x38] sm:$0xff] %v4749
        %4762 = vst [vmem:[#allocation2 + $0x40] sm:$0xff] %v4750
        %4763 = vst [vmem:[#allocation2 + $0x48] sm:$0xff] %v4751
        %4764 = vst [vmem:[#allocation2 + $0x50] sm:$0xff] %v4752
        %4765 = vst [vmem:[#allocation2 + $0x58] sm:$0xff] %v4753
        %v4766 = vld [vmem:[#allocation2] sm:$0xff]
        %v4767 = vld [vmem:[#allocation2 + $0x8] sm:$0xff]
        %v4768 = vld [vmem:[#allocation2 + $0x10] sm:$0xff]
        %v4769 = vld [vmem:[#allocation2 + $0x18] sm:$0xff]
        %v4770 = vld [vmem:[#allocation2 + $0x20] sm:$0xff]
        %v4771 = vld [vmem:[#allocation2 + $0x28] sm:$0xff]
        %v4772 = vld [vmem:[#allocation2 + $0x30] sm:$0xff]
        %v4773 = vld [vmem:[#allocation2 + $0x38] sm:$0xff]
        %v4774 = vld [vmem:[#allocation2 + $0x40] sm:$0xff]
        %v4775 = vld [vmem:[#allocation2 + $0x48] sm:$0xff]
        %v4776 = vld [vmem:[#allocation2 + $0x50] sm:$0xff]
        %v4777 = vld [vmem:[#allocation2 + $0x58] sm:$0xff]
        %s4778 = scalar_lea.vmem %s2, 1056
        %v4779 = vld [vmem:[%s4778] sm:$0xff]
        %v4780 = vld [vmem:[%s4778 + $0x8] sm:$0xff]
        %v4781 = vld [vmem:[%s4778 + $0x10] sm:$0xff]
        %v4782 = vld [vmem:[%s4778 + $0x18] sm:$0xff]
        %v4783 = vld [vmem:[%s4778 + $0x20] sm:$0xff]
        %v4784 = vld [vmem:[%s4778 + $0x28] sm:$0xff]
        %4785 = vrot.lane.b32.xlu0 %v304, 48
        %v4786 = vpop.permute.xlu0 %4785
        %4787 = vrot.lane.b32.xlu0 %v305, 48
        %v4788 = vpop.permute.xlu0 %4787
        %4789 = vrot.lane.b32.xlu0 %v306, 48
        %v4790 = vpop.permute.xlu0 %4789
        %4791 = vrot.lane.b32.xlu0 %v307, 48
        %v4792 = vpop.permute.xlu0 %4791
        %4793 = vrot.lane.b32.xlu0 %v308, 48
        %v4794 = vpop.permute.xlu0 %4793
        %4795 = vrot.lane.b32.xlu0 %v309, 48
        %v4796 = vpop.permute.xlu0 %4795
        %vm4797 = vcmask 392192
        %v4798 = vsel %vm4797, %v4786, %v4788
        %v4799 = vsel %vm4797, %v4788, %v4790
        %v4800 = vsel %vm4797, %v4792, %v4794
        %v4801 = vsel %vm4797, %v4794, %v4796
        %v4807 = vsel %vm394, %v4779, 0
        %v4810 = vsel %vm394, %v4780, 0
        %v4813 = vsel %vm394, %v4781, 0
        %v4816 = vsel %vm394, %v4782, 0
        %v4819 = vsel %vm394, %v4783, 0
        %v4822 = vsel %vm394, %v4784, 0
        %4824 = vmatprep.subr.mxu0 %v4799
        %4825 = vmatpush1.msra.mxu0 %v4798
        %4826 = vmatprep.subr.mxu0 %v4801
        %4827 = vmatpush1.msra.mxu0 %v4800
        %4828 = vmatprep.subr.mxu0 0.0
        %4829 = vmatpush1.msra.mxu0 0.0
        %4830 = vmatprep.subr.mxu0 0.0
        %4831 = vmatpush1.msra.mxu0 0.0
        %4832 = vmatprep.subr.mxu0 0.0
        %4833 = vmatpush1.msra.mxu0 0.0
        %4834 = vmatprep.subr.mxu0 0.0
        %4835 = vmatpush1.msra.mxu0 0.0
        %4836 = vmatprep.subr.mxu0 0.0
        %4837 = vmatpush1.msra.mxu0 0.0
        %4838 = vmatprep.subr.mxu0 0.0
        %4839 = vmatpush1.msra.mxu0 0.0
        %4840 = vmatprep.subr.mxu0 0.0
        %4841 = vmatpush1.msra.mxu0 0.0
        %4842 = vmatprep.subr.mxu0 0.0
        %4843 = vmatpush1.msra.mxu0 0.0
        %4844 = vmatprep.subr.mxu0 0.0
        %4845 = vmatpush1.msra.mxu0 0.0
        %4846 = vmatprep.subr.mxu0 0.0
        %4847 = vmatpush1.msra.mxu0 0.0
        %4848 = vmatprep.subr.mxu0 0.0
        %4849 = vmatpush1.msra.mxu0 0.0
        %4850 = vmatprep.subr.mxu0 0.0
        %4851 = vmatpush1.msra.mxu0 0.0
        %4852 = vmatprep.subr.mxu0 0.0
        %4853 = vmatpush1.msra.mxu0 0.0
        %4854 = vmatprep.subr.mxu0 0.0
        %4855 = vmatpush1.msra.mxu0 0.0
        %4856 = vmatprep.subr.mxu0 0.0
        %4857 = vmatpush1.msra.mxu0 0.0
        %4858 = vmatprep.subr.mxu0 0.0
        %4859 = vmatpush1.msra.mxu0 0.0
        %4860 = vmatprep.subr.mxu0 0.0
        %4861 = vmatpush1.msra.mxu0 0.0
        %4862 = vmatprep.subr.mxu0 0.0
        %4863 = vmatpush1.msra.mxu0 0.0
        %4864 = vmatprep.subr.mxu0 0.0
        %4865 = vmatpush1.msra.mxu0 0.0
        %4866 = vmatprep.subr.mxu0 0.0
        %4867 = vmatpush1.msra.mxu0 0.0
        %4868 = vmatprep.subr.mxu0 0.0
        %4869 = vmatpush1.msra.mxu0 0.0
        %4870 = vmatprep.subr.mxu0 0.0
        %4871 = vmatpush1.msra.mxu0 0.0
        %4872 = vmatprep.subr.mxu0 0.0
        %4873 = vmatpush1.msra.mxu0 0.0
        %4874 = vmatprep.subr.mxu0 0.0
        %4875 = vmatpush1.msra.mxu0 0.0
        %4876 = vmatprep.subr.mxu0 0.0
        %4877 = vmatpush1.msra.mxu0 0.0
        %4878 = vmatprep.subr.mxu0 0.0
        %4879 = vmatpush1.msra.mxu0 0.0
        %4880 = vmatprep.subr.mxu0 0.0
        %4881 = vmatpush1.msra.mxu0 0.0
        %4882 = vmatprep.subr.mxu0 0.0
        %4883 = vmatpush1.msra.mxu0 0.0
        %4884 = vmatprep.subr.mxu0 0.0
        %4885 = vmatpush1.msra.mxu0 0.0
        %4886 = vmatprep.subr.mxu0 0.0
        %4887 = vmatpush1.msra.mxu0 0.0
        %4888 = vmatprep.mubr.f32.mxu0 0.0
        %4889 = vmatmul.mubr.f32.gmra.mrb[0].mxu0 %v4807
        %v4890 = vpop.f32.mrb[0].mxu0
        %v4891 = vadd.f32 0.0, %v4890
        %v4892 = vpop.f32.mrb[0].mxu0
        %v4893 = vadd.f32 0.0, %v4892
        %4894 = vmatprep.mubr.f32.mxu0 0.0
        %4895 = vmatmul.mubr.f32.gmra.mrb[0].mxu0 %v4810
        %v4896 = vpop.f32.mrb[0].mxu0
        %v4897 = vadd.f32 0.0, %v4896
        %v4898 = vpop.f32.mrb[0].mxu0
        %v4899 = vadd.f32 0.0, %v4898
        %4900 = vmatprep.mubr.f32.mxu0 0.0
        %4901 = vmatmul.mubr.f32.gmra.mrb[0].mxu0 %v4813
        %v4902 = vpop.f32.mrb[0].mxu0
        %v4903 = vadd.f32 0.0, %v4902
        %v4904 = vpop.f32.mrb[0].mxu0
        %v4905 = vadd.f32 0.0, %v4904
        %4906 = vmatprep.mubr.f32.mxu0 0.0
        %4907 = vmatmul.mubr.f32.gmra.mrb[0].mxu0 %v4816
        %v4908 = vpop.f32.mrb[0].mxu0
        %v4909 = vadd.f32 0.0, %v4908
        %v4910 = vpop.f32.mrb[0].mxu0
        %v4911 = vadd.f32 0.0, %v4910
        %4912 = vmatprep.mubr.f32.mxu0 0.0
        %4913 = vmatmul.mubr.f32.gmra.mrb[0].mxu0 %v4819
        %v4914 = vpop.f32.mrb[0].mxu0
        %v4915 = vadd.f32 0.0, %v4914
        %v4916 = vpop.f32.mrb[0].mxu0
        %v4917 = vadd.f32 0.0, %v4916
        %4918 = vmatprep.mubr.f32.mxu0 0.0
        %4919 = vmatmul.mubr.f32.gmra.mrb[0].mxu0 %v4822
        %v4920 = vpop.f32.mrb[0].mxu0
        %v4921 = vadd.f32 0.0, %v4920
        %v4922 = vpop.f32.mrb[0].mxu0
        %v4923 = vadd.f32 0.0, %v4922
        %4924 = vdwg.mxu0
        %v4925 = vadd.f32 %v4766, %v4891
        %v4926 = vadd.f32 %v4767, %v4893
        %v4927 = vadd.f32 %v4768, %v4897
        %v4928 = vadd.f32 %v4769, %v4899
        %v4929 = vadd.f32 %v4770, %v4903
        %v4930 = vadd.f32 %v4771, %v4905
        %v4931 = vadd.f32 %v4772, %v4909
        %v4932 = vadd.f32 %v4773, %v4911
        %v4933 = vadd.f32 %v4774, %v4915
        %v4934 = vadd.f32 %v4775, %v4917
        %v4935 = vadd.f32 %v4776, %v4921
        %v4936 = vadd.f32 %v4777, %v4923
        %4937 = vst [vmem:[#allocation2] sm:$0xff] %v4925
        %4938 = vst [vmem:[#allocation2 + $0x8] sm:$0xff] %v4926
        %4939 = vst [vmem:[#allocation2 + $0x10] sm:$0xff] %v4927
        %4940 = vst [vmem:[#allocation2 + $0x18] sm:$0xff] %v4928
        %4941 = vst [vmem:[#allocation2 + $0x20] sm:$0xff] %v4929
        %4942 = vst [vmem:[#allocation2 + $0x28] sm:$0xff] %v4930
        %4943 = vst [vmem:[#allocation2 + $0x30] sm:$0xff] %v4931
        %4944 = vst [vmem:[#allocation2 + $0x38] sm:$0xff] %v4932
        %4945 = vst [vmem:[#allocation2 + $0x40] sm:$0xff] %v4933
        %4946 = vst [vmem:[#allocation2 + $0x48] sm:$0xff] %v4934
        %4947 = vst [vmem:[#allocation2 + $0x50] sm:$0xff] %v4935
        %4948 = vst [vmem:[#allocation2 + $0x58] sm:$0xff] %v4936
        %4949 = vrot.lane.b32.xlu0 %v944, 81
        %v4950 = vpop.permute.xlu0 %4949
        %4951 = vrot.lane.b32.xlu0 %v948, 81
        %v4952 = vpop.permute.xlu0 %4951
        %v4953 = vsel %vm2624, %v4950, %v4952
        %v4957 = vmul.f32 %v304, %v4950
        %v4958 = vmul.f32 %v305, %v4953
        %v4959 = vmul.f32 %v306, %v4952
        %v4960 = vmul.f32 %v307, %v4950
        %v4961 = vmul.f32 %v308, %v4953
        %v4962 = vmul.f32 %v309, %v4952
        %v4963 = vld [vmem:[#allocation2] sm:$0xff]
        %v4964 = vld [vmem:[#allocation2 + $0x8] sm:$0xff]
        %v4965 = vld [vmem:[#allocation2 + $0x10] sm:$0xff]
        %v4966 = vld [vmem:[#allocation2 + $0x18] sm:$0xff]
        %v4967 = vld [vmem:[#allocation2 + $0x20] sm:$0xff]
        %v4968 = vld [vmem:[#allocation2 + $0x28] sm:$0xff]
        %v4969 = vld [vmem:[#allocation2 + $0x30] sm:$0xff]
        %v4970 = vld [vmem:[#allocation2 + $0x38] sm:$0xff]
        %v4971 = vld [vmem:[#allocation2 + $0x40] sm:$0xff]
        %v4972 = vld [vmem:[#allocation2 + $0x48] sm:$0xff]
        %v4973 = vld [vmem:[#allocation2 + $0x50] sm:$0xff]
        %v4974 = vld [vmem:[#allocation2 + $0x58] sm:$0xff]
        %s4975 = scalar_lea.vmem %s2, 1104
        %v4976 = vld [vmem:[%s4975] sm:$0xff]
        %v4977 = vld [vmem:[%s4975 + $0x8] sm:$0xff]
        %v4978 = vld [vmem:[%s4975 + $0x10] sm:$0xff]
        %v4979 = vld [vmem:[%s4975 + $0x18] sm:$0xff]
        %v4980 = vld [vmem:[%s4975 + $0x20] sm:$0xff]
        %v4981 = vld [vmem:[%s4975 + $0x28] sm:$0xff]
        %4988 = vrot.lane.b32.xlu0 %v4957, 47
        %v4989 = vpop.permute.xlu0 %4988
        %4990 = vrot.lane.b32.xlu0 %v4958, 47
        %v4991 = vpop.permute.xlu0 %4990
        %4992 = vrot.lane.b32.xlu0 %v4959, 47
        %v4993 = vpop.permute.xlu0 %4992
        %4994 = vrot.lane.b32.xlu0 %v4960, 47
        %v4995 = vpop.permute.xlu0 %4994
        %4996 = vrot.lane.b32.xlu0 %v4961, 47
        %v4997 = vpop.permute.xlu0 %4996
        %4998 = vrot.lane.b32.xlu0 %v4962, 47
        %v4999 = vpop.permute.xlu0 %4998
        %v5000 = vsel %vm2576, %v4989, %v4991
        %v5001 = vsel %vm2576, %v4991, %v4993
        %v5002 = vsel %vm2576, %v4995, %v4997
        %v5003 = vsel %vm2576, %v4997, %v4999
        %v5009 = vsel %vm394, %v4976, 0
        %v5012 = vsel %vm394, %v4977, 0
        %v5015 = vsel %vm394, %v4978, 0
        %v5018 = vsel %vm394, %v4979, 0
        %v5021 = vsel %vm394, %v4980, 0
        %v5024 = vsel %vm394, %v4981, 0
        %5026 = vmatprep.subr.mxu0 %v5001
        %5027 = vmatpush1.msra.mxu0 %v5000
        %5028 = vmatprep.subr.mxu0 %v5003
        %5029 = vmatpush1.msra.mxu0 %v5002
        %5030 = vmatprep.subr.mxu0 0.0
        %5031 = vmatpush1.msra.mxu0 0.0
        %5032 = vmatprep.subr.mxu0 0.0
        %5033 = vmatpush1.msra.mxu0 0.0
        %5034 = vmatprep.subr.mxu0 0.0
        %5035 = vmatpush1.msra.mxu0 0.0
        %5036 = vmatprep.subr.mxu0 0.0
        %5037 = vmatpush1.msra.mxu0 0.0
        %5038 = vmatprep.subr.mxu0 0.0
        %5039 = vmatpush1.msra.mxu0 0.0
        %5040 = vmatprep.subr.mxu0 0.0
        %5041 = vmatpush1.msra.mxu0 0.0
        %5042 = vmatprep.subr.mxu0 0.0
        %5043 = vmatpush1.msra.mxu0 0.0
        %5044 = vmatprep.subr.mxu0 0.0
        %5045 = vmatpush1.msra.mxu0 0.0
        %5046 = vmatprep.subr.mxu0 0.0
        %5047 = vmatpush1.msra.mxu0 0.0
        %5048 = vmatprep.subr.mxu0 0.0
        %5049 = vmatpush1.msra.mxu0 0.0
        %5050 = vmatprep.subr.mxu0 0.0
        %5051 = vmatpush1.msra.mxu0 0.0
        %5052 = vmatprep.subr.mxu0 0.0
        %5053 = vmatpush1.msra.mxu0 0.0
        %5054 = vmatprep.subr.mxu0 0.0
        %5055 = vmatpush1.msra.mxu0 0.0
        %5056 = vmatprep.subr.mxu0 0.0
        %5057 = vmatpush1.msra.mxu0 0.0
        %5058 = vmatprep.subr.mxu0 0.0
        %5059 = vmatpush1.msra.mxu0 0.0
        %5060 = vmatprep.subr.mxu0 0.0
        %5061 = vmatpush1.msra.mxu0 0.0
        %5062 = vmatprep.subr.mxu0 0.0
        %5063 = vmatpush1.msra.mxu0 0.0
        %5064 = vmatprep.subr.mxu0 0.0
        %5065 = vmatpush1.msra.mxu0 0.0
        %5066 = vmatprep.subr.mxu0 0.0
        %5067 = vmatpush1.msra.mxu0 0.0
        %5068 = vmatprep.subr.mxu0 0.0
        %5069 = vmatpush1.msra.mxu0 0.0
        %5070 = vmatprep.subr.mxu0 0.0
        %5071 = vmatpush1.msra.mxu0 0.0
        %5072 = vmatprep.subr.mxu0 0.0
        %5073 = vmatpush1.msra.mxu0 0.0
        %5074 = vmatprep.subr.mxu0 0.0
        %5075 = vmatpush1.msra.mxu0 0.0
        %5076 = vmatprep.subr.mxu0 0.0
        %5077 = vmatpush1.msra.mxu0 0.0
        %5078 = vmatprep.subr.mxu0 0.0
        %5079 = vmatpush1.msra.mxu0 0.0
        %5080 = vmatprep.subr.mxu0 0.0
        %5081 = vmatpush1.msra.mxu0 0.0
        %5082 = vmatprep.subr.mxu0 0.0
        %5083 = vmatpush1.msra.mxu0 0.0
        %5084 = vmatprep.subr.mxu0 0.0
        %5085 = vmatpush1.msra.mxu0 0.0
        %5086 = vmatprep.subr.mxu0 0.0
        %5087 = vmatpush1.msra.mxu0 0.0
        %5088 = vmatprep.subr.mxu0 0.0
        %5089 = vmatpush1.msra.mxu0 0.0
        %5090 = vmatprep.mubr.f32.mxu0 0.0
        %5091 = vmatmul.mubr.f32.gmra.mrb[0].mxu0 %v5009
        %v5092 = vpop.f32.mrb[0].mxu0
        %v5093 = vadd.f32 0.0, %v5092
        %v5094 = vpop.f32.mrb[0].mxu0
        %v5095 = vadd.f32 0.0, %v5094
        %5096 = vmatprep.mubr.f32.mxu0 0.0
        %5097 = vmatmul.mubr.f32.gmra.mrb[0].mxu0 %v5012
        %v5098 = vpop.f32.mrb[0].mxu0
        %v5099 = vadd.f32 0.0, %v5098
        %v5100 = vpop.f32.mrb[0].mxu0
        %v5101 = vadd.f32 0.0, %v5100
        %5102 = vmatprep.mubr.f32.mxu0 0.0
        %5103 = vmatmul.mubr.f32.gmra.mrb[0].mxu0 %v5015
        %v5104 = vpop.f32.mrb[0].mxu0
        %v5105 = vadd.f32 0.0, %v5104
        %v5106 = vpop.f32.mrb[0].mxu0
        %v5107 = vadd.f32 0.0, %v5106
        %5108 = vmatprep.mubr.f32.mxu0 0.0
        %5109 = vmatmul.mubr.f32.gmra.mrb[0].mxu0 %v5018
        %v5110 = vpop.f32.mrb[0].mxu0
        %v5111 = vadd.f32 0.0, %v5110
        %v5112 = vpop.f32.mrb[0].mxu0
        %v5113 = vadd.f32 0.0, %v5112
        %5114 = vmatprep.mubr.f32.mxu0 0.0
        %5115 = vmatmul.mubr.f32.gmra.mrb[0].mxu0 %v5021
        %v5116 = vpop.f32.mrb[0].mxu0
        %v5117 = vadd.f32 0.0, %v5116
        %v5118 = vpop.f32.mrb[0].mxu0
        %v5119 = vadd.f32 0.0, %v5118
        %5120 = vmatprep.mubr.f32.mxu0 0.0
        %5121 = vmatmul.mubr.f32.gmra.mrb[0].mxu0 %v5024
        %v5122 = vpop.f32.mrb[0].mxu0
        %v5123 = vadd.f32 0.0, %v5122
        %v5124 = vpop.f32.mrb[0].mxu0
        %v5125 = vadd.f32 0.0, %v5124
        %5126 = vdwg.mxu0
        %v5127 = vadd.f32 %v4963, %v5093
        %v5128 = vadd.f32 %v4964, %v5095
        %v5129 = vadd.f32 %v4965, %v5099
        %v5130 = vadd.f32 %v4966, %v5101
        %v5131 = vadd.f32 %v4967, %v5105
        %v5132 = vadd.f32 %v4968, %v5107
        %v5133 = vadd.f32 %v4969, %v5111
        %v5134 = vadd.f32 %v4970, %v5113
        %v5135 = vadd.f32 %v4971, %v5117
        %v5136 = vadd.f32 %v4972, %v5119
        %v5137 = vadd.f32 %v4973, %v5123
        %v5138 = vadd.f32 %v4974, %v5125
        %5139 = vst [vmem:[#allocation2] sm:$0xff] %v5127
        %5140 = vst [vmem:[#allocation2 + $0x8] sm:$0xff] %v5128
        %5141 = vst [vmem:[#allocation2 + $0x10] sm:$0xff] %v5129
        %5142 = vst [vmem:[#allocation2 + $0x18] sm:$0xff] %v5130
        %5143 = vst [vmem:[#allocation2 + $0x20] sm:$0xff] %v5131
        %5144 = vst [vmem:[#allocation2 + $0x28] sm:$0xff] %v5132
        %5145 = vst [vmem:[#allocation2 + $0x30] sm:$0xff] %v5133
        %5146 = vst [vmem:[#allocation2 + $0x38] sm:$0xff] %v5134
        %5147 = vst [vmem:[#allocation2 + $0x40] sm:$0xff] %v5135
        %5148 = vst [vmem:[#allocation2 + $0x48] sm:$0xff] %v5136
        %5149 = vst [vmem:[#allocation2 + $0x50] sm:$0xff] %v5137
        %5150 = vst [vmem:[#allocation2 + $0x58] sm:$0xff] %v5138
        %5151 = vrot.lane.b32.xlu0 %v1158, 82
        %v5152 = vpop.permute.xlu0 %5151
        %5153 = vrot.lane.b32.xlu0 %v1162, 82
        %v5154 = vpop.permute.xlu0 %5153
        %v5155 = vsel %vm2420, %v5152, %v5154
        %v5159 = vmul.f32 %v304, %v5152
        %v5160 = vmul.f32 %v305, %v5155
        %v5161 = vmul.f32 %v306, %v5154
        %v5162 = vmul.f32 %v307, %v5152
        %v5163 = vmul.f32 %v308, %v5155
        %v5164 = vmul.f32 %v309, %v5154
        %v5165 = vld [vmem:[#allocation2] sm:$0xff]
        %v5166 = vld [vmem:[#allocation2 + $0x8] sm:$0xff]
        %v5167 = vld [vmem:[#allocation2 + $0x10] sm:$0xff]
        %v5168 = vld [vmem:[#allocation2 + $0x18] sm:$0xff]
        %v5169 = vld [vmem:[#allocation2 + $0x20] sm:$0xff]
        %v5170 = vld [vmem:[#allocation2 + $0x28] sm:$0xff]
        %v5171 = vld [vmem:[#allocation2 + $0x30] sm:$0xff]
        %v5172 = vld [vmem:[#allocation2 + $0x38] sm:$0xff]
        %v5173 = vld [vmem:[#allocation2 + $0x40] sm:$0xff]
        %v5174 = vld [vmem:[#allocation2 + $0x48] sm:$0xff]
        %v5175 = vld [vmem:[#allocation2 + $0x50] sm:$0xff]
        %v5176 = vld [vmem:[#allocation2 + $0x58] sm:$0xff]
        %s5177 = scalar_lea.vmem %s2, 1152
        %v5178 = vld [vmem:[%s5177] sm:$0xff]
        %v5179 = vld [vmem:[%s5177 + $0x8] sm:$0xff]
        %v5180 = vld [vmem:[%s5177 + $0x10] sm:$0xff]
        %v5181 = vld [vmem:[%s5177 + $0x18] sm:$0xff]
        %v5182 = vld [vmem:[%s5177 + $0x20] sm:$0xff]
        %v5183 = vld [vmem:[%s5177 + $0x28] sm:$0xff]
        %5190 = vrot.lane.b32.xlu0 %v5159, 46
        %v5191 = vpop.permute.xlu0 %5190
        %5192 = vrot.lane.b32.xlu0 %v5160, 46
        %v5193 = vpop.permute.xlu0 %5192
        %5194 = vrot.lane.b32.xlu0 %v5161, 46
        %v5195 = vpop.permute.xlu0 %5194
        %5196 = vrot.lane.b32.xlu0 %v5162, 46
        %v5197 = vpop.permute.xlu0 %5196
        %5198 = vrot.lane.b32.xlu0 %v5163, 46
        %v5199 = vpop.permute.xlu0 %5198
        %5200 = vrot.lane.b32.xlu0 %v5164, 46
        %v5201 = vpop.permute.xlu0 %5200
        %v5202 = vsel %vm2372, %v5191, %v5193
        %v5203 = vsel %vm2372, %v5193, %v5195
        %v5204 = vsel %vm2372, %v5197, %v5199
        %v5205 = vsel %vm2372, %v5199, %v5201
        %v5211 = vsel %vm394, %v5178, 0
        %v5214 = vsel %vm394, %v5179, 0
        %v5217 = vsel %vm394, %v5180, 0
        %v5220 = vsel %vm394, %v5181, 0
        %v5223 = vsel %vm394, %v5182, 0
        %v5226 = vsel %vm394, %v5183, 0
        %5228 = vmatprep.subr.mxu0 %v5203
        %5229 = vmatpush1.msra.mxu0 %v5202
        %5230 = vmatprep.subr.mxu0 %v5205
        %5231 = vmatpush1.msra.mxu0 %v5204
        %5232 = vmatprep.subr.mxu0 0.0
        %5233 = vmatpush1.msra.mxu0 0.0
        %5234 = vmatprep.subr.mxu0 0.0
        %5235 = vmatpush1.msra.mxu0 0.0
        %5236 = vmatprep.subr.mxu0 0.0
        %5237 = vmatpush1.msra.mxu0 0.0
        %5238 = vmatprep.subr.mxu0 0.0
        %5239 = vmatpush1.msra.mxu0 0.0
        %5240 = vmatprep.subr.mxu0 0.0
        %5241 = vmatpush1.msra.mxu0 0.0
        %5242 = vmatprep.subr.mxu0 0.0
        %5243 = vmatpush1.msra.mxu0 0.0
        %5244 = vmatprep.subr.mxu0 0.0
        %5245 = vmatpush1.msra.mxu0 0.0
        %5246 = vmatprep.subr.mxu0 0.0
        %5247 = vmatpush1.msra.mxu0 0.0
        %5248 = vmatprep.subr.mxu0 0.0
        %5249 = vmatpush1.msra.mxu0 0.0
        %5250 = vmatprep.subr.mxu0 0.0
        %5251 = vmatpush1.msra.mxu0 0.0
        %5252 = vmatprep.subr.mxu0 0.0
        %5253 = vmatpush1.msra.mxu0 0.0
        %5254 = vmatprep.subr.mxu0 0.0
        %5255 = vmatpush1.msra.mxu0 0.0
        %5256 = vmatprep.subr.mxu0 0.0
        %5257 = vmatpush1.msra.mxu0 0.0
        %5258 = vmatprep.subr.mxu0 0.0
        %5259 = vmatpush1.msra.mxu0 0.0
        %5260 = vmatprep.subr.mxu0 0.0
        %5261 = vmatpush1.msra.mxu0 0.0
        %5262 = vmatprep.subr.mxu0 0.0
        %5263 = vmatpush1.msra.mxu0 0.0
        %5264 = vmatprep.subr.mxu0 0.0
        %5265 = vmatpush1.msra.mxu0 0.0
        %5266 = vmatprep.subr.mxu0 0.0
        %5267 = vmatpush1.msra.mxu0 0.0
        %5268 = vmatprep.subr.mxu0 0.0
        %5269 = vmatpush1.msra.mxu0 0.0
        %5270 = vmatprep.subr.mxu0 0.0
        %5271 = vmatpush1.msra.mxu0 0.0
        %5272 = vmatprep.subr.mxu0 0.0
        %5273 = vmatpush1.msra.mxu0 0.0
        %5274 = vmatprep.subr.mxu0 0.0
        %5275 = vmatpush1.msra.mxu0 0.0
        %5276 = vmatprep.subr.mxu0 0.0
        %5277 = vmatpush1.msra.mxu0 0.0
        %5278 = vmatprep.subr.mxu0 0.0
        %5279 = vmatpush1.msra.mxu0 0.0
        %5280 = vmatprep.subr.mxu0 0.0
        %5281 = vmatpush1.msra.mxu0 0.0
        %5282 = vmatprep.subr.mxu0 0.0
        %5283 = vmatpush1.msra.mxu0 0.0
        %5284 = vmatprep.subr.mxu0 0.0
        %5285 = vmatpush1.msra.mxu0 0.0
        %5286 = vmatprep.subr.mxu0 0.0
        %5287 = vmatpush1.msra.mxu0 0.0
        %5288 = vmatprep.subr.mxu0 0.0
        %5289 = vmatpush1.msra.mxu0 0.0
        %5290 = vmatprep.subr.mxu0 0.0
        %5291 = vmatpush1.msra.mxu0 0.0
        %5292 = vmatprep.mubr.f32.mxu0 0.0
        %5293 = vmatmul.mubr.f32.gmra.mrb[0].mxu0 %v5211
        %v5294 = vpop.f32.mrb[0].mxu0
        %v5295 = vadd.f32 0.0, %v5294
        %v5296 = vpop.f32.mrb[0].mxu0
        %v5297 = vadd.f32 0.0, %v5296
        %5298 = vmatprep.mubr.f32.mxu0 0.0
        %5299 = vmatmul.mubr.f32.gmra.mrb[0].mxu0 %v5214
        %v5300 = vpop.f32.mrb[0].mxu0
        %v5301 = vadd.f32 0.0, %v5300
        %v5302 = vpop.f32.mrb[0].mxu0
        %v5303 = vadd.f32 0.0, %v5302
        %5304 = vmatprep.mubr.f32.mxu0 0.0
        %5305 = vmatmul.mubr.f32.gmra.mrb[0].mxu0 %v5217
        %v5306 = vpop.f32.mrb[0].mxu0
        %v5307 = vadd.f32 0.0, %v5306
        %v5308 = vpop.f32.mrb[0].mxu0
        %v5309 = vadd.f32 0.0, %v5308
        %5310 = vmatprep.mubr.f32.mxu0 0.0
        %5311 = vmatmul.mubr.f32.gmra.mrb[0].mxu0 %v5220
        %v5312 = vpop.f32.mrb[0].mxu0
        %v5313 = vadd.f32 0.0, %v5312
        %v5314 = vpop.f32.mrb[0].mxu0
        %v5315 = vadd.f32 0.0, %v5314
        %5316 = vmatprep.mubr.f32.mxu0 0.0
        %5317 = vmatmul.mubr.f32.gmra.mrb[0].mxu0 %v5223
        %v5318 = vpop.f32.mrb[0].mxu0
        %v5319 = vadd.f32 0.0, %v5318
        %v5320 = vpop.f32.mrb[0].mxu0
        %v5321 = vadd.f32 0.0, %v5320
        %5322 = vmatprep.mubr.f32.mxu0 0.0
        %5323 = vmatmul.mubr.f32.gmra.mrb[0].mxu0 %v5226
        %v5324 = vpop.f32.mrb[0].mxu0
        %v5325 = vadd.f32 0.0, %v5324
        %v5326 = vpop.f32.mrb[0].mxu0
        %v5327 = vadd.f32 0.0, %v5326
        %5328 = vdwg.mxu0
        %v5329 = vadd.f32 %v5165, %v5295
        %v5330 = vadd.f32 %v5166, %v5297
        %v5331 = vadd.f32 %v5167, %v5301
        %v5332 = vadd.f32 %v5168, %v5303
        %v5333 = vadd.f32 %v5169, %v5307
        %v5334 = vadd.f32 %v5170, %v5309
        %v5335 = vadd.f32 %v5171, %v5313
        %v5336 = vadd.f32 %v5172, %v5315
        %v5337 = vadd.f32 %v5173, %v5319
        %v5338 = vadd.f32 %v5174, %v5321
        %v5339 = vadd.f32 %v5175, %v5325
        %v5340 = vadd.f32 %v5176, %v5327
        %5341 = vst [vmem:[#allocation2] sm:$0xff] %v5329
        %5342 = vst [vmem:[#allocation2 + $0x8] sm:$0xff] %v5330
        %5343 = vst [vmem:[#allocation2 + $0x10] sm:$0xff] %v5331
        %5344 = vst [vmem:[#allocation2 + $0x18] sm:$0xff] %v5332
        %5345 = vst [vmem:[#allocation2 + $0x20] sm:$0xff] %v5333
        %5346 = vst [vmem:[#allocation2 + $0x28] sm:$0xff] %v5334
        %5347 = vst [vmem:[#allocation2 + $0x30] sm:$0xff] %v5335
        %5348 = vst [vmem:[#allocation2 + $0x38] sm:$0xff] %v5336
        %5349 = vst [vmem:[#allocation2 + $0x40] sm:$0xff] %v5337
        %5350 = vst [vmem:[#allocation2 + $0x48] sm:$0xff] %v5338
        %5351 = vst [vmem:[#allocation2 + $0x50] sm:$0xff] %v5339
        %5352 = vst [vmem:[#allocation2 + $0x58] sm:$0xff] %v5340
        %v5353 = vld [vmem:[#allocation2] sm:$0xff]
        %v5354 = vld [vmem:[#allocation2 + $0x8] sm:$0xff]
        %v5355 = vld [vmem:[#allocation2 + $0x10] sm:$0xff]
        %v5356 = vld [vmem:[#allocation2 + $0x18] sm:$0xff]
        %v5357 = vld [vmem:[#allocation2 + $0x20] sm:$0xff]
        %v5358 = vld [vmem:[#allocation2 + $0x28] sm:$0xff]
        %v5359 = vld [vmem:[#allocation2 + $0x30] sm:$0xff]
        %v5360 = vld [vmem:[#allocation2 + $0x38] sm:$0xff]
        %v5361 = vld [vmem:[#allocation2 + $0x40] sm:$0xff]
        %v5362 = vld [vmem:[#allocation2 + $0x48] sm:$0xff]
        %v5363 = vld [vmem:[#allocation2 + $0x50] sm:$0xff]
        %v5364 = vld [vmem:[#allocation2 + $0x58] sm:$0xff]
        %v5365 = vld [vmem:[%s3] sm:$0xff]
        %v5366 = vld [vmem:[%s3 + $0x8] sm:$0xff]
        %v5367 = vld [vmem:[%s3 + $0x10] sm:$0xff]
        %v5368 = vld [vmem:[%s3 + $0x18] sm:$0xff]
        %v5369 = vld [vmem:[%s3 + $0x20] sm:$0xff]
        %v5370 = vld [vmem:[%s3 + $0x28] sm:$0xff]
        %5372 = vset.pattern.permute.xlu0 0
        %5373 = vperm.xlu0 %5372, %v5365
        %v5374 = vpop.permute.xlu0 %5373
        %5377 = vset.pattern.permute.xlu0 0
        %5378 = vperm.xlu0 %5377, %v5366
        %v5379 = vpop.permute.xlu0 %5378
        %5382 = vset.pattern.permute.xlu0 0
        %5383 = vperm.xlu0 %5382, %v5367
        %v5384 = vpop.permute.xlu0 %5383
        %5387 = vset.pattern.permute.xlu0 0
        %5388 = vperm.xlu0 %5387, %v5368
        %v5389 = vpop.permute.xlu0 %5388
        %5392 = vset.pattern.permute.xlu0 0
        %5393 = vperm.xlu0 %5392, %v5369
        %v5394 = vpop.permute.xlu0 %5393
        %5397 = vset.pattern.permute.xlu0 0
        %5398 = vperm.xlu0 %5397, %v5370
        %v5399 = vpop.permute.xlu0 %5398
        %v5401 = vmul.f32 %v5353, %v5374
        %v5402 = vmul.f32 %v5354, %v5374
        %v5403 = vmul.f32 %v5355, %v5379
        %v5404 = vmul.f32 %v5356, %v5379
        %v5405 = vmul.f32 %v5357, %v5384
        %v5406 = vmul.f32 %v5358, %v5384
        %v5407 = vmul.f32 %v5359, %v5389
        %v5408 = vmul.f32 %v5360, %v5389
        %v5409 = vmul.f32 %v5361, %v5394
        %v5410 = vmul.f32 %v5362, %v5394
        %v5411 = vmul.f32 %v5363, %v5399
        %v5412 = vmul.f32 %v5364, %v5399
        %v5413 = vld [vmem:[%s4] sm:$0xff]
        %v5414 = vld [vmem:[%s4 + $0x8] sm:$0xff]
        %v5415 = vld [vmem:[%s4 + $0x10] sm:$0xff]
        %v5416 = vld [vmem:[%s4 + $0x18] sm:$0xff]
        %v5417 = vld [vmem:[%s4 + $0x20] sm:$0xff]
        %v5418 = vld [vmem:[%s4 + $0x28] sm:$0xff]
        %5420 = vset.pattern.permute.xlu0 0
        %5421 = vperm.xlu0 %5420, %v5413
        %v5422 = vpop.permute.xlu0 %5421
        %5425 = vset.pattern.permute.xlu0 0
        %5426 = vperm.xlu0 %5425, %v5414
        %v5427 = vpop.permute.xlu0 %5426
        %5430 = vset.pattern.permute.xlu0 0
        %5431 = vperm.xlu0 %5430, %v5415
        %v5432 = vpop.permute.xlu0 %5431
        %5435 = vset.pattern.permute.xlu0 0
        %5436 = vperm.xlu0 %5435, %v5416
        %v5437 = vpop.permute.xlu0 %5436
        %5440 = vset.pattern.permute.xlu0 0
        %5441 = vperm.xlu0 %5440, %v5417
        %v5442 = vpop.permute.xlu0 %5441
        %5445 = vset.pattern.permute.xlu0 0
        %5446 = vperm.xlu0 %5445, %v5418
        %v5447 = vpop.permute.xlu0 %5446
        %v5449 = vadd.f32 %v5401, %v5422
        %v5450 = vadd.f32 %v5402, %v5422
        %v5451 = vadd.f32 %v5403, %v5427
        %v5452 = vadd.f32 %v5404, %v5427
        %v5453 = vadd.f32 %v5405, %v5432
        %v5454 = vadd.f32 %v5406, %v5432
        %v5455 = vadd.f32 %v5407, %v5437
        %v5456 = vadd.f32 %v5408, %v5437
        %v5457 = vadd.f32 %v5409, %v5442
        %v5458 = vadd.f32 %v5410, %v5442
        %v5459 = vadd.f32 %v5411, %v5447
        %v5460 = vadd.f32 %v5412, %v5447
        %v5461 = vmax.f32 %v5449, 0.0
        %v5462 = vmax.f32 %v5450, 0.0
        %v5463 = vmax.f32 %v5451, 0.0
        %v5464 = vmax.f32 %v5452, 0.0
        %v5465 = vmax.f32 %v5453, 0.0
        %v5466 = vmax.f32 %v5454, 0.0
        %v5467 = vmax.f32 %v5455, 0.0
        %v5468 = vmax.f32 %v5456, 0.0
        %v5469 = vmax.f32 %v5457, 0.0
        %v5470 = vmax.f32 %v5458, 0.0
        %v5471 = vmax.f32 %v5459, 0.0
        %v5472 = vmax.f32 %v5460, 0.0
        %vm5473 = vcmask 261120
        %5474 = vst.msk [vmem:[#allocation3] sm:$0xff] %vm5473, 0.0
        %5475 = vst.msk [vmem:[#allocation3 + $0x18] sm:$0xff] %vm5473, 0.0
        %5476 = vst.msk [vmem:[#allocation3 + $0x30] sm:$0xff] %vm5473, 0.0
        %5477 = vst.msk [vmem:[#allocation3 + $0x48] sm:$0xff] %vm5473, 0.0
        %5478 = vst.msk [vmem:[#allocation3 + $0x60] sm:$0xff] %vm5473, 0.0
        %5479 = vst.msk [vmem:[#allocation3 + $0x78] sm:$0xff] %vm5473, 0.0
        %vm5480 = vcmask 523520
        %5481 = vst.msk [vmem:[#allocation3 + $0x10] sm:$0xff] %vm5480, 0.0
        %5482 = vst.msk [vmem:[#allocation3 + $0x28] sm:$0xff] %vm5480, 0.0
        %5483 = vst.msk [vmem:[#allocation3 + $0x40] sm:$0xff] %vm5480, 0.0
        %5484 = vst.msk [vmem:[#allocation3 + $0x58] sm:$0xff] %vm5480, 0.0
        %5485 = vst.msk [vmem:[#allocation3 + $0x70] sm:$0xff] %vm5480, 0.0
        %5486 = vst.msk [vmem:[#allocation3 + $0x88] sm:$0xff] %vm5480, 0.0
        %5499 = vrot.lane.b32.xlu0 %v5461, 32
        %v5500 = vpop.permute.xlu0 %5499
        %5501 = vrot.lane.b32.xlu0 %v5462, 32
        %v5502 = vpop.permute.xlu0 %5501
        %5503 = vrot.lane.b32.xlu0 %v5463, 32
        %v5504 = vpop.permute.xlu0 %5503
        %5505 = vrot.lane.b32.xlu0 %v5464, 32
        %v5506 = vpop.permute.xlu0 %5505
        %5507 = vrot.lane.b32.xlu0 %v5465, 32
        %v5508 = vpop.permute.xlu0 %5507
        %5509 = vrot.lane.b32.xlu0 %v5466, 32
        %v5510 = vpop.permute.xlu0 %5509
        %5511 = vrot.lane.b32.xlu0 %v5467, 32
        %v5512 = vpop.permute.xlu0 %5511
        %5513 = vrot.lane.b32.xlu0 %v5468, 32
        %v5514 = vpop.permute.xlu0 %5513
        %5515 = vrot.lane.b32.xlu0 %v5469, 32
        %v5516 = vpop.permute.xlu0 %5515
        %5517 = vrot.lane.b32.xlu0 %v5470, 32
        %v5518 = vpop.permute.xlu0 %5517
        %5519 = vrot.lane.b32.xlu0 %v5471, 32
        %v5520 = vpop.permute.xlu0 %5519
        %5521 = vrot.lane.b32.xlu0 %v5472, 32
        %v5522 = vpop.permute.xlu0 %5521
        %v5523 = vsel %vm5473, %v5500, %v5502
        %v5524 = vsel %vm5473, %v5504, %v5506
        %v5525 = vsel %vm5473, %v5508, %v5510
        %v5526 = vsel %vm5473, %v5512, %v5514
        %v5527 = vsel %vm5473, %v5516, %v5518
        %v5528 = vsel %vm5473, %v5520, %v5522
        %vm5547 = vcmask 1047808
        %5548 = vst.msk [vmem:[#allocation3] sm:$0xff] %vm5547, %v5500
        %5549 = vst [vmem:[#allocation3 + $0x8] sm:$0xff] %v5523
        %5550 = vst.msk [vmem:[#allocation3 + $0x10] sm:$0xff] %vm5473, %v5502
        %5551 = vst.msk [vmem:[#allocation3 + $0x18] sm:$0xff] %vm5547, %v5504
        %5552 = vst [vmem:[#allocation3 + $0x20] sm:$0xff] %v5524
        %5553 = vst.msk [vmem:[#allocation3 + $0x28] sm:$0xff] %vm5473, %v5506
        %5554 = vst.msk [vmem:[#allocation3 + $0x30] sm:$0xff] %vm5547, %v5508
        %5555 = vst [vmem:[#allocation3 + $0x38] sm:$0xff] %v5525
        %5556 = vst.msk [vmem:[#allocation3 + $0x40] sm:$0xff] %vm5473, %v5510
        %5557 = vst.msk [vmem:[#allocation3 + $0x48] sm:$0xff] %vm5547, %v5512
        %5558 = vst [vmem:[#allocation3 + $0x50] sm:$0xff] %v5526
        %5559 = vst.msk [vmem:[#allocation3 + $0x58] sm:$0xff] %vm5473, %v5514
        %5560 = vst.msk [vmem:[#allocation3 + $0x60] sm:$0xff] %vm5547, %v5516
        %5561 = vst [vmem:[#allocation3 + $0x68] sm:$0xff] %v5527
        %5562 = vst.msk [vmem:[#allocation3 + $0x70] sm:$0xff] %vm5473, %v5518
        %5563 = vst.msk [vmem:[#allocation3 + $0x78] sm:$0xff] %vm5547, %v5520
        %5564 = vst [vmem:[#allocation3 + $0x80] sm:$0xff] %v5528
        %5565 = vst.msk [vmem:[#allocation3 + $0x88] sm:$0xff] %vm5473, %v5522
        %5566 = vst [vmem:[#allocation4] sm:$0xff] 0.0
        %5567 = vst [vmem:[#allocation4 + $0x8] sm:$0xff] 0.0
        %5568 = vst [vmem:[#allocation4 + $0x10] sm:$0xff] 0.0
        %5569 = vst [vmem:[#allocation4 + $0x18] sm:$0xff] 0.0
        %v5570 = vld [vmem:[#allocation3] sm:$0xff]
        %v5571 = vld [vmem:[#allocation3 + $0x8] sm:$0xff]
        %v5572 = vld [vmem:[#allocation3 + $0x10] sm:$0xff]
        %v5573 = vld [vmem:[#allocation3 + $0x18] sm:$0xff]
        %v5574 = vld [vmem:[#allocation3 + $0x20] sm:$0xff]
        %v5575 = vld [vmem:[#allocation3 + $0x28] sm:$0xff]
        %v5576 = vld [vmem:[#allocation3 + $0x30] sm:$0xff]
        %v5577 = vld [vmem:[#allocation3 + $0x38] sm:$0xff]
        %v5578 = vld [vmem:[#allocation3 + $0x40] sm:$0xff]
        %v5579 = vld [vmem:[#allocation3 + $0x48] sm:$0xff]
        %v5580 = vld [vmem:[#allocation3 + $0x50] sm:$0xff]
        %v5581 = vld [vmem:[#allocation3 + $0x58] sm:$0xff]
        %v5582 = vld [vmem:[#allocation3 + $0x60] sm:$0xff]
        %v5583 = vld [vmem:[#allocation3 + $0x68] sm:$0xff]
        %v5584 = vld [vmem:[#allocation3 + $0x70] sm:$0xff]
        %v5585 = vld [vmem:[#allocation3 + $0x78] sm:$0xff]
        %v5586 = vld [vmem:[#allocation3 + $0x80] sm:$0xff]
        %v5587 = vld [vmem:[#allocation3 + $0x88] sm:$0xff]
        %v5588 = vmul.f32 %v5570, %v549
        %v5589 = vmul.f32 %v5571, %v553
        %v5590 = vmul.f32 %v5572, %v551
        %v5591 = vmul.f32 %v5573, %v549
        %v5592 = vmul.f32 %v5574, %v553
        %v5593 = vmul.f32 %v5575, %v551
        %v5594 = vmul.f32 %v5576, %v549
        %v5595 = vmul.f32 %v5577, %v553
        %v5596 = vmul.f32 %v5578, %v551
        %v5597 = vmul.f32 %v5579, %v549
        %v5598 = vmul.f32 %v5580, %v553
        %v5599 = vmul.f32 %v5581, %v551
        %v5600 = vmul.f32 %v5582, %v549
        %v5601 = vmul.f32 %v5583, %v553
        %v5602 = vmul.f32 %v5584, %v551
        %v5603 = vmul.f32 %v5585, %v549
        %v5604 = vmul.f32 %v5586, %v553
        %v5605 = vmul.f32 %v5587, %v551
        %v5606 = vld [vmem:[#allocation4] sm:$0xff]
        %v5607 = vld [vmem:[#allocation4 + $0x8] sm:$0xff]
        %v5608 = vld [vmem:[#allocation4 + $0x10] sm:$0xff]
        %v5609 = vld [vmem:[#allocation4 + $0x18] sm:$0xff]
        %v5610 = vld [vmem:[%s5] sm:$0xff]
        %v5611 = vld [vmem:[%s5 + $0x8] sm:$0xff]
        %5630 = vrot.lane.b32.xlu0 %v5588, 113
        %v5631 = vpop.permute.xlu0 %5630
        %5632 = vrot.lane.b32.xlu0 %v5589, 113
        %v5633 = vpop.permute.xlu0 %5632
        %5634 = vrot.lane.b32.xlu0 %v5590, 113
        %v5635 = vpop.permute.xlu0 %5634
        %5636 = vrot.lane.b32.xlu0 %v5591, 113
        %v5637 = vpop.permute.xlu0 %5636
        %5638 = vrot.lane.b32.xlu0 %v5592, 113
        %v5639 = vpop.permute.xlu0 %5638
        %5640 = vrot.lane.b32.xlu0 %v5593, 113
        %v5641 = vpop.permute.xlu0 %5640
        %5642 = vrot.lane.b32.xlu0 %v5594, 113
        %v5643 = vpop.permute.xlu0 %5642
        %5644 = vrot.lane.b32.xlu0 %v5595, 113
        %v5645 = vpop.permute.xlu0 %5644
        %5646 = vrot.lane.b32.xlu0 %v5596, 113
        %v5647 = vpop.permute.xlu0 %5646
        %5648 = vrot.lane.b32.xlu0 %v5597, 113
        %v5649 = vpop.permute.xlu0 %5648
        %5650 = vrot.lane.b32.xlu0 %v5598, 113
        %v5651 = vpop.permute.xlu0 %5650
        %5652 = vrot.lane.b32.xlu0 %v5599, 113
        %v5653 = vpop.permute.xlu0 %5652
        %5654 = vrot.lane.b32.xlu0 %v5600, 113
        %v5655 = vpop.permute.xlu0 %5654
        %5656 = vrot.lane.b32.xlu0 %v5601, 113
        %v5657 = vpop.permute.xlu0 %5656
        %5658 = vrot.lane.b32.xlu0 %v5602, 113
        %v5659 = vpop.permute.xlu0 %5658
        %5660 = vrot.lane.b32.xlu0 %v5603, 113
        %v5661 = vpop.permute.xlu0 %5660
        %5662 = vrot.lane.b32.xlu0 %v5604, 113
        %v5663 = vpop.permute.xlu0 %5662
        %5664 = vrot.lane.b32.xlu0 %v5605, 113
        %v5665 = vpop.permute.xlu0 %5664
        %v5666 = vsel %vm600, %v5631, %v5633
        %v5667 = vsel %vm600, %v5633, %v5635
        %v5668 = vsel %vm600, %v5637, %v5639
        %v5669 = vsel %vm600, %v5639, %v5641
        %v5670 = vsel %vm600, %v5643, %v5645
        %v5671 = vsel %vm600, %v5645, %v5647
        %v5672 = vsel %vm600, %v5649, %v5651
        %v5673 = vsel %vm600, %v5651, %v5653
        %v5674 = vsel %vm600, %v5655, %v5657
        %v5675 = vsel %vm600, %v5657, %v5659
        %v5676 = vsel %vm600, %v5661, %v5663
        %v5677 = vsel %vm600, %v5663, %v5665
        %v5691 = vsel %vm4797, %v5610, 0
        %v5694 = vsel %vm4797, %v5611, 0
        %5696 = vmatprep.subr.mxu0 %v5667
        %5697 = vmatpush1.msra.mxu0 %v5666
        %5698 = vmatprep.subr.mxu0 %v5669
        %5699 = vmatpush1.msra.mxu0 %v5668
        %5700 = vmatprep.subr.mxu0 %v5671
        %5701 = vmatpush1.msra.mxu0 %v5670
        %5702 = vmatprep.subr.mxu0 %v5673
        %5703 = vmatpush1.msra.mxu0 %v5672
        %5704 = vmatprep.subr.mxu0 %v5675
        %5705 = vmatpush1.msra.mxu0 %v5674
        %5706 = vmatprep.subr.mxu0 %v5677
        %5707 = vmatpush1.msra.mxu0 %v5676
        %5708 = vmatprep.subr.mxu0 0.0
        %5709 = vmatpush1.msra.mxu0 0.0
        %5710 = vmatprep.subr.mxu0 0.0
        %5711 = vmatpush1.msra.mxu0 0.0
        %5712 = vmatprep.subr.mxu0 0.0
        %5713 = vmatpush1.msra.mxu0 0.0
        %5714 = vmatprep.subr.mxu0 0.0
        %5715 = vmatpush1.msra.mxu0 0.0
        %5716 = vmatprep.subr.mxu0 0.0
        %5717 = vmatpush1.msra.mxu0 0.0
        %5718 = vmatprep.subr.mxu0 0.0
        %5719 = vmatpush1.msra.mxu0 0.0
        %5720 = vmatprep.subr.mxu0 0.0
        %5721 = vmatpush1.msra.mxu0 0.0
        %5722 = vmatprep.subr.mxu0 0.0
        %5723 = vmatpush1.msra.mxu0 0.0
        %5724 = vmatprep.subr.mxu0 0.0
        %5725 = vmatpush1.msra.mxu0 0.0
        %5726 = vmatprep.subr.mxu0 0.0
        %5727 = vmatpush1.msra.mxu0 0.0
        %5728 = vmatprep.subr.mxu0 0.0
        %5729 = vmatpush1.msra.mxu0 0.0
        %5730 = vmatprep.subr.mxu0 0.0
        %5731 = vmatpush1.msra.mxu0 0.0
        %5732 = vmatprep.subr.mxu0 0.0
        %5733 = vmatpush1.msra.mxu0 0.0
        %5734 = vmatprep.subr.mxu0 0.0
        %5735 = vmatpush1.msra.mxu0 0.0
        %5736 = vmatprep.subr.mxu0 0.0
        %5737 = vmatpush1.msra.mxu0 0.0
        %5738 = vmatprep.subr.mxu0 0.0
        %5739 = vmatpush1.msra.mxu0 0.0
        %5740 = vmatprep.subr.mxu0 0.0
        %5741 = vmatpush1.msra.mxu0 0.0
        %5742 = vmatprep.subr.mxu0 0.0
        %5743 = vmatpush1.msra.mxu0 0.0
        %5744 = vmatprep.subr.mxu0 0.0
        %5745 = vmatpush1.msra.mxu0 0.0
        %5746 = vmatprep.subr.mxu0 0.0
        %5747 = vmatpush1.msra.mxu0 0.0
        %5748 = vmatprep.subr.mxu0 0.0
        %5749 = vmatpush1.msra.mxu0 0.0
        %5750 = vmatprep.subr.mxu0 0.0
        %5751 = vmatpush1.msra.mxu0 0.0
        %5752 = vmatprep.subr.mxu0 0.0
        %5753 = vmatpush1.msra.mxu0 0.0
        %5754 = vmatprep.subr.mxu0 0.0
        %5755 = vmatpush1.msra.mxu0 0.0
        %5756 = vmatprep.subr.mxu0 0.0
        %5757 = vmatpush1.msra.mxu0 0.0
        %5758 = vmatprep.subr.mxu0 0.0
        %5759 = vmatpush1.msra.mxu0 0.0
        %5760 = vmatprep.mubr.f32.mxu0 0.0
        %5761 = vmatmul.mubr.f32.gmra.mrb[0].mxu0 %v5691
        %v5762 = vpop.f32.mrb[0].mxu0
        %v5763 = vadd.f32 0.0, %v5762
        %v5764 = vpop.f32.mrb[0].mxu0
        %v5765 = vadd.f32 0.0, %v5764
        %5766 = vmatprep.mubr.f32.mxu0 0.0
        %5767 = vmatmul.mubr.f32.gmra.mrb[0].mxu0 %v5694
        %v5768 = vpop.f32.mrb[0].mxu0
        %v5769 = vadd.f32 0.0, %v5768
        %v5770 = vpop.f32.mrb[0].mxu0
        %v5771 = vadd.f32 0.0, %v5770
        %5772 = vdwg.mxu0
        %v5773 = vadd.f32 %v5606, %v5763
        %v5774 = vadd.f32 %v5607, %v5765
        %v5775 = vadd.f32 %v5608, %v5769
        %v5776 = vadd.f32 %v5609, %v5771
        %5777 = vst [vmem:[#allocation4] sm:$0xff] %v5773
        %5778 = vst [vmem:[#allocation4 + $0x8] sm:$0xff] %v5774
        %5779 = vst [vmem:[#allocation4 + $0x10] sm:$0xff] %v5775
        %5780 = vst [vmem:[#allocation4 + $0x18] sm:$0xff] %v5776
        %v5781 = vld [vmem:[#allocation4] sm:$0xff]
        %v5782 = vld [vmem:[#allocation4 + $0x8] sm:$0xff]
        %v5783 = vld [vmem:[#allocation4 + $0x10] sm:$0xff]
        %v5784 = vld [vmem:[#allocation4 + $0x18] sm:$0xff]
        %s5785 = scalar_lea.vmem %s5, 16
        %v5786 = vld [vmem:[%s5785] sm:$0xff]
        %v5787 = vld [vmem:[%s5785 + $0x8] sm:$0xff]
        %5806 = vrot.lane.b32.xlu0 %v5570, 112
        %v5807 = vpop.permute.xlu0 %5806
        %5808 = vrot.lane.b32.xlu0 %v5571, 112
        %v5809 = vpop.permute.xlu0 %5808
        %5810 = vrot.lane.b32.xlu0 %v5572, 112
        %v5811 = vpop.permute.xlu0 %5810
        %5812 = vrot.lane.b32.xlu0 %v5573, 112
        %v5813 = vpop.permute.xlu0 %5812
        %5814 = vrot.lane.b32.xlu0 %v5574, 112
        %v5815 = vpop.permute.xlu0 %5814
        %5816 = vrot.lane.b32.xlu0 %v5575, 112
        %v5817 = vpop.permute.xlu0 %5816
        %5818 = vrot.lane.b32.xlu0 %v5576, 112
        %v5819 = vpop.permute.xlu0 %5818
        %5820 = vrot.lane.b32.xlu0 %v5577, 112
        %v5821 = vpop.permute.xlu0 %5820
        %5822 = vrot.lane.b32.xlu0 %v5578, 112
        %v5823 = vpop.permute.xlu0 %5822
        %5824 = vrot.lane.b32.xlu0 %v5579, 112
        %v5825 = vpop.permute.xlu0 %5824
        %5826 = vrot.lane.b32.xlu0 %v5580, 112
        %v5827 = vpop.permute.xlu0 %5826
        %5828 = vrot.lane.b32.xlu0 %v5581, 112
        %v5829 = vpop.permute.xlu0 %5828
        %5830 = vrot.lane.b32.xlu0 %v5582, 112
        %v5831 = vpop.permute.xlu0 %5830
        %5832 = vrot.lane.b32.xlu0 %v5583, 112
        %v5833 = vpop.permute.xlu0 %5832
        %5834 = vrot.lane.b32.xlu0 %v5584, 112
        %v5835 = vpop.permute.xlu0 %5834
        %5836 = vrot.lane.b32.xlu0 %v5585, 112
        %v5837 = vpop.permute.xlu0 %5836
        %5838 = vrot.lane.b32.xlu0 %v5586, 112
        %v5839 = vpop.permute.xlu0 %5838
        %5840 = vrot.lane.b32.xlu0 %v5587, 112
        %v5841 = vpop.permute.xlu0 %5840
        %v5842 = vsel %vm789, %v5807, %v5809
        %v5843 = vsel %vm789, %v5809, %v5811
        %v5844 = vsel %vm789, %v5813, %v5815
        %v5845 = vsel %vm789, %v5815, %v5817
        %v5846 = vsel %vm789, %v5819, %v5821
        %v5847 = vsel %vm789, %v5821, %v5823
        %v5848 = vsel %vm789, %v5825, %v5827
        %v5849 = vsel %vm789, %v5827, %v5829
        %v5850 = vsel %vm789, %v5831, %v5833
        %v5851 = vsel %vm789, %v5833, %v5835
        %v5852 = vsel %vm789, %v5837, %v5839
        %v5853 = vsel %vm789, %v5839, %v5841
        %v5867 = vsel %vm4797, %v5786, 0
        %v5870 = vsel %vm4797, %v5787, 0
        %5872 = vmatprep.subr.mxu0 %v5843
        %5873 = vmatpush1.msra.mxu0 %v5842
        %5874 = vmatprep.subr.mxu0 %v5845
        %5875 = vmatpush1.msra.mxu0 %v5844
        %5876 = vmatprep.subr.mxu0 %v5847
        %5877 = vmatpush1.msra.mxu0 %v5846
        %5878 = vmatprep.subr.mxu0 %v5849
        %5879 = vmatpush1.msra.mxu0 %v5848
        %5880 = vmatprep.subr.mxu0 %v5851
        %5881 = vmatpush1.msra.mxu0 %v5850
        %5882 = vmatprep.subr.mxu0 %v5853
        %5883 = vmatpush1.msra.mxu0 %v5852
        %5884 = vmatprep.subr.mxu0 0.0
        %5885 = vmatpush1.msra.mxu0 0.0
        %5886 = vmatprep.subr.mxu0 0.0
        %5887 = vmatpush1.msra.mxu0 0.0
        %5888 = vmatprep.subr.mxu0 0.0
        %5889 = vmatpush1.msra.mxu0 0.0
        %5890 = vmatprep.subr.mxu0 0.0
        %5891 = vmatpush1.msra.mxu0 0.0
        %5892 = vmatprep.subr.mxu0 0.0
        %5893 = vmatpush1.msra.mxu0 0.0
        %5894 = vmatprep.subr.mxu0 0.0
        %5895 = vmatpush1.msra.mxu0 0.0
        %5896 = vmatprep.subr.mxu0 0.0
        %5897 = vmatpush1.msra.mxu0 0.0
        %5898 = vmatprep.subr.mxu0 0.0
        %5899 = vmatpush1.msra.mxu0 0.0
        %5900 = vmatprep.subr.mxu0 0.0
        %5901 = vmatpush1.msra.mxu0 0.0
        %5902 = vmatprep.subr.mxu0 0.0
        %5903 = vmatpush1.msra.mxu0 0.0
        %5904 = vmatprep.subr.mxu0 0.0
        %5905 = vmatpush1.msra.mxu0 0.0
        %5906 = vmatprep.subr.mxu0 0.0
        %5907 = vmatpush1.msra.mxu0 0.0
        %5908 = vmatprep.subr.mxu0 0.0
        %5909 = vmatpush1.msra.mxu0 0.0
        %5910 = vmatprep.subr.mxu0 0.0
        %5911 = vmatpush1.msra.mxu0 0.0
        %5912 = vmatprep.subr.mxu0 0.0
        %5913 = vmatpush1.msra.mxu0 0.0
        %5914 = vmatprep.subr.mxu0 0.0
        %5915 = vmatpush1.msra.mxu0 0.0
        %5916 = vmatprep.subr.mxu0 0.0
        %5917 = vmatpush1.msra.mxu0 0.0
        %5918 = vmatprep.subr.mxu0 0.0
        %5919 = vmatpush1.msra.mxu0 0.0
        %5920 = vmatprep.subr.mxu0 0.0
        %5921 = vmatpush1.msra.mxu0 0.0
        %5922 = vmatprep.subr.mxu0 0.0
        %5923 = vmatpush1.msra.mxu0 0.0
        %5924 = vmatprep.subr.mxu0 0.0
        %5925 = vmatpush1.msra.mxu0 0.0
        %5926 = vmatprep.subr.mxu0 0.0
        %5927 = vmatpush1.msra.mxu0 0.0
        %5928 = vmatprep.subr.mxu0 0.0
        %5929 = vmatpush1.msra.mxu0 0.0
        %5930 = vmatprep.subr.mxu0 0.0
        %5931 = vmatpush1.msra.mxu0 0.0
        %5932 = vmatprep.subr.mxu0 0.0
        %5933 = vmatpush1.msra.mxu0 0.0
        %5934 = vmatprep.subr.mxu0 0.0
        %5935 = vmatpush1.msra.mxu0 0.0
        %5936 = vmatprep.mubr.f32.mxu0 0.0
        %5937 = vmatmul.mubr.f32.gmra.mrb[0].mxu0 %v5867
        %v5938 = vpop.f32.mrb[0].mxu0
        %v5939 = vadd.f32 0.0, %v5938
        %v5940 = vpop.f32.mrb[0].mxu0
        %v5941 = vadd.f32 0.0, %v5940
        %5942 = vmatprep.mubr.f32.mxu0 0.0
        %5943 = vmatmul.mubr.f32.gmra.mrb[0].mxu0 %v5870
        %v5944 = vpop.f32.mrb[0].mxu0
        %v5945 = vadd.f32 0.0, %v5944
        %v5946 = vpop.f32.mrb[0].mxu0
        %v5947 = vadd.f32 0.0, %v5946
        %5948 = vdwg.mxu0
        %v5949 = vadd.f32 %v5781, %v5939
        %v5950 = vadd.f32 %v5782, %v5941
        %v5951 = vadd.f32 %v5783, %v5945
        %v5952 = vadd.f32 %v5784, %v5947
        %5953 = vst [vmem:[#allocation4] sm:$0xff] %v5949
        %5954 = vst [vmem:[#allocation4 + $0x8] sm:$0xff] %v5950
        %5955 = vst [vmem:[#allocation4 + $0x10] sm:$0xff] %v5951
        %5956 = vst [vmem:[#allocation4 + $0x18] sm:$0xff] %v5952
        %v5957 = vmul.f32 %v5570, %v952
        %v5958 = vmul.f32 %v5571, %v956
        %v5959 = vmul.f32 %v5572, %v954
        %v5960 = vmul.f32 %v5573, %v952
        %v5961 = vmul.f32 %v5574, %v956
        %v5962 = vmul.f32 %v5575, %v954
        %v5963 = vmul.f32 %v5576, %v952
        %v5964 = vmul.f32 %v5577, %v956
        %v5965 = vmul.f32 %v5578, %v954
        %v5966 = vmul.f32 %v5579, %v952
        %v5967 = vmul.f32 %v5580, %v956
        %v5968 = vmul.f32 %v5581, %v954
        %v5969 = vmul.f32 %v5582, %v952
        %v5970 = vmul.f32 %v5583, %v956
        %v5971 = vmul.f32 %v5584, %v954
        %v5972 = vmul.f32 %v5585, %v952
        %v5973 = vmul.f32 %v5586, %v956
        %v5974 = vmul.f32 %v5587, %v954
        %v5975 = vld [vmem:[#allocation4] sm:$0xff]
        %v5976 = vld [vmem:[#allocation4 + $0x8] sm:$0xff]
        %v5977 = vld [vmem:[#allocation4 + $0x10] sm:$0xff]
        %v5978 = vld [vmem:[#allocation4 + $0x18] sm:$0xff]
        %s5979 = scalar_lea.vmem %s5, 32
        %v5980 = vld [vmem:[%s5979] sm:$0xff]
        %v5981 = vld [vmem:[%s5979 + $0x8] sm:$0xff]
        %6000 = vrot.lane.b32.xlu0 %v5957, 111
        %v6001 = vpop.permute.xlu0 %6000
        %6002 = vrot.lane.b32.xlu0 %v5958, 111
        %v6003 = vpop.permute.xlu0 %6002
        %6004 = vrot.lane.b32.xlu0 %v5959, 111
        %v6005 = vpop.permute.xlu0 %6004
        %6006 = vrot.lane.b32.xlu0 %v5960, 111
        %v6007 = vpop.permute.xlu0 %6006
        %6008 = vrot.lane.b32.xlu0 %v5961, 111
        %v6009 = vpop.permute.xlu0 %6008
        %6010 = vrot.lane.b32.xlu0 %v5962, 111
        %v6011 = vpop.permute.xlu0 %6010
        %6012 = vrot.lane.b32.xlu0 %v5963, 111
        %v6013 = vpop.permute.xlu0 %6012
        %6014 = vrot.lane.b32.xlu0 %v5964, 111
        %v6015 = vpop.permute.xlu0 %6014
        %6016 = vrot.lane.b32.xlu0 %v5965, 111
        %v6017 = vpop.permute.xlu0 %6016
        %6018 = vrot.lane.b32.xlu0 %v5966, 111
        %v6019 = vpop.permute.xlu0 %6018
        %6020 = vrot.lane.b32.xlu0 %v5967, 111
        %v6021 = vpop.permute.xlu0 %6020
        %6022 = vrot.lane.b32.xlu0 %v5968, 111
        %v6023 = vpop.permute.xlu0 %6022
        %6024 = vrot.lane.b32.xlu0 %v5969, 111
        %v6025 = vpop.permute.xlu0 %6024
        %6026 = vrot.lane.b32.xlu0 %v5970, 111
        %v6027 = vpop.permute.xlu0 %6026
        %6028 = vrot.lane.b32.xlu0 %v5971, 111
        %v6029 = vpop.permute.xlu0 %6028
        %6030 = vrot.lane.b32.xlu0 %v5972, 111
        %v6031 = vpop.permute.xlu0 %6030
        %6032 = vrot.lane.b32.xlu0 %v5973, 111
        %v6033 = vpop.permute.xlu0 %6032
        %6034 = vrot.lane.b32.xlu0 %v5974, 111
        %v6035 = vpop.permute.xlu0 %6034
        %v6036 = vsel %vm1003, %v6001, %v6003
        %v6037 = vsel %vm1003, %v6003, %v6005
        %v6038 = vsel %vm1003, %v6007, %v6009
        %v6039 = vsel %vm1003, %v6009, %v6011
        %v6040 = vsel %vm1003, %v6013, %v6015
        %v6041 = vsel %vm1003, %v6015, %v6017
        %v6042 = vsel %vm1003, %v6019, %v6021
        %v6043 = vsel %vm1003, %v6021, %v6023
        %v6044 = vsel %vm1003, %v6025, %v6027
        %v6045 = vsel %vm1003, %v6027, %v6029
        %v6046 = vsel %vm1003, %v6031, %v6033
        %v6047 = vsel %vm1003, %v6033, %v6035
        %v6061 = vsel %vm4797, %v5980, 0
        %v6064 = vsel %vm4797, %v5981, 0
        %6066 = vmatprep.subr.mxu0 %v6037
        %6067 = vmatpush1.msra.mxu0 %v6036
        %6068 = vmatprep.subr.mxu0 %v6039
        %6069 = vmatpush1.msra.mxu0 %v6038
        %6070 = vmatprep.subr.mxu0 %v6041
        %6071 = vmatpush1.msra.mxu0 %v6040
        %6072 = vmatprep.subr.mxu0 %v6043
        %6073 = vmatpush1.msra.mxu0 %v6042
        %6074 = vmatprep.subr.mxu0 %v6045
        %6075 = vmatpush1.msra.mxu0 %v6044
        %6076 = vmatprep.subr.mxu0 %v6047
        %6077 = vmatpush1.msra.mxu0 %v6046
        %6078 = vmatprep.subr.mxu0 0.0
        %6079 = vmatpush1.msra.mxu0 0.0
        %6080 = vmatprep.subr.mxu0 0.0
        %6081 = vmatpush1.msra.mxu0 0.0
        %6082 = vmatprep.subr.mxu0 0.0
        %6083 = vmatpush1.msra.mxu0 0.0
        %6084 = vmatprep.subr.mxu0 0.0
        %6085 = vmatpush1.msra.mxu0 0.0
        %6086 = vmatprep.subr.mxu0 0.0
        %6087 = vmatpush1.msra.mxu0 0.0
        %6088 = vmatprep.subr.mxu0 0.0
        %6089 = vmatpush1.msra.mxu0 0.0
        %6090 = vmatprep.subr.mxu0 0.0
        %6091 = vmatpush1.msra.mxu0 0.0
        %6092 = vmatprep.subr.mxu0 0.0
        %6093 = vmatpush1.msra.mxu0 0.0
        %6094 = vmatprep.subr.mxu0 0.0
        %6095 = vmatpush1.msra.mxu0 0.0
        %6096 = vmatprep.subr.mxu0 0.0
        %6097 = vmatpush1.msra.mxu0 0.0
        %6098 = vmatprep.subr.mxu0 0.0
        %6099 = vmatpush1.msra.mxu0 0.0
        %6100 = vmatprep.subr.mxu0 0.0
        %6101 = vmatpush1.msra.mxu0 0.0
        %6102 = vmatprep.subr.mxu0 0.0
        %6103 = vmatpush1.msra.mxu0 0.0
        %6104 = vmatprep.subr.mxu0 0.0
        %6105 = vmatpush1.msra.mxu0 0.0
        %6106 = vmatprep.subr.mxu0 0.0
        %6107 = vmatpush1.msra.mxu0 0.0
        %6108 = vmatprep.subr.mxu0 0.0
        %6109 = vmatpush1.msra.mxu0 0.0
        %6110 = vmatprep.subr.mxu0 0.0
        %6111 = vmatpush1.msra.mxu0 0.0
        %6112 = vmatprep.subr.mxu0 0.0
        %6113 = vmatpush1.msra.mxu0 0.0
        %6114 = vmatprep.subr.mxu0 0.0
        %6115 = vmatpush1.msra.mxu0 0.0
        %6116 = vmatprep.subr.mxu0 0.0
        %6117 = vmatpush1.msra.mxu0 0.0
        %6118 = vmatprep.subr.mxu0 0.0
        %6119 = vmatpush1.msra.mxu0 0.0
        %6120 = vmatprep.subr.mxu0 0.0
        %6121 = vmatpush1.msra.mxu0 0.0
        %6122 = vmatprep.subr.mxu0 0.0
        %6123 = vmatpush1.msra.mxu0 0.0
        %6124 = vmatprep.subr.mxu0 0.0
        %6125 = vmatpush1.msra.mxu0 0.0
        %6126 = vmatprep.subr.mxu0 0.0
        %6127 = vmatpush1.msra.mxu0 0.0
        %6128 = vmatprep.subr.mxu0 0.0
        %6129 = vmatpush1.msra.mxu0 0.0
        %6130 = vmatprep.mubr.f32.mxu0 0.0
        %6131 = vmatmul.mubr.f32.gmra.mrb[0].mxu0 %v6061
        %v6132 = vpop.f32.mrb[0].mxu0
        %v6133 = vadd.f32 0.0, %v6132
        %v6134 = vpop.f32.mrb[0].mxu0
        %v6135 = vadd.f32 0.0, %v6134
        %6136 = vmatprep.mubr.f32.mxu0 0.0
        %6137 = vmatmul.mubr.f32.gmra.mrb[0].mxu0 %v6064
        %v6138 = vpop.f32.mrb[0].mxu0
        %v6139 = vadd.f32 0.0, %v6138
        %v6140 = vpop.f32.mrb[0].mxu0
        %v6141 = vadd.f32 0.0, %v6140
        %6142 = vdwg.mxu0
        %v6143 = vadd.f32 %v5975, %v6133
        %v6144 = vadd.f32 %v5976, %v6135
        %v6145 = vadd.f32 %v5977, %v6139
        %v6146 = vadd.f32 %v5978, %v6141
        %6147 = vst [vmem:[#allocation4] sm:$0xff] %v6143
        %6148 = vst [vmem:[#allocation4 + $0x8] sm:$0xff] %v6144
        %6149 = vst [vmem:[#allocation4 + $0x10] sm:$0xff] %v6145
        %6150 = vst [vmem:[#allocation4 + $0x18] sm:$0xff] %v6146
        %v6151 = vmul.f32 %v5570, %v1574
        %v6152 = vmul.f32 %v5571, %v1578
        %v6153 = vmul.f32 %v5572, %v1576
        %v6154 = vmul.f32 %v5573, %v1574
        %v6155 = vmul.f32 %v5574, %v1578
        %v6156 = vmul.f32 %v5575, %v1576
        %v6157 = vmul.f32 %v5576, %v1574
        %v6158 = vmul.f32 %v5577, %v1578
        %v6159 = vmul.f32 %v5578, %v1576
        %v6160 = vmul.f32 %v5579, %v1574
        %v6161 = vmul.f32 %v5580, %v1578
        %v6162 = vmul.f32 %v5581, %v1576
        %v6163 = vmul.f32 %v5582, %v1574
        %v6164 = vmul.f32 %v5583, %v1578
        %v6165 = vmul.f32 %v5584, %v1576
        %v6166 = vmul.f32 %v5585, %v1574
        %v6167 = vmul.f32 %v5586, %v1578
        %v6168 = vmul.f32 %v5587, %v1576
        %v6169 = vld [vmem:[#allocation4] sm:$0xff]
        %v6170 = vld [vmem:[#allocation4 + $0x8] sm:$0xff]
        %v6171 = vld [vmem:[#allocation4 + $0x10] sm:$0xff]
        %v6172 = vld [vmem:[#allocation4 + $0x18] sm:$0xff]
        %s6173 = scalar_lea.vmem %s5, 48
        %v6174 = vld [vmem:[%s6173] sm:$0xff]
        %v6175 = vld [vmem:[%s6173 + $0x8] sm:$0xff]
        %6194 = vrot.lane.b32.xlu0 %v6151, 97
        %v6195 = vpop.permute.xlu0 %6194
        %6196 = vrot.lane.b32.xlu0 %v6152, 97
        %v6197 = vpop.permute.xlu0 %6196
        %6198 = vrot.lane.b32.xlu0 %v6153, 97
        %v6199 = vpop.permute.xlu0 %6198
        %6200 = vrot.lane.b32.xlu0 %v6154, 97
        %v6201 = vpop.permute.xlu0 %6200
        %6202 = vrot.lane.b32.xlu0 %v6155, 97
        %v6203 = vpop.permute.xlu0 %6202
        %6204 = vrot.lane.b32.xlu0 %v6156, 97
        %v6205 = vpop.permute.xlu0 %6204
        %6206 = vrot.lane.b32.xlu0 %v6157, 97
        %v6207 = vpop.permute.xlu0 %6206
        %6208 = vrot.lane.b32.xlu0 %v6158, 97
        %v6209 = vpop.permute.xlu0 %6208
        %6210 = vrot.lane.b32.xlu0 %v6159, 97
        %v6211 = vpop.permute.xlu0 %6210
        %6212 = vrot.lane.b32.xlu0 %v6160, 97
        %v6213 = vpop.permute.xlu0 %6212
        %6214 = vrot.lane.b32.xlu0 %v6161, 97
        %v6215 = vpop.permute.xlu0 %6214
        %6216 = vrot.lane.b32.xlu0 %v6162, 97
        %v6217 = vpop.permute.xlu0 %6216
        %6218 = vrot.lane.b32.xlu0 %v6163, 97
        %v6219 = vpop.permute.xlu0 %6218
        %6220 = vrot.lane.b32.xlu0 %v6164, 97
        %v6221 = vpop.permute.xlu0 %6220
        %6222 = vrot.lane.b32.xlu0 %v6165, 97
        %v6223 = vpop.permute.xlu0 %6222
        %6224 = vrot.lane.b32.xlu0 %v6166, 97
        %v6225 = vpop.permute.xlu0 %6224
        %6226 = vrot.lane.b32.xlu0 %v6167, 97
        %v6227 = vpop.permute.xlu0 %6226
        %6228 = vrot.lane.b32.xlu0 %v6168, 97
        %v6229 = vpop.permute.xlu0 %6228
        %v6230 = vsel %vm1625, %v6195, %v6197
        %v6231 = vsel %vm1625, %v6197, %v6199
        %v6232 = vsel %vm1625, %v6201, %v6203
        %v6233 = vsel %vm1625, %v6203, %v6205
        %v6234 = vsel %vm1625, %v6207, %v6209
        %v6235 = vsel %vm1625, %v6209, %v6211
        %v6236 = vsel %vm1625, %v6213, %v6215
        %v6237 = vsel %vm1625, %v6215, %v6217
        %v6238 = vsel %vm1625, %v6219, %v6221
        %v6239 = vsel %vm1625, %v6221, %v6223
        %v6240 = vsel %vm1625, %v6225, %v6227
        %v6241 = vsel %vm1625, %v6227, %v6229
        %v6255 = vsel %vm4797, %v6174, 0
        %v6258 = vsel %vm4797, %v6175, 0
        %6260 = vmatprep.subr.mxu0 %v6231
        %6261 = vmatpush1.msra.mxu0 %v6230
        %6262 = vmatprep.subr.mxu0 %v6233
        %6263 = vmatpush1.msra.mxu0 %v6232
        %6264 = vmatprep.subr.mxu0 %v6235
        %6265 = vmatpush1.msra.mxu0 %v6234
        %6266 = vmatprep.subr.mxu0 %v6237
        %6267 = vmatpush1.msra.mxu0 %v6236
        %6268 = vmatprep.subr.mxu0 %v6239
        %6269 = vmatpush1.msra.mxu0 %v6238
        %6270 = vmatprep.subr.mxu0 %v6241
        %6271 = vmatpush1.msra.mxu0 %v6240
        %6272 = vmatprep.subr.mxu0 0.0
        %6273 = vmatpush1.msra.mxu0 0.0
        %6274 = vmatprep.subr.mxu0 0.0
        %6275 = vmatpush1.msra.mxu0 0.0
        %6276 = vmatprep.subr.mxu0 0.0
        %6277 = vmatpush1.msra.mxu0 0.0
        %6278 = vmatprep.subr.mxu0 0.0
        %6279 = vmatpush1.msra.mxu0 0.0
        %6280 = vmatprep.subr.mxu0 0.0
        %6281 = vmatpush1.msra.mxu0 0.0
        %6282 = vmatprep.subr.mxu0 0.0
        %6283 = vmatpush1.msra.mxu0 0.0
        %6284 = vmatprep.subr.mxu0 0.0
        %6285 = vmatpush1.msra.mxu0 0.0
        %6286 = vmatprep.subr.mxu0 0.0
        %6287 = vmatpush1.msra.mxu0 0.0
        %6288 = vmatprep.subr.mxu0 0.0
        %6289 = vmatpush1.msra.mxu0 0.0
        %6290 = vmatprep.subr.mxu0 0.0
        %6291 = vmatpush1.msra.mxu0 0.0
        %6292 = vmatprep.subr.mxu0 0.0
        %6293 = vmatpush1.msra.mxu0 0.0
        %6294 = vmatprep.subr.mxu0 0.0
        %6295 = vmatpush1.msra.mxu0 0.0
        %6296 = vmatprep.subr.mxu0 0.0
        %6297 = vmatpush1.msra.mxu0 0.0
        %6298 = vmatprep.subr.mxu0 0.0
        %6299 = vmatpush1.msra.mxu0 0.0
        %6300 = vmatprep.subr.mxu0 0.0
        %6301 = vmatpush1.msra.mxu0 0.0
        %6302 = vmatprep.subr.mxu0 0.0
        %6303 = vmatpush1.msra.mxu0 0.0
        %6304 = vmatprep.subr.mxu0 0.0
        %6305 = vmatpush1.msra.mxu0 0.0
        %6306 = vmatprep.subr.mxu0 0.0
        %6307 = vmatpush1.msra.mxu0 0.0
        %6308 = vmatprep.subr.mxu0 0.0
        %6309 = vmatpush1.msra.mxu0 0.0
        %6310 = vmatprep.subr.mxu0 0.0
        %6311 = vmatpush1.msra.mxu0 0.0
        %6312 = vmatprep.subr.mxu0 0.0
        %6313 = vmatpush1.msra.mxu0 0.0
        %6314 = vmatprep.subr.mxu0 0.0
        %6315 = vmatpush1.msra.mxu0 0.0
        %6316 = vmatprep.subr.mxu0 0.0
        %6317 = vmatpush1.msra.mxu0 0.0
        %6318 = vmatprep.subr.mxu0 0.0
        %6319 = vmatpush1.msra.mxu0 0.0
        %6320 = vmatprep.subr.mxu0 0.0
        %6321 = vmatpush1.msra.mxu0 0.0
        %6322 = vmatprep.subr.mxu0 0.0
        %6323 = vmatpush1.msra.mxu0 0.0
        %6324 = vmatprep.mubr.f32.mxu0 0.0
        %6325 = vmatmul.mubr.f32.gmra.mrb[0].mxu0 %v6255
        %v6326 = vpop.f32.mrb[0].mxu0
        %v6327 = vadd.f32 0.0, %v6326
        %v6328 = vpop.f32.mrb[0].mxu0
        %v6329 = vadd.f32 0.0, %v6328
        %6330 = vmatprep.mubr.f32.mxu0 0.0
        %6331 = vmatmul.mubr.f32.gmra.mrb[0].mxu0 %v6258
        %v6332 = vpop.f32.mrb[0].mxu0
        %v6333 = vadd.f32 0.0, %v6332
        %v6334 = vpop.f32.mrb[0].mxu0
        %v6335 = vadd.f32 0.0, %v6334
        %6336 = vdwg.mxu0
        %v6337 = vadd.f32 %v6169, %v6327
        %v6338 = vadd.f32 %v6170, %v6329
        %v6339 = vadd.f32 %v6171, %v6333
        %v6340 = vadd.f32 %v6172, %v6335
        %6341 = vst [vmem:[#allocation4] sm:$0xff] %v6337
        %6342 = vst [vmem:[#allocation4 + $0x8] sm:$0xff] %v6338
        %6343 = vst [vmem:[#allocation4 + $0x10] sm:$0xff] %v6339
        %6344 = vst [vmem:[#allocation4 + $0x18] sm:$0xff] %v6340
        %v6345 = vld [vmem:[#allocation4] sm:$0xff]
        %v6346 = vld [vmem:[#allocation4 + $0x8] sm:$0xff]
        %v6347 = vld [vmem:[#allocation4 + $0x10] sm:$0xff]
        %v6348 = vld [vmem:[#allocation4 + $0x18] sm:$0xff]
        %s6349 = scalar_lea.vmem %s5, 64
        %v6350 = vld [vmem:[%s6349] sm:$0xff]
        %v6351 = vld [vmem:[%s6349 + $0x8] sm:$0xff]
        %6352 = vrot.lane.b32.xlu0 %v5570, 96
        %v6353 = vpop.permute.xlu0 %6352
        %6354 = vrot.lane.b32.xlu0 %v5571, 96
        %v6355 = vpop.permute.xlu0 %6354
        %6356 = vrot.lane.b32.xlu0 %v5572, 96
        %v6357 = vpop.permute.xlu0 %6356
        %6358 = vrot.lane.b32.xlu0 %v5573, 96
        %v6359 = vpop.permute.xlu0 %6358
        %6360 = vrot.lane.b32.xlu0 %v5574, 96
        %v6361 = vpop.permute.xlu0 %6360
        %6362 = vrot.lane.b32.xlu0 %v5575, 96
        %v6363 = vpop.permute.xlu0 %6362
        %6364 = vrot.lane.b32.xlu0 %v5576, 96
        %v6365 = vpop.permute.xlu0 %6364
        %6366 = vrot.lane.b32.xlu0 %v5577, 96
        %v6367 = vpop.permute.xlu0 %6366
        %6368 = vrot.lane.b32.xlu0 %v5578, 96
        %v6369 = vpop.permute.xlu0 %6368
        %6370 = vrot.lane.b32.xlu0 %v5579, 96
        %v6371 = vpop.permute.xlu0 %6370
        %6372 = vrot.lane.b32.xlu0 %v5580, 96
        %v6373 = vpop.permute.xlu0 %6372
        %6374 = vrot.lane.b32.xlu0 %v5581, 96
        %v6375 = vpop.permute.xlu0 %6374
        %6376 = vrot.lane.b32.xlu0 %v5582, 96
        %v6377 = vpop.permute.xlu0 %6376
        %6378 = vrot.lane.b32.xlu0 %v5583, 96
        %v6379 = vpop.permute.xlu0 %6378
        %6380 = vrot.lane.b32.xlu0 %v5584, 96
        %v6381 = vpop.permute.xlu0 %6380
        %6382 = vrot.lane.b32.xlu0 %v5585, 96
        %v6383 = vpop.permute.xlu0 %6382
        %6384 = vrot.lane.b32.xlu0 %v5586, 96
        %v6385 = vpop.permute.xlu0 %6384
        %6386 = vrot.lane.b32.xlu0 %v5587, 96
        %v6387 = vpop.permute.xlu0 %6386
        %v6388 = vsel %vm1808, %v6353, %v6355
        %v6389 = vsel %vm1808, %v6355, %v6357
        %v6390 = vsel %vm1808, %v6359, %v6361
        %v6391 = vsel %vm1808, %v6361, %v6363
        %v6392 = vsel %vm1808, %v6365, %v6367
        %v6393 = vsel %vm1808, %v6367, %v6369
        %v6394 = vsel %vm1808, %v6371, %v6373
        %v6395 = vsel %vm1808, %v6373, %v6375
        %v6396 = vsel %vm1808, %v6377, %v6379
        %v6397 = vsel %vm1808, %v6379, %v6381
        %v6398 = vsel %vm1808, %v6383, %v6385
        %v6399 = vsel %vm1808, %v6385, %v6387
        %v6413 = vsel %vm4797, %v6350, 0
        %v6416 = vsel %vm4797, %v6351, 0
        %6418 = vmatprep.subr.mxu0 %v6389
        %6419 = vmatpush1.msra.mxu0 %v6388
        %6420 = vmatprep.subr.mxu0 %v6391
        %6421 = vmatpush1.msra.mxu0 %v6390
        %6422 = vmatprep.subr.mxu0 %v6393
        %6423 = vmatpush1.msra.mxu0 %v6392
        %6424 = vmatprep.subr.mxu0 %v6395
        %6425 = vmatpush1.msra.mxu0 %v6394
        %6426 = vmatprep.subr.mxu0 %v6397
        %6427 = vmatpush1.msra.mxu0 %v6396
        %6428 = vmatprep.subr.mxu0 %v6399
        %6429 = vmatpush1.msra.mxu0 %v6398
        %6430 = vmatprep.subr.mxu0 0.0
        %6431 = vmatpush1.msra.mxu0 0.0
        %6432 = vmatprep.subr.mxu0 0.0
        %6433 = vmatpush1.msra.mxu0 0.0
        %6434 = vmatprep.subr.mxu0 0.0
        %6435 = vmatpush1.msra.mxu0 0.0
        %6436 = vmatprep.subr.mxu0 0.0
        %6437 = vmatpush1.msra.mxu0 0.0
        %6438 = vmatprep.subr.mxu0 0.0
        %6439 = vmatpush1.msra.mxu0 0.0
        %6440 = vmatprep.subr.mxu0 0.0
        %6441 = vmatpush1.msra.mxu0 0.0
        %6442 = vmatprep.subr.mxu0 0.0
        %6443 = vmatpush1.msra.mxu0 0.0
        %6444 = vmatprep.subr.mxu0 0.0
        %6445 = vmatpush1.msra.mxu0 0.0
        %6446 = vmatprep.subr.mxu0 0.0
        %6447 = vmatpush1.msra.mxu0 0.0
        %6448 = vmatprep.subr.mxu0 0.0
        %6449 = vmatpush1.msra.mxu0 0.0
        %6450 = vmatprep.subr.mxu0 0.0
        %6451 = vmatpush1.msra.mxu0 0.0
        %6452 = vmatprep.subr.mxu0 0.0
        %6453 = vmatpush1.msra.mxu0 0.0
        %6454 = vmatprep.subr.mxu0 0.0
        %6455 = vmatpush1.msra.mxu0 0.0
        %6456 = vmatprep.subr.mxu0 0.0
        %6457 = vmatpush1.msra.mxu0 0.0
        %6458 = vmatprep.subr.mxu0 0.0
        %6459 = vmatpush1.msra.mxu0 0.0
        %6460 = vmatprep.subr.mxu0 0.0
        %6461 = vmatpush1.msra.mxu0 0.0
        %6462 = vmatprep.subr.mxu0 0.0
        %6463 = vmatpush1.msra.mxu0 0.0
        %6464 = vmatprep.subr.mxu0 0.0
        %6465 = vmatpush1.msra.mxu0 0.0
        %6466 = vmatprep.subr.mxu0 0.0
        %6467 = vmatpush1.msra.mxu0 0.0
        %6468 = vmatprep.subr.mxu0 0.0
        %6469 = vmatpush1.msra.mxu0 0.0
        %6470 = vmatprep.subr.mxu0 0.0
        %6471 = vmatpush1.msra.mxu0 0.0
        %6472 = vmatprep.subr.mxu0 0.0
        %6473 = vmatpush1.msra.mxu0 0.0
        %6474 = vmatprep.subr.mxu0 0.0
        %6475 = vmatpush1.msra.mxu0 0.0
        %6476 = vmatprep.subr.mxu0 0.0
        %6477 = vmatpush1.msra.mxu0 0.0
        %6478 = vmatprep.subr.mxu0 0.0
        %6479 = vmatpush1.msra.mxu0 0.0
        %6480 = vmatprep.subr.mxu0 0.0
        %6481 = vmatpush1.msra.mxu0 0.0
        %6482 = vmatprep.mubr.f32.mxu0 0.0
        %6483 = vmatmul.mubr.f32.gmra.mrb[0].mxu0 %v6413
        %v6484 = vpop.f32.mrb[0].mxu0
        %v6485 = vadd.f32 0.0, %v6484
        %v6486 = vpop.f32.mrb[0].mxu0
        %v6487 = vadd.f32 0.0, %v6486
        %6488 = vmatprep.mubr.f32.mxu0 0.0
        %6489 = vmatmul.mubr.f32.gmra.mrb[0].mxu0 %v6416
        %v6490 = vpop.f32.mrb[0].mxu0
        %v6491 = vadd.f32 0.0, %v6490
        %v6492 = vpop.f32.mrb[0].mxu0
        %v6493 = vadd.f32 0.0, %v6492
        %6494 = vdwg.mxu0
        %v6495 = vadd.f32 %v6345, %v6485
        %v6496 = vadd.f32 %v6346, %v6487
        %v6497 = vadd.f32 %v6347, %v6491
        %v6498 = vadd.f32 %v6348, %v6493
        %6499 = vst [vmem:[#allocation4] sm:$0xff] %v6495
        %6500 = vst [vmem:[#allocation4 + $0x8] sm:$0xff] %v6496
        %6501 = vst [vmem:[#allocation4 + $0x10] sm:$0xff] %v6497
        %6502 = vst [vmem:[#allocation4 + $0x18] sm:$0xff] %v6498
        %v6503 = vmul.f32 %v5570, %v1961
        %v6504 = vmul.f32 %v5571, %v1965
        %v6505 = vmul.f32 %v5572, %v1963
        %v6506 = vmul.f32 %v5573, %v1961
        %v6507 = vmul.f32 %v5574, %v1965
        %v6508 = vmul.f32 %v5575, %v1963
        %v6509 = vmul.f32 %v5576, %v1961
        %v6510 = vmul.f32 %v5577, %v1965
        %v6511 = vmul.f32 %v5578, %v1963
        %v6512 = vmul.f32 %v5579, %v1961
        %v6513 = vmul.f32 %v5580, %v1965
        %v6514 = vmul.f32 %v5581, %v1963
        %v6515 = vmul.f32 %v5582, %v1961
        %v6516 = vmul.f32 %v5583, %v1965
        %v6517 = vmul.f32 %v5584, %v1963
        %v6518 = vmul.f32 %v5585, %v1961
        %v6519 = vmul.f32 %v5586, %v1965
        %v6520 = vmul.f32 %v5587, %v1963
        %v6521 = vld [vmem:[#allocation4] sm:$0xff]
        %v6522 = vld [vmem:[#allocation4 + $0x8] sm:$0xff]
        %v6523 = vld [vmem:[#allocation4 + $0x10] sm:$0xff]
        %v6524 = vld [vmem:[#allocation4 + $0x18] sm:$0xff]
        %s6525 = scalar_lea.vmem %s5, 80
        %v6526 = vld [vmem:[%s6525] sm:$0xff]
        %v6527 = vld [vmem:[%s6525 + $0x8] sm:$0xff]
        %6546 = vrot.lane.b32.xlu0 %v6503, 95
        %v6547 = vpop.permute.xlu0 %6546
        %6548 = vrot.lane.b32.xlu0 %v6504, 95
        %v6549 = vpop.permute.xlu0 %6548
        %6550 = vrot.lane.b32.xlu0 %v6505, 95
        %v6551 = vpop.permute.xlu0 %6550
        %6552 = vrot.lane.b32.xlu0 %v6506, 95
        %v6553 = vpop.permute.xlu0 %6552
        %6554 = vrot.lane.b32.xlu0 %v6507, 95
        %v6555 = vpop.permute.xlu0 %6554
        %6556 = vrot.lane.b32.xlu0 %v6508, 95
        %v6557 = vpop.permute.xlu0 %6556
        %6558 = vrot.lane.b32.xlu0 %v6509, 95
        %v6559 = vpop.permute.xlu0 %6558
        %6560 = vrot.lane.b32.xlu0 %v6510, 95
        %v6561 = vpop.permute.xlu0 %6560
        %6562 = vrot.lane.b32.xlu0 %v6511, 95
        %v6563 = vpop.permute.xlu0 %6562
        %6564 = vrot.lane.b32.xlu0 %v6512, 95
        %v6565 = vpop.permute.xlu0 %6564
        %6566 = vrot.lane.b32.xlu0 %v6513, 95
        %v6567 = vpop.permute.xlu0 %6566
        %6568 = vrot.lane.b32.xlu0 %v6514, 95
        %v6569 = vpop.permute.xlu0 %6568
        %6570 = vrot.lane.b32.xlu0 %v6515, 95
        %v6571 = vpop.permute.xlu0 %6570
        %6572 = vrot.lane.b32.xlu0 %v6516, 95
        %v6573 = vpop.permute.xlu0 %6572
        %6574 = vrot.lane.b32.xlu0 %v6517, 95
        %v6575 = vpop.permute.xlu0 %6574
        %6576 = vrot.lane.b32.xlu0 %v6518, 95
        %v6577 = vpop.permute.xlu0 %6576
        %6578 = vrot.lane.b32.xlu0 %v6519, 95
        %v6579 = vpop.permute.xlu0 %6578
        %6580 = vrot.lane.b32.xlu0 %v6520, 95
        %v6581 = vpop.permute.xlu0 %6580
        %v6582 = vsel %vm2012, %v6547, %v6549
        %v6583 = vsel %vm2012, %v6549, %v6551
        %v6584 = vsel %vm2012, %v6553, %v6555
        %v6585 = vsel %vm2012, %v6555, %v6557
        %v6586 = vsel %vm2012, %v6559, %v6561
        %v6587 = vsel %vm2012, %v6561, %v6563
        %v6588 = vsel %vm2012, %v6565, %v6567
        %v6589 = vsel %vm2012, %v6567, %v6569
        %v6590 = vsel %vm2012, %v6571, %v6573
        %v6591 = vsel %vm2012, %v6573, %v6575
        %v6592 = vsel %vm2012, %v6577, %v6579
        %v6593 = vsel %vm2012, %v6579, %v6581
        %v6607 = vsel %vm4797, %v6526, 0
        %v6610 = vsel %vm4797, %v6527, 0
        %6612 = vmatprep.subr.mxu0 %v6583
        %6613 = vmatpush1.msra.mxu0 %v6582
        %6614 = vmatprep.subr.mxu0 %v6585
        %6615 = vmatpush1.msra.mxu0 %v6584
        %6616 = vmatprep.subr.mxu0 %v6587
        %6617 = vmatpush1.msra.mxu0 %v6586
        %6618 = vmatprep.subr.mxu0 %v6589
        %6619 = vmatpush1.msra.mxu0 %v6588
        %6620 = vmatprep.subr.mxu0 %v6591
        %6621 = vmatpush1.msra.mxu0 %v6590
        %6622 = vmatprep.subr.mxu0 %v6593
        %6623 = vmatpush1.msra.mxu0 %v6592
        %6624 = vmatprep.subr.mxu0 0.0
        %6625 = vmatpush1.msra.mxu0 0.0
        %6626 = vmatprep.subr.mxu0 0.0
        %6627 = vmatpush1.msra.mxu0 0.0
        %6628 = vmatprep.subr.mxu0 0.0
        %6629 = vmatpush1.msra.mxu0 0.0
        %6630 = vmatprep.subr.mxu0 0.0
        %6631 = vmatpush1.msra.mxu0 0.0
        %6632 = vmatprep.subr.mxu0 0.0
        %6633 = vmatpush1.msra.mxu0 0.0
        %6634 = vmatprep.subr.mxu0 0.0
        %6635 = vmatpush1.msra.mxu0 0.0
        %6636 = vmatprep.subr.mxu0 0.0
        %6637 = vmatpush1.msra.mxu0 0.0
        %6638 = vmatprep.subr.mxu0 0.0
        %6639 = vmatpush1.msra.mxu0 0.0
        %6640 = vmatprep.subr.mxu0 0.0
        %6641 = vmatpush1.msra.mxu0 0.0
        %6642 = vmatprep.subr.mxu0 0.0
        %6643 = vmatpush1.msra.mxu0 0.0
        %6644 = vmatprep.subr.mxu0 0.0
        %6645 = vmatpush1.msra.mxu0 0.0
        %6646 = vmatprep.subr.mxu0 0.0
        %6647 = vmatpush1.msra.mxu0 0.0
        %6648 = vmatprep.subr.mxu0 0.0
        %6649 = vmatpush1.msra.mxu0 0.0
        %6650 = vmatprep.subr.mxu0 0.0
        %6651 = vmatpush1.msra.mxu0 0.0
        %6652 = vmatprep.subr.mxu0 0.0
        %6653 = vmatpush1.msra.mxu0 0.0
        %6654 = vmatprep.subr.mxu0 0.0
        %6655 = vmatpush1.msra.mxu0 0.0
        %6656 = vmatprep.subr.mxu0 0.0
        %6657 = vmatpush1.msra.mxu0 0.0
        %6658 = vmatprep.subr.mxu0 0.0
        %6659 = vmatpush1.msra.mxu0 0.0
        %6660 = vmatprep.subr.mxu0 0.0
        %6661 = vmatpush1.msra.mxu0 0.0
        %6662 = vmatprep.subr.mxu0 0.0
        %6663 = vmatpush1.msra.mxu0 0.0
        %6664 = vmatprep.subr.mxu0 0.0
        %6665 = vmatpush1.msra.mxu0 0.0
        %6666 = vmatprep.subr.mxu0 0.0
        %6667 = vmatpush1.msra.mxu0 0.0
        %6668 = vmatprep.subr.mxu0 0.0
        %6669 = vmatpush1.msra.mxu0 0.0
        %6670 = vmatprep.subr.mxu0 0.0
        %6671 = vmatpush1.msra.mxu0 0.0
        %6672 = vmatprep.subr.mxu0 0.0
        %6673 = vmatpush1.msra.mxu0 0.0
        %6674 = vmatprep.subr.mxu0 0.0
        %6675 = vmatpush1.msra.mxu0 0.0
        %6676 = vmatprep.mubr.f32.mxu0 0.0
        %6677 = vmatmul.mubr.f32.gmra.mrb[0].mxu0 %v6607
        %v6678 = vpop.f32.mrb[0].mxu0
        %v6679 = vadd.f32 0.0, %v6678
        %v6680 = vpop.f32.mrb[0].mxu0
        %v6681 = vadd.f32 0.0, %v6680
        %6682 = vmatprep.mubr.f32.mxu0 0.0
        %6683 = vmatmul.mubr.f32.gmra.mrb[0].mxu0 %v6610
        %v6684 = vpop.f32.mrb[0].mxu0
        %v6685 = vadd.f32 0.0, %v6684
        %v6686 = vpop.f32.mrb[0].mxu0
        %v6687 = vadd.f32 0.0, %v6686
        %6688 = vdwg.mxu0
        %v6689 = vadd.f32 %v6521, %v6679
        %v6690 = vadd.f32 %v6522, %v6681
        %v6691 = vadd.f32 %v6523, %v6685
        %v6692 = vadd.f32 %v6524, %v6687
        %6693 = vst [vmem:[#allocation4] sm:$0xff] %v6689
        %6694 = vst [vmem:[#allocation4 + $0x8] sm:$0xff] %v6690
        %6695 = vst [vmem:[#allocation4 + $0x10] sm:$0xff] %v6691
        %6696 = vst [vmem:[#allocation4 + $0x18] sm:$0xff] %v6692
        %v6697 = vmul.f32 %v5570, %v2573
        %v6698 = vmul.f32 %v5571, %v2577
        %v6699 = vmul.f32 %v5572, %v2575
        %v6700 = vmul.f32 %v5573, %v2573
        %v6701 = vmul.f32 %v5574, %v2577
        %v6702 = vmul.f32 %v5575, %v2575
        %v6703 = vmul.f32 %v5576, %v2573
        %v6704 = vmul.f32 %v5577, %v2577
        %v6705 = vmul.f32 %v5578, %v2575
        %v6706 = vmul.f32 %v5579, %v2573
        %v6707 = vmul.f32 %v5580, %v2577
        %v6708 = vmul.f32 %v5581, %v2575
        %v6709 = vmul.f32 %v5582, %v2573
        %v6710 = vmul.f32 %v5583, %v2577
        %v6711 = vmul.f32 %v5584, %v2575
        %v6712 = vmul.f32 %v5585, %v2573
        %v6713 = vmul.f32 %v5586, %v2577
        %v6714 = vmul.f32 %v5587, %v2575
        %v6715 = vld [vmem:[#allocation4] sm:$0xff]
        %v6716 = vld [vmem:[#allocation4 + $0x8] sm:$0xff]
        %v6717 = vld [vmem:[#allocation4 + $0x10] sm:$0xff]
        %v6718 = vld [vmem:[#allocation4 + $0x18] sm:$0xff]
        %s6719 = scalar_lea.vmem %s5, 96
        %v6720 = vld [vmem:[%s6719] sm:$0xff]
        %v6721 = vld [vmem:[%s6719 + $0x8] sm:$0xff]
        %6740 = vrot.lane.b32.xlu0 %v6697, 81
        %v6741 = vpop.permute.xlu0 %6740
        %6742 = vrot.lane.b32.xlu0 %v6698, 81
        %v6743 = vpop.permute.xlu0 %6742
        %6744 = vrot.lane.b32.xlu0 %v6699, 81
        %v6745 = vpop.permute.xlu0 %6744
        %6746 = vrot.lane.b32.xlu0 %v6700, 81
        %v6747 = vpop.permute.xlu0 %6746
        %6748 = vrot.lane.b32.xlu0 %v6701, 81
        %v6749 = vpop.permute.xlu0 %6748
        %6750 = vrot.lane.b32.xlu0 %v6702, 81
        %v6751 = vpop.permute.xlu0 %6750
        %6752 = vrot.lane.b32.xlu0 %v6703, 81
        %v6753 = vpop.permute.xlu0 %6752
        %6754 = vrot.lane.b32.xlu0 %v6704, 81
        %v6755 = vpop.permute.xlu0 %6754
        %6756 = vrot.lane.b32.xlu0 %v6705, 81
        %v6757 = vpop.permute.xlu0 %6756
        %6758 = vrot.lane.b32.xlu0 %v6706, 81
        %v6759 = vpop.permute.xlu0 %6758
        %6760 = vrot.lane.b32.xlu0 %v6707, 81
        %v6761 = vpop.permute.xlu0 %6760
        %6762 = vrot.lane.b32.xlu0 %v6708, 81
        %v6763 = vpop.permute.xlu0 %6762
        %6764 = vrot.lane.b32.xlu0 %v6709, 81
        %v6765 = vpop.permute.xlu0 %6764
        %6766 = vrot.lane.b32.xlu0 %v6710, 81
        %v6767 = vpop.permute.xlu0 %6766
        %6768 = vrot.lane.b32.xlu0 %v6711, 81
        %v6769 = vpop.permute.xlu0 %6768
        %6770 = vrot.lane.b32.xlu0 %v6712, 81
        %v6771 = vpop.permute.xlu0 %6770
        %6772 = vrot.lane.b32.xlu0 %v6713, 81
        %v6773 = vpop.permute.xlu0 %6772
        %6774 = vrot.lane.b32.xlu0 %v6714, 81
        %v6775 = vpop.permute.xlu0 %6774
        %v6776 = vsel %vm2624, %v6741, %v6743
        %v6777 = vsel %vm2624, %v6743, %v6745
        %v6778 = vsel %vm2624, %v6747, %v6749
        %v6779 = vsel %vm2624, %v6749, %v6751
        %v6780 = vsel %vm2624, %v6753, %v6755
        %v6781 = vsel %vm2624, %v6755, %v6757
        %v6782 = vsel %vm2624, %v6759, %v6761
        %v6783 = vsel %vm2624, %v6761, %v6763
        %v6784 = vsel %vm2624, %v6765, %v6767
        %v6785 = vsel %vm2624, %v6767, %v6769
        %v6786 = vsel %vm2624, %v6771, %v6773
        %v6787 = vsel %vm2624, %v6773, %v6775
        %v6801 = vsel %vm4797, %v6720, 0
        %v6804 = vsel %vm4797, %v6721, 0
        %6806 = vmatprep.subr.mxu0 %v6777
        %6807 = vmatpush1.msra.mxu0 %v6776
        %6808 = vmatprep.subr.mxu0 %v6779
        %6809 = vmatpush1.msra.mxu0 %v6778
        %6810 = vmatprep.subr.mxu0 %v6781
        %6811 = vmatpush1.msra.mxu0 %v6780
        %6812 = vmatprep.subr.mxu0 %v6783
        %6813 = vmatpush1.msra.mxu0 %v6782
        %6814 = vmatprep.subr.mxu0 %v6785
        %6815 = vmatpush1.msra.mxu0 %v6784
        %6816 = vmatprep.subr.mxu0 %v6787
        %6817 = vmatpush1.msra.mxu0 %v6786
        %6818 = vmatprep.subr.mxu0 0.0
        %6819 = vmatpush1.msra.mxu0 0.0
        %6820 = vmatprep.subr.mxu0 0.0
        %6821 = vmatpush1.msra.mxu0 0.0
        %6822 = vmatprep.subr.mxu0 0.0
        %6823 = vmatpush1.msra.mxu0 0.0
        %6824 = vmatprep.subr.mxu0 0.0
        %6825 = vmatpush1.msra.mxu0 0.0
        %6826 = vmatprep.subr.mxu0 0.0
        %6827 = vmatpush1.msra.mxu0 0.0
        %6828 = vmatprep.subr.mxu0 0.0
        %6829 = vmatpush1.msra.mxu0 0.0
        %6830 = vmatprep.subr.mxu0 0.0
        %6831 = vmatpush1.msra.mxu0 0.0
        %6832 = vmatprep.subr.mxu0 0.0
        %6833 = vmatpush1.msra.mxu0 0.0
        %6834 = vmatprep.subr.mxu0 0.0
        %6835 = vmatpush1.msra.mxu0 0.0
        %6836 = vmatprep.subr.mxu0 0.0
        %6837 = vmatpush1.msra.mxu0 0.0
        %6838 = vmatprep.subr.mxu0 0.0
        %6839 = vmatpush1.msra.mxu0 0.0
        %6840 = vmatprep.subr.mxu0 0.0
        %6841 = vmatpush1.msra.mxu0 0.0
        %6842 = vmatprep.subr.mxu0 0.0
        %6843 = vmatpush1.msra.mxu0 0.0
        %6844 = vmatprep.subr.mxu0 0.0
        %6845 = vmatpush1.msra.mxu0 0.0
        %6846 = vmatprep.subr.mxu0 0.0
        %6847 = vmatpush1.msra.mxu0 0.0
        %6848 = vmatprep.subr.mxu0 0.0
        %6849 = vmatpush1.msra.mxu0 0.0
        %6850 = vmatprep.subr.mxu0 0.0
        %6851 = vmatpush1.msra.mxu0 0.0
        %6852 = vmatprep.subr.mxu0 0.0
        %6853 = vmatpush1.msra.mxu0 0.0
        %6854 = vmatprep.subr.mxu0 0.0
        %6855 = vmatpush1.msra.mxu0 0.0
        %6856 = vmatprep.subr.mxu0 0.0
        %6857 = vmatpush1.msra.mxu0 0.0
        %6858 = vmatprep.subr.mxu0 0.0
        %6859 = vmatpush1.msra.mxu0 0.0
        %6860 = vmatprep.subr.mxu0 0.0
        %6861 = vmatpush1.msra.mxu0 0.0
        %6862 = vmatprep.subr.mxu0 0.0
        %6863 = vmatpush1.msra.mxu0 0.0
        %6864 = vmatprep.subr.mxu0 0.0
        %6865 = vmatpush1.msra.mxu0 0.0
        %6866 = vmatprep.subr.mxu0 0.0
        %6867 = vmatpush1.msra.mxu0 0.0
        %6868 = vmatprep.subr.mxu0 0.0
        %6869 = vmatpush1.msra.mxu0 0.0
        %6870 = vmatprep.mubr.f32.mxu0 0.0
        %6871 = vmatmul.mubr.f32.gmra.mrb[0].mxu0 %v6801
        %v6872 = vpop.f32.mrb[0].mxu0
        %v6873 = vadd.f32 0.0, %v6872
        %v6874 = vpop.f32.mrb[0].mxu0
        %v6875 = vadd.f32 0.0, %v6874
        %6876 = vmatprep.mubr.f32.mxu0 0.0
        %6877 = vmatmul.mubr.f32.gmra.mrb[0].mxu0 %v6804
        %v6878 = vpop.f32.mrb[0].mxu0
        %v6879 = vadd.f32 0.0, %v6878
        %v6880 = vpop.f32.mrb[0].mxu0
        %v6881 = vadd.f32 0.0, %v6880
        %6882 = vdwg.mxu0
        %v6883 = vadd.f32 %v6715, %v6873
        %v6884 = vadd.f32 %v6716, %v6875
        %v6885 = vadd.f32 %v6717, %v6879
        %v6886 = vadd.f32 %v6718, %v6881
        %6887 = vst [vmem:[#allocation4] sm:$0xff] %v6883
        %6888 = vst [vmem:[#allocation4 + $0x8] sm:$0xff] %v6884
        %6889 = vst [vmem:[#allocation4 + $0x10] sm:$0xff] %v6885
        %6890 = vst [vmem:[#allocation4 + $0x18] sm:$0xff] %v6886
        %v6891 = vld [vmem:[#allocation4] sm:$0xff]
        %v6892 = vld [vmem:[#allocation4 + $0x8] sm:$0xff]
        %v6893 = vld [vmem:[#allocation4 + $0x10] sm:$0xff]
        %v6894 = vld [vmem:[#allocation4 + $0x18] sm:$0xff]
        %s6895 = scalar_lea.vmem %s5, 112
        %v6896 = vld [vmem:[%s6895] sm:$0xff]
        %v6897 = vld [vmem:[%s6895 + $0x8] sm:$0xff]
        %6898 = vrot.lane.b32.xlu0 %v5570, 80
        %v6899 = vpop.permute.xlu0 %6898
        %6900 = vrot.lane.b32.xlu0 %v5571, 80
        %v6901 = vpop.permute.xlu0 %6900
        %6902 = vrot.lane.b32.xlu0 %v5572, 80
        %v6903 = vpop.permute.xlu0 %6902
        %6904 = vrot.lane.b32.xlu0 %v5573, 80
        %v6905 = vpop.permute.xlu0 %6904
        %6906 = vrot.lane.b32.xlu0 %v5574, 80
        %v6907 = vpop.permute.xlu0 %6906
        %6908 = vrot.lane.b32.xlu0 %v5575, 80
        %v6909 = vpop.permute.xlu0 %6908
        %6910 = vrot.lane.b32.xlu0 %v5576, 80
        %v6911 = vpop.permute.xlu0 %6910
        %6912 = vrot.lane.b32.xlu0 %v5577, 80
        %v6913 = vpop.permute.xlu0 %6912
        %6914 = vrot.lane.b32.xlu0 %v5578, 80
        %v6915 = vpop.permute.xlu0 %6914
        %6916 = vrot.lane.b32.xlu0 %v5579, 80
        %v6917 = vpop.permute.xlu0 %6916
        %6918 = vrot.lane.b32.xlu0 %v5580, 80
        %v6919 = vpop.permute.xlu0 %6918
        %6920 = vrot.lane.b32.xlu0 %v5581, 80
        %v6921 = vpop.permute.xlu0 %6920
        %6922 = vrot.lane.b32.xlu0 %v5582, 80
        %v6923 = vpop.permute.xlu0 %6922
        %6924 = vrot.lane.b32.xlu0 %v5583, 80
        %v6925 = vpop.permute.xlu0 %6924
        %6926 = vrot.lane.b32.xlu0 %v5584, 80
        %v6927 = vpop.permute.xlu0 %6926
        %6928 = vrot.lane.b32.xlu0 %v5585, 80
        %v6929 = vpop.permute.xlu0 %6928
        %6930 = vrot.lane.b32.xlu0 %v5586, 80
        %v6931 = vpop.permute.xlu0 %6930
        %6932 = vrot.lane.b32.xlu0 %v5587, 80
        %v6933 = vpop.permute.xlu0 %6932
        %v6934 = vsel %vm2807, %v6899, %v6901
        %v6935 = vsel %vm2807, %v6901, %v6903
        %v6936 = vsel %vm2807, %v6905, %v6907
        %v6937 = vsel %vm2807, %v6907, %v6909
        %v6938 = vsel %vm2807, %v6911, %v6913
        %v6939 = vsel %vm2807, %v6913, %v6915
        %v6940 = vsel %vm2807, %v6917, %v6919
        %v6941 = vsel %vm2807, %v6919, %v6921
        %v6942 = vsel %vm2807, %v6923, %v6925
        %v6943 = vsel %vm2807, %v6925, %v6927
        %v6944 = vsel %vm2807, %v6929, %v6931
        %v6945 = vsel %vm2807, %v6931, %v6933
        %v6959 = vsel %vm4797, %v6896, 0
        %v6962 = vsel %vm4797, %v6897, 0
        %6964 = vmatprep.subr.mxu0 %v6935
        %6965 = vmatpush1.msra.mxu0 %v6934
        %6966 = vmatprep.subr.mxu0 %v6937
        %6967 = vmatpush1.msra.mxu0 %v6936
        %6968 = vmatprep.subr.mxu0 %v6939
        %6969 = vmatpush1.msra.mxu0 %v6938
        %6970 = vmatprep.subr.mxu0 %v6941
        %6971 = vmatpush1.msra.mxu0 %v6940
        %6972 = vmatprep.subr.mxu0 %v6943
        %6973 = vmatpush1.msra.mxu0 %v6942
        %6974 = vmatprep.subr.mxu0 %v6945
        %6975 = vmatpush1.msra.mxu0 %v6944
        %6976 = vmatprep.subr.mxu0 0.0
        %6977 = vmatpush1.msra.mxu0 0.0
        %6978 = vmatprep.subr.mxu0 0.0
        %6979 = vmatpush1.msra.mxu0 0.0
        %6980 = vmatprep.subr.mxu0 0.0
        %6981 = vmatpush1.msra.mxu0 0.0
        %6982 = vmatprep.subr.mxu0 0.0
        %6983 = vmatpush1.msra.mxu0 0.0
        %6984 = vmatprep.subr.mxu0 0.0
        %6985 = vmatpush1.msra.mxu0 0.0
        %6986 = vmatprep.subr.mxu0 0.0
        %6987 = vmatpush1.msra.mxu0 0.0
        %6988 = vmatprep.subr.mxu0 0.0
        %6989 = vmatpush1.msra.mxu0 0.0
        %6990 = vmatprep.subr.mxu0 0.0
        %6991 = vmatpush1.msra.mxu0 0.0
        %6992 = vmatprep.subr.mxu0 0.0
        %6993 = vmatpush1.msra.mxu0 0.0
        %6994 = vmatprep.subr.mxu0 0.0
        %6995 = vmatpush1.msra.mxu0 0.0
        %6996 = vmatprep.subr.mxu0 0.0
        %6997 = vmatpush1.msra.mxu0 0.0
        %6998 = vmatprep.subr.mxu0 0.0
        %6999 = vmatpush1.msra.mxu0 0.0
        %7000 = vmatprep.subr.mxu0 0.0
        %7001 = vmatpush1.msra.mxu0 0.0
        %7002 = vmatprep.subr.mxu0 0.0
        %7003 = vmatpush1.msra.mxu0 0.0
        %7004 = vmatprep.subr.mxu0 0.0
        %7005 = vmatpush1.msra.mxu0 0.0
        %7006 = vmatprep.subr.mxu0 0.0
        %7007 = vmatpush1.msra.mxu0 0.0
        %7008 = vmatprep.subr.mxu0 0.0
        %7009 = vmatpush1.msra.mxu0 0.0
        %7010 = vmatprep.subr.mxu0 0.0
        %7011 = vmatpush1.msra.mxu0 0.0
        %7012 = vmatprep.subr.mxu0 0.0
        %7013 = vmatpush1.msra.mxu0 0.0
        %7014 = vmatprep.subr.mxu0 0.0
        %7015 = vmatpush1.msra.mxu0 0.0
        %7016 = vmatprep.subr.mxu0 0.0
        %7017 = vmatpush1.msra.mxu0 0.0
        %7018 = vmatprep.subr.mxu0 0.0
        %7019 = vmatpush1.msra.mxu0 0.0
        %7020 = vmatprep.subr.mxu0 0.0
        %7021 = vmatpush1.msra.mxu0 0.0
        %7022 = vmatprep.subr.mxu0 0.0
        %7023 = vmatpush1.msra.mxu0 0.0
        %7024 = vmatprep.subr.mxu0 0.0
        %7025 = vmatpush1.msra.mxu0 0.0
        %7026 = vmatprep.subr.mxu0 0.0
        %7027 = vmatpush1.msra.mxu0 0.0
        %7028 = vmatprep.mubr.f32.mxu0 0.0
        %7029 = vmatmul.mubr.f32.gmra.mrb[0].mxu0 %v6959
        %v7030 = vpop.f32.mrb[0].mxu0
        %v7031 = vadd.f32 0.0, %v7030
        %v7032 = vpop.f32.mrb[0].mxu0
        %v7033 = vadd.f32 0.0, %v7032
        %7034 = vmatprep.mubr.f32.mxu0 0.0
        %7035 = vmatmul.mubr.f32.gmra.mrb[0].mxu0 %v6962
        %v7036 = vpop.f32.mrb[0].mxu0
        %v7037 = vadd.f32 0.0, %v7036
        %v7038 = vpop.f32.mrb[0].mxu0
        %v7039 = vadd.f32 0.0, %v7038
        %7040 = vdwg.mxu0
        %v7041 = vadd.f32 %v6891, %v7031
        %v7042 = vadd.f32 %v6892, %v7033
        %v7043 = vadd.f32 %v6893, %v7037
        %v7044 = vadd.f32 %v6894, %v7039
        %7045 = vst [vmem:[#allocation4] sm:$0xff] %v7041
        %7046 = vst [vmem:[#allocation4 + $0x8] sm:$0xff] %v7042
        %7047 = vst [vmem:[#allocation4 + $0x10] sm:$0xff] %v7043
        %7048 = vst [vmem:[#allocation4 + $0x18] sm:$0xff] %v7044
        %v7049 = vmul.f32 %v5570, %v2960
        %v7050 = vmul.f32 %v5571, %v2964
        %v7051 = vmul.f32 %v5572, %v2962
        %v7052 = vmul.f32 %v5573, %v2960
        %v7053 = vmul.f32 %v5574, %v2964
        %v7054 = vmul.f32 %v5575, %v2962
        %v7055 = vmul.f32 %v5576, %v2960
        %v7056 = vmul.f32 %v5577, %v2964
        %v7057 = vmul.f32 %v5578, %v2962
        %v7058 = vmul.f32 %v5579, %v2960
        %v7059 = vmul.f32 %v5580, %v2964
        %v7060 = vmul.f32 %v5581, %v2962
        %v7061 = vmul.f32 %v5582, %v2960
        %v7062 = vmul.f32 %v5583, %v2964
        %v7063 = vmul.f32 %v5584, %v2962
        %v7064 = vmul.f32 %v5585, %v2960
        %v7065 = vmul.f32 %v5586, %v2964
        %v7066 = vmul.f32 %v5587, %v2962
        %v7067 = vld [vmem:[#allocation4] sm:$0xff]
        %v7068 = vld [vmem:[#allocation4 + $0x8] sm:$0xff]
        %v7069 = vld [vmem:[#allocation4 + $0x10] sm:$0xff]
        %v7070 = vld [vmem:[#allocation4 + $0x18] sm:$0xff]
        %s7071 = scalar_lea.vmem %s5, 128
        %v7072 = vld [vmem:[%s7071] sm:$0xff]
        %v7073 = vld [vmem:[%s7071 + $0x8] sm:$0xff]
        %7092 = vrot.lane.b32.xlu0 %v7049, 79
        %v7093 = vpop.permute.xlu0 %7092
        %7094 = vrot.lane.b32.xlu0 %v7050, 79
        %v7095 = vpop.permute.xlu0 %7094
        %7096 = vrot.lane.b32.xlu0 %v7051, 79
        %v7097 = vpop.permute.xlu0 %7096
        %7098 = vrot.lane.b32.xlu0 %v7052, 79
        %v7099 = vpop.permute.xlu0 %7098
        %7100 = vrot.lane.b32.xlu0 %v7053, 79
        %v7101 = vpop.permute.xlu0 %7100
        %7102 = vrot.lane.b32.xlu0 %v7054, 79
        %v7103 = vpop.permute.xlu0 %7102
        %7104 = vrot.lane.b32.xlu0 %v7055, 79
        %v7105 = vpop.permute.xlu0 %7104
        %7106 = vrot.lane.b32.xlu0 %v7056, 79
        %v7107 = vpop.permute.xlu0 %7106
        %7108 = vrot.lane.b32.xlu0 %v7057, 79
        %v7109 = vpop.permute.xlu0 %7108
        %7110 = vrot.lane.b32.xlu0 %v7058, 79
        %v7111 = vpop.permute.xlu0 %7110
        %7112 = vrot.lane.b32.xlu0 %v7059, 79
        %v7113 = vpop.permute.xlu0 %7112
        %7114 = vrot.lane.b32.xlu0 %v7060, 79
        %v7115 = vpop.permute.xlu0 %7114
        %7116 = vrot.lane.b32.xlu0 %v7061, 79
        %v7117 = vpop.permute.xlu0 %7116
        %7118 = vrot.lane.b32.xlu0 %v7062, 79
        %v7119 = vpop.permute.xlu0 %7118
        %7120 = vrot.lane.b32.xlu0 %v7063, 79
        %v7121 = vpop.permute.xlu0 %7120
        %7122 = vrot.lane.b32.xlu0 %v7064, 79
        %v7123 = vpop.permute.xlu0 %7122
        %7124 = vrot.lane.b32.xlu0 %v7065, 79
        %v7125 = vpop.permute.xlu0 %7124
        %7126 = vrot.lane.b32.xlu0 %v7066, 79
        %v7127 = vpop.permute.xlu0 %7126
        %v7128 = vsel %vm3011, %v7093, %v7095
        %v7129 = vsel %vm3011, %v7095, %v7097
        %v7130 = vsel %vm3011, %v7099, %v7101
        %v7131 = vsel %vm3011, %v7101, %v7103
        %v7132 = vsel %vm3011, %v7105, %v7107
        %v7133 = vsel %vm3011, %v7107, %v7109
        %v7134 = vsel %vm3011, %v7111, %v7113
        %v7135 = vsel %vm3011, %v7113, %v7115
        %v7136 = vsel %vm3011, %v7117, %v7119
        %v7137 = vsel %vm3011, %v7119, %v7121
        %v7138 = vsel %vm3011, %v7123, %v7125
        %v7139 = vsel %vm3011, %v7125, %v7127
        %v7153 = vsel %vm4797, %v7072, 0
        %v7156 = vsel %vm4797, %v7073, 0
        %7158 = vmatprep.subr.mxu0 %v7129
        %7159 = vmatpush1.msra.mxu0 %v7128
        %7160 = vmatprep.subr.mxu0 %v7131
        %7161 = vmatpush1.msra.mxu0 %v7130
        %7162 = vmatprep.subr.mxu0 %v7133
        %7163 = vmatpush1.msra.mxu0 %v7132
        %7164 = vmatprep.subr.mxu0 %v7135
        %7165 = vmatpush1.msra.mxu0 %v7134
        %7166 = vmatprep.subr.mxu0 %v7137
        %7167 = vmatpush1.msra.mxu0 %v7136
        %7168 = vmatprep.subr.mxu0 %v7139
        %7169 = vmatpush1.msra.mxu0 %v7138
        %7170 = vmatprep.subr.mxu0 0.0
        %7171 = vmatpush1.msra.mxu0 0.0
        %7172 = vmatprep.subr.mxu0 0.0
        %7173 = vmatpush1.msra.mxu0 0.0
        %7174 = vmatprep.subr.mxu0 0.0
        %7175 = vmatpush1.msra.mxu0 0.0
        %7176 = vmatprep.subr.mxu0 0.0
        %7177 = vmatpush1.msra.mxu0 0.0
        %7178 = vmatprep.subr.mxu0 0.0
        %7179 = vmatpush1.msra.mxu0 0.0
        %7180 = vmatprep.subr.mxu0 0.0
        %7181 = vmatpush1.msra.mxu0 0.0
        %7182 = vmatprep.subr.mxu0 0.0
        %7183 = vmatpush1.msra.mxu0 0.0
        %7184 = vmatprep.subr.mxu0 0.0
        %7185 = vmatpush1.msra.mxu0 0.0
        %7186 = vmatprep.subr.mxu0 0.0
        %7187 = vmatpush1.msra.mxu0 0.0
        %7188 = vmatprep.subr.mxu0 0.0
        %7189 = vmatpush1.msra.mxu0 0.0
        %7190 = vmatprep.subr.mxu0 0.0
        %7191 = vmatpush1.msra.mxu0 0.0
        %7192 = vmatprep.subr.mxu0 0.0
        %7193 = vmatpush1.msra.mxu0 0.0
        %7194 = vmatprep.subr.mxu0 0.0
        %7195 = vmatpush1.msra.mxu0 0.0
        %7196 = vmatprep.subr.mxu0 0.0
        %7197 = vmatpush1.msra.mxu0 0.0
        %7198 = vmatprep.subr.mxu0 0.0
        %7199 = vmatpush1.msra.mxu0 0.0
        %7200 = vmatprep.subr.mxu0 0.0
        %7201 = vmatpush1.msra.mxu0 0.0
        %7202 = vmatprep.subr.mxu0 0.0
        %7203 = vmatpush1.msra.mxu0 0.0
        %7204 = vmatprep.subr.mxu0 0.0
        %7205 = vmatpush1.msra.mxu0 0.0
        %7206 = vmatprep.subr.mxu0 0.0
        %7207 = vmatpush1.msra.mxu0 0.0
        %7208 = vmatprep.subr.mxu0 0.0
        %7209 = vmatpush1.msra.mxu0 0.0
        %7210 = vmatprep.subr.mxu0 0.0
        %7211 = vmatpush1.msra.mxu0 0.0
        %7212 = vmatprep.subr.mxu0 0.0
        %7213 = vmatpush1.msra.mxu0 0.0
        %7214 = vmatprep.subr.mxu0 0.0
        %7215 = vmatpush1.msra.mxu0 0.0
        %7216 = vmatprep.subr.mxu0 0.0
        %7217 = vmatpush1.msra.mxu0 0.0
        %7218 = vmatprep.subr.mxu0 0.0
        %7219 = vmatpush1.msra.mxu0 0.0
        %7220 = vmatprep.subr.mxu0 0.0
        %7221 = vmatpush1.msra.mxu0 0.0
        %7222 = vmatprep.mubr.f32.mxu0 0.0
        %7223 = vmatmul.mubr.f32.gmra.mrb[0].mxu0 %v7153
        %v7224 = vpop.f32.mrb[0].mxu0
        %v7225 = vadd.f32 0.0, %v7224
        %v7226 = vpop.f32.mrb[0].mxu0
        %v7227 = vadd.f32 0.0, %v7226
        %7228 = vmatprep.mubr.f32.mxu0 0.0
        %7229 = vmatmul.mubr.f32.gmra.mrb[0].mxu0 %v7156
        %v7230 = vpop.f32.mrb[0].mxu0
        %v7231 = vadd.f32 0.0, %v7230
        %v7232 = vpop.f32.mrb[0].mxu0
        %v7233 = vadd.f32 0.0, %v7232
        %7234 = vdwg.mxu0
        %v7235 = vadd.f32 %v7067, %v7225
        %v7236 = vadd.f32 %v7068, %v7227
        %v7237 = vadd.f32 %v7069, %v7231
        %v7238 = vadd.f32 %v7070, %v7233
        %7239 = vst [vmem:[#allocation4] sm:$0xff] %v7235
        %7240 = vst [vmem:[#allocation4 + $0x8] sm:$0xff] %v7236
        %7241 = vst [vmem:[#allocation4 + $0x10] sm:$0xff] %v7237
        %7242 = vst [vmem:[#allocation4 + $0x18] sm:$0xff] %v7238
        %v7243 = vld [vmem:[#allocation4] sm:$0xff]
        %v7244 = vld [vmem:[#allocation4 + $0x8] sm:$0xff]
        %v7245 = vld [vmem:[#allocation4 + $0x10] sm:$0xff]
        %v7246 = vld [vmem:[#allocation4 + $0x18] sm:$0xff]
        %v7247 = vld [vmem:[%s6] sm:$0xff]
        %v7248 = vld [vmem:[%s6 + $0x8] sm:$0xff]
        %7250 = vset.pattern.permute.xlu0 0
        %7251 = vperm.xlu0 %7250, %v7247
        %v7252 = vpop.permute.xlu0 %7251
        %7255 = vset.pattern.permute.xlu0 0
        %7256 = vperm.xlu0 %7255, %v7248
        %v7257 = vpop.permute.xlu0 %7256
        %v7259 = vmul.f32 %v7243, %v7252
        %v7260 = vmul.f32 %v7244, %v7252
        %v7261 = vmul.f32 %v7245, %v7257
        %v7262 = vmul.f32 %v7246, %v7257
        %v7263 = vld [vmem:[%s7] sm:$0xff]
        %v7264 = vld [vmem:[%s7 + $0x8] sm:$0xff]
        %7266 = vset.pattern.permute.xlu0 0
        %7267 = vperm.xlu0 %7266, %v7263
        %v7268 = vpop.permute.xlu0 %7267
        %7271 = vset.pattern.permute.xlu0 0
        %7272 = vperm.xlu0 %7271, %v7264
        %v7273 = vpop.permute.xlu0 %7272
        %v7275 = vadd.f32 %v7259, %v7268
        %v7276 = vadd.f32 %v7260, %v7268
        %v7277 = vadd.f32 %v7261, %v7273
        %v7278 = vadd.f32 %v7262, %v7273
        %7279 = vst [vmem:[%s298] sm:$0xff] %v7275
        %7280 = vst [vmem:[%s298 + $0x8] sm:$0xff] %v7276
        %7281 = vst [vmem:[%s298 + $0x10] sm:$0xff] %v7277
        %7282 = vst [vmem:[%s298 + $0x18] sm:$0xff] %v7278
        %s7283 = sand.u32 %s203, 1
        %s7284 = scalar_lea.sflag [#allocation6], %s7283
        %s7285 = sand.u32 %s203, 1
        %s7286 = smul.addr %s7285, 32
        %s7287 = scalar_lea.vmem [#allocation5], %s7286
        // Predicated region
        $region53: #{tpu_custom_call.1} parent=51 // pred_check
          %p7288 = pneg %p213
        $region54: #{tpu_custom_call.1} parent=51 // pred_check_branch
          %7290 = sbr.rel (%p7288) target = $region56
        $region55: #{tpu_custom_call.1} parent=51 // pred_region
          %s7292 = ssub.s32 512, 512
          %7293 = vsyncadd %s7284, %s7292
          %s7294 = smul.addr %s22, 4
          %s7295 = smul.addr %s7294, 128
          %s7296 = scalar_lea.hbm %s8, %s7295
          %s7297 = sshll.u32 %s7287, 4
          %s7298 = int_to_ptr.vmem [resolvable:$true] %s7297
          %7303 = dma.vmem_to_hbm [thread:$0]  %s7298, 512, %s7296, %s7284, 256, 256, 16
        $region56: #{tpu_custom_call.1} parent=51 // pred_fallthru
          _
      $region52: #{tpu_custom_call.1} parent=5 // pred_fallthru
        _
      %p7304 = scmp.le.s32.totalorder 2, %s17
      // Predicated region
      $region57: #{tpu_custom_call.1} parent=5 // pred_check
        %p7305 = pneg %p7304
      $region58: #{tpu_custom_call.1} parent=5 // pred_check_branch
        %7307 = sbr.rel (%p7305) target = $region60
      $region59: #{tpu_custom_call.1} parent=5 // pred_region
        %s7308 = ssub.s32 %s17, 2
        // Predicated region
        $region61: #{tpu_custom_call.1} parent=59 // pred_check
          %p7309 = pneg %p219
        $region62: #{tpu_custom_call.1} parent=59 // pred_check_branch
          %7311 = sbr.rel (%p7309) target = $region64
        $region63: #{tpu_custom_call.1} parent=59 // pred_region
          %s7312 = sand.u32 %s204, 1
          %s7313 = scalar_lea.sflag [#allocation6], %s7312
          %s7314 = sand.u32 %s204, 1
          %s7315 = smul.addr %s7314, 32
          %s7316 = scalar_lea.vmem [#allocation5], %s7315
          %7317 = dma.done %s7313, 512
        $region64: #{tpu_custom_call.1} parent=59 // pred_fallthru
          _
      $region60: #{tpu_custom_call.1} parent=5 // pred_fallthru
        _
    $region6: #{tpu_custom_call.1} parent=1 // loop_footer
      %s21 = sadd.s32 1, %s17
    $region7: #{tpu_custom_call.1} parent=1 // loop_footer_branch
      %16 = sbr.rel target = $region3
    $region8: #{tpu_custom_call.1} parent=1 // loop_exit
      _
    %7318 = vsyncpa [#allocation6], 1
    %s7319 = scalar_lea.sflag [#allocation6], 1
    %7320 = vsyncpa %s7319, 1

</llo_original>
